<compile_context>
chip_gen: v7x
topology: tpu7x:2x2x1
jax: 0.10.0
libtpu: 0.0.40
codegen_flags: <defaults>
</compile_context>

<pallas_src>
import functools

import jax
import jax.numpy as jnp
from jax import lax
from jax.experimental import pallas as pl
from jax.experimental.pallas import tpu as pltpu

EPS = 1e-5  # nn.InstanceNorm2d default


# ---------------------------------------------------------------------------
# In-kernel helpers (traced once per pallas_call; all operands live in VMEM).
# ---------------------------------------------------------------------------
def _fill_cols(col_ref, y):
    """Stage y (H, W, C) into the W-unrolled reflection-padded scratch.

    col_ref[dw, r, w, :] == ypad[r, w + dw, :], where ypad is y with
    ReflectionPad2d(1) applied in H and W.  Only leading-dim (H) shifts and
    slice-stores are used -- no concatenates, no full-image sublane relayouts.
    """
    H, W, C = y.shape
    y = y.astype(col_ref.dtype)
    # dw = 1 tap: padded column w+1 is original column w -> plain copy.
    col_ref[1, 1:H + 1, :, :] = y
    # dw = 0 tap: padded column w is original column w-1 (col 0 reflects col 1).
    col_ref[0, 1:H + 1, 1:W, :] = y[:, 0:W - 1, :]
    col_ref[0, 1:H + 1, 0:1, :] = y[:, 1:2, :]
    # dw = 2 tap: padded column w+2 is original w+1 (last reflects col W-2).
    col_ref[2, 1:H + 1, 0:W - 1, :] = y[:, 1:W, :]
    col_ref[2, 1:H + 1, W - 1:W, :] = y[:, W - 2:W - 1, :]
    # Reflect the padded rows: padded row 0 == padded row 2, row H+1 == H-1.
    # These are leading-dim copies (free of relayout).
    col_ref[:, 0:1] = col_ref[:, 2:3]
    col_ref[:, H + 1:H + 2] = col_ref[:, H - 1:H]


def _conv3x3(col_ref, w_ref, b, H, W):
    """3x3 conv from the staged columns.

    out[h*W + w, cout] = sum_{dh,dw,cin} col[dw, h+dh, w, cin] * w[dh, dw, cin, cout]

    Every patch read is a leading-dim slice (free); accumulation is f32.
    Returns flat (H*W, Cout) f32.
    """
    acc = None
    for dh in range(3):
        for dw in range(3):
            patch = col_ref[dw, dh:dh + H].reshape(H * W, -1)
            part = jnp.dot(patch, w_ref[dh, dw],
                           preferred_element_type=jnp.float32)
            acc = part if acc is None else acc + part
    # Conv bias (mathematically a no-op before InstanceNorm, kept for fidelity).
    return acc + b


def _instance_norm(y):
    """y: flat (H*W, C) f32.  Per-channel spatial mean / biased var, no affine,
    eps inside rsqrt -- matches nn.InstanceNorm2d defaults.  Single fused pass
    (sum and sum-of-squares together)."""
    inv_n = 1.0 / y.shape[0]
    s = jnp.sum(y, axis=0, keepdims=True)
    ss = jnp.sum(y * y, axis=0, keepdims=True)
    mean = s * inv_n
    var = jnp.maximum(ss * inv_n - mean * mean, 0.0)
    return (y - mean) * lax.rsqrt(var + EPS)


# ---------------------------------------------------------------------------
# Pallas kernel: one batch element per grid step (whole image fits in VMEM).
# ---------------------------------------------------------------------------
def _resblock_kernel(x_ref, w1_ref, b1_ref, w2_ref, b2_ref, o_ref, col_ref):
    _, H, W, C = x_ref.shape
    x = x_ref[0]                                   # (H, W, C) input dtype
    xf = x.astype(jnp.float32)

    # conv1 (+bias) -> instance norm -> relu, all on flat (H*W, C) data.
    _fill_cols(col_ref, x)
    y = _conv3x3(col_ref, w1_ref, b1_ref[...], H, W)
    y = jnp.maximum(_instance_norm(y), 0.0)

    # conv2 (+bias) -> instance norm.
    _fill_cols(col_ref, y.reshape(H, W, C))
    y = _conv3x3(col_ref, w2_ref, b2_ref[...], H, W)
    y = _instance_norm(y)

    # Residual add, then back to (H, W, C) for the store.
    out = xf.reshape(H * W, C) + y
    o_ref[0] = out.reshape(H, W, C).astype(o_ref.dtype)


def _vmem_limit_bytes(H, W, C, in_dtype, compute_dtype):
    item_in = jnp.dtype(in_dtype).itemsize
    item_c = jnp.dtype(compute_dtype).itemsize
    img = H * W * C
    est = (2 * 2 * img * item_in                       # double-buffered x / out
           + 2 * (2 * 9 * C * C * item_c + 2 * C * 4)  # weights + biases
           + 3 * (H + 2) * W * C * item_c              # im2col scratch
           + 8 * img * 4)                              # f32 intermediates
    return int(min(64 * 1024 * 1024, max(32 * 1024 * 1024, 2 * est)))


def prepare_params(w1_oihw, b1, w2_oihw, b2, *, compute_dtype=jnp.bfloat16):
    """One-time parameter transform (hoist out of the per-call path):
    PyTorch OIHW conv weights -> HWIO in the MXU compute dtype; biases (1, C) f32."""
    def prep_w(w):
        return jnp.transpose(w, (2, 3, 1, 0)).astype(compute_dtype)

    def prep_b(b):
        return b.reshape(1, -1).astype(jnp.float32)

    return prep_w(w1_oihw), prep_b(b1), prep_w(w2_oihw), prep_b(b2)


def residual_block_nhwc(x, w1_hwio, b1, w2_hwio, b2):
    """x: (N, H, W, C); w*: (3, 3, C, C) HWIO (MXU dtype); b*: (1, C) f32."""
    N, H, W, C = x.shape
    assert H >= 2 and W >= 2, "ReflectionPad2d(1) needs H, W >= 2"
    compute_dtype = w1_hwio.dtype

    flops = 2 * 2 * 9 * H * W * C * C * N
    bytes_accessed = (2 * N * H * W * C * jnp.dtype(x.dtype).itemsize
                      + 2 * 9 * C * C * jnp.dtype(compute_dtype).itemsize
                      + 2 * C * 4)

    return pl.pallas_call(
        _resblock_kernel,
        out_shape=jax.ShapeDtypeStruct((N, H, W, C), x.dtype),
        grid=(N,),
        in_specs=[
            pl.BlockSpec((1, H, W, C), lambda n: (n, 0, 0, 0)),
            pl.BlockSpec((3, 3, C, C), lambda n: (0, 0, 0, 0)),
            pl.BlockSpec((1, C), lambda n: (0, 0)),
            pl.BlockSpec((3, 3, C, C), lambda n: (0, 0, 0, 0)),
            pl.BlockSpec((1, C), lambda n: (0, 0)),
        ],
        out_specs=pl.BlockSpec((1, H, W, C), lambda n: (n, 0, 0, 0)),
        scratch_shapes=[pltpu.VMEM((3, H + 2, W, C), compute_dtype)],
        compiler_params=pltpu.CompilerParams(
            dimension_semantics=("parallel",),
            vmem_limit_bytes=_vmem_limit_bytes(H, W, C, x.dtype, compute_dtype)),
        cost_estimate=pl.CostEstimate(
            flops=flops, transcendentals=2 * N * C,
            bytes_accessed=bytes_accessed),
    )(x, w1_hwio, b1, w2_hwio, b2)


@functools.partial(jax.jit, static_argnames=("compute_dtype",))
def residual_block_nchw(x_nchw, w1_oihw, b1, w2_oihw, b2,
                        compute_dtype=jnp.bfloat16):
    # PyTorch-facing wrapper: NCHW in / NCHW out, OIHW weights.  In a full
    # CycleGAN generator, stay in NHWC between blocks and call prepare_params
    # once at parameter-load time instead of per block invocation.
    x = jnp.transpose(x_nchw, (0, 2, 3, 1))            # -> NHWC
    params = prepare_params(w1_oihw, b1, w2_oihw, b2,
                            compute_dtype=compute_dtype)
    out = residual_block_nhwc(x, *params)
    return jnp.transpose(out, (0, 3, 1, 2))            # -> NCHW


# ---------------------------------------------------------------------------
# Pure-JAX reference (correctness check against the kernel).
# ---------------------------------------------------------------------------
def _reference_nchw(x, w1, b1, w2, b2):
    def inorm(y):
        m = jnp.mean(y, axis=(2, 3), keepdims=True)
        v = jnp.mean((y - m) ** 2, axis=(2, 3), keepdims=True)
        return (y - m) * lax.rsqrt(v + EPS)

    def conv(y, w, b):
        yp = jnp.pad(y, ((0, 0), (0, 0), (1, 1), (1, 1)), mode="reflect")
        out = lax.conv_general_dilated(
            yp, w, window_strides=(1, 1), padding="VALID",
            dimension_numbers=("NCHW", "OIHW", "NCHW"))
        return out + b[None, :, None, None]

    y = jnp.maximum(inorm(conv(x, w1, b1)), 0.0)
    y = inorm(conv(y, w2, b2))
    return x + y


if __name__ == "__main__":
    N, C, H, W = 2, 4, 16, 16   # in_features == out_features (residual add)

    key = jax.random.PRNGKey(0)
    kx, kw1, kb1, kw2, kb2 = jax.random.split(key, 5)

    x = jax.random.normal(kx, (N, C, H, W), dtype=jnp.float32)
    # PyTorch Conv2d parameter shapes: (Cout, Cin, 3, 3) and (Cout,).
    w1 = jax.random.normal(kw1, (C, C, 3, 3), dtype=jnp.float32) * 0.1
    b1 = jax.random.normal(kb1, (C,), dtype=jnp.float32) * 0.1
    w2 = jax.random.normal(kw2, (C, C, 3, 3), dtype=jnp.float32) * 0.1
    b2 = jax.random.normal(kb2, (C,), dtype=jnp.float32) * 0.1

    ref = jax.block_until_ready(_reference_nchw(x, w1, b1, w2, b2))

    # Exact path (f32 MXU inputs) -- tight tolerance.
    out_f32 = jax.block_until_ready(
        residual_block_nchw(x, w1, b1, w2, b2, compute_dtype=jnp.float32))
    assert out_f32.shape == x.shape and out_f32.dtype == x.dtype
    assert jnp.allclose(out_f32, ref, atol=1e-3, rtol=1e-3), (
        float(jnp.max(jnp.abs(out_f32 - ref))))

    # Default fast path (bf16 MXU inputs, f32 accumulation/norm/residual).
    out_bf16 = jax.block_until_ready(residual_block_nchw(x, w1, b1, w2, b2))
    assert out_bf16.shape == x.shape and out_bf16.dtype == x.dtype
    assert jnp.allclose(out_bf16, ref, atol=3e-2, rtol=3e-2), (
        float(jnp.max(jnp.abs(out_bf16 - ref))))

    print("KERNEL_OK")
</pallas_src>

<mosaic_0001>
module attributes {stable_mosaic.version = 11 : i64} {
  func.func @_resblock_kernel(%arg0: i32, %arg1: memref<1x16x16x4xf32, #tpu.memory_space<vmem>>, %arg2: memref<3x3x4x4xf32, #tpu.memory_space<vmem>>, %arg3: memref<1x4xf32, #tpu.memory_space<vmem>>, %arg4: memref<3x3x4x4xf32, #tpu.memory_space<vmem>>, %arg5: memref<1x4xf32, #tpu.memory_space<vmem>>, %arg6: memref<1x16x16x4xf32, #tpu.memory_space<vmem>>, %arg7: memref<3x18x16x4xf32, #tpu.memory_space<vmem>>) attributes {dimension_semantics = [#tpu.dimension_semantics<parallel>], iteration_bounds = array<i64: 2>, scalar_prefetch = 0 : i64, scratch_operands = 1 : i64, tpu.core_type = #tpu.core_type<tc>, window_params = [{transform_indices = @transform_0, window_bounds = array<i64: 1, 16, 16, 4>}, {pipeline_mode = #tpu.pipeline_mode<synchronous>, transform_indices = @transform_1, window_bounds = array<i64: 3, 3, 4, 4>}, {pipeline_mode = #tpu.pipeline_mode<synchronous>, transform_indices = @transform_2, window_bounds = array<i64: 1, 4>}, {pipeline_mode = #tpu.pipeline_mode<synchronous>, transform_indices = @transform_3, window_bounds = array<i64: 3, 3, 4, 4>}, {pipeline_mode = #tpu.pipeline_mode<synchronous>, transform_indices = @transform_4, window_bounds = array<i64: 1, 4>}, {transform_indices = @transform_5, window_bounds = array<i64: 1, 16, 16, 4>}]} {
    %c0 = arith.constant 0 : index
    %c0_0 = arith.constant 0 : index
    %c0_1 = arith.constant 0 : index
    %c0_2 = arith.constant 0 : index
    %0 = vector.load %arg1[%c0, %c0_0, %c0_1, %c0_2] : memref<1x16x16x4xf32, #tpu.memory_space<vmem>>, vector<1x16x16x4xf32>
    %1 = vector.shape_cast %0 : vector<1x16x16x4xf32> to vector<16x16x4xf32>
    %c1 = arith.constant 1 : index
    %c1_3 = arith.constant 1 : index
    %c0_4 = arith.constant 0 : index
    %c0_5 = arith.constant 0 : index
    %2 = vector.load %arg7[%c1, %c1_3, %c0_4, %c0_5] : memref<3x18x16x4xf32, #tpu.memory_space<vmem>>, vector<1x16x16x4xf32>
    %3 = vector.shape_cast %2 : vector<1x16x16x4xf32> to vector<16x16x4xf32>
    %4 = vector.shape_cast %1 : vector<16x16x4xf32> to vector<1x16x16x4xf32>
    tpu.vector_store %arg7[%c1, %c1_3, %c0_4, %c0_5], %4 {strides = array<i32>} : memref<3x18x16x4xf32, #tpu.memory_space<vmem>>, vector<1x16x16x4xf32>,
    %5 = vector.extract_strided_slice %1 {offsets = [0, 0, 0], sizes = [16, 15, 4], strides = [1, 1, 1]} : vector<16x16x4xf32> to vector<16x15x4xf32>
    %c0_6 = arith.constant 0 : index
    %c1_7 = arith.constant 1 : index
    %c1_8 = arith.constant 1 : index
    %c0_9 = arith.constant 0 : index
    %6 = vector.load %arg7[%c0_6, %c1_7, %c1_8, %c0_9] : memref<3x18x16x4xf32, #tpu.memory_space<vmem>>, vector<1x16x15x4xf32>
    %7 = vector.shape_cast %6 : vector<1x16x15x4xf32> to vector<16x15x4xf32>
    %8 = vector.shape_cast %5 : vector<16x15x4xf32> to vector<1x16x15x4xf32>
    tpu.vector_store %arg7[%c0_6, %c1_7, %c1_8, %c0_9], %8 {strides = array<i32>} : memref<3x18x16x4xf32, #tpu.memory_space<vmem>>, vector<1x16x15x4xf32>,
    %9 = vector.extract_strided_slice %1 {offsets = [0, 1, 0], sizes = [16, 1, 4], strides = [1, 1, 1]} : vector<16x16x4xf32> to vector<16x1x4xf32>
    %c0_10 = arith.constant 0 : index
    %c1_11 = arith.constant 1 : index
    %c0_12 = arith.constant 0 : index
    %c0_13 = arith.constant 0 : index
    %10 = vector.load %arg7[%c0_10, %c1_11, %c0_12, %c0_13] : memref<3x18x16x4xf32, #tpu.memory_space<vmem>>, vector<1x16x1x4xf32>
    %11 = vector.shape_cast %10 : vector<1x16x1x4xf32> to vector<16x1x4xf32>
    %12 = vector.shape_cast %9 : vector<16x1x4xf32> to vector<1x16x1x4xf32>
    tpu.vector_store %arg7[%c0_10, %c1_11, %c0_12, %c0_13], %12 {strides = array<i32>} : memref<3x18x16x4xf32, #tpu.memory_space<vmem>>, vector<1x16x1x4xf32>,
    %13 = vector.extract_strided_slice %1 {offsets = [0, 1, 0], sizes = [16, 15, 4], strides = [1, 1, 1]} : vector<16x16x4xf32> to vector<16x15x4xf32>
    %c2 = arith.constant 2 : index
    %c1_14 = arith.constant 1 : index
    %c0_15 = arith.constant 0 : index
    %c0_16 = arith.constant 0 : index
    %14 = vector.load %arg7[%c2, %c1_14, %c0_15, %c0_16] : memref<3x18x16x4xf32, #tpu.memory_space<vmem>>, vector<1x16x15x4xf32>
    %15 = vector.shape_cast %14 : vector<1x16x15x4xf32> to vector<16x15x4xf32>
    %16 = vector.shape_cast %13 : vector<16x15x4xf32> to vector<1x16x15x4xf32>
    tpu.vector_store %arg7[%c2, %c1_14, %c0_15, %c0_16], %16 {strides = array<i32>} : memref<3x18x16x4xf32, #tpu.memory_space<vmem>>, vector<1x16x15x4xf32>,
    %17 = vector.extract_strided_slice %1 {offsets = [0, 14, 0], sizes = [16, 1, 4], strides = [1, 1, 1]} : vector<16x16x4xf32> to vector<16x1x4xf32>
    %c2_17 = arith.constant 2 : index
    %c1_18 = arith.constant 1 : index
    %c15 = arith.constant 15 : index
    %c0_19 = arith.constant 0 : index
    %18 = vector.load %arg7[%c2_17, %c1_18, %c15, %c0_19] : memref<3x18x16x4xf32, #tpu.memory_space<vmem>>, vector<1x16x1x4xf32>
    %19 = vector.shape_cast %18 : vector<1x16x1x4xf32> to vector<16x1x4xf32>
    %20 = vector.shape_cast %17 : vector<16x1x4xf32> to vector<1x16x1x4xf32>
    tpu.vector_store %arg7[%c2_17, %c1_18, %c15, %c0_19], %20 {strides = array<i32>} : memref<3x18x16x4xf32, #tpu.memory_space<vmem>>, vector<1x16x1x4xf32>,
    %c0_20 = arith.constant 0 : index
    %c2_21 = arith.constant 2 : index
    %c0_22 = arith.constant 0 : index
    %c0_23 = arith.constant 0 : index
    %21 = vector.load %arg7[%c0_20, %c2_21, %c0_22, %c0_23] : memref<3x18x16x4xf32, #tpu.memory_space<vmem>>, vector<3x1x16x4xf32>
    %c0_24 = arith.constant 0 : index
    %c0_25 = arith.constant 0 : index
    %c0_26 = arith.constant 0 : index
    %c0_27 = arith.constant 0 : index
    %22 = vector.load %arg7[%c0_24, %c0_25, %c0_26, %c0_27] : memref<3x18x16x4xf32, #tpu.memory_space<vmem>>, vector<3x1x16x4xf32>
    tpu.vector_store %arg7[%c0_24, %c0_25, %c0_26, %c0_27], %21 {strides = array<i32>} : memref<3x18x16x4xf32, #tpu.memory_space<vmem>>, vector<3x1x16x4xf32>,
    %c0_28 = arith.constant 0 : index
    %c15_29 = arith.constant 15 : index
    %c0_30 = arith.constant 0 : index
    %c0_31 = arith.constant 0 : index
    %23 = vector.load %arg7[%c0_28, %c15_29, %c0_30, %c0_31] : memref<3x18x16x4xf32, #tpu.memory_space<vmem>>, vector<3x1x16x4xf32>
    %c0_32 = arith.constant 0 : index
    %c17 = arith.constant 17 : index
    %c0_33 = arith.constant 0 : index
    %c0_34 = arith.constant 0 : index
    %24 = vector.load %arg7[%c0_32, %c17, %c0_33, %c0_34] : memref<3x18x16x4xf32, #tpu.memory_space<vmem>>, vector<3x1x16x4xf32>
    tpu.vector_store %arg7[%c0_32, %c17, %c0_33, %c0_34], %23 {strides = array<i32>} : memref<3x18x16x4xf32, #tpu.memory_space<vmem>>, vector<3x1x16x4xf32>,
    %c0_35 = arith.constant 0 : index
    %c0_36 = arith.constant 0 : index
    %25 = vector.load %arg3[%c0_35, %c0_36] : memref<1x4xf32, #tpu.memory_space<vmem>>, vector<1x4xf32>
    %c0_37 = arith.constant 0 : index
    %c0_38 = arith.constant 0 : index
    %c0_39 = arith.constant 0 : index
    %c0_40 = arith.constant 0 : index
    %26 = vector.load %arg7[%c0_37, %c0_38, %c0_39, %c0_40] : memref<3x18x16x4xf32, #tpu.memory_space<vmem>>, vector<1x16x16x4xf32>
    %27 = vector.shape_cast %26 : vector<1x16x16x4xf32> to vector<16x16x4xf32>
    %28 = vector.shape_cast %27 : vector<16x16x4xf32> to vector<256x4xf32>
    %c0_41 = arith.constant 0 : index
    %c0_42 = arith.constant 0 : index
    %c0_43 = arith.constant 0 : index
    %c0_44 = arith.constant 0 : index
    %29 = vector.load %arg2[%c0_41, %c0_42, %c0_43, %c0_44] : memref<3x3x4x4xf32, #tpu.memory_space<vmem>>, vector<1x1x4x4xf32>
    %30 = vector.shape_cast %29 : vector<1x1x4x4xf32> to vector<4x4xf32>
    %cst = arith.constant dense<0.000000e+00> : vector<256x4xf32>
    %31 = tpu.matmul %28, %30, %cst {dimension_numbers = #tpu.dot_dimension_numbers<[1], [0], [0], [1], [0, 0, 1, 1], [], []>} : vector<256x4xf32>, vector<4x4xf32>, vector<256x4xf32> -> vector<256x4xf32>
    %c1_45 = arith.constant 1 : index
    %c0_46 = arith.constant 0 : index
    %c0_47 = arith.constant 0 : index
    %c0_48 = arith.constant 0 : index
    %32 = vector.load %arg7[%c1_45, %c0_46, %c0_47, %c0_48] : memref<3x18x16x4xf32, #tpu.memory_space<vmem>>, vector<1x16x16x4xf32>
    %33 = vector.shape_cast %32 : vector<1x16x16x4xf32> to vector<16x16x4xf32>
    %34 = vector.shape_cast %33 : vector<16x16x4xf32> to vector<256x4xf32>
    %c0_49 = arith.constant 0 : index
    %c1_50 = arith.constant 1 : index
    %c0_51 = arith.constant 0 : index
    %c0_52 = arith.constant 0 : index
    %35 = vector.load %arg2[%c0_49, %c1_50, %c0_51, %c0_52] : memref<3x3x4x4xf32, #tpu.memory_space<vmem>>, vector<1x1x4x4xf32>
    %36 = vector.shape_cast %35 : vector<1x1x4x4xf32> to vector<4x4xf32>
    %cst_53 = arith.constant dense<0.000000e+00> : vector<256x4xf32>
    %37 = tpu.matmul %34, %36, %cst_53 {dimension_numbers = #tpu.dot_dimension_numbers<[1], [0], [0], [1], [0, 0, 1, 1], [], []>} : vector<256x4xf32>, vector<4x4xf32>, vector<256x4xf32> -> vector<256x4xf32>
    %38 = arith.addf %31, %37 : vector<256x4xf32>
    %c2_54 = arith.constant 2 : index
    %c0_55 = arith.constant 0 : index
    %c0_56 = arith.constant 0 : index
    %c0_57 = arith.constant 0 : index
    %39 = vector.load %arg7[%c2_54, %c0_55, %c0_56, %c0_57] : memref<3x18x16x4xf32, #tpu.memory_space<vmem>>, vector<1x16x16x4xf32>
    %40 = vector.shape_cast %39 : vector<1x16x16x4xf32> to vector<16x16x4xf32>
    %41 = vector.shape_cast %40 : vector<16x16x4xf32> to vector<256x4xf32>
    %c0_58 = arith.constant 0 : index
    %c2_59 = arith.constant 2 : index
    %c0_60 = arith.constant 0 : index
    %c0_61 = arith.constant 0 : index
    %42 = vector.load %arg2[%c0_58, %c2_59, %c0_60, %c0_61] : memref<3x3x4x4xf32, #tpu.memory_space<vmem>>, vector<1x1x4x4xf32>
    %43 = vector.shape_cast %42 : vector<1x1x4x4xf32> to vector<4x4xf32>
    %cst_62 = arith.constant dense<0.000000e+00> : vector<256x4xf32>
    %44 = tpu.matmul %41, %43, %cst_62 {dimension_numbers = #tpu.dot_dimension_numbers<[1], [0], [0], [1], [0, 0, 1, 1], [], []>} : vector<256x4xf32>, vector<4x4xf32>, vector<256x4xf32> -> vector<256x4xf32>
    %45 = arith.addf %38, %44 : vector<256x4xf32>
    %c0_63 = arith.constant 0 : index
    %c1_64 = arith.constant 1 : index
    %c0_65 = arith.constant 0 : index
    %c0_66 = arith.constant 0 : index
    %46 = vector.load %arg7[%c0_63, %c1_64, %c0_65, %c0_66] : memref<3x18x16x4xf32, #tpu.memory_space<vmem>>, vector<1x16x16x4xf32>
    %47 = vector.shape_cast %46 : vector<1x16x16x4xf32> to vector<16x16x4xf32>
    %48 = vector.shape_cast %47 : vector<16x16x4xf32> to vector<256x4xf32>
    %c1_67 = arith.constant 1 : index
    %c0_68 = arith.constant 0 : index
    %c0_69 = arith.constant 0 : index
    %c0_70 = arith.constant 0 : index
    %49 = vector.load %arg2[%c1_67, %c0_68, %c0_69, %c0_70] : memref<3x3x4x4xf32, #tpu.memory_space<vmem>>, vector<1x1x4x4xf32>
    %50 = vector.shape_cast %49 : vector<1x1x4x4xf32> to vector<4x4xf32>
    %cst_71 = arith.constant dense<0.000000e+00> : vector<256x4xf32>
    %51 = tpu.matmul %48, %50, %cst_71 {dimension_numbers = #tpu.dot_dimension_numbers<[1], [0], [0], [1], [0, 0, 1, 1], [], []>} : vector<256x4xf32>, vector<4x4xf32>, vector<256x4xf32> -> vector<256x4xf32>
    %52 = arith.addf %45, %51 : vector<256x4xf32>
    %c1_72 = arith.constant 1 : index
    %c1_73 = arith.constant 1 : index
    %c0_74 = arith.constant 0 : index
    %c0_75 = arith.constant 0 : index
    %53 = vector.load %arg7[%c1_72, %c1_73, %c0_74, %c0_75] : memref<3x18x16x4xf32, #tpu.memory_space<vmem>>, vector<1x16x16x4xf32>
    %54 = vector.shape_cast %53 : vector<1x16x16x4xf32> to vector<16x16x4xf32>
    %55 = vector.shape_cast %54 : vector<16x16x4xf32> to vector<256x4xf32>
    %c1_76 = arith.constant 1 : index
    %c1_77 = arith.constant 1 : index
    %c0_78 = arith.constant 0 : index
    %c0_79 = arith.constant 0 : index
    %56 = vector.load %arg2[%c1_76, %c1_77, %c0_78, %c0_79] : memref<3x3x4x4xf32, #tpu.memory_space<vmem>>, vector<1x1x4x4xf32>
    %57 = vector.shape_cast %56 : vector<1x1x4x4xf32> to vector<4x4xf32>
    %cst_80 = arith.constant dense<0.000000e+00> : vector<256x4xf32>
    %58 = tpu.matmul %55, %57, %cst_80 {dimension_numbers = #tpu.dot_dimension_numbers<[1], [0], [0], [1], [0, 0, 1, 1], [], []>} : vector<256x4xf32>, vector<4x4xf32>, vector<256x4xf32> -> vector<256x4xf32>
    %59 = arith.addf %52, %58 : vector<256x4xf32>
    %c2_81 = arith.constant 2 : index
    %c1_82 = arith.constant 1 : index
    %c0_83 = arith.constant 0 : index
    %c0_84 = arith.constant 0 : index
    %60 = vector.load %arg7[%c2_81, %c1_82, %c0_83, %c0_84] : memref<3x18x16x4xf32, #tpu.memory_space<vmem>>, vector<1x16x16x4xf32>
    %61 = vector.shape_cast %60 : vector<1x16x16x4xf32> to vector<16x16x4xf32>
    %62 = vector.shape_cast %61 : vector<16x16x4xf32> to vector<256x4xf32>
    %c1_85 = arith.constant 1 : index
    %c2_86 = arith.constant 2 : index
    %c0_87 = arith.constant 0 : index
    %c0_88 = arith.constant 0 : index
    %63 = vector.load %arg2[%c1_85, %c2_86, %c0_87, %c0_88] : memref<3x3x4x4xf32, #tpu.memory_space<vmem>>, vector<1x1x4x4xf32>
    %64 = vector.shape_cast %63 : vector<1x1x4x4xf32> to vector<4x4xf32>
    %cst_89 = arith.constant dense<0.000000e+00> : vector<256x4xf32>
    %65 = tpu.matmul %62, %64, %cst_89 {dimension_numbers = #tpu.dot_dimension_numbers<[1], [0], [0], [1], [0, 0, 1, 1], [], []>} : vector<256x4xf32>, vector<4x4xf32>, vector<256x4xf32> -> vector<256x4xf32>
    %66 = arith.addf %59, %65 : vector<256x4xf32>
    %c0_90 = arith.constant 0 : index
    %c2_91 = arith.constant 2 : index
    %c0_92 = arith.constant 0 : index
    %c0_93 = arith.constant 0 : index
    %67 = vector.load %arg7[%c0_90, %c2_91, %c0_92, %c0_93] : memref<3x18x16x4xf32, #tpu.memory_space<vmem>>, vector<1x16x16x4xf32>
    %68 = vector.shape_cast %67 : vector<1x16x16x4xf32> to vector<16x16x4xf32>
    %69 = vector.shape_cast %68 : vector<16x16x4xf32> to vector<256x4xf32>
    %c2_94 = arith.constant 2 : index
    %c0_95 = arith.constant 0 : index
    %c0_96 = arith.constant 0 : index
    %c0_97 = arith.constant 0 : index
    %70 = vector.load %arg2[%c2_94, %c0_95, %c0_96, %c0_97] : memref<3x3x4x4xf32, #tpu.memory_space<vmem>>, vector<1x1x4x4xf32>
    %71 = vector.shape_cast %70 : vector<1x1x4x4xf32> to vector<4x4xf32>
    %cst_98 = arith.constant dense<0.000000e+00> : vector<256x4xf32>
    %72 = tpu.matmul %69, %71, %cst_98 {dimension_numbers = #tpu.dot_dimension_numbers<[1], [0], [0], [1], [0, 0, 1, 1], [], []>} : vector<256x4xf32>, vector<4x4xf32>, vector<256x4xf32> -> vector<256x4xf32>
    %73 = arith.addf %66, %72 : vector<256x4xf32>
    %c1_99 = arith.constant 1 : index
    %c2_100 = arith.constant 2 : index
    %c0_101 = arith.constant 0 : index
    %c0_102 = arith.constant 0 : index
    %74 = vector.load %arg7[%c1_99, %c2_100, %c0_101, %c0_102] : memref<3x18x16x4xf32, #tpu.memory_space<vmem>>, vector<1x16x16x4xf32>
    %75 = vector.shape_cast %74 : vector<1x16x16x4xf32> to vector<16x16x4xf32>
    %76 = vector.shape_cast %75 : vector<16x16x4xf32> to vector<256x4xf32>
    %c2_103 = arith.constant 2 : index
    %c1_104 = arith.constant 1 : index
    %c0_105 = arith.constant 0 : index
    %c0_106 = arith.constant 0 : index
    %77 = vector.load %arg2[%c2_103, %c1_104, %c0_105, %c0_106] : memref<3x3x4x4xf32, #tpu.memory_space<vmem>>, vector<1x1x4x4xf32>
    %78 = vector.shape_cast %77 : vector<1x1x4x4xf32> to vector<4x4xf32>
    %cst_107 = arith.constant dense<0.000000e+00> : vector<256x4xf32>
    %79 = tpu.matmul %76, %78, %cst_107 {dimension_numbers = #tpu.dot_dimension_numbers<[1], [0], [0], [1], [0, 0, 1, 1], [], []>} : vector<256x4xf32>, vector<4x4xf32>, vector<256x4xf32> -> vector<256x4xf32>
    %80 = arith.addf %73, %79 : vector<256x4xf32>
    %c2_108 = arith.constant 2 : index
    %c2_109 = arith.constant 2 : index
    %c0_110 = arith.constant 0 : index
    %c0_111 = arith.constant 0 : index
    %81 = vector.load %arg7[%c2_108, %c2_109, %c0_110, %c0_111] : memref<3x18x16x4xf32, #tpu.memory_space<vmem>>, vector<1x16x16x4xf32>
    %82 = vector.shape_cast %81 : vector<1x16x16x4xf32> to vector<16x16x4xf32>
    %83 = vector.shape_cast %82 : vector<16x16x4xf32> to vector<256x4xf32>
    %c2_112 = arith.constant 2 : index
    %c2_113 = arith.constant 2 : index
    %c0_114 = arith.constant 0 : index
    %c0_115 = arith.constant 0 : index
    %84 = vector.load %arg2[%c2_112, %c2_113, %c0_114, %c0_115] : memref<3x3x4x4xf32, #tpu.memory_space<vmem>>, vector<1x1x4x4xf32>
    %85 = vector.shape_cast %84 : vector<1x1x4x4xf32> to vector<4x4xf32>
    %cst_116 = arith.constant dense<0.000000e+00> : vector<256x4xf32>
    %86 = tpu.matmul %83, %85, %cst_116 {dimension_numbers = #tpu.dot_dimension_numbers<[1], [0], [0], [1], [0, 0, 1, 1], [], []>} : vector<256x4xf32>, vector<4x4xf32>, vector<256x4xf32> -> vector<256x4xf32>
    %87 = arith.addf %80, %86 : vector<256x4xf32>
    %88 = vector.broadcast %25 : vector<1x4xf32> to vector<256x4xf32>
    %89 = arith.addf %87, %88 : vector<256x4xf32>
    %cst_117 = arith.constant dense<0.000000e+00> : vector<4xf32>
    %90 = vector.multi_reduction <add>, %89, %cst_117 [0] : vector<256x4xf32> to vector<4xf32>
    %91 = vector.shape_cast %90 : vector<4xf32> to vector<1x4xf32>
    %92 = arith.mulf %89, %89 : vector<256x4xf32>
    %cst_118 = arith.constant dense<0.000000e+00> : vector<4xf32>
    %93 = vector.multi_reduction <add>, %92, %cst_118 [0] : vector<256x4xf32> to vector<4xf32>
    %94 = vector.shape_cast %93 : vector<4xf32> to vector<1x4xf32>
    %cst_119 = arith.constant 3.906250e-03 : f32
    %95 = vector.broadcast %cst_119 : f32 to vector<1x4xf32>
    %96 = arith.mulf %91, %95 : vector<1x4xf32>
    %cst_120 = arith.constant 3.906250e-03 : f32
    %97 = vector.broadcast %cst_120 : f32 to vector<1x4xf32>
    %98 = arith.mulf %94, %97 : vector<1x4xf32>
    %99 = arith.mulf %96, %96 : vector<1x4xf32>
    %100 = arith.subf %98, %99 : vector<1x4xf32>
    %cst_121 = arith.constant 0.000000e+00 : f32
    %101 = vector.broadcast %cst_121 : f32 to vector<1x4xf32>
    %102 = arith.maximumf %100, %101 : vector<1x4xf32>
    %103 = vector.broadcast %96 : vector<1x4xf32> to vector<256x4xf32>
    %104 = arith.subf %89, %103 : vector<256x4xf32>
    %cst_122 = arith.constant 9.99999974E-6 : f32
    %105 = vector.broadcast %cst_122 : f32 to vector<1x4xf32>
    %106 = arith.addf %102, %105 : vector<1x4xf32>
    %107 = math.rsqrt %106 : vector<1x4xf32>
    %108 = vector.broadcast %107 : vector<1x4xf32> to vector<256x4xf32>
    %109 = arith.mulf %104, %108 : vector<256x4xf32>
    %cst_123 = arith.constant 0.000000e+00 : f32
    %110 = vector.broadcast %cst_123 : f32 to vector<256x4xf32>
    %111 = arith.maximumf %109, %110 : vector<256x4xf32>
    %112 = vector.shape_cast %111 : vector<256x4xf32> to vector<16x16x4xf32>
    %c1_124 = arith.constant 1 : index
    %c1_125 = arith.constant 1 : index
    %c0_126 = arith.constant 0 : index
    %c0_127 = arith.constant 0 : index
    %113 = vector.load %arg7[%c1_124, %c1_125, %c0_126, %c0_127] : memref<3x18x16x4xf32, #tpu.memory_space<vmem>>, vector<1x16x16x4xf32>
    %114 = vector.shape_cast %113 : vector<1x16x16x4xf32> to vector<16x16x4xf32>
    %115 = vector.shape_cast %112 : vector<16x16x4xf32> to vector<1x16x16x4xf32>
    tpu.vector_store %arg7[%c1_124, %c1_125, %c0_126, %c0_127], %115 {strides = array<i32>} : memref<3x18x16x4xf32, #tpu.memory_space<vmem>>, vector<1x16x16x4xf32>,
    %116 = vector.extract_strided_slice %112 {offsets = [0, 0, 0], sizes = [16, 15, 4], strides = [1, 1, 1]} : vector<16x16x4xf32> to vector<16x15x4xf32>
    %c0_128 = arith.constant 0 : index
    %c1_129 = arith.constant 1 : index
    %c1_130 = arith.constant 1 : index
    %c0_131 = arith.constant 0 : index
    %117 = vector.load %arg7[%c0_128, %c1_129, %c1_130, %c0_131] : memref<3x18x16x4xf32, #tpu.memory_space<vmem>>, vector<1x16x15x4xf32>
    %118 = vector.shape_cast %117 : vector<1x16x15x4xf32> to vector<16x15x4xf32>
    %119 = vector.shape_cast %116 : vector<16x15x4xf32> to vector<1x16x15x4xf32>
    tpu.vector_store %arg7[%c0_128, %c1_129, %c1_130, %c0_131], %119 {strides = array<i32>} : memref<3x18x16x4xf32, #tpu.memory_space<vmem>>, vector<1x16x15x4xf32>,
    %120 = vector.extract_strided_slice %112 {offsets = [0, 1, 0], sizes = [16, 1, 4], strides = [1, 1, 1]} : vector<16x16x4xf32> to vector<16x1x4xf32>
    %c0_132 = arith.constant 0 : index
    %c1_133 = arith.constant 1 : index
    %c0_134 = arith.constant 0 : index
    %c0_135 = arith.constant 0 : index
    %121 = vector.load %arg7[%c0_132, %c1_133, %c0_134, %c0_135] : memref<3x18x16x4xf32, #tpu.memory_space<vmem>>, vector<1x16x1x4xf32>
    %122 = vector.shape_cast %121 : vector<1x16x1x4xf32> to vector<16x1x4xf32>
    %123 = vector.shape_cast %120 : vector<16x1x4xf32> to vector<1x16x1x4xf32>
    tpu.vector_store %arg7[%c0_132, %c1_133, %c0_134, %c0_135], %123 {strides = array<i32>} : memref<3x18x16x4xf32, #tpu.memory_space<vmem>>, vector<1x16x1x4xf32>,
    %124 = vector.extract_strided_slice %112 {offsets = [0, 1, 0], sizes = [16, 15, 4], strides = [1, 1, 1]} : vector<16x16x4xf32> to vector<16x15x4xf32>
    %c2_136 = arith.constant 2 : index
    %c1_137 = arith.constant 1 : index
    %c0_138 = arith.constant 0 : index
    %c0_139 = arith.constant 0 : index
    %125 = vector.load %arg7[%c2_136, %c1_137, %c0_138, %c0_139] : memref<3x18x16x4xf32, #tpu.memory_space<vmem>>, vector<1x16x15x4xf32>
    %126 = vector.shape_cast %125 : vector<1x16x15x4xf32> to vector<16x15x4xf32>
    %127 = vector.shape_cast %124 : vector<16x15x4xf32> to vector<1x16x15x4xf32>
    tpu.vector_store %arg7[%c2_136, %c1_137, %c0_138, %c0_139], %127 {strides = array<i32>} : memref<3x18x16x4xf32, #tpu.memory_space<vmem>>, vector<1x16x15x4xf32>,
    %128 = vector.extract_strided_slice %112 {offsets = [0, 14, 0], sizes = [16, 1, 4], strides = [1, 1, 1]} : vector<16x16x4xf32> to vector<16x1x4xf32>
    %c2_140 = arith.constant 2 : index
    %c1_141 = arith.constant 1 : index
    %c15_142 = arith.constant 15 : index
    %c0_143 = arith.constant 0 : index
    %129 = vector.load %arg7[%c2_140, %c1_141, %c15_142, %c0_143] : memref<3x18x16x4xf32, #tpu.memory_space<vmem>>, vector<1x16x1x4xf32>
    %130 = vector.shape_cast %129 : vector<1x16x1x4xf32> to vector<16x1x4xf32>
    %131 = vector.shape_cast %128 : vector<16x1x4xf32> to vector<1x16x1x4xf32>
    tpu.vector_store %arg7[%c2_140, %c1_141, %c15_142, %c0_143], %131 {strides = array<i32>} : memref<3x18x16x4xf32, #tpu.memory_space<vmem>>, vector<1x16x1x4xf32>,
    %c0_144 = arith.constant 0 : index
    %c2_145 = arith.constant 2 : index
    %c0_146 = arith.constant 0 : index
    %c0_147 = arith.constant 0 : index
    %132 = vector.load %arg7[%c0_144, %c2_145, %c0_146, %c0_147] : memref<3x18x16x4xf32, #tpu.memory_space<vmem>>, vector<3x1x16x4xf32>
    %c0_148 = arith.constant 0 : index
    %c0_149 = arith.constant 0 : index
    %c0_150 = arith.constant 0 : index
    %c0_151 = arith.constant 0 : index
    %133 = vector.load %arg7[%c0_148, %c0_149, %c0_150, %c0_151] : memref<3x18x16x4xf32, #tpu.memory_space<vmem>>, vector<3x1x16x4xf32>
    tpu.vector_store %arg7[%c0_148, %c0_149, %c0_150, %c0_151], %132 {strides = array<i32>} : memref<3x18x16x4xf32, #tpu.memory_space<vmem>>, vector<3x1x16x4xf32>,
    %c0_152 = arith.constant 0 : index
    %c15_153 = arith.constant 15 : index
    %c0_154 = arith.constant 0 : index
    %c0_155 = arith.constant 0 : index
    %134 = vector.load %arg7[%c0_152, %c15_153, %c0_154, %c0_155] : memref<3x18x16x4xf32, #tpu.memory_space<vmem>>, vector<3x1x16x4xf32>
    %c0_156 = arith.constant 0 : index
    %c17_157 = arith.constant 17 : index
    %c0_158 = arith.constant 0 : index
    %c0_159 = arith.constant 0 : index
    %135 = vector.load %arg7[%c0_156, %c17_157, %c0_158, %c0_159] : memref<3x18x16x4xf32, #tpu.memory_space<vmem>>, vector<3x1x16x4xf32>
    tpu.vector_store %arg7[%c0_156, %c17_157, %c0_158, %c0_159], %134 {strides = array<i32>} : memref<3x18x16x4xf32, #tpu.memory_space<vmem>>, vector<3x1x16x4xf32>,
    %c0_160 = arith.constant 0 : index
    %c0_161 = arith.constant 0 : index
    %136 = vector.load %arg5[%c0_160, %c0_161] : memref<1x4xf32, #tpu.memory_space<vmem>>, vector<1x4xf32>
    %c0_162 = arith.constant 0 : index
    %c0_163 = arith.constant 0 : index
    %c0_164 = arith.constant 0 : index
    %c0_165 = arith.constant 0 : index
    %137 = vector.load %arg7[%c0_162, %c0_163, %c0_164, %c0_165] : memref<3x18x16x4xf32, #tpu.memory_space<vmem>>, vector<1x16x16x4xf32>
    %138 = vector.shape_cast %137 : vector<1x16x16x4xf32> to vector<16x16x4xf32>
    %139 = vector.shape_cast %138 : vector<16x16x4xf32> to vector<256x4xf32>
    %c0_166 = arith.constant 0 : index
    %c0_167 = arith.constant 0 : index
    %c0_168 = arith.constant 0 : index
    %c0_169 = arith.constant 0 : index
    %140 = vector.load %arg4[%c0_166, %c0_167, %c0_168, %c0_169] : memref<3x3x4x4xf32, #tpu.memory_space<vmem>>, vector<1x1x4x4xf32>
    %141 = vector.shape_cast %140 : vector<1x1x4x4xf32> to vector<4x4xf32>
    %cst_170 = arith.constant dense<0.000000e+00> : vector<256x4xf32>
    %142 = tpu.matmul %139, %141, %cst_170 {dimension_numbers = #tpu.dot_dimension_numbers<[1], [0], [0], [1], [0, 0, 1, 1], [], []>} : vector<256x4xf32>, vector<4x4xf32>, vector<256x4xf32> -> vector<256x4xf32>
    %c1_171 = arith.constant 1 : index
    %c0_172 = arith.constant 0 : index
    %c0_173 = arith.constant 0 : index
    %c0_174 = arith.constant 0 : index
    %143 = vector.load %arg7[%c1_171, %c0_172, %c0_173, %c0_174] : memref<3x18x16x4xf32, #tpu.memory_space<vmem>>, vector<1x16x16x4xf32>
    %144 = vector.shape_cast %143 : vector<1x16x16x4xf32> to vector<16x16x4xf32>
    %145 = vector.shape_cast %144 : vector<16x16x4xf32> to vector<256x4xf32>
    %c0_175 = arith.constant 0 : index
    %c1_176 = arith.constant 1 : index
    %c0_177 = arith.constant 0 : index
    %c0_178 = arith.constant 0 : index
    %146 = vector.load %arg4[%c0_175, %c1_176, %c0_177, %c0_178] : memref<3x3x4x4xf32, #tpu.memory_space<vmem>>, vector<1x1x4x4xf32>
    %147 = vector.shape_cast %146 : vector<1x1x4x4xf32> to vector<4x4xf32>
    %cst_179 = arith.constant dense<0.000000e+00> : vector<256x4xf32>
    %148 = tpu.matmul %145, %147, %cst_179 {dimension_numbers = #tpu.dot_dimension_numbers<[1], [0], [0], [1], [0, 0, 1, 1], [], []>} : vector<256x4xf32>, vector<4x4xf32>, vector<256x4xf32> -> vector<256x4xf32>
    %149 = arith.addf %142, %148 : vector<256x4xf32>
    %c2_180 = arith.constant 2 : index
    %c0_181 = arith.constant 0 : index
    %c0_182 = arith.constant 0 : index
    %c0_183 = arith.constant 0 : index
    %150 = vector.load %arg7[%c2_180, %c0_181, %c0_182, %c0_183] : memref<3x18x16x4xf32, #tpu.memory_space<vmem>>, vector<1x16x16x4xf32>
    %151 = vector.shape_cast %150 : vector<1x16x16x4xf32> to vector<16x16x4xf32>
    %152 = vector.shape_cast %151 : vector<16x16x4xf32> to vector<256x4xf32>
    %c0_184 = arith.constant 0 : index
    %c2_185 = arith.constant 2 : index
    %c0_186 = arith.constant 0 : index
    %c0_187 = arith.constant 0 : index
    %153 = vector.load %arg4[%c0_184, %c2_185, %c0_186, %c0_187] : memref<3x3x4x4xf32, #tpu.memory_space<vmem>>, vector<1x1x4x4xf32>
    %154 = vector.shape_cast %153 : vector<1x1x4x4xf32> to vector<4x4xf32>
    %cst_188 = arith.constant dense<0.000000e+00> : vector<256x4xf32>
    %155 = tpu.matmul %152, %154, %cst_188 {dimension_numbers = #tpu.dot_dimension_numbers<[1], [0], [0], [1], [0, 0, 1, 1], [], []>} : vector<256x4xf32>, vector<4x4xf32>, vector<256x4xf32> -> vector<256x4xf32>
    %156 = arith.addf %149, %155 : vector<256x4xf32>
    %c0_189 = arith.constant 0 : index
    %c1_190 = arith.constant 1 : index
    %c0_191 = arith.constant 0 : index
    %c0_192 = arith.constant 0 : index
    %157 = vector.load %arg7[%c0_189, %c1_190, %c0_191, %c0_192] : memref<3x18x16x4xf32, #tpu.memory_space<vmem>>, vector<1x16x16x4xf32>
    %158 = vector.shape_cast %157 : vector<1x16x16x4xf32> to vector<16x16x4xf32>
    %159 = vector.shape_cast %158 : vector<16x16x4xf32> to vector<256x4xf32>
    %c1_193 = arith.constant 1 : index
    %c0_194 = arith.constant 0 : index
    %c0_195 = arith.constant 0 : index
    %c0_196 = arith.constant 0 : index
    %160 = vector.load %arg4[%c1_193, %c0_194, %c0_195, %c0_196] : memref<3x3x4x4xf32, #tpu.memory_space<vmem>>, vector<1x1x4x4xf32>
    %161 = vector.shape_cast %160 : vector<1x1x4x4xf32> to vector<4x4xf32>
    %cst_197 = arith.constant dense<0.000000e+00> : vector<256x4xf32>
    %162 = tpu.matmul %159, %161, %cst_197 {dimension_numbers = #tpu.dot_dimension_numbers<[1], [0], [0], [1], [0, 0, 1, 1], [], []>} : vector<256x4xf32>, vector<4x4xf32>, vector<256x4xf32> -> vector<256x4xf32>
    %163 = arith.addf %156, %162 : vector<256x4xf32>
    %c1_198 = arith.constant 1 : index
    %c1_199 = arith.constant 1 : index
    %c0_200 = arith.constant 0 : index
    %c0_201 = arith.constant 0 : index
    %164 = vector.load %arg7[%c1_198, %c1_199, %c0_200, %c0_201] : memref<3x18x16x4xf32, #tpu.memory_space<vmem>>, vector<1x16x16x4xf32>
    %165 = vector.shape_cast %164 : vector<1x16x16x4xf32> to vector<16x16x4xf32>
    %166 = vector.shape_cast %165 : vector<16x16x4xf32> to vector<256x4xf32>
    %c1_202 = arith.constant 1 : index
    %c1_203 = arith.constant 1 : index
    %c0_204 = arith.constant 0 : index
    %c0_205 = arith.constant 0 : index
    %167 = vector.load %arg4[%c1_202, %c1_203, %c0_204, %c0_205] : memref<3x3x4x4xf32, #tpu.memory_space<vmem>>, vector<1x1x4x4xf32>
    %168 = vector.shape_cast %167 : vector<1x1x4x4xf32> to vector<4x4xf32>
    %cst_206 = arith.constant dense<0.000000e+00> : vector<256x4xf32>
    %169 = tpu.matmul %166, %168, %cst_206 {dimension_numbers = #tpu.dot_dimension_numbers<[1], [0], [0], [1], [0, 0, 1, 1], [], []>} : vector<256x4xf32>, vector<4x4xf32>, vector<256x4xf32> -> vector<256x4xf32>
    %170 = arith.addf %163, %169 : vector<256x4xf32>
    %c2_207 = arith.constant 2 : index
    %c1_208 = arith.constant 1 : index
    %c0_209 = arith.constant 0 : index
    %c0_210 = arith.constant 0 : index
    %171 = vector.load %arg7[%c2_207, %c1_208, %c0_209, %c0_210] : memref<3x18x16x4xf32, #tpu.memory_space<vmem>>, vector<1x16x16x4xf32>
    %172 = vector.shape_cast %171 : vector<1x16x16x4xf32> to vector<16x16x4xf32>
    %173 = vector.shape_cast %172 : vector<16x16x4xf32> to vector<256x4xf32>
    %c1_211 = arith.constant 1 : index
    %c2_212 = arith.constant 2 : index
    %c0_213 = arith.constant 0 : index
    %c0_214 = arith.constant 0 : index
    %174 = vector.load %arg4[%c1_211, %c2_212, %c0_213, %c0_214] : memref<3x3x4x4xf32, #tpu.memory_space<vmem>>, vector<1x1x4x4xf32>
    %175 = vector.shape_cast %174 : vector<1x1x4x4xf32> to vector<4x4xf32>
    %cst_215 = arith.constant dense<0.000000e+00> : vector<256x4xf32>
    %176 = tpu.matmul %173, %175, %cst_215 {dimension_numbers = #tpu.dot_dimension_numbers<[1], [0], [0], [1], [0, 0, 1, 1], [], []>} : vector<256x4xf32>, vector<4x4xf32>, vector<256x4xf32> -> vector<256x4xf32>
    %177 = arith.addf %170, %176 : vector<256x4xf32>
    %c0_216 = arith.constant 0 : index
    %c2_217 = arith.constant 2 : index
    %c0_218 = arith.constant 0 : index
    %c0_219 = arith.constant 0 : index
    %178 = vector.load %arg7[%c0_216, %c2_217, %c0_218, %c0_219] : memref<3x18x16x4xf32, #tpu.memory_space<vmem>>, vector<1x16x16x4xf32>
    %179 = vector.shape_cast %178 : vector<1x16x16x4xf32> to vector<16x16x4xf32>
    %180 = vector.shape_cast %179 : vector<16x16x4xf32> to vector<256x4xf32>
    %c2_220 = arith.constant 2 : index
    %c0_221 = arith.constant 0 : index
    %c0_222 = arith.constant 0 : index
    %c0_223 = arith.constant 0 : index
    %181 = vector.load %arg4[%c2_220, %c0_221, %c0_222, %c0_223] : memref<3x3x4x4xf32, #tpu.memory_space<vmem>>, vector<1x1x4x4xf32>
    %182 = vector.shape_cast %181 : vector<1x1x4x4xf32> to vector<4x4xf32>
    %cst_224 = arith.constant dense<0.000000e+00> : vector<256x4xf32>
    %183 = tpu.matmul %180, %182, %cst_224 {dimension_numbers = #tpu.dot_dimension_numbers<[1], [0], [0], [1], [0, 0, 1, 1], [], []>} : vector<256x4xf32>, vector<4x4xf32>, vector<256x4xf32> -> vector<256x4xf32>
    %184 = arith.addf %177, %183 : vector<256x4xf32>
    %c1_225 = arith.constant 1 : index
    %c2_226 = arith.constant 2 : index
    %c0_227 = arith.constant 0 : index
    %c0_228 = arith.constant 0 : index
    %185 = vector.load %arg7[%c1_225, %c2_226, %c0_227, %c0_228] : memref<3x18x16x4xf32, #tpu.memory_space<vmem>>, vector<1x16x16x4xf32>
    %186 = vector.shape_cast %185 : vector<1x16x16x4xf32> to vector<16x16x4xf32>
    %187 = vector.shape_cast %186 : vector<16x16x4xf32> to vector<256x4xf32>
    %c2_229 = arith.constant 2 : index
    %c1_230 = arith.constant 1 : index
    %c0_231 = arith.constant 0 : index
    %c0_232 = arith.constant 0 : index
    %188 = vector.load %arg4[%c2_229, %c1_230, %c0_231, %c0_232] : memref<3x3x4x4xf32, #tpu.memory_space<vmem>>, vector<1x1x4x4xf32>
    %189 = vector.shape_cast %188 : vector<1x1x4x4xf32> to vector<4x4xf32>
    %cst_233 = arith.constant dense<0.000000e+00> : vector<256x4xf32>
    %190 = tpu.matmul %187, %189, %cst_233 {dimension_numbers = #tpu.dot_dimension_numbers<[1], [0], [0], [1], [0, 0, 1, 1], [], []>} : vector<256x4xf32>, vector<4x4xf32>, vector<256x4xf32> -> vector<256x4xf32>
    %191 = arith.addf %184, %190 : vector<256x4xf32>
    %c2_234 = arith.constant 2 : index
    %c2_235 = arith.constant 2 : index
    %c0_236 = arith.constant 0 : index
    %c0_237 = arith.constant 0 : index
    %192 = vector.load %arg7[%c2_234, %c2_235, %c0_236, %c0_237] : memref<3x18x16x4xf32, #tpu.memory_space<vmem>>, vector<1x16x16x4xf32>
    %193 = vector.shape_cast %192 : vector<1x16x16x4xf32> to vector<16x16x4xf32>
    %194 = vector.shape_cast %193 : vector<16x16x4xf32> to vector<256x4xf32>
    %c2_238 = arith.constant 2 : index
    %c2_239 = arith.constant 2 : index
    %c0_240 = arith.constant 0 : index
    %c0_241 = arith.constant 0 : index
    %195 = vector.load %arg4[%c2_238, %c2_239, %c0_240, %c0_241] : memref<3x3x4x4xf32, #tpu.memory_space<vmem>>, vector<1x1x4x4xf32>
    %196 = vector.shape_cast %195 : vector<1x1x4x4xf32> to vector<4x4xf32>
    %cst_242 = arith.constant dense<0.000000e+00> : vector<256x4xf32>
    %197 = tpu.matmul %194, %196, %cst_242 {dimension_numbers = #tpu.dot_dimension_numbers<[1], [0], [0], [1], [0, 0, 1, 1], [], []>} : vector<256x4xf32>, vector<4x4xf32>, vector<256x4xf32> -> vector<256x4xf32>
    %198 = arith.addf %191, %197 : vector<256x4xf32>
    %199 = vector.broadcast %136 : vector<1x4xf32> to vector<256x4xf32>
    %200 = arith.addf %198, %199 : vector<256x4xf32>
    %cst_243 = arith.constant dense<0.000000e+00> : vector<4xf32>
    %201 = vector.multi_reduction <add>, %200, %cst_243 [0] : vector<256x4xf32> to vector<4xf32>
    %202 = vector.shape_cast %201 : vector<4xf32> to vector<1x4xf32>
    %203 = arith.mulf %200, %200 : vector<256x4xf32>
    %cst_244 = arith.constant dense<0.000000e+00> : vector<4xf32>
    %204 = vector.multi_reduction <add>, %203, %cst_244 [0] : vector<256x4xf32> to vector<4xf32>
    %205 = vector.shape_cast %204 : vector<4xf32> to vector<1x4xf32>
    %cst_245 = arith.constant 3.906250e-03 : f32
    %206 = vector.broadcast %cst_245 : f32 to vector<1x4xf32>
    %207 = arith.mulf %202, %206 : vector<1x4xf32>
    %cst_246 = arith.constant 3.906250e-03 : f32
    %208 = vector.broadcast %cst_246 : f32 to vector<1x4xf32>
    %209 = arith.mulf %205, %208 : vector<1x4xf32>
    %210 = arith.mulf %207, %207 : vector<1x4xf32>
    %211 = arith.subf %209, %210 : vector<1x4xf32>
    %cst_247 = arith.constant 0.000000e+00 : f32
    %212 = vector.broadcast %cst_247 : f32 to vector<1x4xf32>
    %213 = arith.maximumf %211, %212 : vector<1x4xf32>
    %214 = vector.broadcast %207 : vector<1x4xf32> to vector<256x4xf32>
    %215 = arith.subf %200, %214 : vector<256x4xf32>
    %cst_248 = arith.constant 9.99999974E-6 : f32
    %216 = vector.broadcast %cst_248 : f32 to vector<1x4xf32>
    %217 = arith.addf %213, %216 : vector<1x4xf32>
    %218 = math.rsqrt %217 : vector<1x4xf32>
    %219 = vector.broadcast %218 : vector<1x4xf32> to vector<256x4xf32>
    %220 = arith.mulf %215, %219 : vector<256x4xf32>
    %221 = vector.shape_cast %1 : vector<16x16x4xf32> to vector<256x4xf32>
    %222 = arith.addf %221, %220 : vector<256x4xf32>
    %223 = vector.shape_cast %222 : vector<256x4xf32> to vector<16x16x4xf32>
    %c0_249 = arith.constant 0 : index
    %c0_250 = arith.constant 0 : index
    %c0_251 = arith.constant 0 : index
    %c0_252 = arith.constant 0 : index
    %224 = vector.load %arg6[%c0_249, %c0_250, %c0_251, %c0_252] : memref<1x16x16x4xf32, #tpu.memory_space<vmem>>, vector<1x16x16x4xf32>
    %225 = vector.shape_cast %224 : vector<1x16x16x4xf32> to vector<16x16x4xf32>
    %226 = vector.shape_cast %223 : vector<16x16x4xf32> to vector<1x16x16x4xf32>
    tpu.vector_store %arg6[%c0_249, %c0_250, %c0_251, %c0_252], %226 {strides = array<i32>} : memref<1x16x16x4xf32, #tpu.memory_space<vmem>>, vector<1x16x16x4xf32>,
    return
  }
  func.func @transform_0(%arg0: i32) -> (i32, i32, i32, i32) {
    %c0_i32 = arith.constant 0 : i32
    %c0_i32_0 = arith.constant 0 : i32
    %c0_i32_1 = arith.constant 0 : i32
    %c0_i32_2 = arith.constant 0 : i32
    return %arg0, %c0_i32, %c0_i32_0, %c0_i32_1 : i32, i32, i32, i32
  }
  func.func @transform_1(%arg0: i32) -> (i32, i32, i32, i32) {
    %c0_i32 = arith.constant 0 : i32
    %c0_i32_0 = arith.constant 0 : i32
    %c0_i32_1 = arith.constant 0 : i32
    %c0_i32_2 = arith.constant 0 : i32
    %c0_i32_3 = arith.constant 0 : i32
    return %c0_i32, %c0_i32_0, %c0_i32_1, %c0_i32_2 : i32, i32, i32, i32
  }
  func.func @transform_2(%arg0: i32) -> (i32, i32) {
    %c0_i32 = arith.constant 0 : i32
    %c0_i32_0 = arith.constant 0 : i32
    %c0_i32_1 = arith.constant 0 : i32
    return %c0_i32, %c0_i32_0 : i32, i32
  }
  func.func @transform_3(%arg0: i32) -> (i32, i32, i32, i32) {
    %c0_i32 = arith.constant 0 : i32
    %c0_i32_0 = arith.constant 0 : i32
    %c0_i32_1 = arith.constant 0 : i32
    %c0_i32_2 = arith.constant 0 : i32
    %c0_i32_3 = arith.constant 0 : i32
    return %c0_i32, %c0_i32_0, %c0_i32_1, %c0_i32_2 : i32, i32, i32, i32
  }
  func.func @transform_4(%arg0: i32) -> (i32, i32) {
    %c0_i32 = arith.constant 0 : i32
    %c0_i32_0 = arith.constant 0 : i32
    %c0_i32_1 = arith.constant 0 : i32
    return %c0_i32, %c0_i32_0 : i32, i32
  }
  func.func @transform_5(%arg0: i32) -> (i32, i32, i32, i32) {
    %c0_i32 = arith.constant 0 : i32
    %c0_i32_0 = arith.constant 0 : i32
    %c0_i32_1 = arith.constant 0 : i32
    %c0_i32_2 = arith.constant 0 : i32
    return %arg0, %c0_i32, %c0_i32_0, %c0_i32_1 : i32, i32, i32, i32
  }
}

</mosaic_0001>

<llo_original>
// kernel: residual_block_nchw.1
$region0: #{residual_block_nchw.1}
  #allocation0 [shape = 'u32[]', space=smem, size = 0x4, offset = 0x4, fixed_abs, tag = 'smem constant byte address 0x4 - core index']
  #allocation1 [shape = 'u32[144,128]{1,0:T(1,128)}', space=vmem, size = 0x12000, scoped, tag = 'internal scratch']
  #allocation2 [shape = 'f32[3,18,16,4]{3,2,1,0:T(8,128)}', space=vmem, size = 0x6c000, scoped, tag = 'scratch operand']
  %s0 = inlined_call_operand.vmem [shape: f32[2,16,16,4], index: 0, kind: input, shape index: {}]
  %s1 = inlined_call_operand.vmem [shape: f32[3,3,4,4], index: 1, kind: input, shape index: {}]
  %s2 = inlined_call_operand.vmem [shape: f32[1,4], index: 2, kind: input, shape index: {}]
  %s3 = inlined_call_operand.vmem [shape: f32[3,3,4,4], index: 3, kind: input, shape index: {}]
  %s4 = inlined_call_operand.vmem [shape: f32[1,4], index: 4, kind: input, shape index: {}]
  %s5 = inlined_call_operand.vmem [shape: f32[2,16,16,4], index: 5, kind: output, shape index: {}]
  %s6 = sld [smem:[#allocation0]]
  $region53: #{residual_block_nchw.1} parent=0
    _
  %s8 = ssub.s32 1, %s6
  %s9 = scalar_select 0, %s8, %s6
  loop: start=0, step=1, limit=4
  $region2: #{residual_block_nchw.1} parent=0 // loop_pre_header
    _
  $region3: #{residual_block_nchw.1} parent=0 // loop_header
    %s11 = sphi 0, %s15
    %p12 = scmp.ge.s32.totalorder %s11, 4
    %s21 = sphi 0, %s23
    %s24 = sphi 0, %s21
    %s25 = sphi 0, %s24
    %s41 = sphi 0, %s25
    %s45 = sphi 0, %s45
    %s47 = sphi 0, %s45
    %s48 = sphi 0, %s47
    %s62 = sphi 0, %s48
    %s66 = sphi 0, %s66
    %s68 = sphi 0, %s66
    %s69 = sphi 0, %s68
    %s83 = sphi 0, %s69
    %s87 = sphi 0, %s87
    %s89 = sphi 0, %s87
    %s90 = sphi 0, %s89
    %s104 = sphi 0, %s90
    %s108 = sphi 0, %s108
    %s110 = sphi 0, %s108
    %s111 = sphi 0, %s110
    %s125 = sphi 0, %s111
    %s131 = sphi 0, %s133
    %s134 = sphi 0, %s131
    %s135 = sphi 0, %s134
    %s151 = sphi 0, %s135
  $region4: #{residual_block_nchw.1} parent=0 // loop_header_branch
    %14 = sbr.rel (%p12) target = $region8
  $region5: #{residual_block_nchw.1} parent=0 // loop_body
    %s16 = ssub.s32 %s11, 1
    %s17 = ssub.s32 %s11, 2
    %s18 = sadd.s32 %s11, 1
    %s19 = ssub.s32 %s11, %s18
    %p20 = scmp.eq.s32.totalorder %s19, 0
    %s22 = sadd.s32 %s21, 1
    %s23 = scalar_select %p20, %s21, %s22
    %p26 = pneg %p20
    %p27 = scmp.eq.s32.totalorder %s11, 1
    %p28 = por %p26, %p27
    %p29 = scmp.ne.s32.totalorder %s21, %s24
    %p30 = scmp.eq.s32.totalorder %s11, 0
    %p31 = por %p29, %p30
    %p32 = scmp.ne.s32.totalorder %s21, %s24
    %p33 = scmp.eq.s32.totalorder %s16, 1
    %p34 = por %p32, %p33
    %p35 = scmp.ne.s32.totalorder %s24, %s25
    %p36 = scmp.eq.s32.totalorder %s16, 0
    %p37 = por %p35, %p36
    %p38 = scmp.ne.s32.totalorder %s24, %s25
    %p39 = scmp.eq.s32.totalorder %s17, 1
    %p40 = por %p38, %p39
    %p42 = scmp.ne.s32.totalorder %s25, %s41
    %p43 = scmp.eq.s32.totalorder %s17, 0
    %p44 = por %p42, %p43
    %s46 = sadd.s32 %s45, 1
    %p49 = scmp.eq.s32.totalorder %s11, 1
    %p50 = scmp.ne.s32.totalorder %s45, %s47
    %p51 = scmp.eq.s32.totalorder %s11, 0
    %p52 = por %p50, %p51
    %p53 = scmp.ne.s32.totalorder %s45, %s47
    %p54 = scmp.eq.s32.totalorder %s16, 1
    %p55 = por %p53, %p54
    %p56 = scmp.ne.s32.totalorder %s47, %s48
    %p57 = scmp.eq.s32.totalorder %s16, 0
    %p58 = por %p56, %p57
    %p59 = scmp.ne.s32.totalorder %s47, %s48
    %p60 = scmp.eq.s32.totalorder %s17, 1
    %p61 = por %p59, %p60
    %p63 = scmp.ne.s32.totalorder %s48, %s62
    %p64 = scmp.eq.s32.totalorder %s17, 0
    %p65 = por %p63, %p64
    %s67 = sadd.s32 %s66, 1
    %p70 = scmp.eq.s32.totalorder %s11, 1
    %p71 = scmp.ne.s32.totalorder %s66, %s68
    %p72 = scmp.eq.s32.totalorder %s11, 0
    %p73 = por %p71, %p72
    %p74 = scmp.ne.s32.totalorder %s66, %s68
    %p75 = scmp.eq.s32.totalorder %s16, 1
    %p76 = por %p74, %p75
    %p77 = scmp.ne.s32.totalorder %s68, %s69
    %p78 = scmp.eq.s32.totalorder %s16, 0
    %p79 = por %p77, %p78
    %p80 = scmp.ne.s32.totalorder %s68, %s69
    %p81 = scmp.eq.s32.totalorder %s17, 1
    %p82 = por %p80, %p81
    %p84 = scmp.ne.s32.totalorder %s69, %s83
    %p85 = scmp.eq.s32.totalorder %s17, 0
    %p86 = por %p84, %p85
    %s88 = sadd.s32 %s87, 1
    %p91 = scmp.eq.s32.totalorder %s11, 1
    %p92 = scmp.ne.s32.totalorder %s87, %s89
    %p93 = scmp.eq.s32.totalorder %s11, 0
    %p94 = por %p92, %p93
    %p95 = scmp.ne.s32.totalorder %s87, %s89
    %p96 = scmp.eq.s32.totalorder %s16, 1
    %p97 = por %p95, %p96
    %p98 = scmp.ne.s32.totalorder %s89, %s90
    %p99 = scmp.eq.s32.totalorder %s16, 0
    %p100 = por %p98, %p99
    %p101 = scmp.ne.s32.totalorder %s89, %s90
    %p102 = scmp.eq.s32.totalorder %s17, 1
    %p103 = por %p101, %p102
    %p105 = scmp.ne.s32.totalorder %s90, %s104
    %p106 = scmp.eq.s32.totalorder %s17, 0
    %p107 = por %p105, %p106
    %s109 = sadd.s32 %s108, 1
    %p112 = scmp.eq.s32.totalorder %s11, 1
    %p113 = scmp.ne.s32.totalorder %s108, %s110
    %p114 = scmp.eq.s32.totalorder %s11, 0
    %p115 = por %p113, %p114
    %p116 = scmp.ne.s32.totalorder %s108, %s110
    %p117 = scmp.eq.s32.totalorder %s16, 1
    %p118 = por %p116, %p117
    %p119 = scmp.ne.s32.totalorder %s110, %s111
    %p120 = scmp.eq.s32.totalorder %s16, 0
    %p121 = por %p119, %p120
    %p122 = scmp.ne.s32.totalorder %s110, %s111
    %p123 = scmp.eq.s32.totalorder %s17, 1
    %p124 = por %p122, %p123
    %p126 = scmp.ne.s32.totalorder %s111, %s125
    %p127 = scmp.eq.s32.totalorder %s17, 0
    %p128 = por %p126, %p127
    %s129 = ssub.s32 %s11, %s18
    %p130 = scmp.eq.s32.totalorder %s129, 0
    %s132 = sadd.s32 %s131, 1
    %s133 = scalar_select %p130, %s131, %s132
    %p136 = pneg %p130
    %p137 = scmp.eq.s32.totalorder %s11, 1
    %p138 = por %p136, %p137
    %p139 = scmp.ne.s32.totalorder %s131, %s134
    %p140 = scmp.eq.s32.totalorder %s11, 0
    %p141 = por %p139, %p140
    %p142 = scmp.ne.s32.totalorder %s131, %s134
    %p143 = scmp.eq.s32.totalorder %s16, 1
    %p144 = por %p142, %p143
    %p145 = scmp.ne.s32.totalorder %s134, %s135
    %p146 = scmp.eq.s32.totalorder %s16, 0
    %p147 = por %p145, %p146
    %p148 = scmp.ne.s32.totalorder %s134, %s135
    %p149 = scmp.eq.s32.totalorder %s17, 1
    %p150 = por %p148, %p149
    %p152 = scmp.ne.s32.totalorder %s135, %s151
    %p153 = scmp.eq.s32.totalorder %s17, 0
    %p154 = por %p152, %p153
    %p155 = scmp.le.s32.totalorder 1, %s11
    %p156 = scmp.lt.s32.totalorder %s11, 3
    %p157 = pnand %p155, %p156
    %p158 = pneg %p157
    // Predicated region
    $region9: #{residual_block_nchw.1} parent=5 // pred_check
      _
    $region10: #{residual_block_nchw.1} parent=5 // pred_check_branch
      %160 = sbr.rel (%p157) target = $region12
    $region11: #{residual_block_nchw.1} parent=5 // pred_region
      %s161 = ssub.s32 %s11, 1
      // Predicated region
      $region13: #{residual_block_nchw.1} parent=11 // pred_check
        %p162 = pneg %p58
      $region14: #{residual_block_nchw.1} parent=11 // pred_check_branch
        %164 = sbr.rel (%p162) target = $region16
      $region15: #{residual_block_nchw.1} parent=11 // pred_region
        _
      $region16: #{residual_block_nchw.1} parent=11 // pred_fallthru
        _
      // Predicated region
      $region17: #{residual_block_nchw.1} parent=11 // pred_check
        %p165 = pneg %p79
      $region18: #{residual_block_nchw.1} parent=11 // pred_check_branch
        %167 = sbr.rel (%p165) target = $region20
      $region19: #{residual_block_nchw.1} parent=11 // pred_region
        _
      $region20: #{residual_block_nchw.1} parent=11 // pred_fallthru
        _
      // Predicated region
      $region21: #{residual_block_nchw.1} parent=11 // pred_check
        %p168 = pneg %p100
      $region22: #{residual_block_nchw.1} parent=11 // pred_check_branch
        %170 = sbr.rel (%p168) target = $region24
      $region23: #{residual_block_nchw.1} parent=11 // pred_region
        _
      $region24: #{residual_block_nchw.1} parent=11 // pred_fallthru
        _
      // Predicated region
      $region25: #{residual_block_nchw.1} parent=11 // pred_check
        %p171 = pneg %p121
      $region26: #{residual_block_nchw.1} parent=11 // pred_check_branch
        %173 = sbr.rel (%p171) target = $region28
      $region27: #{residual_block_nchw.1} parent=11 // pred_region
        _
      $region28: #{residual_block_nchw.1} parent=11 // pred_fallthru
        _
    $region12: #{residual_block_nchw.1} parent=5 // pred_fallthru
      _
    %p174 = scmp.lt.s32.totalorder %s11, 2
    // Predicated region
    $region29: #{residual_block_nchw.1} parent=5 // pred_check
      %p175 = pneg %p174
    $region30: #{residual_block_nchw.1} parent=5 // pred_check_branch
      %177 = sbr.rel (%p175) target = $region32
    $region31: #{residual_block_nchw.1} parent=5 // pred_region
      // Predicated region
      $region33: #{residual_block_nchw.1} parent=31 // pred_check
        %p178 = pneg %p31
      $region34: #{residual_block_nchw.1} parent=31 // pred_check_branch
        %180 = sbr.rel (%p178) target = $region36
      $region35: #{residual_block_nchw.1} parent=31 // pred_region
        %p181 = scmp.lt.s32.totalorder %s11, 1
        %s182 = scalar_select %p181, %s11, 1
        %s183 = smul.addr %s182, 32
        %s184 = smul.addr %s183, 8
        %s185 = scalar_lea.vmem %s0, %s184
      $region36: #{residual_block_nchw.1} parent=31 // pred_fallthru
        _
    $region32: #{residual_block_nchw.1} parent=5 // pred_fallthru
      _
    %p186 = scmp.le.s32.totalorder 1, %s11
    %p187 = scmp.lt.s32.totalorder %s11, 3
    %p188 = pnand %p186, %p187
    %p189 = pneg %p188
    // Predicated region
    $region37: #{residual_block_nchw.1} parent=5 // pred_check
      _
    $region38: #{residual_block_nchw.1} parent=5 // pred_check_branch
      %191 = sbr.rel (%p188) target = $region40
    $region39: #{residual_block_nchw.1} parent=5 // pred_region
      %s192 = ssub.s32 %s11, 1
      %p193 = scmp.lt.s32.totalorder %s16, 1
      %s194 = scalar_select %p193, %s16, 1
      %s195 = smul.addr %s194, 32
      %s196 = smul.addr %s195, 8
      %s197 = scalar_lea.vmem %s0, %s196
      %p198 = pneg %p37
      %p199 = pneg %p34
      %p200 = pneg %p58
      %p201 = pneg %p55
      %p202 = pneg %p79
      %p203 = pneg %p76
      %p204 = pneg %p100
      %p205 = pneg %p97
      %p206 = pneg %p121
      %p207 = pneg %p118
      %p208 = pneg %p147
      %p209 = pneg %p144
      %p210 = scmp.lt.s32.totalorder %s16, 1
      %s211 = scalar_select %p210, %s16, 1
      %s212 = smul.addr %s211, 32
      %s213 = smul.addr %s212, 8
      %s214 = scalar_lea.vmem %s5, %s213
      %p215 = scmp.lt.s32.totalorder %s16, 1
      %s216 = scalar_select %p215, %s16, 1
      %s217 = smul.addr %s216, 32
      %s218 = smul.addr %s217, 8
      %s219 = scalar_lea.vmem %s0, %s218
      %p220 = scmp.lt.s32.totalorder %s16, 1
      %s221 = scalar_select %p220, %s16, 1
      %s222 = smul.addr %s221, 32
      %s223 = smul.addr %s222, 8
      %s224 = scalar_lea.vmem %s5, %s223
      %v225 = vld [vmem:[%s219] sm:$0xff]
      %v226 = vld [vmem:[%s219 + $0x8] sm:$0xff]
      %v227 = vld [vmem:[%s219 + $0x10] sm:$0xff]
      %v228 = vld [vmem:[%s219 + $0x18] sm:$0xff]
      %v229 = vld [vmem:[%s219 + $0x20] sm:$0xff]
      %v230 = vld [vmem:[%s219 + $0x28] sm:$0xff]
      %v231 = vld [vmem:[%s219 + $0x30] sm:$0xff]
      %v232 = vld [vmem:[%s219 + $0x38] sm:$0xff]
      %v233 = vld [vmem:[%s219 + $0x40] sm:$0xff]
      %v234 = vld [vmem:[%s219 + $0x48] sm:$0xff]
      %v235 = vld [vmem:[%s219 + $0x50] sm:$0xff]
      %v236 = vld [vmem:[%s219 + $0x58] sm:$0xff]
      %v237 = vld [vmem:[%s219 + $0x60] sm:$0xff]
      %v238 = vld [vmem:[%s219 + $0x68] sm:$0xff]
      %v239 = vld [vmem:[%s219 + $0x70] sm:$0xff]
      %v240 = vld [vmem:[%s219 + $0x78] sm:$0xff]
      %v241 = vld [vmem:[%s219 + $0x80] sm:$0xff]
      %v242 = vld [vmem:[%s219 + $0x88] sm:$0xff]
      %v243 = vld [vmem:[%s219 + $0x90] sm:$0xff]
      %v244 = vld [vmem:[%s219 + $0x98] sm:$0xff]
      %v245 = vld [vmem:[%s219 + $0xa0] sm:$0xff]
      %v246 = vld [vmem:[%s219 + $0xa8] sm:$0xff]
      %v247 = vld [vmem:[%s219 + $0xb0] sm:$0xff]
      %v248 = vld [vmem:[%s219 + $0xb8] sm:$0xff]
      %v249 = vld [vmem:[%s219 + $0xc0] sm:$0xff]
      %v250 = vld [vmem:[%s219 + $0xc8] sm:$0xff]
      %v251 = vld [vmem:[%s219 + $0xd0] sm:$0xff]
      %v252 = vld [vmem:[%s219 + $0xd8] sm:$0xff]
      %v253 = vld [vmem:[%s219 + $0xe0] sm:$0xff]
      %v254 = vld [vmem:[%s219 + $0xe8] sm:$0xff]
      %v255 = vld [vmem:[%s219 + $0xf0] sm:$0xff]
      %v256 = vld [vmem:[%s219 + $0xf8] sm:$0xff]
      %s257 = scalar_lea.vmem [#allocation2], 304
      %vm258 = vcmask 31744
      %259 = vst.msk [vmem:[%s257] sm:$0xff] %vm258, %v225
      %260 = vst.msk [vmem:[%s257 + $0x8] sm:$0xff] %vm258, %v226
      %261 = vst.msk [vmem:[%s257 + $0x10] sm:$0xff] %vm258, %v227
      %262 = vst.msk [vmem:[%s257 + $0x18] sm:$0xff] %vm258, %v228
      %263 = vst.msk [vmem:[%s257 + $0x20] sm:$0xff] %vm258, %v229
      %264 = vst.msk [vmem:[%s257 + $0x28] sm:$0xff] %vm258, %v230
      %265 = vst.msk [vmem:[%s257 + $0x30] sm:$0xff] %vm258, %v231
      %266 = vst.msk [vmem:[%s257 + $0x38] sm:$0xff] %vm258, %v232
      %267 = vst.msk [vmem:[%s257 + $0x40] sm:$0xff] %vm258, %v233
      %268 = vst.msk [vmem:[%s257 + $0x48] sm:$0xff] %vm258, %v234
      %269 = vst.msk [vmem:[%s257 + $0x50] sm:$0xff] %vm258, %v235
      %270 = vst.msk [vmem:[%s257 + $0x58] sm:$0xff] %vm258, %v236
      %271 = vst.msk [vmem:[%s257 + $0x60] sm:$0xff] %vm258, %v237
      %272 = vst.msk [vmem:[%s257 + $0x68] sm:$0xff] %vm258, %v238
      %273 = vst.msk [vmem:[%s257 + $0x70] sm:$0xff] %vm258, %v239
      %274 = vst.msk [vmem:[%s257 + $0x78] sm:$0xff] %vm258, %v240
      %275 = vst.msk [vmem:[%s257 + $0x80] sm:$0xff] %vm258, %v241
      %276 = vst.msk [vmem:[%s257 + $0x88] sm:$0xff] %vm258, %v242
      %277 = vst.msk [vmem:[%s257 + $0x90] sm:$0xff] %vm258, %v243
      %278 = vst.msk [vmem:[%s257 + $0x98] sm:$0xff] %vm258, %v244
      %279 = vst.msk [vmem:[%s257 + $0xa0] sm:$0xff] %vm258, %v245
      %280 = vst.msk [vmem:[%s257 + $0xa8] sm:$0xff] %vm258, %v246
      %281 = vst.msk [vmem:[%s257 + $0xb0] sm:$0xff] %vm258, %v247
      %282 = vst.msk [vmem:[%s257 + $0xb8] sm:$0xff] %vm258, %v248
      %283 = vst.msk [vmem:[%s257 + $0xc0] sm:$0xff] %vm258, %v249
      %284 = vst.msk [vmem:[%s257 + $0xc8] sm:$0xff] %vm258, %v250
      %285 = vst.msk [vmem:[%s257 + $0xd0] sm:$0xff] %vm258, %v251
      %286 = vst.msk [vmem:[%s257 + $0xd8] sm:$0xff] %vm258, %v252
      %287 = vst.msk [vmem:[%s257 + $0xe0] sm:$0xff] %vm258, %v253
      %288 = vst.msk [vmem:[%s257 + $0xe8] sm:$0xff] %vm258, %v254
      %289 = vst.msk [vmem:[%s257 + $0xf0] sm:$0xff] %vm258, %v255
      %290 = vst.msk [vmem:[%s257 + $0xf8] sm:$0xff] %vm258, %v256
      %s291 = scalar_lea.vmem [#allocation2], 16
      %292 = vst.msk [vmem:[%s291 + $0x1] sm:$0xff] %vm258, %v225
      %vm293 = vcmask 30720
      %294 = vst.msk [vmem:[%s291 + $0x9] sm:$0x7f] %vm293, %v226
      %295 = vst.msk [vmem:[%s291 + $0x11] sm:$0xff] %vm258, %v227
      %296 = vst.msk [vmem:[%s291 + $0x19] sm:$0x7f] %vm293, %v228
      %297 = vst.msk [vmem:[%s291 + $0x21] sm:$0xff] %vm258, %v229
      %298 = vst.msk [vmem:[%s291 + $0x29] sm:$0x7f] %vm293, %v230
      %299 = vst.msk [vmem:[%s291 + $0x31] sm:$0xff] %vm258, %v231
      %300 = vst.msk [vmem:[%s291 + $0x39] sm:$0x7f] %vm293, %v232
      %301 = vst.msk [vmem:[%s291 + $0x41] sm:$0xff] %vm258, %v233
      %302 = vst.msk [vmem:[%s291 + $0x49] sm:$0x7f] %vm293, %v234
      %303 = vst.msk [vmem:[%s291 + $0x51] sm:$0xff] %vm258, %v235
      %304 = vst.msk [vmem:[%s291 + $0x59] sm:$0x7f] %vm293, %v236
      %305 = vst.msk [vmem:[%s291 + $0x61] sm:$0xff] %vm258, %v237
      %306 = vst.msk [vmem:[%s291 + $0x69] sm:$0x7f] %vm293, %v238
      %307 = vst.msk [vmem:[%s291 + $0x71] sm:$0xff] %vm258, %v239
      %308 = vst.msk [vmem:[%s291 + $0x79] sm:$0x7f] %vm293, %v240
      %309 = vst.msk [vmem:[%s291 + $0x81] sm:$0xff] %vm258, %v241
      %310 = vst.msk [vmem:[%s291 + $0x89] sm:$0x7f] %vm293, %v242
      %311 = vst.msk [vmem:[%s291 + $0x91] sm:$0xff] %vm258, %v243
      %312 = vst.msk [vmem:[%s291 + $0x99] sm:$0x7f] %vm293, %v244
      %313 = vst.msk [vmem:[%s291 + $0xa1] sm:$0xff] %vm258, %v245
      %314 = vst.msk [vmem:[%s291 + $0xa9] sm:$0x7f] %vm293, %v246
      %315 = vst.msk [vmem:[%s291 + $0xb1] sm:$0xff] %vm258, %v247
      %316 = vst.msk [vmem:[%s291 + $0xb9] sm:$0x7f] %vm293, %v248
      %317 = vst.msk [vmem:[%s291 + $0xc1] sm:$0xff] %vm258, %v249
      %318 = vst.msk [vmem:[%s291 + $0xc9] sm:$0x7f] %vm293, %v250
      %319 = vst.msk [vmem:[%s291 + $0xd1] sm:$0xff] %vm258, %v251
      %320 = vst.msk [vmem:[%s291 + $0xd9] sm:$0x7f] %vm293, %v252
      %321 = vst.msk [vmem:[%s291 + $0xe1] sm:$0xff] %vm258, %v253
      %322 = vst.msk [vmem:[%s291 + $0xe9] sm:$0x7f] %vm293, %v254
      %323 = vst.msk [vmem:[%s291 + $0xf1] sm:$0xff] %vm258, %v255
      %324 = vst.msk [vmem:[%s291 + $0xf9] sm:$0x7f] %vm293, %v256
      %vm325 = vcmask 25601
      %326 = vst.msk [vmem:[%s291 - $0x1] sm:$0x2] %vm325, %v225
      %327 = vst.msk [vmem:[%s291 + $0xf] sm:$0x2] %vm325, %v227
      %328 = vst.msk [vmem:[%s291 + $0x1f] sm:$0x2] %vm325, %v229
      %329 = vst.msk [vmem:[%s291 + $0x2f] sm:$0x2] %vm325, %v231
      %330 = vst.msk [vmem:[%s291 + $0x3f] sm:$0x2] %vm325, %v233
      %331 = vst.msk [vmem:[%s291 + $0x4f] sm:$0x2] %vm325, %v235
      %332 = vst.msk [vmem:[%s291 + $0x5f] sm:$0x2] %vm325, %v237
      %333 = vst.msk [vmem:[%s291 + $0x6f] sm:$0x2] %vm325, %v239
      %334 = vst.msk [vmem:[%s291 + $0x7f] sm:$0x2] %vm325, %v241
      %335 = vst.msk [vmem:[%s291 + $0x8f] sm:$0x2] %vm325, %v243
      %336 = vst.msk [vmem:[%s291 + $0x9f] sm:$0x2] %vm325, %v245
      %337 = vst.msk [vmem:[%s291 + $0xaf] sm:$0x2] %vm325, %v247
      %338 = vst.msk [vmem:[%s291 + $0xbf] sm:$0x2] %vm325, %v249
      %339 = vst.msk [vmem:[%s291 + $0xcf] sm:$0x2] %vm325, %v251
      %340 = vst.msk [vmem:[%s291 + $0xdf] sm:$0x2] %vm325, %v253
      %341 = vst.msk [vmem:[%s291 + $0xef] sm:$0x2] %vm325, %v255
      %s342 = scalar_lea.vmem [#allocation2], 592
      %vm343 = vcmask 31745
      %344 = vst.msk [vmem:[%s342 - $0x1] sm:$0xfe] %vm343, %v225
      %345 = vst.msk [vmem:[%s342 + $0x7] sm:$0xff] %vm258, %v226
      %346 = vst.msk [vmem:[%s342 + $0xf] sm:$0xfe] %vm343, %v227
      %347 = vst.msk [vmem:[%s342 + $0x17] sm:$0xff] %vm258, %v228
      %348 = vst.msk [vmem:[%s342 + $0x1f] sm:$0xfe] %vm343, %v229
      %349 = vst.msk [vmem:[%s342 + $0x27] sm:$0xff] %vm258, %v230
      %350 = vst.msk [vmem:[%s342 + $0x2f] sm:$0xfe] %vm343, %v231
      %351 = vst.msk [vmem:[%s342 + $0x37] sm:$0xff] %vm258, %v232
      %352 = vst.msk [vmem:[%s342 + $0x3f] sm:$0xfe] %vm343, %v233
      %353 = vst.msk [vmem:[%s342 + $0x47] sm:$0xff] %vm258, %v234
      %354 = vst.msk [vmem:[%s342 + $0x4f] sm:$0xfe] %vm343, %v235
      %355 = vst.msk [vmem:[%s342 + $0x57] sm:$0xff] %vm258, %v236
      %356 = vst.msk [vmem:[%s342 + $0x5f] sm:$0xfe] %vm343, %v237
      %357 = vst.msk [vmem:[%s342 + $0x67] sm:$0xff] %vm258, %v238
      %358 = vst.msk [vmem:[%s342 + $0x6f] sm:$0xfe] %vm343, %v239
      %359 = vst.msk [vmem:[%s342 + $0x77] sm:$0xff] %vm258, %v240
      %360 = vst.msk [vmem:[%s342 + $0x7f] sm:$0xfe] %vm343, %v241
      %361 = vst.msk [vmem:[%s342 + $0x87] sm:$0xff] %vm258, %v242
      %362 = vst.msk [vmem:[%s342 + $0x8f] sm:$0xfe] %vm343, %v243
      %363 = vst.msk [vmem:[%s342 + $0x97] sm:$0xff] %vm258, %v244
      %364 = vst.msk [vmem:[%s342 + $0x9f] sm:$0xfe] %vm343, %v245
      %365 = vst.msk [vmem:[%s342 + $0xa7] sm:$0xff] %vm258, %v246
      %366 = vst.msk [vmem:[%s342 + $0xaf] sm:$0xfe] %vm343, %v247
      %367 = vst.msk [vmem:[%s342 + $0xb7] sm:$0xff] %vm258, %v248
      %368 = vst.msk [vmem:[%s342 + $0xbf] sm:$0xfe] %vm343, %v249
      %369 = vst.msk [vmem:[%s342 + $0xc7] sm:$0xff] %vm258, %v250
      %370 = vst.msk [vmem:[%s342 + $0xcf] sm:$0xfe] %vm343, %v251
      %371 = vst.msk [vmem:[%s342 + $0xd7] sm:$0xff] %vm258, %v252
      %372 = vst.msk [vmem:[%s342 + $0xdf] sm:$0xfe] %vm343, %v253
      %373 = vst.msk [vmem:[%s342 + $0xe7] sm:$0xff] %vm258, %v254
      %374 = vst.msk [vmem:[%s342 + $0xef] sm:$0xfe] %vm343, %v255
      %375 = vst.msk [vmem:[%s342 + $0xf7] sm:$0xff] %vm258, %v256
      %vm376 = vcmask 30726
      %377 = vst.msk [vmem:[%s342 + $0x9] sm:$0x40] %vm376, %v226
      %378 = vst.msk [vmem:[%s342 + $0x19] sm:$0x40] %vm376, %v228
      %379 = vst.msk [vmem:[%s342 + $0x29] sm:$0x40] %vm376, %v230
      %380 = vst.msk [vmem:[%s342 + $0x39] sm:$0x40] %vm376, %v232
      %381 = vst.msk [vmem:[%s342 + $0x49] sm:$0x40] %vm376, %v234
      %382 = vst.msk [vmem:[%s342 + $0x59] sm:$0x40] %vm376, %v236
      %383 = vst.msk [vmem:[%s342 + $0x69] sm:$0x40] %vm376, %v238
      %384 = vst.msk [vmem:[%s342 + $0x79] sm:$0x40] %vm376, %v240
      %385 = vst.msk [vmem:[%s342 + $0x89] sm:$0x40] %vm376, %v242
      %386 = vst.msk [vmem:[%s342 + $0x99] sm:$0x40] %vm376, %v244
      %387 = vst.msk [vmem:[%s342 + $0xa9] sm:$0x40] %vm376, %v246
      %388 = vst.msk [vmem:[%s342 + $0xb9] sm:$0x40] %vm376, %v248
      %389 = vst.msk [vmem:[%s342 + $0xc9] sm:$0x40] %vm376, %v250
      %390 = vst.msk [vmem:[%s342 + $0xd9] sm:$0x40] %vm376, %v252
      %391 = vst.msk [vmem:[%s342 + $0xe9] sm:$0x40] %vm376, %v254
      %392 = vst.msk [vmem:[%s342 + $0xf9] sm:$0x40] %vm376, %v256
      %s393 = scalar_lea.vmem [#allocation2], 32
      %v394 = vld [vmem:[%s393] sm:$0xff]
      %v395 = vld [vmem:[%s393 + $0x8] sm:$0xff]
      %v396 = vld [vmem:[%s393 + $0x120] sm:$0xff]
      %v397 = vld [vmem:[%s393 + $0x128] sm:$0xff]
      %v398 = vld [vmem:[%s393 + $0x240] sm:$0xff]
      %v399 = vld [vmem:[%s393 + $0x248] sm:$0xff]
      %400 = vst.msk [vmem:[#allocation2] sm:$0xff] %vm258, %v394
      %401 = vst.msk [vmem:[#allocation2 + $0x8] sm:$0xff] %vm258, %v395
      %402 = vst.msk [vmem:[#allocation2 + $0x120] sm:$0xff] %vm258, %v396
      %403 = vst.msk [vmem:[#allocation2 + $0x128] sm:$0xff] %vm258, %v397
      %404 = vst.msk [vmem:[#allocation2 + $0x240] sm:$0xff] %vm258, %v398
      %405 = vst.msk [vmem:[#allocation2 + $0x248] sm:$0xff] %vm258, %v399
      %s406 = scalar_lea.vmem [#allocation2], 240
      %v407 = vld [vmem:[%s406] sm:$0xff]
      %v408 = vld [vmem:[%s406 + $0x8] sm:$0xff]
      %v409 = vld [vmem:[%s406 + $0x120] sm:$0xff]
      %v410 = vld [vmem:[%s406 + $0x128] sm:$0xff]
      %v411 = vld [vmem:[%s406 + $0x240] sm:$0xff]
      %v412 = vld [vmem:[%s406 + $0x248] sm:$0xff]
      %s413 = scalar_lea.vmem [#allocation2], 272
      %414 = vst.msk [vmem:[%s413] sm:$0xff] %vm258, %v407
      %415 = vst.msk [vmem:[%s413 + $0x8] sm:$0xff] %vm258, %v408
      %416 = vst.msk [vmem:[%s413 + $0x120] sm:$0xff] %vm258, %v409
      %417 = vst.msk [vmem:[%s413 + $0x128] sm:$0xff] %vm258, %v410
      %418 = vst.msk [vmem:[%s413 + $0x240] sm:$0xff] %vm258, %v411
      %419 = vst.msk [vmem:[%s413 + $0x248] sm:$0xff] %vm258, %v412
      %v420 = vld [vmem:[%s2] sm:$0x1]
      %v421 = vld [vmem:[#allocation2] sm:$0xff]
      %v422 = vld [vmem:[#allocation2 + $0x8] sm:$0xff]
      %v423 = vld [vmem:[#allocation2 + $0x10] sm:$0xff]
      %v424 = vld [vmem:[#allocation2 + $0x18] sm:$0xff]
      %v425 = vld [vmem:[#allocation2 + $0x20] sm:$0xff]
      %v426 = vld [vmem:[#allocation2 + $0x28] sm:$0xff]
      %v427 = vld [vmem:[#allocation2 + $0x30] sm:$0xff]
      %v428 = vld [vmem:[#allocation2 + $0x38] sm:$0xff]
      %v429 = vld [vmem:[#allocation2 + $0x40] sm:$0xff]
      %v430 = vld [vmem:[#allocation2 + $0x48] sm:$0xff]
      %v431 = vld [vmem:[#allocation2 + $0x50] sm:$0xff]
      %v432 = vld [vmem:[#allocation2 + $0x58] sm:$0xff]
      %v433 = vld [vmem:[#allocation2 + $0x60] sm:$0xff]
      %v434 = vld [vmem:[#allocation2 + $0x68] sm:$0xff]
      %v435 = vld [vmem:[#allocation2 + $0x70] sm:$0xff]
      %v436 = vld [vmem:[#allocation2 + $0x78] sm:$0xff]
      %v437 = vld [vmem:[#allocation2 + $0x80] sm:$0xff]
      %v438 = vld [vmem:[#allocation2 + $0x88] sm:$0xff]
      %v439 = vld [vmem:[#allocation2 + $0x90] sm:$0xff]
      %v440 = vld [vmem:[#allocation2 + $0x98] sm:$0xff]
      %v441 = vld [vmem:[#allocation2 + $0xa0] sm:$0xff]
      %v442 = vld [vmem:[#allocation2 + $0xa8] sm:$0xff]
      %v443 = vld [vmem:[#allocation2 + $0xb0] sm:$0xff]
      %v444 = vld [vmem:[#allocation2 + $0xb8] sm:$0xff]
      %v445 = vld [vmem:[#allocation2 + $0xc0] sm:$0xff]
      %v446 = vld [vmem:[#allocation2 + $0xc8] sm:$0xff]
      %v447 = vld [vmem:[#allocation2 + $0xd0] sm:$0xff]
      %v448 = vld [vmem:[#allocation2 + $0xd8] sm:$0xff]
      %v449 = vld [vmem:[#allocation2 + $0xe0] sm:$0xff]
      %v450 = vld [vmem:[#allocation2 + $0xe8] sm:$0xff]
      %v451 = vld [vmem:[#allocation2 + $0xf0] sm:$0xff]
      %v452 = vld [vmem:[#allocation2 + $0xf8] sm:$0xff]
      %v453 = vld [vmem:[%s1] sm:$0xf]
      %s454 = scalar_lea.vmem [#allocation2], 288
      %v455 = vld [vmem:[%s454] sm:$0xff]
      %v456 = vld [vmem:[%s454 + $0x8] sm:$0xff]
      %v457 = vld [vmem:[%s454 + $0x10] sm:$0xff]
      %v458 = vld [vmem:[%s454 + $0x18] sm:$0xff]
      %v459 = vld [vmem:[%s454 + $0x20] sm:$0xff]
      %v460 = vld [vmem:[%s454 + $0x28] sm:$0xff]
      %v461 = vld [vmem:[%s454 + $0x30] sm:$0xff]
      %v462 = vld [vmem:[%s454 + $0x38] sm:$0xff]
      %v463 = vld [vmem:[%s454 + $0x40] sm:$0xff]
      %v464 = vld [vmem:[%s454 + $0x48] sm:$0xff]
      %v465 = vld [vmem:[%s454 + $0x50] sm:$0xff]
      %v466 = vld [vmem:[%s454 + $0x58] sm:$0xff]
      %v467 = vld [vmem:[%s454 + $0x60] sm:$0xff]
      %v468 = vld [vmem:[%s454 + $0x68] sm:$0xff]
      %v469 = vld [vmem:[%s454 + $0x70] sm:$0xff]
      %v470 = vld [vmem:[%s454 + $0x78] sm:$0xff]
      %v471 = vld [vmem:[%s454 + $0x80] sm:$0xff]
      %v472 = vld [vmem:[%s454 + $0x88] sm:$0xff]
      %v473 = vld [vmem:[%s454 + $0x90] sm:$0xff]
      %v474 = vld [vmem:[%s454 + $0x98] sm:$0xff]
      %v475 = vld [vmem:[%s454 + $0xa0] sm:$0xff]
      %v476 = vld [vmem:[%s454 + $0xa8] sm:$0xff]
      %v477 = vld [vmem:[%s454 + $0xb0] sm:$0xff]
      %v478 = vld [vmem:[%s454 + $0xb8] sm:$0xff]
      %v479 = vld [vmem:[%s454 + $0xc0] sm:$0xff]
      %v480 = vld [vmem:[%s454 + $0xc8] sm:$0xff]
      %v481 = vld [vmem:[%s454 + $0xd0] sm:$0xff]
      %v482 = vld [vmem:[%s454 + $0xd8] sm:$0xff]
      %v483 = vld [vmem:[%s454 + $0xe0] sm:$0xff]
      %v484 = vld [vmem:[%s454 + $0xe8] sm:$0xff]
      %v485 = vld [vmem:[%s454 + $0xf0] sm:$0xff]
      %v486 = vld [vmem:[%s454 + $0xf8] sm:$0xff]
      %s487 = scalar_lea.vmem %s1, 4
      %v488 = vld [vmem:[%s487] sm:$0xf]
      %v490 = vsel %vm258, %v455, 0
      %v493 = vsel %vm258, %v456, 0
      %v496 = vsel %vm258, %v457, 0
      %v499 = vsel %vm258, %v458, 0
      %v502 = vsel %vm258, %v459, 0
      %v505 = vsel %vm258, %v460, 0
      %v508 = vsel %vm258, %v461, 0
      %v511 = vsel %vm258, %v462, 0
      %v514 = vsel %vm258, %v463, 0
      %v517 = vsel %vm258, %v464, 0
      %v520 = vsel %vm258, %v465, 0
      %v523 = vsel %vm258, %v466, 0
      %v526 = vsel %vm258, %v467, 0
      %v529 = vsel %vm258, %v468, 0
      %v532 = vsel %vm258, %v469, 0
      %v535 = vsel %vm258, %v470, 0
      %v538 = vsel %vm258, %v471, 0
      %v541 = vsel %vm258, %v472, 0
      %v544 = vsel %vm258, %v473, 0
      %v547 = vsel %vm258, %v474, 0
      %v550 = vsel %vm258, %v475, 0
      %v553 = vsel %vm258, %v476, 0
      %v556 = vsel %vm258, %v477, 0
      %v559 = vsel %vm258, %v478, 0
      %v562 = vsel %vm258, %v479, 0
      %v565 = vsel %vm258, %v480, 0
      %v568 = vsel %vm258, %v481, 0
      %v571 = vsel %vm258, %v482, 0
      %v574 = vsel %vm258, %v483, 0
      %v577 = vsel %vm258, %v484, 0
      %v580 = vsel %vm258, %v485, 0
      %v583 = vsel %vm258, %v486, 0
      %vm585 = vcmask 1043456
      %v587 = vsel %vm585, %v488, 0
      %589 = vmatprep.subr.mxu0 0.0
      %590 = vmatpush1.msra.mxu0 %v587
      %591 = vmatprep.subr.mxu0 0.0
      %592 = vmatpush1.msra.mxu0 0.0
      %593 = vmatprep.subr.mxu0 0.0
      %594 = vmatpush1.msra.mxu0 0.0
      %595 = vmatprep.subr.mxu0 0.0
      %596 = vmatpush1.msra.mxu0 0.0
      %597 = vmatprep.subr.mxu0 0.0
      %598 = vmatpush1.msra.mxu0 0.0
      %599 = vmatprep.subr.mxu0 0.0
      %600 = vmatpush1.msra.mxu0 0.0
      %601 = vmatprep.subr.mxu0 0.0
      %602 = vmatpush1.msra.mxu0 0.0
      %603 = vmatprep.subr.mxu0 0.0
      %604 = vmatpush1.msra.mxu0 0.0
      %605 = vmatprep.subr.mxu0 0.0
      %606 = vmatpush1.msra.mxu0 0.0
      %607 = vmatprep.subr.mxu0 0.0
      %608 = vmatpush1.msra.mxu0 0.0
      %609 = vmatprep.subr.mxu0 0.0
      %610 = vmatpush1.msra.mxu0 0.0
      %611 = vmatprep.subr.mxu0 0.0
      %612 = vmatpush1.msra.mxu0 0.0
      %613 = vmatprep.subr.mxu0 0.0
      %614 = vmatpush1.msra.mxu0 0.0
      %615 = vmatprep.subr.mxu0 0.0
      %616 = vmatpush1.msra.mxu0 0.0
      %617 = vmatprep.subr.mxu0 0.0
      %618 = vmatpush1.msra.mxu0 0.0
      %619 = vmatprep.subr.mxu0 0.0
      %620 = vmatpush1.msra.mxu0 0.0
      %621 = vmatprep.subr.mxu0 0.0
      %622 = vmatpush1.msra.mxu0 0.0
      %623 = vmatprep.subr.mxu0 0.0
      %624 = vmatpush1.msra.mxu0 0.0
      %625 = vmatprep.subr.mxu0 0.0
      %626 = vmatpush1.msra.mxu0 0.0
      %627 = vmatprep.subr.mxu0 0.0
      %628 = vmatpush1.msra.mxu0 0.0
      %629 = vmatprep.subr.mxu0 0.0
      %630 = vmatpush1.msra.mxu0 0.0
      %631 = vmatprep.subr.mxu0 0.0
      %632 = vmatpush1.msra.mxu0 0.0
      %633 = vmatprep.subr.mxu0 0.0
      %634 = vmatpush1.msra.mxu0 0.0
      %635 = vmatprep.subr.mxu0 0.0
      %636 = vmatpush1.msra.mxu0 0.0
      %637 = vmatprep.subr.mxu0 0.0
      %638 = vmatpush1.msra.mxu0 0.0
      %639 = vmatprep.subr.mxu0 0.0
      %640 = vmatpush1.msra.mxu0 0.0
      %641 = vmatprep.subr.mxu0 0.0
      %642 = vmatpush1.msra.mxu0 0.0
      %643 = vmatprep.subr.mxu0 0.0
      %644 = vmatpush1.msra.mxu0 0.0
      %645 = vmatprep.subr.mxu0 0.0
      %646 = vmatpush1.msra.mxu0 0.0
      %647 = vmatprep.subr.mxu0 0.0
      %648 = vmatpush1.msra.mxu0 0.0
      %649 = vmatprep.subr.mxu0 0.0
      %650 = vmatpush1.msra.mxu0 0.0
      %651 = vmatprep.subr.mxu0 0.0
      %652 = vmatpush1.msra.mxu0 0.0
      %653 = vmatprep.mubr.f32.mxu0 0.0
      %654 = vmatmul.mubr.f32.gmra.mrb[0].mxu0 %v490
      %v655 = vpop.f32.mrb[0].mxu0
      %v656 = vadd.f32 0.0, %v655
      %v657 = vpop.f32.mrb[0].mxu0
      %658 = vmatprep.mubr.f32.mxu0 0.0
      %659 = vmatmul.mubr.f32.gmra.mrb[0].mxu0 %v493
      %v660 = vpop.f32.mrb[0].mxu0
      %v661 = vadd.f32 0.0, %v660
      %v662 = vpop.f32.mrb[0].mxu0
      %663 = vmatprep.mubr.f32.mxu0 0.0
      %664 = vmatmul.mubr.f32.gmra.mrb[0].mxu0 %v496
      %v665 = vpop.f32.mrb[0].mxu0
      %v666 = vadd.f32 0.0, %v665
      %v667 = vpop.f32.mrb[0].mxu0
      %668 = vmatprep.mubr.f32.mxu0 0.0
      %669 = vmatmul.mubr.f32.gmra.mrb[0].mxu0 %v499
      %v670 = vpop.f32.mrb[0].mxu0
      %v671 = vadd.f32 0.0, %v670
      %v672 = vpop.f32.mrb[0].mxu0
      %673 = vmatprep.mubr.f32.mxu0 0.0
      %674 = vmatmul.mubr.f32.gmra.mrb[0].mxu0 %v502
      %v675 = vpop.f32.mrb[0].mxu0
      %v676 = vadd.f32 0.0, %v675
      %v677 = vpop.f32.mrb[0].mxu0
      %678 = vmatprep.mubr.f32.mxu0 0.0
      %679 = vmatmul.mubr.f32.gmra.mrb[0].mxu0 %v505
      %v680 = vpop.f32.mrb[0].mxu0
      %v681 = vadd.f32 0.0, %v680
      %v682 = vpop.f32.mrb[0].mxu0
      %683 = vmatprep.mubr.f32.mxu0 0.0
      %684 = vmatmul.mubr.f32.gmra.mrb[0].mxu0 %v508
      %v685 = vpop.f32.mrb[0].mxu0
      %v686 = vadd.f32 0.0, %v685
      %v687 = vpop.f32.mrb[0].mxu0
      %688 = vmatprep.mubr.f32.mxu0 0.0
      %689 = vmatmul.mubr.f32.gmra.mrb[0].mxu0 %v511
      %v690 = vpop.f32.mrb[0].mxu0
      %v691 = vadd.f32 0.0, %v690
      %v692 = vpop.f32.mrb[0].mxu0
      %693 = vmatprep.mubr.f32.mxu0 0.0
      %694 = vmatmul.mubr.f32.gmra.mrb[0].mxu0 %v514
      %v695 = vpop.f32.mrb[0].mxu0
      %v696 = vadd.f32 0.0, %v695
      %v697 = vpop.f32.mrb[0].mxu0
      %698 = vmatprep.mubr.f32.mxu0 0.0
      %699 = vmatmul.mubr.f32.gmra.mrb[0].mxu0 %v517
      %v700 = vpop.f32.mrb[0].mxu0
      %v701 = vadd.f32 0.0, %v700
      %v702 = vpop.f32.mrb[0].mxu0
      %703 = vmatprep.mubr.f32.mxu0 0.0
      %704 = vmatmul.mubr.f32.gmra.mrb[0].mxu0 %v520
      %v705 = vpop.f32.mrb[0].mxu0
      %v706 = vadd.f32 0.0, %v705
      %v707 = vpop.f32.mrb[0].mxu0
      %708 = vmatprep.mubr.f32.mxu0 0.0
      %709 = vmatmul.mubr.f32.gmra.mrb[0].mxu0 %v523
      %v710 = vpop.f32.mrb[0].mxu0
      %v711 = vadd.f32 0.0, %v710
      %v712 = vpop.f32.mrb[0].mxu0
      %713 = vmatprep.mubr.f32.mxu0 0.0
      %714 = vmatmul.mubr.f32.gmra.mrb[0].mxu0 %v526
      %v715 = vpop.f32.mrb[0].mxu0
      %v716 = vadd.f32 0.0, %v715
      %v717 = vpop.f32.mrb[0].mxu0
      %718 = vmatprep.mubr.f32.mxu0 0.0
      %719 = vmatmul.mubr.f32.gmra.mrb[0].mxu0 %v529
      %v720 = vpop.f32.mrb[0].mxu0
      %v721 = vadd.f32 0.0, %v720
      %v722 = vpop.f32.mrb[0].mxu0
      %723 = vmatprep.mubr.f32.mxu0 0.0
      %724 = vmatmul.mubr.f32.gmra.mrb[0].mxu0 %v532
      %v725 = vpop.f32.mrb[0].mxu0
      %v726 = vadd.f32 0.0, %v725
      %v727 = vpop.f32.mrb[0].mxu0
      %728 = vmatprep.mubr.f32.mxu0 0.0
      %729 = vmatmul.mubr.f32.gmra.mrb[0].mxu0 %v535
      %v730 = vpop.f32.mrb[0].mxu0
      %v731 = vadd.f32 0.0, %v730
      %v732 = vpop.f32.mrb[0].mxu0
      %733 = vmatprep.mubr.f32.mxu0 0.0
      %734 = vmatmul.mubr.f32.gmra.mrb[0].mxu0 %v538
      %v735 = vpop.f32.mrb[0].mxu0
      %v736 = vadd.f32 0.0, %v735
      %v737 = vpop.f32.mrb[0].mxu0
      %738 = vmatprep.mubr.f32.mxu0 0.0
      %739 = vmatmul.mubr.f32.gmra.mrb[0].mxu0 %v541
      %v740 = vpop.f32.mrb[0].mxu0
      %v741 = vadd.f32 0.0, %v740
      %v742 = vpop.f32.mrb[0].mxu0
      %743 = vmatprep.mubr.f32.mxu0 0.0
      %744 = vmatmul.mubr.f32.gmra.mrb[0].mxu0 %v544
      %v745 = vpop.f32.mrb[0].mxu0
      %v746 = vadd.f32 0.0, %v745
      %v747 = vpop.f32.mrb[0].mxu0
      %748 = vmatprep.mubr.f32.mxu0 0.0
      %749 = vmatmul.mubr.f32.gmra.mrb[0].mxu0 %v547
      %v750 = vpop.f32.mrb[0].mxu0
      %v751 = vadd.f32 0.0, %v750
      %v752 = vpop.f32.mrb[0].mxu0
      %753 = vmatprep.mubr.f32.mxu0 0.0
      %754 = vmatmul.mubr.f32.gmra.mrb[0].mxu0 %v550
      %v755 = vpop.f32.mrb[0].mxu0
      %v756 = vadd.f32 0.0, %v755
      %v757 = vpop.f32.mrb[0].mxu0
      %758 = vmatprep.mubr.f32.mxu0 0.0
      %759 = vmatmul.mubr.f32.gmra.mrb[0].mxu0 %v553
      %v760 = vpop.f32.mrb[0].mxu0
      %v761 = vadd.f32 0.0, %v760
      %v762 = vpop.f32.mrb[0].mxu0
      %763 = vmatprep.mubr.f32.mxu0 0.0
      %764 = vmatmul.mubr.f32.gmra.mrb[0].mxu0 %v556
      %v765 = vpop.f32.mrb[0].mxu0
      %v766 = vadd.f32 0.0, %v765
      %v767 = vpop.f32.mrb[0].mxu0
      %768 = vmatprep.mubr.f32.mxu0 0.0
      %769 = vmatmul.mubr.f32.gmra.mrb[0].mxu0 %v559
      %v770 = vpop.f32.mrb[0].mxu0
      %v771 = vadd.f32 0.0, %v770
      %v772 = vpop.f32.mrb[0].mxu0
      %773 = vmatprep.mubr.f32.mxu0 0.0
      %774 = vmatmul.mubr.f32.gmra.mrb[0].mxu0 %v562
      %v775 = vpop.f32.mrb[0].mxu0
      %v776 = vadd.f32 0.0, %v775
      %v777 = vpop.f32.mrb[0].mxu0
      %778 = vmatprep.mubr.f32.mxu0 0.0
      %779 = vmatmul.mubr.f32.gmra.mrb[0].mxu0 %v565
      %v780 = vpop.f32.mrb[0].mxu0
      %v781 = vadd.f32 0.0, %v780
      %v782 = vpop.f32.mrb[0].mxu0
      %783 = vmatprep.mubr.f32.mxu0 0.0
      %784 = vmatmul.mubr.f32.gmra.mrb[0].mxu0 %v568
      %v785 = vpop.f32.mrb[0].mxu0
      %v786 = vadd.f32 0.0, %v785
      %v787 = vpop.f32.mrb[0].mxu0
      %788 = vmatprep.mubr.f32.mxu0 0.0
      %789 = vmatmul.mubr.f32.gmra.mrb[0].mxu0 %v571
      %v790 = vpop.f32.mrb[0].mxu0
      %v791 = vadd.f32 0.0, %v790
      %v792 = vpop.f32.mrb[0].mxu0
      %793 = vmatprep.mubr.f32.mxu0 0.0
      %794 = vmatmul.mubr.f32.gmra.mrb[0].mxu0 %v574
      %v795 = vpop.f32.mrb[0].mxu0
      %v796 = vadd.f32 0.0, %v795
      %v797 = vpop.f32.mrb[0].mxu0
      %798 = vmatprep.mubr.f32.mxu0 0.0
      %799 = vmatmul.mubr.f32.gmra.mrb[0].mxu0 %v577
      %v800 = vpop.f32.mrb[0].mxu0
      %v801 = vadd.f32 0.0, %v800
      %v802 = vpop.f32.mrb[0].mxu0
      %803 = vmatprep.mubr.f32.mxu0 0.0
      %804 = vmatmul.mubr.f32.gmra.mrb[0].mxu0 %v580
      %v805 = vpop.f32.mrb[0].mxu0
      %v806 = vadd.f32 0.0, %v805
      %v807 = vpop.f32.mrb[0].mxu0
      %808 = vmatprep.mubr.f32.mxu0 0.0
      %809 = vmatmul.mubr.f32.gmra.mrb[0].mxu0 %v583
      %v810 = vpop.f32.mrb[0].mxu0
      %v811 = vadd.f32 0.0, %v810
      %v812 = vpop.f32.mrb[0].mxu0
      %813 = vdwg.mxu0
      %v815 = vsel %vm258, %v421, 0
      %v818 = vsel %vm258, %v422, 0
      %v821 = vsel %vm258, %v423, 0
      %v824 = vsel %vm258, %v424, 0
      %v827 = vsel %vm258, %v425, 0
      %v830 = vsel %vm258, %v426, 0
      %v833 = vsel %vm258, %v427, 0
      %v836 = vsel %vm258, %v428, 0
      %v839 = vsel %vm258, %v429, 0
      %v842 = vsel %vm258, %v430, 0
      %v845 = vsel %vm258, %v431, 0
      %v848 = vsel %vm258, %v432, 0
      %v851 = vsel %vm258, %v433, 0
      %v854 = vsel %vm258, %v434, 0
      %v857 = vsel %vm258, %v435, 0
      %v860 = vsel %vm258, %v436, 0
      %v863 = vsel %vm258, %v437, 0
      %v866 = vsel %vm258, %v438, 0
      %v869 = vsel %vm258, %v439, 0
      %v872 = vsel %vm258, %v440, 0
      %v875 = vsel %vm258, %v441, 0
      %v878 = vsel %vm258, %v442, 0
      %v881 = vsel %vm258, %v443, 0
      %v884 = vsel %vm258, %v444, 0
      %v887 = vsel %vm258, %v445, 0
      %v890 = vsel %vm258, %v446, 0
      %v893 = vsel %vm258, %v447, 0
      %v896 = vsel %vm258, %v448, 0
      %v899 = vsel %vm258, %v449, 0
      %v902 = vsel %vm258, %v450, 0
      %v905 = vsel %vm258, %v451, 0
      %v908 = vsel %vm258, %v452, 0
      %v911 = vsel %vm585, %v453, 0
      %913 = vmatprep.subr.mxu0 0.0
      %914 = vmatpush1.msra.mxu0 %v911
      %915 = vmatprep.subr.mxu0 0.0
      %916 = vmatpush1.msra.mxu0 0.0
      %917 = vmatprep.subr.mxu0 0.0
      %918 = vmatpush1.msra.mxu0 0.0
      %919 = vmatprep.subr.mxu0 0.0
      %920 = vmatpush1.msra.mxu0 0.0
      %921 = vmatprep.subr.mxu0 0.0
      %922 = vmatpush1.msra.mxu0 0.0
      %923 = vmatprep.subr.mxu0 0.0
      %924 = vmatpush1.msra.mxu0 0.0
      %925 = vmatprep.subr.mxu0 0.0
      %926 = vmatpush1.msra.mxu0 0.0
      %927 = vmatprep.subr.mxu0 0.0
      %928 = vmatpush1.msra.mxu0 0.0
      %929 = vmatprep.subr.mxu0 0.0
      %930 = vmatpush1.msra.mxu0 0.0
      %931 = vmatprep.subr.mxu0 0.0
      %932 = vmatpush1.msra.mxu0 0.0
      %933 = vmatprep.subr.mxu0 0.0
      %934 = vmatpush1.msra.mxu0 0.0
      %935 = vmatprep.subr.mxu0 0.0
      %936 = vmatpush1.msra.mxu0 0.0
      %937 = vmatprep.subr.mxu0 0.0
      %938 = vmatpush1.msra.mxu0 0.0
      %939 = vmatprep.subr.mxu0 0.0
      %940 = vmatpush1.msra.mxu0 0.0
      %941 = vmatprep.subr.mxu0 0.0
      %942 = vmatpush1.msra.mxu0 0.0
      %943 = vmatprep.subr.mxu0 0.0
      %944 = vmatpush1.msra.mxu0 0.0
      %945 = vmatprep.subr.mxu0 0.0
      %946 = vmatpush1.msra.mxu0 0.0
      %947 = vmatprep.subr.mxu0 0.0
      %948 = vmatpush1.msra.mxu0 0.0
      %949 = vmatprep.subr.mxu0 0.0
      %950 = vmatpush1.msra.mxu0 0.0
      %951 = vmatprep.subr.mxu0 0.0
      %952 = vmatpush1.msra.mxu0 0.0
      %953 = vmatprep.subr.mxu0 0.0
      %954 = vmatpush1.msra.mxu0 0.0
      %955 = vmatprep.subr.mxu0 0.0
      %956 = vmatpush1.msra.mxu0 0.0
      %957 = vmatprep.subr.mxu0 0.0
      %958 = vmatpush1.msra.mxu0 0.0
      %959 = vmatprep.subr.mxu0 0.0
      %960 = vmatpush1.msra.mxu0 0.0
      %961 = vmatprep.subr.mxu0 0.0
      %962 = vmatpush1.msra.mxu0 0.0
      %963 = vmatprep.subr.mxu0 0.0
      %964 = vmatpush1.msra.mxu0 0.0
      %965 = vmatprep.subr.mxu0 0.0
      %966 = vmatpush1.msra.mxu0 0.0
      %967 = vmatprep.subr.mxu0 0.0
      %968 = vmatpush1.msra.mxu0 0.0
      %969 = vmatprep.subr.mxu0 0.0
      %970 = vmatpush1.msra.mxu0 0.0
      %971 = vmatprep.subr.mxu0 0.0
      %972 = vmatpush1.msra.mxu0 0.0
      %973 = vmatprep.subr.mxu0 0.0
      %974 = vmatpush1.msra.mxu0 0.0
      %975 = vmatprep.subr.mxu0 0.0
      %976 = vmatpush1.msra.mxu0 0.0
      %977 = vmatprep.mubr.f32.mxu0 0.0
      %978 = vmatmul.mubr.f32.gmra.mrb[0].mxu0 %v815
      %v979 = vpop.f32.mrb[0].mxu0
      %v980 = vadd.f32 %v656, %v979
      %v981 = vpop.f32.mrb[0].mxu0
      %982 = vmatprep.mubr.f32.mxu0 0.0
      %983 = vmatmul.mubr.f32.gmra.mrb[0].mxu0 %v818
      %v984 = vpop.f32.mrb[0].mxu0
      %v985 = vadd.f32 %v661, %v984
      %v986 = vpop.f32.mrb[0].mxu0
      %987 = vmatprep.mubr.f32.mxu0 0.0
      %988 = vmatmul.mubr.f32.gmra.mrb[0].mxu0 %v821
      %v989 = vpop.f32.mrb[0].mxu0
      %v990 = vadd.f32 %v666, %v989
      %v991 = vpop.f32.mrb[0].mxu0
      %992 = vmatprep.mubr.f32.mxu0 0.0
      %993 = vmatmul.mubr.f32.gmra.mrb[0].mxu0 %v824
      %v994 = vpop.f32.mrb[0].mxu0
      %v995 = vadd.f32 %v671, %v994
      %v996 = vpop.f32.mrb[0].mxu0
      %997 = vmatprep.mubr.f32.mxu0 0.0
      %998 = vmatmul.mubr.f32.gmra.mrb[0].mxu0 %v827
      %v999 = vpop.f32.mrb[0].mxu0
      %v1000 = vadd.f32 %v676, %v999
      %v1001 = vpop.f32.mrb[0].mxu0
      %1002 = vmatprep.mubr.f32.mxu0 0.0
      %1003 = vmatmul.mubr.f32.gmra.mrb[0].mxu0 %v830
      %v1004 = vpop.f32.mrb[0].mxu0
      %v1005 = vadd.f32 %v681, %v1004
      %v1006 = vpop.f32.mrb[0].mxu0
      %1007 = vmatprep.mubr.f32.mxu0 0.0
      %1008 = vmatmul.mubr.f32.gmra.mrb[0].mxu0 %v833
      %v1009 = vpop.f32.mrb[0].mxu0
      %v1010 = vadd.f32 %v686, %v1009
      %v1011 = vpop.f32.mrb[0].mxu0
      %1012 = vmatprep.mubr.f32.mxu0 0.0
      %1013 = vmatmul.mubr.f32.gmra.mrb[0].mxu0 %v836
      %v1014 = vpop.f32.mrb[0].mxu0
      %v1015 = vadd.f32 %v691, %v1014
      %v1016 = vpop.f32.mrb[0].mxu0
      %1017 = vmatprep.mubr.f32.mxu0 0.0
      %1018 = vmatmul.mubr.f32.gmra.mrb[0].mxu0 %v839
      %v1019 = vpop.f32.mrb[0].mxu0
      %v1020 = vadd.f32 %v696, %v1019
      %v1021 = vpop.f32.mrb[0].mxu0
      %1022 = vmatprep.mubr.f32.mxu0 0.0
      %1023 = vmatmul.mubr.f32.gmra.mrb[0].mxu0 %v842
      %v1024 = vpop.f32.mrb[0].mxu0
      %v1025 = vadd.f32 %v701, %v1024
      %v1026 = vpop.f32.mrb[0].mxu0
      %1027 = vmatprep.mubr.f32.mxu0 0.0
      %1028 = vmatmul.mubr.f32.gmra.mrb[0].mxu0 %v845
      %v1029 = vpop.f32.mrb[0].mxu0
      %v1030 = vadd.f32 %v706, %v1029
      %v1031 = vpop.f32.mrb[0].mxu0
      %1032 = vmatprep.mubr.f32.mxu0 0.0
      %1033 = vmatmul.mubr.f32.gmra.mrb[0].mxu0 %v848
      %v1034 = vpop.f32.mrb[0].mxu0
      %v1035 = vadd.f32 %v711, %v1034
      %v1036 = vpop.f32.mrb[0].mxu0
      %1037 = vmatprep.mubr.f32.mxu0 0.0
      %1038 = vmatmul.mubr.f32.gmra.mrb[0].mxu0 %v851
      %v1039 = vpop.f32.mrb[0].mxu0
      %v1040 = vadd.f32 %v716, %v1039
      %v1041 = vpop.f32.mrb[0].mxu0
      %1042 = vmatprep.mubr.f32.mxu0 0.0
      %1043 = vmatmul.mubr.f32.gmra.mrb[0].mxu0 %v854
      %v1044 = vpop.f32.mrb[0].mxu0
      %v1045 = vadd.f32 %v721, %v1044
      %v1046 = vpop.f32.mrb[0].mxu0
      %1047 = vmatprep.mubr.f32.mxu0 0.0
      %1048 = vmatmul.mubr.f32.gmra.mrb[0].mxu0 %v857
      %v1049 = vpop.f32.mrb[0].mxu0
      %v1050 = vadd.f32 %v726, %v1049
      %v1051 = vpop.f32.mrb[0].mxu0
      %1052 = vmatprep.mubr.f32.mxu0 0.0
      %1053 = vmatmul.mubr.f32.gmra.mrb[0].mxu0 %v860
      %v1054 = vpop.f32.mrb[0].mxu0
      %v1055 = vadd.f32 %v731, %v1054
      %v1056 = vpop.f32.mrb[0].mxu0
      %1057 = vmatprep.mubr.f32.mxu0 0.0
      %1058 = vmatmul.mubr.f32.gmra.mrb[0].mxu0 %v863
      %v1059 = vpop.f32.mrb[0].mxu0
      %v1060 = vadd.f32 %v736, %v1059
      %v1061 = vpop.f32.mrb[0].mxu0
      %1062 = vmatprep.mubr.f32.mxu0 0.0
      %1063 = vmatmul.mubr.f32.gmra.mrb[0].mxu0 %v866
      %v1064 = vpop.f32.mrb[0].mxu0
      %v1065 = vadd.f32 %v741, %v1064
      %v1066 = vpop.f32.mrb[0].mxu0
      %1067 = vmatprep.mubr.f32.mxu0 0.0
      %1068 = vmatmul.mubr.f32.gmra.mrb[0].mxu0 %v869
      %v1069 = vpop.f32.mrb[0].mxu0
      %v1070 = vadd.f32 %v746, %v1069
      %v1071 = vpop.f32.mrb[0].mxu0
      %1072 = vmatprep.mubr.f32.mxu0 0.0
      %1073 = vmatmul.mubr.f32.gmra.mrb[0].mxu0 %v872
      %v1074 = vpop.f32.mrb[0].mxu0
      %v1075 = vadd.f32 %v751, %v1074
      %v1076 = vpop.f32.mrb[0].mxu0
      %1077 = vmatprep.mubr.f32.mxu0 0.0
      %1078 = vmatmul.mubr.f32.gmra.mrb[0].mxu0 %v875
      %v1079 = vpop.f32.mrb[0].mxu0
      %v1080 = vadd.f32 %v756, %v1079
      %v1081 = vpop.f32.mrb[0].mxu0
      %1082 = vmatprep.mubr.f32.mxu0 0.0
      %1083 = vmatmul.mubr.f32.gmra.mrb[0].mxu0 %v878
      %v1084 = vpop.f32.mrb[0].mxu0
      %v1085 = vadd.f32 %v761, %v1084
      %v1086 = vpop.f32.mrb[0].mxu0
      %1087 = vmatprep.mubr.f32.mxu0 0.0
      %1088 = vmatmul.mubr.f32.gmra.mrb[0].mxu0 %v881
      %v1089 = vpop.f32.mrb[0].mxu0
      %v1090 = vadd.f32 %v766, %v1089
      %v1091 = vpop.f32.mrb[0].mxu0
      %1092 = vmatprep.mubr.f32.mxu0 0.0
      %1093 = vmatmul.mubr.f32.gmra.mrb[0].mxu0 %v884
      %v1094 = vpop.f32.mrb[0].mxu0
      %v1095 = vadd.f32 %v771, %v1094
      %v1096 = vpop.f32.mrb[0].mxu0
      %1097 = vmatprep.mubr.f32.mxu0 0.0
      %1098 = vmatmul.mubr.f32.gmra.mrb[0].mxu0 %v887
      %v1099 = vpop.f32.mrb[0].mxu0
      %v1100 = vadd.f32 %v776, %v1099
      %v1101 = vpop.f32.mrb[0].mxu0
      %1102 = vmatprep.mubr.f32.mxu0 0.0
      %1103 = vmatmul.mubr.f32.gmra.mrb[0].mxu0 %v890
      %v1104 = vpop.f32.mrb[0].mxu0
      %v1105 = vadd.f32 %v781, %v1104
      %v1106 = vpop.f32.mrb[0].mxu0
      %1107 = vmatprep.mubr.f32.mxu0 0.0
      %1108 = vmatmul.mubr.f32.gmra.mrb[0].mxu0 %v893
      %v1109 = vpop.f32.mrb[0].mxu0
      %v1110 = vadd.f32 %v786, %v1109
      %v1111 = vpop.f32.mrb[0].mxu0
      %1112 = vmatprep.mubr.f32.mxu0 0.0
      %1113 = vmatmul.mubr.f32.gmra.mrb[0].mxu0 %v896
      %v1114 = vpop.f32.mrb[0].mxu0
      %v1115 = vadd.f32 %v791, %v1114
      %v1116 = vpop.f32.mrb[0].mxu0
      %1117 = vmatprep.mubr.f32.mxu0 0.0
      %1118 = vmatmul.mubr.f32.gmra.mrb[0].mxu0 %v899
      %v1119 = vpop.f32.mrb[0].mxu0
      %v1120 = vadd.f32 %v796, %v1119
      %v1121 = vpop.f32.mrb[0].mxu0
      %1122 = vmatprep.mubr.f32.mxu0 0.0
      %1123 = vmatmul.mubr.f32.gmra.mrb[0].mxu0 %v902
      %v1124 = vpop.f32.mrb[0].mxu0
      %v1125 = vadd.f32 %v801, %v1124
      %v1126 = vpop.f32.mrb[0].mxu0
      %1127 = vmatprep.mubr.f32.mxu0 0.0
      %1128 = vmatmul.mubr.f32.gmra.mrb[0].mxu0 %v905
      %v1129 = vpop.f32.mrb[0].mxu0
      %v1130 = vadd.f32 %v806, %v1129
      %v1131 = vpop.f32.mrb[0].mxu0
      %1132 = vmatprep.mubr.f32.mxu0 0.0
      %1133 = vmatmul.mubr.f32.gmra.mrb[0].mxu0 %v908
      %v1134 = vpop.f32.mrb[0].mxu0
      %v1135 = vadd.f32 %v811, %v1134
      %v1136 = vpop.f32.mrb[0].mxu0
      %1137 = vdwg.mxu0
      %s1138 = scalar_lea.vmem [#allocation2], 576
      %v1139 = vld [vmem:[%s1138] sm:$0xff]
      %v1140 = vld [vmem:[%s1138 + $0x8] sm:$0xff]
      %v1141 = vld [vmem:[%s1138 + $0x10] sm:$0xff]
      %v1142 = vld [vmem:[%s1138 + $0x18] sm:$0xff]
      %v1143 = vld [vmem:[%s1138 + $0x20] sm:$0xff]
      %v1144 = vld [vmem:[%s1138 + $0x28] sm:$0xff]
      %v1145 = vld [vmem:[%s1138 + $0x30] sm:$0xff]
      %v1146 = vld [vmem:[%s1138 + $0x38] sm:$0xff]
      %v1147 = vld [vmem:[%s1138 + $0x40] sm:$0xff]
      %v1148 = vld [vmem:[%s1138 + $0x48] sm:$0xff]
      %v1149 = vld [vmem:[%s1138 + $0x50] sm:$0xff]
      %v1150 = vld [vmem:[%s1138 + $0x58] sm:$0xff]
      %v1151 = vld [vmem:[%s1138 + $0x60] sm:$0xff]
      %v1152 = vld [vmem:[%s1138 + $0x68] sm:$0xff]
      %v1153 = vld [vmem:[%s1138 + $0x70] sm:$0xff]
      %v1154 = vld [vmem:[%s1138 + $0x78] sm:$0xff]
      %v1155 = vld [vmem:[%s1138 + $0x80] sm:$0xff]
      %v1156 = vld [vmem:[%s1138 + $0x88] sm:$0xff]
      %v1157 = vld [vmem:[%s1138 + $0x90] sm:$0xff]
      %v1158 = vld [vmem:[%s1138 + $0x98] sm:$0xff]
      %v1159 = vld [vmem:[%s1138 + $0xa0] sm:$0xff]
      %v1160 = vld [vmem:[%s1138 + $0xa8] sm:$0xff]
      %v1161 = vld [vmem:[%s1138 + $0xb0] sm:$0xff]
      %v1162 = vld [vmem:[%s1138 + $0xb8] sm:$0xff]
      %v1163 = vld [vmem:[%s1138 + $0xc0] sm:$0xff]
      %v1164 = vld [vmem:[%s1138 + $0xc8] sm:$0xff]
      %v1165 = vld [vmem:[%s1138 + $0xd0] sm:$0xff]
      %v1166 = vld [vmem:[%s1138 + $0xd8] sm:$0xff]
      %v1167 = vld [vmem:[%s1138 + $0xe0] sm:$0xff]
      %v1168 = vld [vmem:[%s1138 + $0xe8] sm:$0xff]
      %v1169 = vld [vmem:[%s1138 + $0xf0] sm:$0xff]
      %v1170 = vld [vmem:[%s1138 + $0xf8] sm:$0xff]
      %s1171 = scalar_lea.vmem %s1, 8
      %v1172 = vld [vmem:[%s1171] sm:$0xf]
      %v1174 = vsel %vm258, %v1139, 0
      %v1177 = vsel %vm258, %v1140, 0
      %v1180 = vsel %vm258, %v1141, 0
      %v1183 = vsel %vm258, %v1142, 0
      %v1186 = vsel %vm258, %v1143, 0
      %v1189 = vsel %vm258, %v1144, 0
      %v1192 = vsel %vm258, %v1145, 0
      %v1195 = vsel %vm258, %v1146, 0
      %v1198 = vsel %vm258, %v1147, 0
      %v1201 = vsel %vm258, %v1148, 0
      %v1204 = vsel %vm258, %v1149, 0
      %v1207 = vsel %vm258, %v1150, 0
      %v1210 = vsel %vm258, %v1151, 0
      %v1213 = vsel %vm258, %v1152, 0
      %v1216 = vsel %vm258, %v1153, 0
      %v1219 = vsel %vm258, %v1154, 0
      %v1222 = vsel %vm258, %v1155, 0
      %v1225 = vsel %vm258, %v1156, 0
      %v1228 = vsel %vm258, %v1157, 0
      %v1231 = vsel %vm258, %v1158, 0
      %v1234 = vsel %vm258, %v1159, 0
      %v1237 = vsel %vm258, %v1160, 0
      %v1240 = vsel %vm258, %v1161, 0
      %v1243 = vsel %vm258, %v1162, 0
      %v1246 = vsel %vm258, %v1163, 0
      %v1249 = vsel %vm258, %v1164, 0
      %v1252 = vsel %vm258, %v1165, 0
      %v1255 = vsel %vm258, %v1166, 0
      %v1258 = vsel %vm258, %v1167, 0
      %v1261 = vsel %vm258, %v1168, 0
      %v1264 = vsel %vm258, %v1169, 0
      %v1267 = vsel %vm258, %v1170, 0
      %v1270 = vsel %vm585, %v1172, 0
      %1272 = vmatprep.subr.mxu0 0.0
      %1273 = vmatpush1.msra.mxu0 %v1270
      %1274 = vmatprep.subr.mxu0 0.0
      %1275 = vmatpush1.msra.mxu0 0.0
      %1276 = vmatprep.subr.mxu0 0.0
      %1277 = vmatpush1.msra.mxu0 0.0
      %1278 = vmatprep.subr.mxu0 0.0
      %1279 = vmatpush1.msra.mxu0 0.0
      %1280 = vmatprep.subr.mxu0 0.0
      %1281 = vmatpush1.msra.mxu0 0.0
      %1282 = vmatprep.subr.mxu0 0.0
      %1283 = vmatpush1.msra.mxu0 0.0
      %1284 = vmatprep.subr.mxu0 0.0
      %1285 = vmatpush1.msra.mxu0 0.0
      %1286 = vmatprep.subr.mxu0 0.0
      %1287 = vmatpush1.msra.mxu0 0.0
      %1288 = vmatprep.subr.mxu0 0.0
      %1289 = vmatpush1.msra.mxu0 0.0
      %1290 = vmatprep.subr.mxu0 0.0
      %1291 = vmatpush1.msra.mxu0 0.0
      %1292 = vmatprep.subr.mxu0 0.0
      %1293 = vmatpush1.msra.mxu0 0.0
      %1294 = vmatprep.subr.mxu0 0.0
      %1295 = vmatpush1.msra.mxu0 0.0
      %1296 = vmatprep.subr.mxu0 0.0
      %1297 = vmatpush1.msra.mxu0 0.0
      %1298 = vmatprep.subr.mxu0 0.0
      %1299 = vmatpush1.msra.mxu0 0.0
      %1300 = vmatprep.subr.mxu0 0.0
      %1301 = vmatpush1.msra.mxu0 0.0
      %1302 = vmatprep.subr.mxu0 0.0
      %1303 = vmatpush1.msra.mxu0 0.0
      %1304 = vmatprep.subr.mxu0 0.0
      %1305 = vmatpush1.msra.mxu0 0.0
      %1306 = vmatprep.subr.mxu0 0.0
      %1307 = vmatpush1.msra.mxu0 0.0
      %1308 = vmatprep.subr.mxu0 0.0
      %1309 = vmatpush1.msra.mxu0 0.0
      %1310 = vmatprep.subr.mxu0 0.0
      %1311 = vmatpush1.msra.mxu0 0.0
      %1312 = vmatprep.subr.mxu0 0.0
      %1313 = vmatpush1.msra.mxu0 0.0
      %1314 = vmatprep.subr.mxu0 0.0
      %1315 = vmatpush1.msra.mxu0 0.0
      %1316 = vmatprep.subr.mxu0 0.0
      %1317 = vmatpush1.msra.mxu0 0.0
      %1318 = vmatprep.subr.mxu0 0.0
      %1319 = vmatpush1.msra.mxu0 0.0
      %1320 = vmatprep.subr.mxu0 0.0
      %1321 = vmatpush1.msra.mxu0 0.0
      %1322 = vmatprep.subr.mxu0 0.0
      %1323 = vmatpush1.msra.mxu0 0.0
      %1324 = vmatprep.subr.mxu0 0.0
      %1325 = vmatpush1.msra.mxu0 0.0
      %1326 = vmatprep.subr.mxu0 0.0
      %1327 = vmatpush1.msra.mxu0 0.0
      %1328 = vmatprep.subr.mxu0 0.0
      %1329 = vmatpush1.msra.mxu0 0.0
      %1330 = vmatprep.subr.mxu0 0.0
      %1331 = vmatpush1.msra.mxu0 0.0
      %1332 = vmatprep.subr.mxu0 0.0
      %1333 = vmatpush1.msra.mxu0 0.0
      %1334 = vmatprep.subr.mxu0 0.0
      %1335 = vmatpush1.msra.mxu0 0.0
      %1336 = vmatprep.mubr.f32.mxu0 0.0
      %1337 = vmatmul.mubr.f32.gmra.mrb[0].mxu0 %v1174
      %v1338 = vpop.f32.mrb[0].mxu0
      %v1339 = vadd.f32 0.0, %v1338
      %v1340 = vpop.f32.mrb[0].mxu0
      %1341 = vmatprep.mubr.f32.mxu0 0.0
      %1342 = vmatmul.mubr.f32.gmra.mrb[0].mxu0 %v1177
      %v1343 = vpop.f32.mrb[0].mxu0
      %v1344 = vadd.f32 0.0, %v1343
      %v1345 = vpop.f32.mrb[0].mxu0
      %1346 = vmatprep.mubr.f32.mxu0 0.0
      %1347 = vmatmul.mubr.f32.gmra.mrb[0].mxu0 %v1180
      %v1348 = vpop.f32.mrb[0].mxu0
      %v1349 = vadd.f32 0.0, %v1348
      %v1350 = vpop.f32.mrb[0].mxu0
      %1351 = vmatprep.mubr.f32.mxu0 0.0
      %1352 = vmatmul.mubr.f32.gmra.mrb[0].mxu0 %v1183
      %v1353 = vpop.f32.mrb[0].mxu0
      %v1354 = vadd.f32 0.0, %v1353
      %v1355 = vpop.f32.mrb[0].mxu0
      %1356 = vmatprep.mubr.f32.mxu0 0.0
      %1357 = vmatmul.mubr.f32.gmra.mrb[0].mxu0 %v1186
      %v1358 = vpop.f32.mrb[0].mxu0
      %v1359 = vadd.f32 0.0, %v1358
      %v1360 = vpop.f32.mrb[0].mxu0
      %1361 = vmatprep.mubr.f32.mxu0 0.0
      %1362 = vmatmul.mubr.f32.gmra.mrb[0].mxu0 %v1189
      %v1363 = vpop.f32.mrb[0].mxu0
      %v1364 = vadd.f32 0.0, %v1363
      %v1365 = vpop.f32.mrb[0].mxu0
      %1366 = vmatprep.mubr.f32.mxu0 0.0
      %1367 = vmatmul.mubr.f32.gmra.mrb[0].mxu0 %v1192
      %v1368 = vpop.f32.mrb[0].mxu0
      %v1369 = vadd.f32 0.0, %v1368
      %v1370 = vpop.f32.mrb[0].mxu0
      %1371 = vmatprep.mubr.f32.mxu0 0.0
      %1372 = vmatmul.mubr.f32.gmra.mrb[0].mxu0 %v1195
      %v1373 = vpop.f32.mrb[0].mxu0
      %v1374 = vadd.f32 0.0, %v1373
      %v1375 = vpop.f32.mrb[0].mxu0
      %1376 = vmatprep.mubr.f32.mxu0 0.0
      %1377 = vmatmul.mubr.f32.gmra.mrb[0].mxu0 %v1198
      %v1378 = vpop.f32.mrb[0].mxu0
      %v1379 = vadd.f32 0.0, %v1378
      %v1380 = vpop.f32.mrb[0].mxu0
      %1381 = vmatprep.mubr.f32.mxu0 0.0
      %1382 = vmatmul.mubr.f32.gmra.mrb[0].mxu0 %v1201
      %v1383 = vpop.f32.mrb[0].mxu0
      %v1384 = vadd.f32 0.0, %v1383
      %v1385 = vpop.f32.mrb[0].mxu0
      %1386 = vmatprep.mubr.f32.mxu0 0.0
      %1387 = vmatmul.mubr.f32.gmra.mrb[0].mxu0 %v1204
      %v1388 = vpop.f32.mrb[0].mxu0
      %v1389 = vadd.f32 0.0, %v1388
      %v1390 = vpop.f32.mrb[0].mxu0
      %1391 = vmatprep.mubr.f32.mxu0 0.0
      %1392 = vmatmul.mubr.f32.gmra.mrb[0].mxu0 %v1207
      %v1393 = vpop.f32.mrb[0].mxu0
      %v1394 = vadd.f32 0.0, %v1393
      %v1395 = vpop.f32.mrb[0].mxu0
      %1396 = vmatprep.mubr.f32.mxu0 0.0
      %1397 = vmatmul.mubr.f32.gmra.mrb[0].mxu0 %v1210
      %v1398 = vpop.f32.mrb[0].mxu0
      %v1399 = vadd.f32 0.0, %v1398
      %v1400 = vpop.f32.mrb[0].mxu0
      %1401 = vmatprep.mubr.f32.mxu0 0.0
      %1402 = vmatmul.mubr.f32.gmra.mrb[0].mxu0 %v1213
      %v1403 = vpop.f32.mrb[0].mxu0
      %v1404 = vadd.f32 0.0, %v1403
      %v1405 = vpop.f32.mrb[0].mxu0
      %1406 = vmatprep.mubr.f32.mxu0 0.0
      %1407 = vmatmul.mubr.f32.gmra.mrb[0].mxu0 %v1216
      %v1408 = vpop.f32.mrb[0].mxu0
      %v1409 = vadd.f32 0.0, %v1408
      %v1410 = vpop.f32.mrb[0].mxu0
      %1411 = vmatprep.mubr.f32.mxu0 0.0
      %1412 = vmatmul.mubr.f32.gmra.mrb[0].mxu0 %v1219
      %v1413 = vpop.f32.mrb[0].mxu0
      %v1414 = vadd.f32 0.0, %v1413
      %v1415 = vpop.f32.mrb[0].mxu0
      %1416 = vmatprep.mubr.f32.mxu0 0.0
      %1417 = vmatmul.mubr.f32.gmra.mrb[0].mxu0 %v1222
      %v1418 = vpop.f32.mrb[0].mxu0
      %v1419 = vadd.f32 0.0, %v1418
      %v1420 = vpop.f32.mrb[0].mxu0
      %1421 = vmatprep.mubr.f32.mxu0 0.0
      %1422 = vmatmul.mubr.f32.gmra.mrb[0].mxu0 %v1225
      %v1423 = vpop.f32.mrb[0].mxu0
      %v1424 = vadd.f32 0.0, %v1423
      %v1425 = vpop.f32.mrb[0].mxu0
      %1426 = vmatprep.mubr.f32.mxu0 0.0
      %1427 = vmatmul.mubr.f32.gmra.mrb[0].mxu0 %v1228
      %v1428 = vpop.f32.mrb[0].mxu0
      %v1429 = vadd.f32 0.0, %v1428
      %v1430 = vpop.f32.mrb[0].mxu0
      %1431 = vmatprep.mubr.f32.mxu0 0.0
      %1432 = vmatmul.mubr.f32.gmra.mrb[0].mxu0 %v1231
      %v1433 = vpop.f32.mrb[0].mxu0
      %v1434 = vadd.f32 0.0, %v1433
      %v1435 = vpop.f32.mrb[0].mxu0
      %1436 = vmatprep.mubr.f32.mxu0 0.0
      %1437 = vmatmul.mubr.f32.gmra.mrb[0].mxu0 %v1234
      %v1438 = vpop.f32.mrb[0].mxu0
      %v1439 = vadd.f32 0.0, %v1438
      %v1440 = vpop.f32.mrb[0].mxu0
      %1441 = vmatprep.mubr.f32.mxu0 0.0
      %1442 = vmatmul.mubr.f32.gmra.mrb[0].mxu0 %v1237
      %v1443 = vpop.f32.mrb[0].mxu0
      %v1444 = vadd.f32 0.0, %v1443
      %v1445 = vpop.f32.mrb[0].mxu0
      %1446 = vmatprep.mubr.f32.mxu0 0.0
      %1447 = vmatmul.mubr.f32.gmra.mrb[0].mxu0 %v1240
      %v1448 = vpop.f32.mrb[0].mxu0
      %v1449 = vadd.f32 0.0, %v1448
      %v1450 = vpop.f32.mrb[0].mxu0
      %1451 = vmatprep.mubr.f32.mxu0 0.0
      %1452 = vmatmul.mubr.f32.gmra.mrb[0].mxu0 %v1243
      %v1453 = vpop.f32.mrb[0].mxu0
      %v1454 = vadd.f32 0.0, %v1453
      %v1455 = vpop.f32.mrb[0].mxu0
      %1456 = vmatprep.mubr.f32.mxu0 0.0
      %1457 = vmatmul.mubr.f32.gmra.mrb[0].mxu0 %v1246
      %v1458 = vpop.f32.mrb[0].mxu0
      %v1459 = vadd.f32 0.0, %v1458
      %v1460 = vpop.f32.mrb[0].mxu0
      %1461 = vmatprep.mubr.f32.mxu0 0.0
      %1462 = vmatmul.mubr.f32.gmra.mrb[0].mxu0 %v1249
      %v1463 = vpop.f32.mrb[0].mxu0
      %v1464 = vadd.f32 0.0, %v1463
      %v1465 = vpop.f32.mrb[0].mxu0
      %1466 = vmatprep.mubr.f32.mxu0 0.0
      %1467 = vmatmul.mubr.f32.gmra.mrb[0].mxu0 %v1252
      %v1468 = vpop.f32.mrb[0].mxu0
      %v1469 = vadd.f32 0.0, %v1468
      %v1470 = vpop.f32.mrb[0].mxu0
      %1471 = vmatprep.mubr.f32.mxu0 0.0
      %1472 = vmatmul.mubr.f32.gmra.mrb[0].mxu0 %v1255
      %v1473 = vpop.f32.mrb[0].mxu0
      %v1474 = vadd.f32 0.0, %v1473
      %v1475 = vpop.f32.mrb[0].mxu0
      %1476 = vmatprep.mubr.f32.mxu0 0.0
      %1477 = vmatmul.mubr.f32.gmra.mrb[0].mxu0 %v1258
      %v1478 = vpop.f32.mrb[0].mxu0
      %v1479 = vadd.f32 0.0, %v1478
      %v1480 = vpop.f32.mrb[0].mxu0
      %1481 = vmatprep.mubr.f32.mxu0 0.0
      %1482 = vmatmul.mubr.f32.gmra.mrb[0].mxu0 %v1261
      %v1483 = vpop.f32.mrb[0].mxu0
      %v1484 = vadd.f32 0.0, %v1483
      %v1485 = vpop.f32.mrb[0].mxu0
      %1486 = vmatprep.mubr.f32.mxu0 0.0
      %1487 = vmatmul.mubr.f32.gmra.mrb[0].mxu0 %v1264
      %v1488 = vpop.f32.mrb[0].mxu0
      %v1489 = vadd.f32 0.0, %v1488
      %v1490 = vpop.f32.mrb[0].mxu0
      %1491 = vmatprep.mubr.f32.mxu0 0.0
      %1492 = vmatmul.mubr.f32.gmra.mrb[0].mxu0 %v1267
      %v1493 = vpop.f32.mrb[0].mxu0
      %v1494 = vadd.f32 0.0, %v1493
      %v1495 = vpop.f32.mrb[0].mxu0
      %1496 = vdwg.mxu0
      %v1497 = vadd.f32 %v980, %v1339
      %v1498 = vadd.f32 %v985, %v1344
      %v1499 = vadd.f32 %v990, %v1349
      %v1500 = vadd.f32 %v995, %v1354
      %v1501 = vadd.f32 %v1000, %v1359
      %v1502 = vadd.f32 %v1005, %v1364
      %v1503 = vadd.f32 %v1010, %v1369
      %v1504 = vadd.f32 %v1015, %v1374
      %v1505 = vadd.f32 %v1020, %v1379
      %v1506 = vadd.f32 %v1025, %v1384
      %v1507 = vadd.f32 %v1030, %v1389
      %v1508 = vadd.f32 %v1035, %v1394
      %v1509 = vadd.f32 %v1040, %v1399
      %v1510 = vadd.f32 %v1045, %v1404
      %v1511 = vadd.f32 %v1050, %v1409
      %v1512 = vadd.f32 %v1055, %v1414
      %v1513 = vadd.f32 %v1060, %v1419
      %v1514 = vadd.f32 %v1065, %v1424
      %v1515 = vadd.f32 %v1070, %v1429
      %v1516 = vadd.f32 %v1075, %v1434
      %v1517 = vadd.f32 %v1080, %v1439
      %v1518 = vadd.f32 %v1085, %v1444
      %v1519 = vadd.f32 %v1090, %v1449
      %v1520 = vadd.f32 %v1095, %v1454
      %v1521 = vadd.f32 %v1100, %v1459
      %v1522 = vadd.f32 %v1105, %v1464
      %v1523 = vadd.f32 %v1110, %v1469
      %v1524 = vadd.f32 %v1115, %v1474
      %v1525 = vadd.f32 %v1120, %v1479
      %v1526 = vadd.f32 %v1125, %v1484
      %v1527 = vadd.f32 %v1130, %v1489
      %v1528 = vadd.f32 %v1135, %v1494
      %v1529 = vld [vmem:[%s291] sm:$0xff]
      %v1530 = vld [vmem:[%s291 + $0x8] sm:$0xff]
      %v1531 = vld [vmem:[%s291 + $0x10] sm:$0xff]
      %v1532 = vld [vmem:[%s291 + $0x18] sm:$0xff]
      %v1533 = vld [vmem:[%s291 + $0x20] sm:$0xff]
      %v1534 = vld [vmem:[%s291 + $0x28] sm:$0xff]
      %v1535 = vld [vmem:[%s291 + $0x30] sm:$0xff]
      %v1536 = vld [vmem:[%s291 + $0x38] sm:$0xff]
      %v1537 = vld [vmem:[%s291 + $0x40] sm:$0xff]
      %v1538 = vld [vmem:[%s291 + $0x48] sm:$0xff]
      %v1539 = vld [vmem:[%s291 + $0x50] sm:$0xff]
      %v1540 = vld [vmem:[%s291 + $0x58] sm:$0xff]
      %v1541 = vld [vmem:[%s291 + $0x60] sm:$0xff]
      %v1542 = vld [vmem:[%s291 + $0x68] sm:$0xff]
      %v1543 = vld [vmem:[%s291 + $0x70] sm:$0xff]
      %v1544 = vld [vmem:[%s291 + $0x78] sm:$0xff]
      %v1545 = vld [vmem:[%s291 + $0x80] sm:$0xff]
      %v1546 = vld [vmem:[%s291 + $0x88] sm:$0xff]
      %v1547 = vld [vmem:[%s291 + $0x90] sm:$0xff]
      %v1548 = vld [vmem:[%s291 + $0x98] sm:$0xff]
      %v1549 = vld [vmem:[%s291 + $0xa0] sm:$0xff]
      %v1550 = vld [vmem:[%s291 + $0xa8] sm:$0xff]
      %v1551 = vld [vmem:[%s291 + $0xb0] sm:$0xff]
      %v1552 = vld [vmem:[%s291 + $0xb8] sm:$0xff]
      %v1553 = vld [vmem:[%s291 + $0xc0] sm:$0xff]
      %v1554 = vld [vmem:[%s291 + $0xc8] sm:$0xff]
      %v1555 = vld [vmem:[%s291 + $0xd0] sm:$0xff]
      %v1556 = vld [vmem:[%s291 + $0xd8] sm:$0xff]
      %v1557 = vld [vmem:[%s291 + $0xe0] sm:$0xff]
      %v1558 = vld [vmem:[%s291 + $0xe8] sm:$0xff]
      %v1559 = vld [vmem:[%s291 + $0xf0] sm:$0xff]
      %v1560 = vld [vmem:[%s291 + $0xf8] sm:$0xff]
      %s1561 = scalar_lea.vmem %s1, 12
      %v1562 = vld [vmem:[%s1561] sm:$0xf]
      %v1564 = vsel %vm258, %v1529, 0
      %v1567 = vsel %vm258, %v1530, 0
      %v1570 = vsel %vm258, %v1531, 0
      %v1573 = vsel %vm258, %v1532, 0
      %v1576 = vsel %vm258, %v1533, 0
      %v1579 = vsel %vm258, %v1534, 0
      %v1582 = vsel %vm258, %v1535, 0
      %v1585 = vsel %vm258, %v1536, 0
      %v1588 = vsel %vm258, %v1537, 0
      %v1591 = vsel %vm258, %v1538, 0
      %v1594 = vsel %vm258, %v1539, 0
      %v1597 = vsel %vm258, %v1540, 0
      %v1600 = vsel %vm258, %v1541, 0
      %v1603 = vsel %vm258, %v1542, 0
      %v1606 = vsel %vm258, %v1543, 0
      %v1609 = vsel %vm258, %v1544, 0
      %v1612 = vsel %vm258, %v1545, 0
      %v1615 = vsel %vm258, %v1546, 0
      %v1618 = vsel %vm258, %v1547, 0
      %v1621 = vsel %vm258, %v1548, 0
      %v1624 = vsel %vm258, %v1549, 0
      %v1627 = vsel %vm258, %v1550, 0
      %v1630 = vsel %vm258, %v1551, 0
      %v1633 = vsel %vm258, %v1552, 0
      %v1636 = vsel %vm258, %v1553, 0
      %v1639 = vsel %vm258, %v1554, 0
      %v1642 = vsel %vm258, %v1555, 0
      %v1645 = vsel %vm258, %v1556, 0
      %v1648 = vsel %vm258, %v1557, 0
      %v1651 = vsel %vm258, %v1558, 0
      %v1654 = vsel %vm258, %v1559, 0
      %v1657 = vsel %vm258, %v1560, 0
      %v1660 = vsel %vm585, %v1562, 0
      %1662 = vmatprep.subr.mxu0 0.0
      %1663 = vmatpush1.msra.mxu0 %v1660
      %1664 = vmatprep.subr.mxu0 0.0
      %1665 = vmatpush1.msra.mxu0 0.0
      %1666 = vmatprep.subr.mxu0 0.0
      %1667 = vmatpush1.msra.mxu0 0.0
      %1668 = vmatprep.subr.mxu0 0.0
      %1669 = vmatpush1.msra.mxu0 0.0
      %1670 = vmatprep.subr.mxu0 0.0
      %1671 = vmatpush1.msra.mxu0 0.0
      %1672 = vmatprep.subr.mxu0 0.0
      %1673 = vmatpush1.msra.mxu0 0.0
      %1674 = vmatprep.subr.mxu0 0.0
      %1675 = vmatpush1.msra.mxu0 0.0
      %1676 = vmatprep.subr.mxu0 0.0
      %1677 = vmatpush1.msra.mxu0 0.0
      %1678 = vmatprep.subr.mxu0 0.0
      %1679 = vmatpush1.msra.mxu0 0.0
      %1680 = vmatprep.subr.mxu0 0.0
      %1681 = vmatpush1.msra.mxu0 0.0
      %1682 = vmatprep.subr.mxu0 0.0
      %1683 = vmatpush1.msra.mxu0 0.0
      %1684 = vmatprep.subr.mxu0 0.0
      %1685 = vmatpush1.msra.mxu0 0.0
      %1686 = vmatprep.subr.mxu0 0.0
      %1687 = vmatpush1.msra.mxu0 0.0
      %1688 = vmatprep.subr.mxu0 0.0
      %1689 = vmatpush1.msra.mxu0 0.0
      %1690 = vmatprep.subr.mxu0 0.0
      %1691 = vmatpush1.msra.mxu0 0.0
      %1692 = vmatprep.subr.mxu0 0.0
      %1693 = vmatpush1.msra.mxu0 0.0
      %1694 = vmatprep.subr.mxu0 0.0
      %1695 = vmatpush1.msra.mxu0 0.0
      %1696 = vmatprep.subr.mxu0 0.0
      %1697 = vmatpush1.msra.mxu0 0.0
      %1698 = vmatprep.subr.mxu0 0.0
      %1699 = vmatpush1.msra.mxu0 0.0
      %1700 = vmatprep.subr.mxu0 0.0
      %1701 = vmatpush1.msra.mxu0 0.0
      %1702 = vmatprep.subr.mxu0 0.0
      %1703 = vmatpush1.msra.mxu0 0.0
      %1704 = vmatprep.subr.mxu0 0.0
      %1705 = vmatpush1.msra.mxu0 0.0
      %1706 = vmatprep.subr.mxu0 0.0
      %1707 = vmatpush1.msra.mxu0 0.0
      %1708 = vmatprep.subr.mxu0 0.0
      %1709 = vmatpush1.msra.mxu0 0.0
      %1710 = vmatprep.subr.mxu0 0.0
      %1711 = vmatpush1.msra.mxu0 0.0
      %1712 = vmatprep.subr.mxu0 0.0
      %1713 = vmatpush1.msra.mxu0 0.0
      %1714 = vmatprep.subr.mxu0 0.0
      %1715 = vmatpush1.msra.mxu0 0.0
      %1716 = vmatprep.subr.mxu0 0.0
      %1717 = vmatpush1.msra.mxu0 0.0
      %1718 = vmatprep.subr.mxu0 0.0
      %1719 = vmatpush1.msra.mxu0 0.0
      %1720 = vmatprep.subr.mxu0 0.0
      %1721 = vmatpush1.msra.mxu0 0.0
      %1722 = vmatprep.subr.mxu0 0.0
      %1723 = vmatpush1.msra.mxu0 0.0
      %1724 = vmatprep.subr.mxu0 0.0
      %1725 = vmatpush1.msra.mxu0 0.0
      %1726 = vmatprep.mubr.f32.mxu0 0.0
      %1727 = vmatmul.mubr.f32.gmra.mrb[0].mxu0 %v1564
      %v1728 = vpop.f32.mrb[0].mxu0
      %v1729 = vadd.f32 0.0, %v1728
      %v1730 = vpop.f32.mrb[0].mxu0
      %1731 = vmatprep.mubr.f32.mxu0 0.0
      %1732 = vmatmul.mubr.f32.gmra.mrb[0].mxu0 %v1567
      %v1733 = vpop.f32.mrb[0].mxu0
      %v1734 = vadd.f32 0.0, %v1733
      %v1735 = vpop.f32.mrb[0].mxu0
      %1736 = vmatprep.mubr.f32.mxu0 0.0
      %1737 = vmatmul.mubr.f32.gmra.mrb[0].mxu0 %v1570
      %v1738 = vpop.f32.mrb[0].mxu0
      %v1739 = vadd.f32 0.0, %v1738
      %v1740 = vpop.f32.mrb[0].mxu0
      %1741 = vmatprep.mubr.f32.mxu0 0.0
      %1742 = vmatmul.mubr.f32.gmra.mrb[0].mxu0 %v1573
      %v1743 = vpop.f32.mrb[0].mxu0
      %v1744 = vadd.f32 0.0, %v1743
      %v1745 = vpop.f32.mrb[0].mxu0
      %1746 = vmatprep.mubr.f32.mxu0 0.0
      %1747 = vmatmul.mubr.f32.gmra.mrb[0].mxu0 %v1576
      %v1748 = vpop.f32.mrb[0].mxu0
      %v1749 = vadd.f32 0.0, %v1748
      %v1750 = vpop.f32.mrb[0].mxu0
      %1751 = vmatprep.mubr.f32.mxu0 0.0
      %1752 = vmatmul.mubr.f32.gmra.mrb[0].mxu0 %v1579
      %v1753 = vpop.f32.mrb[0].mxu0
      %v1754 = vadd.f32 0.0, %v1753
      %v1755 = vpop.f32.mrb[0].mxu0
      %1756 = vmatprep.mubr.f32.mxu0 0.0
      %1757 = vmatmul.mubr.f32.gmra.mrb[0].mxu0 %v1582
      %v1758 = vpop.f32.mrb[0].mxu0
      %v1759 = vadd.f32 0.0, %v1758
      %v1760 = vpop.f32.mrb[0].mxu0
      %1761 = vmatprep.mubr.f32.mxu0 0.0
      %1762 = vmatmul.mubr.f32.gmra.mrb[0].mxu0 %v1585
      %v1763 = vpop.f32.mrb[0].mxu0
      %v1764 = vadd.f32 0.0, %v1763
      %v1765 = vpop.f32.mrb[0].mxu0
      %1766 = vmatprep.mubr.f32.mxu0 0.0
      %1767 = vmatmul.mubr.f32.gmra.mrb[0].mxu0 %v1588
      %v1768 = vpop.f32.mrb[0].mxu0
      %v1769 = vadd.f32 0.0, %v1768
      %v1770 = vpop.f32.mrb[0].mxu0
      %1771 = vmatprep.mubr.f32.mxu0 0.0
      %1772 = vmatmul.mubr.f32.gmra.mrb[0].mxu0 %v1591
      %v1773 = vpop.f32.mrb[0].mxu0
      %v1774 = vadd.f32 0.0, %v1773
      %v1775 = vpop.f32.mrb[0].mxu0
      %1776 = vmatprep.mubr.f32.mxu0 0.0
      %1777 = vmatmul.mubr.f32.gmra.mrb[0].mxu0 %v1594
      %v1778 = vpop.f32.mrb[0].mxu0
      %v1779 = vadd.f32 0.0, %v1778
      %v1780 = vpop.f32.mrb[0].mxu0
      %1781 = vmatprep.mubr.f32.mxu0 0.0
      %1782 = vmatmul.mubr.f32.gmra.mrb[0].mxu0 %v1597
      %v1783 = vpop.f32.mrb[0].mxu0
      %v1784 = vadd.f32 0.0, %v1783
      %v1785 = vpop.f32.mrb[0].mxu0
      %1786 = vmatprep.mubr.f32.mxu0 0.0
      %1787 = vmatmul.mubr.f32.gmra.mrb[0].mxu0 %v1600
      %v1788 = vpop.f32.mrb[0].mxu0
      %v1789 = vadd.f32 0.0, %v1788
      %v1790 = vpop.f32.mrb[0].mxu0
      %1791 = vmatprep.mubr.f32.mxu0 0.0
      %1792 = vmatmul.mubr.f32.gmra.mrb[0].mxu0 %v1603
      %v1793 = vpop.f32.mrb[0].mxu0
      %v1794 = vadd.f32 0.0, %v1793
      %v1795 = vpop.f32.mrb[0].mxu0
      %1796 = vmatprep.mubr.f32.mxu0 0.0
      %1797 = vmatmul.mubr.f32.gmra.mrb[0].mxu0 %v1606
      %v1798 = vpop.f32.mrb[0].mxu0
      %v1799 = vadd.f32 0.0, %v1798
      %v1800 = vpop.f32.mrb[0].mxu0
      %1801 = vmatprep.mubr.f32.mxu0 0.0
      %1802 = vmatmul.mubr.f32.gmra.mrb[0].mxu0 %v1609
      %v1803 = vpop.f32.mrb[0].mxu0
      %v1804 = vadd.f32 0.0, %v1803
      %v1805 = vpop.f32.mrb[0].mxu0
      %1806 = vmatprep.mubr.f32.mxu0 0.0
      %1807 = vmatmul.mubr.f32.gmra.mrb[0].mxu0 %v1612
      %v1808 = vpop.f32.mrb[0].mxu0
      %v1809 = vadd.f32 0.0, %v1808
      %v1810 = vpop.f32.mrb[0].mxu0
      %1811 = vmatprep.mubr.f32.mxu0 0.0
      %1812 = vmatmul.mubr.f32.gmra.mrb[0].mxu0 %v1615
      %v1813 = vpop.f32.mrb[0].mxu0
      %v1814 = vadd.f32 0.0, %v1813
      %v1815 = vpop.f32.mrb[0].mxu0
      %1816 = vmatprep.mubr.f32.mxu0 0.0
      %1817 = vmatmul.mubr.f32.gmra.mrb[0].mxu0 %v1618
      %v1818 = vpop.f32.mrb[0].mxu0
      %v1819 = vadd.f32 0.0, %v1818
      %v1820 = vpop.f32.mrb[0].mxu0
      %1821 = vmatprep.mubr.f32.mxu0 0.0
      %1822 = vmatmul.mubr.f32.gmra.mrb[0].mxu0 %v1621
      %v1823 = vpop.f32.mrb[0].mxu0
      %v1824 = vadd.f32 0.0, %v1823
      %v1825 = vpop.f32.mrb[0].mxu0
      %1826 = vmatprep.mubr.f32.mxu0 0.0
      %1827 = vmatmul.mubr.f32.gmra.mrb[0].mxu0 %v1624
      %v1828 = vpop.f32.mrb[0].mxu0
      %v1829 = vadd.f32 0.0, %v1828
      %v1830 = vpop.f32.mrb[0].mxu0
      %1831 = vmatprep.mubr.f32.mxu0 0.0
      %1832 = vmatmul.mubr.f32.gmra.mrb[0].mxu0 %v1627
      %v1833 = vpop.f32.mrb[0].mxu0
      %v1834 = vadd.f32 0.0, %v1833
      %v1835 = vpop.f32.mrb[0].mxu0
      %1836 = vmatprep.mubr.f32.mxu0 0.0
      %1837 = vmatmul.mubr.f32.gmra.mrb[0].mxu0 %v1630
      %v1838 = vpop.f32.mrb[0].mxu0
      %v1839 = vadd.f32 0.0, %v1838
      %v1840 = vpop.f32.mrb[0].mxu0
      %1841 = vmatprep.mubr.f32.mxu0 0.0
      %1842 = vmatmul.mubr.f32.gmra.mrb[0].mxu0 %v1633
      %v1843 = vpop.f32.mrb[0].mxu0
      %v1844 = vadd.f32 0.0, %v1843
      %v1845 = vpop.f32.mrb[0].mxu0
      %1846 = vmatprep.mubr.f32.mxu0 0.0
      %1847 = vmatmul.mubr.f32.gmra.mrb[0].mxu0 %v1636
      %v1848 = vpop.f32.mrb[0].mxu0
      %v1849 = vadd.f32 0.0, %v1848
      %v1850 = vpop.f32.mrb[0].mxu0
      %1851 = vmatprep.mubr.f32.mxu0 0.0
      %1852 = vmatmul.mubr.f32.gmra.mrb[0].mxu0 %v1639
      %v1853 = vpop.f32.mrb[0].mxu0
      %v1854 = vadd.f32 0.0, %v1853
      %v1855 = vpop.f32.mrb[0].mxu0
      %1856 = vmatprep.mubr.f32.mxu0 0.0
      %1857 = vmatmul.mubr.f32.gmra.mrb[0].mxu0 %v1642
      %v1858 = vpop.f32.mrb[0].mxu0
      %v1859 = vadd.f32 0.0, %v1858
      %v1860 = vpop.f32.mrb[0].mxu0
      %1861 = vmatprep.mubr.f32.mxu0 0.0
      %1862 = vmatmul.mubr.f32.gmra.mrb[0].mxu0 %v1645
      %v1863 = vpop.f32.mrb[0].mxu0
      %v1864 = vadd.f32 0.0, %v1863
      %v1865 = vpop.f32.mrb[0].mxu0
      %1866 = vmatprep.mubr.f32.mxu0 0.0
      %1867 = vmatmul.mubr.f32.gmra.mrb[0].mxu0 %v1648
      %v1868 = vpop.f32.mrb[0].mxu0
      %v1869 = vadd.f32 0.0, %v1868
      %v1870 = vpop.f32.mrb[0].mxu0
      %1871 = vmatprep.mubr.f32.mxu0 0.0
      %1872 = vmatmul.mubr.f32.gmra.mrb[0].mxu0 %v1651
      %v1873 = vpop.f32.mrb[0].mxu0
      %v1874 = vadd.f32 0.0, %v1873
      %v1875 = vpop.f32.mrb[0].mxu0
      %1876 = vmatprep.mubr.f32.mxu0 0.0
      %1877 = vmatmul.mubr.f32.gmra.mrb[0].mxu0 %v1654
      %v1878 = vpop.f32.mrb[0].mxu0
      %v1879 = vadd.f32 0.0, %v1878
      %v1880 = vpop.f32.mrb[0].mxu0
      %1881 = vmatprep.mubr.f32.mxu0 0.0
      %1882 = vmatmul.mubr.f32.gmra.mrb[0].mxu0 %v1657
      %v1883 = vpop.f32.mrb[0].mxu0
      %v1884 = vadd.f32 0.0, %v1883
      %v1885 = vpop.f32.mrb[0].mxu0
      %1886 = vdwg.mxu0
      %v1887 = vadd.f32 %v1497, %v1729
      %v1888 = vadd.f32 %v1498, %v1734
      %v1889 = vadd.f32 %v1499, %v1739
      %v1890 = vadd.f32 %v1500, %v1744
      %v1891 = vadd.f32 %v1501, %v1749
      %v1892 = vadd.f32 %v1502, %v1754
      %v1893 = vadd.f32 %v1503, %v1759
      %v1894 = vadd.f32 %v1504, %v1764
      %v1895 = vadd.f32 %v1505, %v1769
      %v1896 = vadd.f32 %v1506, %v1774
      %v1897 = vadd.f32 %v1507, %v1779
      %v1898 = vadd.f32 %v1508, %v1784
      %v1899 = vadd.f32 %v1509, %v1789
      %v1900 = vadd.f32 %v1510, %v1794
      %v1901 = vadd.f32 %v1511, %v1799
      %v1902 = vadd.f32 %v1512, %v1804
      %v1903 = vadd.f32 %v1513, %v1809
      %v1904 = vadd.f32 %v1514, %v1814
      %v1905 = vadd.f32 %v1515, %v1819
      %v1906 = vadd.f32 %v1516, %v1824
      %v1907 = vadd.f32 %v1517, %v1829
      %v1908 = vadd.f32 %v1518, %v1834
      %v1909 = vadd.f32 %v1519, %v1839
      %v1910 = vadd.f32 %v1520, %v1844
      %v1911 = vadd.f32 %v1521, %v1849
      %v1912 = vadd.f32 %v1522, %v1854
      %v1913 = vadd.f32 %v1523, %v1859
      %v1914 = vadd.f32 %v1524, %v1864
      %v1915 = vadd.f32 %v1525, %v1869
      %v1916 = vadd.f32 %v1526, %v1874
      %v1917 = vadd.f32 %v1527, %v1879
      %v1918 = vadd.f32 %v1528, %v1884
      %v1919 = vld [vmem:[%s257] sm:$0xff]
      %v1920 = vld [vmem:[%s257 + $0x8] sm:$0xff]
      %v1921 = vld [vmem:[%s257 + $0x10] sm:$0xff]
      %v1922 = vld [vmem:[%s257 + $0x18] sm:$0xff]
      %v1923 = vld [vmem:[%s257 + $0x20] sm:$0xff]
      %v1924 = vld [vmem:[%s257 + $0x28] sm:$0xff]
      %v1925 = vld [vmem:[%s257 + $0x30] sm:$0xff]
      %v1926 = vld [vmem:[%s257 + $0x38] sm:$0xff]
      %v1927 = vld [vmem:[%s257 + $0x40] sm:$0xff]
      %v1928 = vld [vmem:[%s257 + $0x48] sm:$0xff]
      %v1929 = vld [vmem:[%s257 + $0x50] sm:$0xff]
      %v1930 = vld [vmem:[%s257 + $0x58] sm:$0xff]
      %v1931 = vld [vmem:[%s257 + $0x60] sm:$0xff]
      %v1932 = vld [vmem:[%s257 + $0x68] sm:$0xff]
      %v1933 = vld [vmem:[%s257 + $0x70] sm:$0xff]
      %v1934 = vld [vmem:[%s257 + $0x78] sm:$0xff]
      %v1935 = vld [vmem:[%s257 + $0x80] sm:$0xff]
      %v1936 = vld [vmem:[%s257 + $0x88] sm:$0xff]
      %v1937 = vld [vmem:[%s257 + $0x90] sm:$0xff]
      %v1938 = vld [vmem:[%s257 + $0x98] sm:$0xff]
      %v1939 = vld [vmem:[%s257 + $0xa0] sm:$0xff]
      %v1940 = vld [vmem:[%s257 + $0xa8] sm:$0xff]
      %v1941 = vld [vmem:[%s257 + $0xb0] sm:$0xff]
      %v1942 = vld [vmem:[%s257 + $0xb8] sm:$0xff]
      %v1943 = vld [vmem:[%s257 + $0xc0] sm:$0xff]
      %v1944 = vld [vmem:[%s257 + $0xc8] sm:$0xff]
      %v1945 = vld [vmem:[%s257 + $0xd0] sm:$0xff]
      %v1946 = vld [vmem:[%s257 + $0xd8] sm:$0xff]
      %v1947 = vld [vmem:[%s257 + $0xe0] sm:$0xff]
      %v1948 = vld [vmem:[%s257 + $0xe8] sm:$0xff]
      %v1949 = vld [vmem:[%s257 + $0xf0] sm:$0xff]
      %v1950 = vld [vmem:[%s257 + $0xf8] sm:$0xff]
      %s1951 = scalar_lea.vmem %s1, 16
      %v1952 = vld [vmem:[%s1951] sm:$0xf]
      %v1954 = vsel %vm258, %v1919, 0
      %v1957 = vsel %vm258, %v1920, 0
      %v1960 = vsel %vm258, %v1921, 0
      %v1963 = vsel %vm258, %v1922, 0
      %v1966 = vsel %vm258, %v1923, 0
      %v1969 = vsel %vm258, %v1924, 0
      %v1972 = vsel %vm258, %v1925, 0
      %v1975 = vsel %vm258, %v1926, 0
      %v1978 = vsel %vm258, %v1927, 0
      %v1981 = vsel %vm258, %v1928, 0
      %v1984 = vsel %vm258, %v1929, 0
      %v1987 = vsel %vm258, %v1930, 0
      %v1990 = vsel %vm258, %v1931, 0
      %v1993 = vsel %vm258, %v1932, 0
      %v1996 = vsel %vm258, %v1933, 0
      %v1999 = vsel %vm258, %v1934, 0
      %v2002 = vsel %vm258, %v1935, 0
      %v2005 = vsel %vm258, %v1936, 0
      %v2008 = vsel %vm258, %v1937, 0
      %v2011 = vsel %vm258, %v1938, 0
      %v2014 = vsel %vm258, %v1939, 0
      %v2017 = vsel %vm258, %v1940, 0
      %v2020 = vsel %vm258, %v1941, 0
      %v2023 = vsel %vm258, %v1942, 0
      %v2026 = vsel %vm258, %v1943, 0
      %v2029 = vsel %vm258, %v1944, 0
      %v2032 = vsel %vm258, %v1945, 0
      %v2035 = vsel %vm258, %v1946, 0
      %v2038 = vsel %vm258, %v1947, 0
      %v2041 = vsel %vm258, %v1948, 0
      %v2044 = vsel %vm258, %v1949, 0
      %v2047 = vsel %vm258, %v1950, 0
      %v2050 = vsel %vm585, %v1952, 0
      %2052 = vmatprep.subr.mxu0 0.0
      %2053 = vmatpush1.msra.mxu0 %v2050
      %2054 = vmatprep.subr.mxu0 0.0
      %2055 = vmatpush1.msra.mxu0 0.0
      %2056 = vmatprep.subr.mxu0 0.0
      %2057 = vmatpush1.msra.mxu0 0.0
      %2058 = vmatprep.subr.mxu0 0.0
      %2059 = vmatpush1.msra.mxu0 0.0
      %2060 = vmatprep.subr.mxu0 0.0
      %2061 = vmatpush1.msra.mxu0 0.0
      %2062 = vmatprep.subr.mxu0 0.0
      %2063 = vmatpush1.msra.mxu0 0.0
      %2064 = vmatprep.subr.mxu0 0.0
      %2065 = vmatpush1.msra.mxu0 0.0
      %2066 = vmatprep.subr.mxu0 0.0
      %2067 = vmatpush1.msra.mxu0 0.0
      %2068 = vmatprep.subr.mxu0 0.0
      %2069 = vmatpush1.msra.mxu0 0.0
      %2070 = vmatprep.subr.mxu0 0.0
      %2071 = vmatpush1.msra.mxu0 0.0
      %2072 = vmatprep.subr.mxu0 0.0
      %2073 = vmatpush1.msra.mxu0 0.0
      %2074 = vmatprep.subr.mxu0 0.0
      %2075 = vmatpush1.msra.mxu0 0.0
      %2076 = vmatprep.subr.mxu0 0.0
      %2077 = vmatpush1.msra.mxu0 0.0
      %2078 = vmatprep.subr.mxu0 0.0
      %2079 = vmatpush1.msra.mxu0 0.0
      %2080 = vmatprep.subr.mxu0 0.0
      %2081 = vmatpush1.msra.mxu0 0.0
      %2082 = vmatprep.subr.mxu0 0.0
      %2083 = vmatpush1.msra.mxu0 0.0
      %2084 = vmatprep.subr.mxu0 0.0
      %2085 = vmatpush1.msra.mxu0 0.0
      %2086 = vmatprep.subr.mxu0 0.0
      %2087 = vmatpush1.msra.mxu0 0.0
      %2088 = vmatprep.subr.mxu0 0.0
      %2089 = vmatpush1.msra.mxu0 0.0
      %2090 = vmatprep.subr.mxu0 0.0
      %2091 = vmatpush1.msra.mxu0 0.0
      %2092 = vmatprep.subr.mxu0 0.0
      %2093 = vmatpush1.msra.mxu0 0.0
      %2094 = vmatprep.subr.mxu0 0.0
      %2095 = vmatpush1.msra.mxu0 0.0
      %2096 = vmatprep.subr.mxu0 0.0
      %2097 = vmatpush1.msra.mxu0 0.0
      %2098 = vmatprep.subr.mxu0 0.0
      %2099 = vmatpush1.msra.mxu0 0.0
      %2100 = vmatprep.subr.mxu0 0.0
      %2101 = vmatpush1.msra.mxu0 0.0
      %2102 = vmatprep.subr.mxu0 0.0
      %2103 = vmatpush1.msra.mxu0 0.0
      %2104 = vmatprep.subr.mxu0 0.0
      %2105 = vmatpush1.msra.mxu0 0.0
      %2106 = vmatprep.subr.mxu0 0.0
      %2107 = vmatpush1.msra.mxu0 0.0
      %2108 = vmatprep.subr.mxu0 0.0
      %2109 = vmatpush1.msra.mxu0 0.0
      %2110 = vmatprep.subr.mxu0 0.0
      %2111 = vmatpush1.msra.mxu0 0.0
      %2112 = vmatprep.subr.mxu0 0.0
      %2113 = vmatpush1.msra.mxu0 0.0
      %2114 = vmatprep.subr.mxu0 0.0
      %2115 = vmatpush1.msra.mxu0 0.0
      %2116 = vmatprep.mubr.f32.mxu0 0.0
      %2117 = vmatmul.mubr.f32.gmra.mrb[0].mxu0 %v1954
      %v2118 = vpop.f32.mrb[0].mxu0
      %v2119 = vadd.f32 0.0, %v2118
      %v2120 = vpop.f32.mrb[0].mxu0
      %2121 = vmatprep.mubr.f32.mxu0 0.0
      %2122 = vmatmul.mubr.f32.gmra.mrb[0].mxu0 %v1957
      %v2123 = vpop.f32.mrb[0].mxu0
      %v2124 = vadd.f32 0.0, %v2123
      %v2125 = vpop.f32.mrb[0].mxu0
      %2126 = vmatprep.mubr.f32.mxu0 0.0
      %2127 = vmatmul.mubr.f32.gmra.mrb[0].mxu0 %v1960
      %v2128 = vpop.f32.mrb[0].mxu0
      %v2129 = vadd.f32 0.0, %v2128
      %v2130 = vpop.f32.mrb[0].mxu0
      %2131 = vmatprep.mubr.f32.mxu0 0.0
      %2132 = vmatmul.mubr.f32.gmra.mrb[0].mxu0 %v1963
      %v2133 = vpop.f32.mrb[0].mxu0
      %v2134 = vadd.f32 0.0, %v2133
      %v2135 = vpop.f32.mrb[0].mxu0
      %2136 = vmatprep.mubr.f32.mxu0 0.0
      %2137 = vmatmul.mubr.f32.gmra.mrb[0].mxu0 %v1966
      %v2138 = vpop.f32.mrb[0].mxu0
      %v2139 = vadd.f32 0.0, %v2138
      %v2140 = vpop.f32.mrb[0].mxu0
      %2141 = vmatprep.mubr.f32.mxu0 0.0
      %2142 = vmatmul.mubr.f32.gmra.mrb[0].mxu0 %v1969
      %v2143 = vpop.f32.mrb[0].mxu0
      %v2144 = vadd.f32 0.0, %v2143
      %v2145 = vpop.f32.mrb[0].mxu0
      %2146 = vmatprep.mubr.f32.mxu0 0.0
      %2147 = vmatmul.mubr.f32.gmra.mrb[0].mxu0 %v1972
      %v2148 = vpop.f32.mrb[0].mxu0
      %v2149 = vadd.f32 0.0, %v2148
      %v2150 = vpop.f32.mrb[0].mxu0
      %2151 = vmatprep.mubr.f32.mxu0 0.0
      %2152 = vmatmul.mubr.f32.gmra.mrb[0].mxu0 %v1975
      %v2153 = vpop.f32.mrb[0].mxu0
      %v2154 = vadd.f32 0.0, %v2153
      %v2155 = vpop.f32.mrb[0].mxu0
      %2156 = vmatprep.mubr.f32.mxu0 0.0
      %2157 = vmatmul.mubr.f32.gmra.mrb[0].mxu0 %v1978
      %v2158 = vpop.f32.mrb[0].mxu0
      %v2159 = vadd.f32 0.0, %v2158
      %v2160 = vpop.f32.mrb[0].mxu0
      %2161 = vmatprep.mubr.f32.mxu0 0.0
      %2162 = vmatmul.mubr.f32.gmra.mrb[0].mxu0 %v1981
      %v2163 = vpop.f32.mrb[0].mxu0
      %v2164 = vadd.f32 0.0, %v2163
      %v2165 = vpop.f32.mrb[0].mxu0
      %2166 = vmatprep.mubr.f32.mxu0 0.0
      %2167 = vmatmul.mubr.f32.gmra.mrb[0].mxu0 %v1984
      %v2168 = vpop.f32.mrb[0].mxu0
      %v2169 = vadd.f32 0.0, %v2168
      %v2170 = vpop.f32.mrb[0].mxu0
      %2171 = vmatprep.mubr.f32.mxu0 0.0
      %2172 = vmatmul.mubr.f32.gmra.mrb[0].mxu0 %v1987
      %v2173 = vpop.f32.mrb[0].mxu0
      %v2174 = vadd.f32 0.0, %v2173
      %v2175 = vpop.f32.mrb[0].mxu0
      %2176 = vmatprep.mubr.f32.mxu0 0.0
      %2177 = vmatmul.mubr.f32.gmra.mrb[0].mxu0 %v1990
      %v2178 = vpop.f32.mrb[0].mxu0
      %v2179 = vadd.f32 0.0, %v2178
      %v2180 = vpop.f32.mrb[0].mxu0
      %2181 = vmatprep.mubr.f32.mxu0 0.0
      %2182 = vmatmul.mubr.f32.gmra.mrb[0].mxu0 %v1993
      %v2183 = vpop.f32.mrb[0].mxu0
      %v2184 = vadd.f32 0.0, %v2183
      %v2185 = vpop.f32.mrb[0].mxu0
      %2186 = vmatprep.mubr.f32.mxu0 0.0
      %2187 = vmatmul.mubr.f32.gmra.mrb[0].mxu0 %v1996
      %v2188 = vpop.f32.mrb[0].mxu0
      %v2189 = vadd.f32 0.0, %v2188
      %v2190 = vpop.f32.mrb[0].mxu0
      %2191 = vmatprep.mubr.f32.mxu0 0.0
      %2192 = vmatmul.mubr.f32.gmra.mrb[0].mxu0 %v1999
      %v2193 = vpop.f32.mrb[0].mxu0
      %v2194 = vadd.f32 0.0, %v2193
      %v2195 = vpop.f32.mrb[0].mxu0
      %2196 = vmatprep.mubr.f32.mxu0 0.0
      %2197 = vmatmul.mubr.f32.gmra.mrb[0].mxu0 %v2002
      %v2198 = vpop.f32.mrb[0].mxu0
      %v2199 = vadd.f32 0.0, %v2198
      %v2200 = vpop.f32.mrb[0].mxu0
      %2201 = vmatprep.mubr.f32.mxu0 0.0
      %2202 = vmatmul.mubr.f32.gmra.mrb[0].mxu0 %v2005
      %v2203 = vpop.f32.mrb[0].mxu0
      %v2204 = vadd.f32 0.0, %v2203
      %v2205 = vpop.f32.mrb[0].mxu0
      %2206 = vmatprep.mubr.f32.mxu0 0.0
      %2207 = vmatmul.mubr.f32.gmra.mrb[0].mxu0 %v2008
      %v2208 = vpop.f32.mrb[0].mxu0
      %v2209 = vadd.f32 0.0, %v2208
      %v2210 = vpop.f32.mrb[0].mxu0
      %2211 = vmatprep.mubr.f32.mxu0 0.0
      %2212 = vmatmul.mubr.f32.gmra.mrb[0].mxu0 %v2011
      %v2213 = vpop.f32.mrb[0].mxu0
      %v2214 = vadd.f32 0.0, %v2213
      %v2215 = vpop.f32.mrb[0].mxu0
      %2216 = vmatprep.mubr.f32.mxu0 0.0
      %2217 = vmatmul.mubr.f32.gmra.mrb[0].mxu0 %v2014
      %v2218 = vpop.f32.mrb[0].mxu0
      %v2219 = vadd.f32 0.0, %v2218
      %v2220 = vpop.f32.mrb[0].mxu0
      %2221 = vmatprep.mubr.f32.mxu0 0.0
      %2222 = vmatmul.mubr.f32.gmra.mrb[0].mxu0 %v2017
      %v2223 = vpop.f32.mrb[0].mxu0
      %v2224 = vadd.f32 0.0, %v2223
      %v2225 = vpop.f32.mrb[0].mxu0
      %2226 = vmatprep.mubr.f32.mxu0 0.0
      %2227 = vmatmul.mubr.f32.gmra.mrb[0].mxu0 %v2020
      %v2228 = vpop.f32.mrb[0].mxu0
      %v2229 = vadd.f32 0.0, %v2228
      %v2230 = vpop.f32.mrb[0].mxu0
      %2231 = vmatprep.mubr.f32.mxu0 0.0
      %2232 = vmatmul.mubr.f32.gmra.mrb[0].mxu0 %v2023
      %v2233 = vpop.f32.mrb[0].mxu0
      %v2234 = vadd.f32 0.0, %v2233
      %v2235 = vpop.f32.mrb[0].mxu0
      %2236 = vmatprep.mubr.f32.mxu0 0.0
      %2237 = vmatmul.mubr.f32.gmra.mrb[0].mxu0 %v2026
      %v2238 = vpop.f32.mrb[0].mxu0
      %v2239 = vadd.f32 0.0, %v2238
      %v2240 = vpop.f32.mrb[0].mxu0
      %2241 = vmatprep.mubr.f32.mxu0 0.0
      %2242 = vmatmul.mubr.f32.gmra.mrb[0].mxu0 %v2029
      %v2243 = vpop.f32.mrb[0].mxu0
      %v2244 = vadd.f32 0.0, %v2243
      %v2245 = vpop.f32.mrb[0].mxu0
      %2246 = vmatprep.mubr.f32.mxu0 0.0
      %2247 = vmatmul.mubr.f32.gmra.mrb[0].mxu0 %v2032
      %v2248 = vpop.f32.mrb[0].mxu0
      %v2249 = vadd.f32 0.0, %v2248
      %v2250 = vpop.f32.mrb[0].mxu0
      %2251 = vmatprep.mubr.f32.mxu0 0.0
      %2252 = vmatmul.mubr.f32.gmra.mrb[0].mxu0 %v2035
      %v2253 = vpop.f32.mrb[0].mxu0
      %v2254 = vadd.f32 0.0, %v2253
      %v2255 = vpop.f32.mrb[0].mxu0
      %2256 = vmatprep.mubr.f32.mxu0 0.0
      %2257 = vmatmul.mubr.f32.gmra.mrb[0].mxu0 %v2038
      %v2258 = vpop.f32.mrb[0].mxu0
      %v2259 = vadd.f32 0.0, %v2258
      %v2260 = vpop.f32.mrb[0].mxu0
      %2261 = vmatprep.mubr.f32.mxu0 0.0
      %2262 = vmatmul.mubr.f32.gmra.mrb[0].mxu0 %v2041
      %v2263 = vpop.f32.mrb[0].mxu0
      %v2264 = vadd.f32 0.0, %v2263
      %v2265 = vpop.f32.mrb[0].mxu0
      %2266 = vmatprep.mubr.f32.mxu0 0.0
      %2267 = vmatmul.mubr.f32.gmra.mrb[0].mxu0 %v2044
      %v2268 = vpop.f32.mrb[0].mxu0
      %v2269 = vadd.f32 0.0, %v2268
      %v2270 = vpop.f32.mrb[0].mxu0
      %2271 = vmatprep.mubr.f32.mxu0 0.0
      %2272 = vmatmul.mubr.f32.gmra.mrb[0].mxu0 %v2047
      %v2273 = vpop.f32.mrb[0].mxu0
      %v2274 = vadd.f32 0.0, %v2273
      %v2275 = vpop.f32.mrb[0].mxu0
      %2276 = vdwg.mxu0
      %v2277 = vadd.f32 %v1887, %v2119
      %v2278 = vadd.f32 %v1888, %v2124
      %v2279 = vadd.f32 %v1889, %v2129
      %v2280 = vadd.f32 %v1890, %v2134
      %v2281 = vadd.f32 %v1891, %v2139
      %v2282 = vadd.f32 %v1892, %v2144
      %v2283 = vadd.f32 %v1893, %v2149
      %v2284 = vadd.f32 %v1894, %v2154
      %v2285 = vadd.f32 %v1895, %v2159
      %v2286 = vadd.f32 %v1896, %v2164
      %v2287 = vadd.f32 %v1897, %v2169
      %v2288 = vadd.f32 %v1898, %v2174
      %v2289 = vadd.f32 %v1899, %v2179
      %v2290 = vadd.f32 %v1900, %v2184
      %v2291 = vadd.f32 %v1901, %v2189
      %v2292 = vadd.f32 %v1902, %v2194
      %v2293 = vadd.f32 %v1903, %v2199
      %v2294 = vadd.f32 %v1904, %v2204
      %v2295 = vadd.f32 %v1905, %v2209
      %v2296 = vadd.f32 %v1906, %v2214
      %v2297 = vadd.f32 %v1907, %v2219
      %v2298 = vadd.f32 %v1908, %v2224
      %v2299 = vadd.f32 %v1909, %v2229
      %v2300 = vadd.f32 %v1910, %v2234
      %v2301 = vadd.f32 %v1911, %v2239
      %v2302 = vadd.f32 %v1912, %v2244
      %v2303 = vadd.f32 %v1913, %v2249
      %v2304 = vadd.f32 %v1914, %v2254
      %v2305 = vadd.f32 %v1915, %v2259
      %v2306 = vadd.f32 %v1916, %v2264
      %v2307 = vadd.f32 %v1917, %v2269
      %v2308 = vadd.f32 %v1918, %v2274
      %v2309 = vld [vmem:[%s342] sm:$0xff]
      %v2310 = vld [vmem:[%s342 + $0x8] sm:$0xff]
      %v2311 = vld [vmem:[%s342 + $0x10] sm:$0xff]
      %v2312 = vld [vmem:[%s342 + $0x18] sm:$0xff]
      %v2313 = vld [vmem:[%s342 + $0x20] sm:$0xff]
      %v2314 = vld [vmem:[%s342 + $0x28] sm:$0xff]
      %v2315 = vld [vmem:[%s342 + $0x30] sm:$0xff]
      %v2316 = vld [vmem:[%s342 + $0x38] sm:$0xff]
      %v2317 = vld [vmem:[%s342 + $0x40] sm:$0xff]
      %v2318 = vld [vmem:[%s342 + $0x48] sm:$0xff]
      %v2319 = vld [vmem:[%s342 + $0x50] sm:$0xff]
      %v2320 = vld [vmem:[%s342 + $0x58] sm:$0xff]
      %v2321 = vld [vmem:[%s342 + $0x60] sm:$0xff]
      %v2322 = vld [vmem:[%s342 + $0x68] sm:$0xff]
      %v2323 = vld [vmem:[%s342 + $0x70] sm:$0xff]
      %v2324 = vld [vmem:[%s342 + $0x78] sm:$0xff]
      %v2325 = vld [vmem:[%s342 + $0x80] sm:$0xff]
      %v2326 = vld [vmem:[%s342 + $0x88] sm:$0xff]
      %v2327 = vld [vmem:[%s342 + $0x90] sm:$0xff]
      %v2328 = vld [vmem:[%s342 + $0x98] sm:$0xff]
      %v2329 = vld [vmem:[%s342 + $0xa0] sm:$0xff]
      %v2330 = vld [vmem:[%s342 + $0xa8] sm:$0xff]
      %v2331 = vld [vmem:[%s342 + $0xb0] sm:$0xff]
      %v2332 = vld [vmem:[%s342 + $0xb8] sm:$0xff]
      %v2333 = vld [vmem:[%s342 + $0xc0] sm:$0xff]
      %v2334 = vld [vmem:[%s342 + $0xc8] sm:$0xff]
      %v2335 = vld [vmem:[%s342 + $0xd0] sm:$0xff]
      %v2336 = vld [vmem:[%s342 + $0xd8] sm:$0xff]
      %v2337 = vld [vmem:[%s342 + $0xe0] sm:$0xff]
      %v2338 = vld [vmem:[%s342 + $0xe8] sm:$0xff]
      %v2339 = vld [vmem:[%s342 + $0xf0] sm:$0xff]
      %v2340 = vld [vmem:[%s342 + $0xf8] sm:$0xff]
      %s2341 = scalar_lea.vmem %s1, 20
      %v2342 = vld [vmem:[%s2341] sm:$0xf]
      %v2344 = vsel %vm258, %v2309, 0
      %v2347 = vsel %vm258, %v2310, 0
      %v2350 = vsel %vm258, %v2311, 0
      %v2353 = vsel %vm258, %v2312, 0
      %v2356 = vsel %vm258, %v2313, 0
      %v2359 = vsel %vm258, %v2314, 0
      %v2362 = vsel %vm258, %v2315, 0
      %v2365 = vsel %vm258, %v2316, 0
      %v2368 = vsel %vm258, %v2317, 0
      %v2371 = vsel %vm258, %v2318, 0
      %v2374 = vsel %vm258, %v2319, 0
      %v2377 = vsel %vm258, %v2320, 0
      %v2380 = vsel %vm258, %v2321, 0
      %v2383 = vsel %vm258, %v2322, 0
      %v2386 = vsel %vm258, %v2323, 0
      %v2389 = vsel %vm258, %v2324, 0
      %v2392 = vsel %vm258, %v2325, 0
      %v2395 = vsel %vm258, %v2326, 0
      %v2398 = vsel %vm258, %v2327, 0
      %v2401 = vsel %vm258, %v2328, 0
      %v2404 = vsel %vm258, %v2329, 0
      %v2407 = vsel %vm258, %v2330, 0
      %v2410 = vsel %vm258, %v2331, 0
      %v2413 = vsel %vm258, %v2332, 0
      %v2416 = vsel %vm258, %v2333, 0
      %v2419 = vsel %vm258, %v2334, 0
      %v2422 = vsel %vm258, %v2335, 0
      %v2425 = vsel %vm258, %v2336, 0
      %v2428 = vsel %vm258, %v2337, 0
      %v2431 = vsel %vm258, %v2338, 0
      %v2434 = vsel %vm258, %v2339, 0
      %v2437 = vsel %vm258, %v2340, 0
      %v2440 = vsel %vm585, %v2342, 0
      %2442 = vmatprep.subr.mxu0 0.0
      %2443 = vmatpush1.msra.mxu0 %v2440
      %2444 = vmatprep.subr.mxu0 0.0
      %2445 = vmatpush1.msra.mxu0 0.0
      %2446 = vmatprep.subr.mxu0 0.0
      %2447 = vmatpush1.msra.mxu0 0.0
      %2448 = vmatprep.subr.mxu0 0.0
      %2449 = vmatpush1.msra.mxu0 0.0
      %2450 = vmatprep.subr.mxu0 0.0
      %2451 = vmatpush1.msra.mxu0 0.0
      %2452 = vmatprep.subr.mxu0 0.0
      %2453 = vmatpush1.msra.mxu0 0.0
      %2454 = vmatprep.subr.mxu0 0.0
      %2455 = vmatpush1.msra.mxu0 0.0
      %2456 = vmatprep.subr.mxu0 0.0
      %2457 = vmatpush1.msra.mxu0 0.0
      %2458 = vmatprep.subr.mxu0 0.0
      %2459 = vmatpush1.msra.mxu0 0.0
      %2460 = vmatprep.subr.mxu0 0.0
      %2461 = vmatpush1.msra.mxu0 0.0
      %2462 = vmatprep.subr.mxu0 0.0
      %2463 = vmatpush1.msra.mxu0 0.0
      %2464 = vmatprep.subr.mxu0 0.0
      %2465 = vmatpush1.msra.mxu0 0.0
      %2466 = vmatprep.subr.mxu0 0.0
      %2467 = vmatpush1.msra.mxu0 0.0
      %2468 = vmatprep.subr.mxu0 0.0
      %2469 = vmatpush1.msra.mxu0 0.0
      %2470 = vmatprep.subr.mxu0 0.0
      %2471 = vmatpush1.msra.mxu0 0.0
      %2472 = vmatprep.subr.mxu0 0.0
      %2473 = vmatpush1.msra.mxu0 0.0
      %2474 = vmatprep.subr.mxu0 0.0
      %2475 = vmatpush1.msra.mxu0 0.0
      %2476 = vmatprep.subr.mxu0 0.0
      %2477 = vmatpush1.msra.mxu0 0.0
      %2478 = vmatprep.subr.mxu0 0.0
      %2479 = vmatpush1.msra.mxu0 0.0
      %2480 = vmatprep.subr.mxu0 0.0
      %2481 = vmatpush1.msra.mxu0 0.0
      %2482 = vmatprep.subr.mxu0 0.0
      %2483 = vmatpush1.msra.mxu0 0.0
      %2484 = vmatprep.subr.mxu0 0.0
      %2485 = vmatpush1.msra.mxu0 0.0
      %2486 = vmatprep.subr.mxu0 0.0
      %2487 = vmatpush1.msra.mxu0 0.0
      %2488 = vmatprep.subr.mxu0 0.0
      %2489 = vmatpush1.msra.mxu0 0.0
      %2490 = vmatprep.subr.mxu0 0.0
      %2491 = vmatpush1.msra.mxu0 0.0
      %2492 = vmatprep.subr.mxu0 0.0
      %2493 = vmatpush1.msra.mxu0 0.0
      %2494 = vmatprep.subr.mxu0 0.0
      %2495 = vmatpush1.msra.mxu0 0.0
      %2496 = vmatprep.subr.mxu0 0.0
      %2497 = vmatpush1.msra.mxu0 0.0
      %2498 = vmatprep.subr.mxu0 0.0
      %2499 = vmatpush1.msra.mxu0 0.0
      %2500 = vmatprep.subr.mxu0 0.0
      %2501 = vmatpush1.msra.mxu0 0.0
      %2502 = vmatprep.subr.mxu0 0.0
      %2503 = vmatpush1.msra.mxu0 0.0
      %2504 = vmatprep.subr.mxu0 0.0
      %2505 = vmatpush1.msra.mxu0 0.0
      %2506 = vmatprep.mubr.f32.mxu0 0.0
      %2507 = vmatmul.mubr.f32.gmra.mrb[0].mxu0 %v2344
      %v2508 = vpop.f32.mrb[0].mxu0
      %v2509 = vadd.f32 0.0, %v2508
      %v2510 = vpop.f32.mrb[0].mxu0
      %2511 = vmatprep.mubr.f32.mxu0 0.0
      %2512 = vmatmul.mubr.f32.gmra.mrb[0].mxu0 %v2347
      %v2513 = vpop.f32.mrb[0].mxu0
      %v2514 = vadd.f32 0.0, %v2513
      %v2515 = vpop.f32.mrb[0].mxu0
      %2516 = vmatprep.mubr.f32.mxu0 0.0
      %2517 = vmatmul.mubr.f32.gmra.mrb[0].mxu0 %v2350
      %v2518 = vpop.f32.mrb[0].mxu0
      %v2519 = vadd.f32 0.0, %v2518
      %v2520 = vpop.f32.mrb[0].mxu0
      %2521 = vmatprep.mubr.f32.mxu0 0.0
      %2522 = vmatmul.mubr.f32.gmra.mrb[0].mxu0 %v2353
      %v2523 = vpop.f32.mrb[0].mxu0
      %v2524 = vadd.f32 0.0, %v2523
      %v2525 = vpop.f32.mrb[0].mxu0
      %2526 = vmatprep.mubr.f32.mxu0 0.0
      %2527 = vmatmul.mubr.f32.gmra.mrb[0].mxu0 %v2356
      %v2528 = vpop.f32.mrb[0].mxu0
      %v2529 = vadd.f32 0.0, %v2528
      %v2530 = vpop.f32.mrb[0].mxu0
      %2531 = vmatprep.mubr.f32.mxu0 0.0
      %2532 = vmatmul.mubr.f32.gmra.mrb[0].mxu0 %v2359
      %v2533 = vpop.f32.mrb[0].mxu0
      %v2534 = vadd.f32 0.0, %v2533
      %v2535 = vpop.f32.mrb[0].mxu0
      %2536 = vmatprep.mubr.f32.mxu0 0.0
      %2537 = vmatmul.mubr.f32.gmra.mrb[0].mxu0 %v2362
      %v2538 = vpop.f32.mrb[0].mxu0
      %v2539 = vadd.f32 0.0, %v2538
      %v2540 = vpop.f32.mrb[0].mxu0
      %2541 = vmatprep.mubr.f32.mxu0 0.0
      %2542 = vmatmul.mubr.f32.gmra.mrb[0].mxu0 %v2365
      %v2543 = vpop.f32.mrb[0].mxu0
      %v2544 = vadd.f32 0.0, %v2543
      %v2545 = vpop.f32.mrb[0].mxu0
      %2546 = vmatprep.mubr.f32.mxu0 0.0
      %2547 = vmatmul.mubr.f32.gmra.mrb[0].mxu0 %v2368
      %v2548 = vpop.f32.mrb[0].mxu0
      %v2549 = vadd.f32 0.0, %v2548
      %v2550 = vpop.f32.mrb[0].mxu0
      %2551 = vmatprep.mubr.f32.mxu0 0.0
      %2552 = vmatmul.mubr.f32.gmra.mrb[0].mxu0 %v2371
      %v2553 = vpop.f32.mrb[0].mxu0
      %v2554 = vadd.f32 0.0, %v2553
      %v2555 = vpop.f32.mrb[0].mxu0
      %2556 = vmatprep.mubr.f32.mxu0 0.0
      %2557 = vmatmul.mubr.f32.gmra.mrb[0].mxu0 %v2374
      %v2558 = vpop.f32.mrb[0].mxu0
      %v2559 = vadd.f32 0.0, %v2558
      %v2560 = vpop.f32.mrb[0].mxu0
      %2561 = vmatprep.mubr.f32.mxu0 0.0
      %2562 = vmatmul.mubr.f32.gmra.mrb[0].mxu0 %v2377
      %v2563 = vpop.f32.mrb[0].mxu0
      %v2564 = vadd.f32 0.0, %v2563
      %v2565 = vpop.f32.mrb[0].mxu0
      %2566 = vmatprep.mubr.f32.mxu0 0.0
      %2567 = vmatmul.mubr.f32.gmra.mrb[0].mxu0 %v2380
      %v2568 = vpop.f32.mrb[0].mxu0
      %v2569 = vadd.f32 0.0, %v2568
      %v2570 = vpop.f32.mrb[0].mxu0
      %2571 = vmatprep.mubr.f32.mxu0 0.0
      %2572 = vmatmul.mubr.f32.gmra.mrb[0].mxu0 %v2383
      %v2573 = vpop.f32.mrb[0].mxu0
      %v2574 = vadd.f32 0.0, %v2573
      %v2575 = vpop.f32.mrb[0].mxu0
      %2576 = vmatprep.mubr.f32.mxu0 0.0
      %2577 = vmatmul.mubr.f32.gmra.mrb[0].mxu0 %v2386
      %v2578 = vpop.f32.mrb[0].mxu0
      %v2579 = vadd.f32 0.0, %v2578
      %v2580 = vpop.f32.mrb[0].mxu0
      %2581 = vmatprep.mubr.f32.mxu0 0.0
      %2582 = vmatmul.mubr.f32.gmra.mrb[0].mxu0 %v2389
      %v2583 = vpop.f32.mrb[0].mxu0
      %v2584 = vadd.f32 0.0, %v2583
      %v2585 = vpop.f32.mrb[0].mxu0
      %2586 = vmatprep.mubr.f32.mxu0 0.0
      %2587 = vmatmul.mubr.f32.gmra.mrb[0].mxu0 %v2392
      %v2588 = vpop.f32.mrb[0].mxu0
      %v2589 = vadd.f32 0.0, %v2588
      %v2590 = vpop.f32.mrb[0].mxu0
      %2591 = vmatprep.mubr.f32.mxu0 0.0
      %2592 = vmatmul.mubr.f32.gmra.mrb[0].mxu0 %v2395
      %v2593 = vpop.f32.mrb[0].mxu0
      %v2594 = vadd.f32 0.0, %v2593
      %v2595 = vpop.f32.mrb[0].mxu0
      %2596 = vmatprep.mubr.f32.mxu0 0.0
      %2597 = vmatmul.mubr.f32.gmra.mrb[0].mxu0 %v2398
      %v2598 = vpop.f32.mrb[0].mxu0
      %v2599 = vadd.f32 0.0, %v2598
      %v2600 = vpop.f32.mrb[0].mxu0
      %2601 = vmatprep.mubr.f32.mxu0 0.0
      %2602 = vmatmul.mubr.f32.gmra.mrb[0].mxu0 %v2401
      %v2603 = vpop.f32.mrb[0].mxu0
      %v2604 = vadd.f32 0.0, %v2603
      %v2605 = vpop.f32.mrb[0].mxu0
      %2606 = vmatprep.mubr.f32.mxu0 0.0
      %2607 = vmatmul.mubr.f32.gmra.mrb[0].mxu0 %v2404
      %v2608 = vpop.f32.mrb[0].mxu0
      %v2609 = vadd.f32 0.0, %v2608
      %v2610 = vpop.f32.mrb[0].mxu0
      %2611 = vmatprep.mubr.f32.mxu0 0.0
      %2612 = vmatmul.mubr.f32.gmra.mrb[0].mxu0 %v2407
      %v2613 = vpop.f32.mrb[0].mxu0
      %v2614 = vadd.f32 0.0, %v2613
      %v2615 = vpop.f32.mrb[0].mxu0
      %2616 = vmatprep.mubr.f32.mxu0 0.0
      %2617 = vmatmul.mubr.f32.gmra.mrb[0].mxu0 %v2410
      %v2618 = vpop.f32.mrb[0].mxu0
      %v2619 = vadd.f32 0.0, %v2618
      %v2620 = vpop.f32.mrb[0].mxu0
      %2621 = vmatprep.mubr.f32.mxu0 0.0
      %2622 = vmatmul.mubr.f32.gmra.mrb[0].mxu0 %v2413
      %v2623 = vpop.f32.mrb[0].mxu0
      %v2624 = vadd.f32 0.0, %v2623
      %v2625 = vpop.f32.mrb[0].mxu0
      %2626 = vmatprep.mubr.f32.mxu0 0.0
      %2627 = vmatmul.mubr.f32.gmra.mrb[0].mxu0 %v2416
      %v2628 = vpop.f32.mrb[0].mxu0
      %v2629 = vadd.f32 0.0, %v2628
      %v2630 = vpop.f32.mrb[0].mxu0
      %2631 = vmatprep.mubr.f32.mxu0 0.0
      %2632 = vmatmul.mubr.f32.gmra.mrb[0].mxu0 %v2419
      %v2633 = vpop.f32.mrb[0].mxu0
      %v2634 = vadd.f32 0.0, %v2633
      %v2635 = vpop.f32.mrb[0].mxu0
      %2636 = vmatprep.mubr.f32.mxu0 0.0
      %2637 = vmatmul.mubr.f32.gmra.mrb[0].mxu0 %v2422
      %v2638 = vpop.f32.mrb[0].mxu0
      %v2639 = vadd.f32 0.0, %v2638
      %v2640 = vpop.f32.mrb[0].mxu0
      %2641 = vmatprep.mubr.f32.mxu0 0.0
      %2642 = vmatmul.mubr.f32.gmra.mrb[0].mxu0 %v2425
      %v2643 = vpop.f32.mrb[0].mxu0
      %v2644 = vadd.f32 0.0, %v2643
      %v2645 = vpop.f32.mrb[0].mxu0
      %2646 = vmatprep.mubr.f32.mxu0 0.0
      %2647 = vmatmul.mubr.f32.gmra.mrb[0].mxu0 %v2428
      %v2648 = vpop.f32.mrb[0].mxu0
      %v2649 = vadd.f32 0.0, %v2648
      %v2650 = vpop.f32.mrb[0].mxu0
      %2651 = vmatprep.mubr.f32.mxu0 0.0
      %2652 = vmatmul.mubr.f32.gmra.mrb[0].mxu0 %v2431
      %v2653 = vpop.f32.mrb[0].mxu0
      %v2654 = vadd.f32 0.0, %v2653
      %v2655 = vpop.f32.mrb[0].mxu0
      %2656 = vmatprep.mubr.f32.mxu0 0.0
      %2657 = vmatmul.mubr.f32.gmra.mrb[0].mxu0 %v2434
      %v2658 = vpop.f32.mrb[0].mxu0
      %v2659 = vadd.f32 0.0, %v2658
      %v2660 = vpop.f32.mrb[0].mxu0
      %2661 = vmatprep.mubr.f32.mxu0 0.0
      %2662 = vmatmul.mubr.f32.gmra.mrb[0].mxu0 %v2437
      %v2663 = vpop.f32.mrb[0].mxu0
      %v2664 = vadd.f32 0.0, %v2663
      %v2665 = vpop.f32.mrb[0].mxu0
      %2666 = vdwg.mxu0
      %v2667 = vadd.f32 %v2277, %v2509
      %v2668 = vadd.f32 %v2278, %v2514
      %v2669 = vadd.f32 %v2279, %v2519
      %v2670 = vadd.f32 %v2280, %v2524
      %v2671 = vadd.f32 %v2281, %v2529
      %v2672 = vadd.f32 %v2282, %v2534
      %v2673 = vadd.f32 %v2283, %v2539
      %v2674 = vadd.f32 %v2284, %v2544
      %v2675 = vadd.f32 %v2285, %v2549
      %v2676 = vadd.f32 %v2286, %v2554
      %v2677 = vadd.f32 %v2287, %v2559
      %v2678 = vadd.f32 %v2288, %v2564
      %v2679 = vadd.f32 %v2289, %v2569
      %v2680 = vadd.f32 %v2290, %v2574
      %v2681 = vadd.f32 %v2291, %v2579
      %v2682 = vadd.f32 %v2292, %v2584
      %v2683 = vadd.f32 %v2293, %v2589
      %v2684 = vadd.f32 %v2294, %v2594
      %v2685 = vadd.f32 %v2295, %v2599
      %v2686 = vadd.f32 %v2296, %v2604
      %v2687 = vadd.f32 %v2297, %v2609
      %v2688 = vadd.f32 %v2298, %v2614
      %v2689 = vadd.f32 %v2299, %v2619
      %v2690 = vadd.f32 %v2300, %v2624
      %v2691 = vadd.f32 %v2301, %v2629
      %v2692 = vadd.f32 %v2302, %v2634
      %v2693 = vadd.f32 %v2303, %v2639
      %v2694 = vadd.f32 %v2304, %v2644
      %v2695 = vadd.f32 %v2305, %v2649
      %v2696 = vadd.f32 %v2306, %v2654
      %v2697 = vadd.f32 %v2307, %v2659
      %v2698 = vadd.f32 %v2308, %v2664
      %v2699 = vld [vmem:[%s393] sm:$0xff]
      %v2700 = vld [vmem:[%s393 + $0x8] sm:$0xff]
      %v2701 = vld [vmem:[%s393 + $0x10] sm:$0xff]
      %v2702 = vld [vmem:[%s393 + $0x18] sm:$0xff]
      %v2703 = vld [vmem:[%s393 + $0x20] sm:$0xff]
      %v2704 = vld [vmem:[%s393 + $0x28] sm:$0xff]
      %v2705 = vld [vmem:[%s393 + $0x30] sm:$0xff]
      %v2706 = vld [vmem:[%s393 + $0x38] sm:$0xff]
      %v2707 = vld [vmem:[%s393 + $0x40] sm:$0xff]
      %v2708 = vld [vmem:[%s393 + $0x48] sm:$0xff]
      %v2709 = vld [vmem:[%s393 + $0x50] sm:$0xff]
      %v2710 = vld [vmem:[%s393 + $0x58] sm:$0xff]
      %v2711 = vld [vmem:[%s393 + $0x60] sm:$0xff]
      %v2712 = vld [vmem:[%s393 + $0x68] sm:$0xff]
      %v2713 = vld [vmem:[%s393 + $0x70] sm:$0xff]
      %v2714 = vld [vmem:[%s393 + $0x78] sm:$0xff]
      %v2715 = vld [vmem:[%s393 + $0x80] sm:$0xff]
      %v2716 = vld [vmem:[%s393 + $0x88] sm:$0xff]
      %v2717 = vld [vmem:[%s393 + $0x90] sm:$0xff]
      %v2718 = vld [vmem:[%s393 + $0x98] sm:$0xff]
      %v2719 = vld [vmem:[%s393 + $0xa0] sm:$0xff]
      %v2720 = vld [vmem:[%s393 + $0xa8] sm:$0xff]
      %v2721 = vld [vmem:[%s393 + $0xb0] sm:$0xff]
      %v2722 = vld [vmem:[%s393 + $0xb8] sm:$0xff]
      %v2723 = vld [vmem:[%s393 + $0xc0] sm:$0xff]
      %v2724 = vld [vmem:[%s393 + $0xc8] sm:$0xff]
      %v2725 = vld [vmem:[%s393 + $0xd0] sm:$0xff]
      %v2726 = vld [vmem:[%s393 + $0xd8] sm:$0xff]
      %v2727 = vld [vmem:[%s393 + $0xe0] sm:$0xff]
      %v2728 = vld [vmem:[%s393 + $0xe8] sm:$0xff]
      %v2729 = vld [vmem:[%s393 + $0xf0] sm:$0xff]
      %v2730 = vld [vmem:[%s393 + $0xf8] sm:$0xff]
      %s2731 = scalar_lea.vmem %s1, 24
      %v2732 = vld [vmem:[%s2731] sm:$0xf]
      %v2734 = vsel %vm258, %v2699, 0
      %v2737 = vsel %vm258, %v2700, 0
      %v2740 = vsel %vm258, %v2701, 0
      %v2743 = vsel %vm258, %v2702, 0
      %v2746 = vsel %vm258, %v2703, 0
      %v2749 = vsel %vm258, %v2704, 0
      %v2752 = vsel %vm258, %v2705, 0
      %v2755 = vsel %vm258, %v2706, 0
      %v2758 = vsel %vm258, %v2707, 0
      %v2761 = vsel %vm258, %v2708, 0
      %v2764 = vsel %vm258, %v2709, 0
      %v2767 = vsel %vm258, %v2710, 0
      %v2770 = vsel %vm258, %v2711, 0
      %v2773 = vsel %vm258, %v2712, 0
      %v2776 = vsel %vm258, %v2713, 0
      %v2779 = vsel %vm258, %v2714, 0
      %v2782 = vsel %vm258, %v2715, 0
      %v2785 = vsel %vm258, %v2716, 0
      %v2788 = vsel %vm258, %v2717, 0
      %v2791 = vsel %vm258, %v2718, 0
      %v2794 = vsel %vm258, %v2719, 0
      %v2797 = vsel %vm258, %v2720, 0
      %v2800 = vsel %vm258, %v2721, 0
      %v2803 = vsel %vm258, %v2722, 0
      %v2806 = vsel %vm258, %v2723, 0
      %v2809 = vsel %vm258, %v2724, 0
      %v2812 = vsel %vm258, %v2725, 0
      %v2815 = vsel %vm258, %v2726, 0
      %v2818 = vsel %vm258, %v2727, 0
      %v2821 = vsel %vm258, %v2728, 0
      %v2824 = vsel %vm258, %v2729, 0
      %v2827 = vsel %vm258, %v2730, 0
      %v2830 = vsel %vm585, %v2732, 0
      %2832 = vmatprep.subr.mxu0 0.0
      %2833 = vmatpush1.msra.mxu0 %v2830
      %2834 = vmatprep.subr.mxu0 0.0
      %2835 = vmatpush1.msra.mxu0 0.0
      %2836 = vmatprep.subr.mxu0 0.0
      %2837 = vmatpush1.msra.mxu0 0.0
      %2838 = vmatprep.subr.mxu0 0.0
      %2839 = vmatpush1.msra.mxu0 0.0
      %2840 = vmatprep.subr.mxu0 0.0
      %2841 = vmatpush1.msra.mxu0 0.0
      %2842 = vmatprep.subr.mxu0 0.0
      %2843 = vmatpush1.msra.mxu0 0.0
      %2844 = vmatprep.subr.mxu0 0.0
      %2845 = vmatpush1.msra.mxu0 0.0
      %2846 = vmatprep.subr.mxu0 0.0
      %2847 = vmatpush1.msra.mxu0 0.0
      %2848 = vmatprep.subr.mxu0 0.0
      %2849 = vmatpush1.msra.mxu0 0.0
      %2850 = vmatprep.subr.mxu0 0.0
      %2851 = vmatpush1.msra.mxu0 0.0
      %2852 = vmatprep.subr.mxu0 0.0
      %2853 = vmatpush1.msra.mxu0 0.0
      %2854 = vmatprep.subr.mxu0 0.0
      %2855 = vmatpush1.msra.mxu0 0.0
      %2856 = vmatprep.subr.mxu0 0.0
      %2857 = vmatpush1.msra.mxu0 0.0
      %2858 = vmatprep.subr.mxu0 0.0
      %2859 = vmatpush1.msra.mxu0 0.0
      %2860 = vmatprep.subr.mxu0 0.0
      %2861 = vmatpush1.msra.mxu0 0.0
      %2862 = vmatprep.subr.mxu0 0.0
      %2863 = vmatpush1.msra.mxu0 0.0
      %2864 = vmatprep.subr.mxu0 0.0
      %2865 = vmatpush1.msra.mxu0 0.0
      %2866 = vmatprep.subr.mxu0 0.0
      %2867 = vmatpush1.msra.mxu0 0.0
      %2868 = vmatprep.subr.mxu0 0.0
      %2869 = vmatpush1.msra.mxu0 0.0
      %2870 = vmatprep.subr.mxu0 0.0
      %2871 = vmatpush1.msra.mxu0 0.0
      %2872 = vmatprep.subr.mxu0 0.0
      %2873 = vmatpush1.msra.mxu0 0.0
      %2874 = vmatprep.subr.mxu0 0.0
      %2875 = vmatpush1.msra.mxu0 0.0
      %2876 = vmatprep.subr.mxu0 0.0
      %2877 = vmatpush1.msra.mxu0 0.0
      %2878 = vmatprep.subr.mxu0 0.0
      %2879 = vmatpush1.msra.mxu0 0.0
      %2880 = vmatprep.subr.mxu0 0.0
      %2881 = vmatpush1.msra.mxu0 0.0
      %2882 = vmatprep.subr.mxu0 0.0
      %2883 = vmatpush1.msra.mxu0 0.0
      %2884 = vmatprep.subr.mxu0 0.0
      %2885 = vmatpush1.msra.mxu0 0.0
      %2886 = vmatprep.subr.mxu0 0.0
      %2887 = vmatpush1.msra.mxu0 0.0
      %2888 = vmatprep.subr.mxu0 0.0
      %2889 = vmatpush1.msra.mxu0 0.0
      %2890 = vmatprep.subr.mxu0 0.0
      %2891 = vmatpush1.msra.mxu0 0.0
      %2892 = vmatprep.subr.mxu0 0.0
      %2893 = vmatpush1.msra.mxu0 0.0
      %2894 = vmatprep.subr.mxu0 0.0
      %2895 = vmatpush1.msra.mxu0 0.0
      %2896 = vmatprep.mubr.f32.mxu0 0.0
      %2897 = vmatmul.mubr.f32.gmra.mrb[0].mxu0 %v2734
      %v2898 = vpop.f32.mrb[0].mxu0
      %v2899 = vadd.f32 0.0, %v2898
      %v2900 = vpop.f32.mrb[0].mxu0
      %2901 = vmatprep.mubr.f32.mxu0 0.0
      %2902 = vmatmul.mubr.f32.gmra.mrb[0].mxu0 %v2737
      %v2903 = vpop.f32.mrb[0].mxu0
      %v2904 = vadd.f32 0.0, %v2903
      %v2905 = vpop.f32.mrb[0].mxu0
      %2906 = vmatprep.mubr.f32.mxu0 0.0
      %2907 = vmatmul.mubr.f32.gmra.mrb[0].mxu0 %v2740
      %v2908 = vpop.f32.mrb[0].mxu0
      %v2909 = vadd.f32 0.0, %v2908
      %v2910 = vpop.f32.mrb[0].mxu0
      %2911 = vmatprep.mubr.f32.mxu0 0.0
      %2912 = vmatmul.mubr.f32.gmra.mrb[0].mxu0 %v2743
      %v2913 = vpop.f32.mrb[0].mxu0
      %v2914 = vadd.f32 0.0, %v2913
      %v2915 = vpop.f32.mrb[0].mxu0
      %2916 = vmatprep.mubr.f32.mxu0 0.0
      %2917 = vmatmul.mubr.f32.gmra.mrb[0].mxu0 %v2746
      %v2918 = vpop.f32.mrb[0].mxu0
      %v2919 = vadd.f32 0.0, %v2918
      %v2920 = vpop.f32.mrb[0].mxu0
      %2921 = vmatprep.mubr.f32.mxu0 0.0
      %2922 = vmatmul.mubr.f32.gmra.mrb[0].mxu0 %v2749
      %v2923 = vpop.f32.mrb[0].mxu0
      %v2924 = vadd.f32 0.0, %v2923
      %v2925 = vpop.f32.mrb[0].mxu0
      %2926 = vmatprep.mubr.f32.mxu0 0.0
      %2927 = vmatmul.mubr.f32.gmra.mrb[0].mxu0 %v2752
      %v2928 = vpop.f32.mrb[0].mxu0
      %v2929 = vadd.f32 0.0, %v2928
      %v2930 = vpop.f32.mrb[0].mxu0
      %2931 = vmatprep.mubr.f32.mxu0 0.0
      %2932 = vmatmul.mubr.f32.gmra.mrb[0].mxu0 %v2755
      %v2933 = vpop.f32.mrb[0].mxu0
      %v2934 = vadd.f32 0.0, %v2933
      %v2935 = vpop.f32.mrb[0].mxu0
      %2936 = vmatprep.mubr.f32.mxu0 0.0
      %2937 = vmatmul.mubr.f32.gmra.mrb[0].mxu0 %v2758
      %v2938 = vpop.f32.mrb[0].mxu0
      %v2939 = vadd.f32 0.0, %v2938
      %v2940 = vpop.f32.mrb[0].mxu0
      %2941 = vmatprep.mubr.f32.mxu0 0.0
      %2942 = vmatmul.mubr.f32.gmra.mrb[0].mxu0 %v2761
      %v2943 = vpop.f32.mrb[0].mxu0
      %v2944 = vadd.f32 0.0, %v2943
      %v2945 = vpop.f32.mrb[0].mxu0
      %2946 = vmatprep.mubr.f32.mxu0 0.0
      %2947 = vmatmul.mubr.f32.gmra.mrb[0].mxu0 %v2764
      %v2948 = vpop.f32.mrb[0].mxu0
      %v2949 = vadd.f32 0.0, %v2948
      %v2950 = vpop.f32.mrb[0].mxu0
      %2951 = vmatprep.mubr.f32.mxu0 0.0
      %2952 = vmatmul.mubr.f32.gmra.mrb[0].mxu0 %v2767
      %v2953 = vpop.f32.mrb[0].mxu0
      %v2954 = vadd.f32 0.0, %v2953
      %v2955 = vpop.f32.mrb[0].mxu0
      %2956 = vmatprep.mubr.f32.mxu0 0.0
      %2957 = vmatmul.mubr.f32.gmra.mrb[0].mxu0 %v2770
      %v2958 = vpop.f32.mrb[0].mxu0
      %v2959 = vadd.f32 0.0, %v2958
      %v2960 = vpop.f32.mrb[0].mxu0
      %2961 = vmatprep.mubr.f32.mxu0 0.0
      %2962 = vmatmul.mubr.f32.gmra.mrb[0].mxu0 %v2773
      %v2963 = vpop.f32.mrb[0].mxu0
      %v2964 = vadd.f32 0.0, %v2963
      %v2965 = vpop.f32.mrb[0].mxu0
      %2966 = vmatprep.mubr.f32.mxu0 0.0
      %2967 = vmatmul.mubr.f32.gmra.mrb[0].mxu0 %v2776
      %v2968 = vpop.f32.mrb[0].mxu0
      %v2969 = vadd.f32 0.0, %v2968
      %v2970 = vpop.f32.mrb[0].mxu0
      %2971 = vmatprep.mubr.f32.mxu0 0.0
      %2972 = vmatmul.mubr.f32.gmra.mrb[0].mxu0 %v2779
      %v2973 = vpop.f32.mrb[0].mxu0
      %v2974 = vadd.f32 0.0, %v2973
      %v2975 = vpop.f32.mrb[0].mxu0
      %2976 = vmatprep.mubr.f32.mxu0 0.0
      %2977 = vmatmul.mubr.f32.gmra.mrb[0].mxu0 %v2782
      %v2978 = vpop.f32.mrb[0].mxu0
      %v2979 = vadd.f32 0.0, %v2978
      %v2980 = vpop.f32.mrb[0].mxu0
      %2981 = vmatprep.mubr.f32.mxu0 0.0
      %2982 = vmatmul.mubr.f32.gmra.mrb[0].mxu0 %v2785
      %v2983 = vpop.f32.mrb[0].mxu0
      %v2984 = vadd.f32 0.0, %v2983
      %v2985 = vpop.f32.mrb[0].mxu0
      %2986 = vmatprep.mubr.f32.mxu0 0.0
      %2987 = vmatmul.mubr.f32.gmra.mrb[0].mxu0 %v2788
      %v2988 = vpop.f32.mrb[0].mxu0
      %v2989 = vadd.f32 0.0, %v2988
      %v2990 = vpop.f32.mrb[0].mxu0
      %2991 = vmatprep.mubr.f32.mxu0 0.0
      %2992 = vmatmul.mubr.f32.gmra.mrb[0].mxu0 %v2791
      %v2993 = vpop.f32.mrb[0].mxu0
      %v2994 = vadd.f32 0.0, %v2993
      %v2995 = vpop.f32.mrb[0].mxu0
      %2996 = vmatprep.mubr.f32.mxu0 0.0
      %2997 = vmatmul.mubr.f32.gmra.mrb[0].mxu0 %v2794
      %v2998 = vpop.f32.mrb[0].mxu0
      %v2999 = vadd.f32 0.0, %v2998
      %v3000 = vpop.f32.mrb[0].mxu0
      %3001 = vmatprep.mubr.f32.mxu0 0.0
      %3002 = vmatmul.mubr.f32.gmra.mrb[0].mxu0 %v2797
      %v3003 = vpop.f32.mrb[0].mxu0
      %v3004 = vadd.f32 0.0, %v3003
      %v3005 = vpop.f32.mrb[0].mxu0
      %3006 = vmatprep.mubr.f32.mxu0 0.0
      %3007 = vmatmul.mubr.f32.gmra.mrb[0].mxu0 %v2800
      %v3008 = vpop.f32.mrb[0].mxu0
      %v3009 = vadd.f32 0.0, %v3008
      %v3010 = vpop.f32.mrb[0].mxu0
      %3011 = vmatprep.mubr.f32.mxu0 0.0
      %3012 = vmatmul.mubr.f32.gmra.mrb[0].mxu0 %v2803
      %v3013 = vpop.f32.mrb[0].mxu0
      %v3014 = vadd.f32 0.0, %v3013
      %v3015 = vpop.f32.mrb[0].mxu0
      %3016 = vmatprep.mubr.f32.mxu0 0.0
      %3017 = vmatmul.mubr.f32.gmra.mrb[0].mxu0 %v2806
      %v3018 = vpop.f32.mrb[0].mxu0
      %v3019 = vadd.f32 0.0, %v3018
      %v3020 = vpop.f32.mrb[0].mxu0
      %3021 = vmatprep.mubr.f32.mxu0 0.0
      %3022 = vmatmul.mubr.f32.gmra.mrb[0].mxu0 %v2809
      %v3023 = vpop.f32.mrb[0].mxu0
      %v3024 = vadd.f32 0.0, %v3023
      %v3025 = vpop.f32.mrb[0].mxu0
      %3026 = vmatprep.mubr.f32.mxu0 0.0
      %3027 = vmatmul.mubr.f32.gmra.mrb[0].mxu0 %v2812
      %v3028 = vpop.f32.mrb[0].mxu0
      %v3029 = vadd.f32 0.0, %v3028
      %v3030 = vpop.f32.mrb[0].mxu0
      %3031 = vmatprep.mubr.f32.mxu0 0.0
      %3032 = vmatmul.mubr.f32.gmra.mrb[0].mxu0 %v2815
      %v3033 = vpop.f32.mrb[0].mxu0
      %v3034 = vadd.f32 0.0, %v3033
      %v3035 = vpop.f32.mrb[0].mxu0
      %3036 = vmatprep.mubr.f32.mxu0 0.0
      %3037 = vmatmul.mubr.f32.gmra.mrb[0].mxu0 %v2818
      %v3038 = vpop.f32.mrb[0].mxu0
      %v3039 = vadd.f32 0.0, %v3038
      %v3040 = vpop.f32.mrb[0].mxu0
      %3041 = vmatprep.mubr.f32.mxu0 0.0
      %3042 = vmatmul.mubr.f32.gmra.mrb[0].mxu0 %v2821
      %v3043 = vpop.f32.mrb[0].mxu0
      %v3044 = vadd.f32 0.0, %v3043
      %v3045 = vpop.f32.mrb[0].mxu0
      %3046 = vmatprep.mubr.f32.mxu0 0.0
      %3047 = vmatmul.mubr.f32.gmra.mrb[0].mxu0 %v2824
      %v3048 = vpop.f32.mrb[0].mxu0
      %v3049 = vadd.f32 0.0, %v3048
      %v3050 = vpop.f32.mrb[0].mxu0
      %3051 = vmatprep.mubr.f32.mxu0 0.0
      %3052 = vmatmul.mubr.f32.gmra.mrb[0].mxu0 %v2827
      %v3053 = vpop.f32.mrb[0].mxu0
      %v3054 = vadd.f32 0.0, %v3053
      %v3055 = vpop.f32.mrb[0].mxu0
      %3056 = vdwg.mxu0
      %v3057 = vadd.f32 %v2667, %v2899
      %v3058 = vadd.f32 %v2668, %v2904
      %v3059 = vadd.f32 %v2669, %v2909
      %v3060 = vadd.f32 %v2670, %v2914
      %v3061 = vadd.f32 %v2671, %v2919
      %v3062 = vadd.f32 %v2672, %v2924
      %v3063 = vadd.f32 %v2673, %v2929
      %v3064 = vadd.f32 %v2674, %v2934
      %v3065 = vadd.f32 %v2675, %v2939
      %v3066 = vadd.f32 %v2676, %v2944
      %v3067 = vadd.f32 %v2677, %v2949
      %v3068 = vadd.f32 %v2678, %v2954
      %v3069 = vadd.f32 %v2679, %v2959
      %v3070 = vadd.f32 %v2680, %v2964
      %v3071 = vadd.f32 %v2681, %v2969
      %v3072 = vadd.f32 %v2682, %v2974
      %v3073 = vadd.f32 %v2683, %v2979
      %v3074 = vadd.f32 %v2684, %v2984
      %v3075 = vadd.f32 %v2685, %v2989
      %v3076 = vadd.f32 %v2686, %v2994
      %v3077 = vadd.f32 %v2687, %v2999
      %v3078 = vadd.f32 %v2688, %v3004
      %v3079 = vadd.f32 %v2689, %v3009
      %v3080 = vadd.f32 %v2690, %v3014
      %v3081 = vadd.f32 %v2691, %v3019
      %v3082 = vadd.f32 %v2692, %v3024
      %v3083 = vadd.f32 %v2693, %v3029
      %v3084 = vadd.f32 %v2694, %v3034
      %v3085 = vadd.f32 %v2695, %v3039
      %v3086 = vadd.f32 %v2696, %v3044
      %v3087 = vadd.f32 %v2697, %v3049
      %v3088 = vadd.f32 %v2698, %v3054
      %s3089 = scalar_lea.vmem [#allocation2], 320
      %v3090 = vld [vmem:[%s3089] sm:$0xff]
      %v3091 = vld [vmem:[%s3089 + $0x8] sm:$0xff]
      %v3092 = vld [vmem:[%s3089 + $0x10] sm:$0xff]
      %v3093 = vld [vmem:[%s3089 + $0x18] sm:$0xff]
      %v3094 = vld [vmem:[%s3089 + $0x20] sm:$0xff]
      %v3095 = vld [vmem:[%s3089 + $0x28] sm:$0xff]
      %v3096 = vld [vmem:[%s3089 + $0x30] sm:$0xff]
      %v3097 = vld [vmem:[%s3089 + $0x38] sm:$0xff]
      %v3098 = vld [vmem:[%s3089 + $0x40] sm:$0xff]
      %v3099 = vld [vmem:[%s3089 + $0x48] sm:$0xff]
      %v3100 = vld [vmem:[%s3089 + $0x50] sm:$0xff]
      %v3101 = vld [vmem:[%s3089 + $0x58] sm:$0xff]
      %v3102 = vld [vmem:[%s3089 + $0x60] sm:$0xff]
      %v3103 = vld [vmem:[%s3089 + $0x68] sm:$0xff]
      %v3104 = vld [vmem:[%s3089 + $0x70] sm:$0xff]
      %v3105 = vld [vmem:[%s3089 + $0x78] sm:$0xff]
      %v3106 = vld [vmem:[%s3089 + $0x80] sm:$0xff]
      %v3107 = vld [vmem:[%s3089 + $0x88] sm:$0xff]
      %v3108 = vld [vmem:[%s3089 + $0x90] sm:$0xff]
      %v3109 = vld [vmem:[%s3089 + $0x98] sm:$0xff]
      %v3110 = vld [vmem:[%s3089 + $0xa0] sm:$0xff]
      %v3111 = vld [vmem:[%s3089 + $0xa8] sm:$0xff]
      %v3112 = vld [vmem:[%s3089 + $0xb0] sm:$0xff]
      %v3113 = vld [vmem:[%s3089 + $0xb8] sm:$0xff]
      %v3114 = vld [vmem:[%s3089 + $0xc0] sm:$0xff]
      %v3115 = vld [vmem:[%s3089 + $0xc8] sm:$0xff]
      %v3116 = vld [vmem:[%s3089 + $0xd0] sm:$0xff]
      %v3117 = vld [vmem:[%s3089 + $0xd8] sm:$0xff]
      %v3118 = vld [vmem:[%s3089 + $0xe0] sm:$0xff]
      %v3119 = vld [vmem:[%s3089 + $0xe8] sm:$0xff]
      %v3120 = vld [vmem:[%s3089 + $0xf0] sm:$0xff]
      %v3121 = vld [vmem:[%s3089 + $0xf8] sm:$0xff]
      %s3122 = scalar_lea.vmem %s1, 28
      %v3123 = vld [vmem:[%s3122] sm:$0xf]
      %v3125 = vsel %vm258, %v3090, 0
      %v3128 = vsel %vm258, %v3091, 0
      %v3131 = vsel %vm258, %v3092, 0
      %v3134 = vsel %vm258, %v3093, 0
      %v3137 = vsel %vm258, %v3094, 0
      %v3140 = vsel %vm258, %v3095, 0
      %v3143 = vsel %vm258, %v3096, 0
      %v3146 = vsel %vm258, %v3097, 0
      %v3149 = vsel %vm258, %v3098, 0
      %v3152 = vsel %vm258, %v3099, 0
      %v3155 = vsel %vm258, %v3100, 0
      %v3158 = vsel %vm258, %v3101, 0
      %v3161 = vsel %vm258, %v3102, 0
      %v3164 = vsel %vm258, %v3103, 0
      %v3167 = vsel %vm258, %v3104, 0
      %v3170 = vsel %vm258, %v3105, 0
      %v3173 = vsel %vm258, %v3106, 0
      %v3176 = vsel %vm258, %v3107, 0
      %v3179 = vsel %vm258, %v3108, 0
      %v3182 = vsel %vm258, %v3109, 0
      %v3185 = vsel %vm258, %v3110, 0
      %v3188 = vsel %vm258, %v3111, 0
      %v3191 = vsel %vm258, %v3112, 0
      %v3194 = vsel %vm258, %v3113, 0
      %v3197 = vsel %vm258, %v3114, 0
      %v3200 = vsel %vm258, %v3115, 0
      %v3203 = vsel %vm258, %v3116, 0
      %v3206 = vsel %vm258, %v3117, 0
      %v3209 = vsel %vm258, %v3118, 0
      %v3212 = vsel %vm258, %v3119, 0
      %v3215 = vsel %vm258, %v3120, 0
      %v3218 = vsel %vm258, %v3121, 0
      %v3221 = vsel %vm585, %v3123, 0
      %3223 = vmatprep.subr.mxu0 0.0
      %3224 = vmatpush1.msra.mxu0 %v3221
      %3225 = vmatprep.subr.mxu0 0.0
      %3226 = vmatpush1.msra.mxu0 0.0
      %3227 = vmatprep.subr.mxu0 0.0
      %3228 = vmatpush1.msra.mxu0 0.0
      %3229 = vmatprep.subr.mxu0 0.0
      %3230 = vmatpush1.msra.mxu0 0.0
      %3231 = vmatprep.subr.mxu0 0.0
      %3232 = vmatpush1.msra.mxu0 0.0
      %3233 = vmatprep.subr.mxu0 0.0
      %3234 = vmatpush1.msra.mxu0 0.0
      %3235 = vmatprep.subr.mxu0 0.0
      %3236 = vmatpush1.msra.mxu0 0.0
      %3237 = vmatprep.subr.mxu0 0.0
      %3238 = vmatpush1.msra.mxu0 0.0
      %3239 = vmatprep.subr.mxu0 0.0
      %3240 = vmatpush1.msra.mxu0 0.0
      %3241 = vmatprep.subr.mxu0 0.0
      %3242 = vmatpush1.msra.mxu0 0.0
      %3243 = vmatprep.subr.mxu0 0.0
      %3244 = vmatpush1.msra.mxu0 0.0
      %3245 = vmatprep.subr.mxu0 0.0
      %3246 = vmatpush1.msra.mxu0 0.0
      %3247 = vmatprep.subr.mxu0 0.0
      %3248 = vmatpush1.msra.mxu0 0.0
      %3249 = vmatprep.subr.mxu0 0.0
      %3250 = vmatpush1.msra.mxu0 0.0
      %3251 = vmatprep.subr.mxu0 0.0
      %3252 = vmatpush1.msra.mxu0 0.0
      %3253 = vmatprep.subr.mxu0 0.0
      %3254 = vmatpush1.msra.mxu0 0.0
      %3255 = vmatprep.subr.mxu0 0.0
      %3256 = vmatpush1.msra.mxu0 0.0
      %3257 = vmatprep.subr.mxu0 0.0
      %3258 = vmatpush1.msra.mxu0 0.0
      %3259 = vmatprep.subr.mxu0 0.0
      %3260 = vmatpush1.msra.mxu0 0.0
      %3261 = vmatprep.subr.mxu0 0.0
      %3262 = vmatpush1.msra.mxu0 0.0
      %3263 = vmatprep.subr.mxu0 0.0
      %3264 = vmatpush1.msra.mxu0 0.0
      %3265 = vmatprep.subr.mxu0 0.0
      %3266 = vmatpush1.msra.mxu0 0.0
      %3267 = vmatprep.subr.mxu0 0.0
      %3268 = vmatpush1.msra.mxu0 0.0
      %3269 = vmatprep.subr.mxu0 0.0
      %3270 = vmatpush1.msra.mxu0 0.0
      %3271 = vmatprep.subr.mxu0 0.0
      %3272 = vmatpush1.msra.mxu0 0.0
      %3273 = vmatprep.subr.mxu0 0.0
      %3274 = vmatpush1.msra.mxu0 0.0
      %3275 = vmatprep.subr.mxu0 0.0
      %3276 = vmatpush1.msra.mxu0 0.0
      %3277 = vmatprep.subr.mxu0 0.0
      %3278 = vmatpush1.msra.mxu0 0.0
      %3279 = vmatprep.subr.mxu0 0.0
      %3280 = vmatpush1.msra.mxu0 0.0
      %3281 = vmatprep.subr.mxu0 0.0
      %3282 = vmatpush1.msra.mxu0 0.0
      %3283 = vmatprep.subr.mxu0 0.0
      %3284 = vmatpush1.msra.mxu0 0.0
      %3285 = vmatprep.subr.mxu0 0.0
      %3286 = vmatpush1.msra.mxu0 0.0
      %3287 = vmatprep.mubr.f32.mxu0 0.0
      %3288 = vmatmul.mubr.f32.gmra.mrb[0].mxu0 %v3125
      %v3289 = vpop.f32.mrb[0].mxu0
      %v3290 = vadd.f32 0.0, %v3289
      %v3291 = vpop.f32.mrb[0].mxu0
      %3292 = vmatprep.mubr.f32.mxu0 0.0
      %3293 = vmatmul.mubr.f32.gmra.mrb[0].mxu0 %v3128
      %v3294 = vpop.f32.mrb[0].mxu0
      %v3295 = vadd.f32 0.0, %v3294
      %v3296 = vpop.f32.mrb[0].mxu0
      %3297 = vmatprep.mubr.f32.mxu0 0.0
      %3298 = vmatmul.mubr.f32.gmra.mrb[0].mxu0 %v3131
      %v3299 = vpop.f32.mrb[0].mxu0
      %v3300 = vadd.f32 0.0, %v3299
      %v3301 = vpop.f32.mrb[0].mxu0
      %3302 = vmatprep.mubr.f32.mxu0 0.0
      %3303 = vmatmul.mubr.f32.gmra.mrb[0].mxu0 %v3134
      %v3304 = vpop.f32.mrb[0].mxu0
      %v3305 = vadd.f32 0.0, %v3304
      %v3306 = vpop.f32.mrb[0].mxu0
      %3307 = vmatprep.mubr.f32.mxu0 0.0
      %3308 = vmatmul.mubr.f32.gmra.mrb[0].mxu0 %v3137
      %v3309 = vpop.f32.mrb[0].mxu0
      %v3310 = vadd.f32 0.0, %v3309
      %v3311 = vpop.f32.mrb[0].mxu0
      %3312 = vmatprep.mubr.f32.mxu0 0.0
      %3313 = vmatmul.mubr.f32.gmra.mrb[0].mxu0 %v3140
      %v3314 = vpop.f32.mrb[0].mxu0
      %v3315 = vadd.f32 0.0, %v3314
      %v3316 = vpop.f32.mrb[0].mxu0
      %3317 = vmatprep.mubr.f32.mxu0 0.0
      %3318 = vmatmul.mubr.f32.gmra.mrb[0].mxu0 %v3143
      %v3319 = vpop.f32.mrb[0].mxu0
      %v3320 = vadd.f32 0.0, %v3319
      %v3321 = vpop.f32.mrb[0].mxu0
      %3322 = vmatprep.mubr.f32.mxu0 0.0
      %3323 = vmatmul.mubr.f32.gmra.mrb[0].mxu0 %v3146
      %v3324 = vpop.f32.mrb[0].mxu0
      %v3325 = vadd.f32 0.0, %v3324
      %v3326 = vpop.f32.mrb[0].mxu0
      %3327 = vmatprep.mubr.f32.mxu0 0.0
      %3328 = vmatmul.mubr.f32.gmra.mrb[0].mxu0 %v3149
      %v3329 = vpop.f32.mrb[0].mxu0
      %v3330 = vadd.f32 0.0, %v3329
      %v3331 = vpop.f32.mrb[0].mxu0
      %3332 = vmatprep.mubr.f32.mxu0 0.0
      %3333 = vmatmul.mubr.f32.gmra.mrb[0].mxu0 %v3152
      %v3334 = vpop.f32.mrb[0].mxu0
      %v3335 = vadd.f32 0.0, %v3334
      %v3336 = vpop.f32.mrb[0].mxu0
      %3337 = vmatprep.mubr.f32.mxu0 0.0
      %3338 = vmatmul.mubr.f32.gmra.mrb[0].mxu0 %v3155
      %v3339 = vpop.f32.mrb[0].mxu0
      %v3340 = vadd.f32 0.0, %v3339
      %v3341 = vpop.f32.mrb[0].mxu0
      %3342 = vmatprep.mubr.f32.mxu0 0.0
      %3343 = vmatmul.mubr.f32.gmra.mrb[0].mxu0 %v3158
      %v3344 = vpop.f32.mrb[0].mxu0
      %v3345 = vadd.f32 0.0, %v3344
      %v3346 = vpop.f32.mrb[0].mxu0
      %3347 = vmatprep.mubr.f32.mxu0 0.0
      %3348 = vmatmul.mubr.f32.gmra.mrb[0].mxu0 %v3161
      %v3349 = vpop.f32.mrb[0].mxu0
      %v3350 = vadd.f32 0.0, %v3349
      %v3351 = vpop.f32.mrb[0].mxu0
      %3352 = vmatprep.mubr.f32.mxu0 0.0
      %3353 = vmatmul.mubr.f32.gmra.mrb[0].mxu0 %v3164
      %v3354 = vpop.f32.mrb[0].mxu0
      %v3355 = vadd.f32 0.0, %v3354
      %v3356 = vpop.f32.mrb[0].mxu0
      %3357 = vmatprep.mubr.f32.mxu0 0.0
      %3358 = vmatmul.mubr.f32.gmra.mrb[0].mxu0 %v3167
      %v3359 = vpop.f32.mrb[0].mxu0
      %v3360 = vadd.f32 0.0, %v3359
      %v3361 = vpop.f32.mrb[0].mxu0
      %3362 = vmatprep.mubr.f32.mxu0 0.0
      %3363 = vmatmul.mubr.f32.gmra.mrb[0].mxu0 %v3170
      %v3364 = vpop.f32.mrb[0].mxu0
      %v3365 = vadd.f32 0.0, %v3364
      %v3366 = vpop.f32.mrb[0].mxu0
      %3367 = vmatprep.mubr.f32.mxu0 0.0
      %3368 = vmatmul.mubr.f32.gmra.mrb[0].mxu0 %v3173
      %v3369 = vpop.f32.mrb[0].mxu0
      %v3370 = vadd.f32 0.0, %v3369
      %v3371 = vpop.f32.mrb[0].mxu0
      %3372 = vmatprep.mubr.f32.mxu0 0.0
      %3373 = vmatmul.mubr.f32.gmra.mrb[0].mxu0 %v3176
      %v3374 = vpop.f32.mrb[0].mxu0
      %v3375 = vadd.f32 0.0, %v3374
      %v3376 = vpop.f32.mrb[0].mxu0
      %3377 = vmatprep.mubr.f32.mxu0 0.0
      %3378 = vmatmul.mubr.f32.gmra.mrb[0].mxu0 %v3179
      %v3379 = vpop.f32.mrb[0].mxu0
      %v3380 = vadd.f32 0.0, %v3379
      %v3381 = vpop.f32.mrb[0].mxu0
      %3382 = vmatprep.mubr.f32.mxu0 0.0
      %3383 = vmatmul.mubr.f32.gmra.mrb[0].mxu0 %v3182
      %v3384 = vpop.f32.mrb[0].mxu0
      %v3385 = vadd.f32 0.0, %v3384
      %v3386 = vpop.f32.mrb[0].mxu0
      %3387 = vmatprep.mubr.f32.mxu0 0.0
      %3388 = vmatmul.mubr.f32.gmra.mrb[0].mxu0 %v3185
      %v3389 = vpop.f32.mrb[0].mxu0
      %v3390 = vadd.f32 0.0, %v3389
      %v3391 = vpop.f32.mrb[0].mxu0
      %3392 = vmatprep.mubr.f32.mxu0 0.0
      %3393 = vmatmul.mubr.f32.gmra.mrb[0].mxu0 %v3188
      %v3394 = vpop.f32.mrb[0].mxu0
      %v3395 = vadd.f32 0.0, %v3394
      %v3396 = vpop.f32.mrb[0].mxu0
      %3397 = vmatprep.mubr.f32.mxu0 0.0
      %3398 = vmatmul.mubr.f32.gmra.mrb[0].mxu0 %v3191
      %v3399 = vpop.f32.mrb[0].mxu0
      %v3400 = vadd.f32 0.0, %v3399
      %v3401 = vpop.f32.mrb[0].mxu0
      %3402 = vmatprep.mubr.f32.mxu0 0.0
      %3403 = vmatmul.mubr.f32.gmra.mrb[0].mxu0 %v3194
      %v3404 = vpop.f32.mrb[0].mxu0
      %v3405 = vadd.f32 0.0, %v3404
      %v3406 = vpop.f32.mrb[0].mxu0
      %3407 = vmatprep.mubr.f32.mxu0 0.0
      %3408 = vmatmul.mubr.f32.gmra.mrb[0].mxu0 %v3197
      %v3409 = vpop.f32.mrb[0].mxu0
      %v3410 = vadd.f32 0.0, %v3409
      %v3411 = vpop.f32.mrb[0].mxu0
      %3412 = vmatprep.mubr.f32.mxu0 0.0
      %3413 = vmatmul.mubr.f32.gmra.mrb[0].mxu0 %v3200
      %v3414 = vpop.f32.mrb[0].mxu0
      %v3415 = vadd.f32 0.0, %v3414
      %v3416 = vpop.f32.mrb[0].mxu0
      %3417 = vmatprep.mubr.f32.mxu0 0.0
      %3418 = vmatmul.mubr.f32.gmra.mrb[0].mxu0 %v3203
      %v3419 = vpop.f32.mrb[0].mxu0
      %v3420 = vadd.f32 0.0, %v3419
      %v3421 = vpop.f32.mrb[0].mxu0
      %3422 = vmatprep.mubr.f32.mxu0 0.0
      %3423 = vmatmul.mubr.f32.gmra.mrb[0].mxu0 %v3206
      %v3424 = vpop.f32.mrb[0].mxu0
      %v3425 = vadd.f32 0.0, %v3424
      %v3426 = vpop.f32.mrb[0].mxu0
      %3427 = vmatprep.mubr.f32.mxu0 0.0
      %3428 = vmatmul.mubr.f32.gmra.mrb[0].mxu0 %v3209
      %v3429 = vpop.f32.mrb[0].mxu0
      %v3430 = vadd.f32 0.0, %v3429
      %v3431 = vpop.f32.mrb[0].mxu0
      %3432 = vmatprep.mubr.f32.mxu0 0.0
      %3433 = vmatmul.mubr.f32.gmra.mrb[0].mxu0 %v3212
      %v3434 = vpop.f32.mrb[0].mxu0
      %v3435 = vadd.f32 0.0, %v3434
      %v3436 = vpop.f32.mrb[0].mxu0
      %3437 = vmatprep.mubr.f32.mxu0 0.0
      %3438 = vmatmul.mubr.f32.gmra.mrb[0].mxu0 %v3215
      %v3439 = vpop.f32.mrb[0].mxu0
      %v3440 = vadd.f32 0.0, %v3439
      %v3441 = vpop.f32.mrb[0].mxu0
      %3442 = vmatprep.mubr.f32.mxu0 0.0
      %3443 = vmatmul.mubr.f32.gmra.mrb[0].mxu0 %v3218
      %v3444 = vpop.f32.mrb[0].mxu0
      %v3445 = vadd.f32 0.0, %v3444
      %v3446 = vpop.f32.mrb[0].mxu0
      %3447 = vdwg.mxu0
      %v3448 = vadd.f32 %v3057, %v3290
      %v3449 = vadd.f32 %v3058, %v3295
      %v3450 = vadd.f32 %v3059, %v3300
      %v3451 = vadd.f32 %v3060, %v3305
      %v3452 = vadd.f32 %v3061, %v3310
      %v3453 = vadd.f32 %v3062, %v3315
      %v3454 = vadd.f32 %v3063, %v3320
      %v3455 = vadd.f32 %v3064, %v3325
      %v3456 = vadd.f32 %v3065, %v3330
      %v3457 = vadd.f32 %v3066, %v3335
      %v3458 = vadd.f32 %v3067, %v3340
      %v3459 = vadd.f32 %v3068, %v3345
      %v3460 = vadd.f32 %v3069, %v3350
      %v3461 = vadd.f32 %v3070, %v3355
      %v3462 = vadd.f32 %v3071, %v3360
      %v3463 = vadd.f32 %v3072, %v3365
      %v3464 = vadd.f32 %v3073, %v3370
      %v3465 = vadd.f32 %v3074, %v3375
      %v3466 = vadd.f32 %v3075, %v3380
      %v3467 = vadd.f32 %v3076, %v3385
      %v3468 = vadd.f32 %v3077, %v3390
      %v3469 = vadd.f32 %v3078, %v3395
      %v3470 = vadd.f32 %v3079, %v3400
      %v3471 = vadd.f32 %v3080, %v3405
      %v3472 = vadd.f32 %v3081, %v3410
      %v3473 = vadd.f32 %v3082, %v3415
      %v3474 = vadd.f32 %v3083, %v3420
      %v3475 = vadd.f32 %v3084, %v3425
      %v3476 = vadd.f32 %v3085, %v3430
      %v3477 = vadd.f32 %v3086, %v3435
      %v3478 = vadd.f32 %v3087, %v3440
      %v3479 = vadd.f32 %v3088, %v3445
      %s3480 = scalar_lea.vmem [#allocation2], 608
      %v3481 = vld [vmem:[%s3480] sm:$0xff]
      %v3482 = vld [vmem:[%s3480 + $0x8] sm:$0xff]
      %v3483 = vld [vmem:[%s3480 + $0x10] sm:$0xff]
      %v3484 = vld [vmem:[%s3480 + $0x18] sm:$0xff]
      %v3485 = vld [vmem:[%s3480 + $0x20] sm:$0xff]
      %v3486 = vld [vmem:[%s3480 + $0x28] sm:$0xff]
      %v3487 = vld [vmem:[%s3480 + $0x30] sm:$0xff]
      %v3488 = vld [vmem:[%s3480 + $0x38] sm:$0xff]
      %v3489 = vld [vmem:[%s3480 + $0x40] sm:$0xff]
      %v3490 = vld [vmem:[%s3480 + $0x48] sm:$0xff]
      %v3491 = vld [vmem:[%s3480 + $0x50] sm:$0xff]
      %v3492 = vld [vmem:[%s3480 + $0x58] sm:$0xff]
      %v3493 = vld [vmem:[%s3480 + $0x60] sm:$0xff]
      %v3494 = vld [vmem:[%s3480 + $0x68] sm:$0xff]
      %v3495 = vld [vmem:[%s3480 + $0x70] sm:$0xff]
      %v3496 = vld [vmem:[%s3480 + $0x78] sm:$0xff]
      %v3497 = vld [vmem:[%s3480 + $0x80] sm:$0xff]
      %v3498 = vld [vmem:[%s3480 + $0x88] sm:$0xff]
      %v3499 = vld [vmem:[%s3480 + $0x90] sm:$0xff]
      %v3500 = vld [vmem:[%s3480 + $0x98] sm:$0xff]
      %v3501 = vld [vmem:[%s3480 + $0xa0] sm:$0xff]
      %v3502 = vld [vmem:[%s3480 + $0xa8] sm:$0xff]
      %v3503 = vld [vmem:[%s3480 + $0xb0] sm:$0xff]
      %v3504 = vld [vmem:[%s3480 + $0xb8] sm:$0xff]
      %v3505 = vld [vmem:[%s3480 + $0xc0] sm:$0xff]
      %v3506 = vld [vmem:[%s3480 + $0xc8] sm:$0xff]
      %v3507 = vld [vmem:[%s3480 + $0xd0] sm:$0xff]
      %v3508 = vld [vmem:[%s3480 + $0xd8] sm:$0xff]
      %v3509 = vld [vmem:[%s3480 + $0xe0] sm:$0xff]
      %v3510 = vld [vmem:[%s3480 + $0xe8] sm:$0xff]
      %v3511 = vld [vmem:[%s3480 + $0xf0] sm:$0xff]
      %v3512 = vld [vmem:[%s3480 + $0xf8] sm:$0xff]
      %s3513 = scalar_lea.vmem %s1, 32
      %v3514 = vld [vmem:[%s3513] sm:$0xf]
      %v3516 = vsel %vm258, %v3481, 0
      %v3519 = vsel %vm258, %v3482, 0
      %v3522 = vsel %vm258, %v3483, 0
      %v3525 = vsel %vm258, %v3484, 0
      %v3528 = vsel %vm258, %v3485, 0
      %v3531 = vsel %vm258, %v3486, 0
      %v3534 = vsel %vm258, %v3487, 0
      %v3537 = vsel %vm258, %v3488, 0
      %v3540 = vsel %vm258, %v3489, 0
      %v3543 = vsel %vm258, %v3490, 0
      %v3546 = vsel %vm258, %v3491, 0
      %v3549 = vsel %vm258, %v3492, 0
      %v3552 = vsel %vm258, %v3493, 0
      %v3555 = vsel %vm258, %v3494, 0
      %v3558 = vsel %vm258, %v3495, 0
      %v3561 = vsel %vm258, %v3496, 0
      %v3564 = vsel %vm258, %v3497, 0
      %v3567 = vsel %vm258, %v3498, 0
      %v3570 = vsel %vm258, %v3499, 0
      %v3573 = vsel %vm258, %v3500, 0
      %v3576 = vsel %vm258, %v3501, 0
      %v3579 = vsel %vm258, %v3502, 0
      %v3582 = vsel %vm258, %v3503, 0
      %v3585 = vsel %vm258, %v3504, 0
      %v3588 = vsel %vm258, %v3505, 0
      %v3591 = vsel %vm258, %v3506, 0
      %v3594 = vsel %vm258, %v3507, 0
      %v3597 = vsel %vm258, %v3508, 0
      %v3600 = vsel %vm258, %v3509, 0
      %v3603 = vsel %vm258, %v3510, 0
      %v3606 = vsel %vm258, %v3511, 0
      %v3609 = vsel %vm258, %v3512, 0
      %v3612 = vsel %vm585, %v3514, 0
      %3614 = vmatprep.subr.mxu0 0.0
      %3615 = vmatpush1.msra.mxu0 %v3612
      %3616 = vmatprep.subr.mxu0 0.0
      %3617 = vmatpush1.msra.mxu0 0.0
      %3618 = vmatprep.subr.mxu0 0.0
      %3619 = vmatpush1.msra.mxu0 0.0
      %3620 = vmatprep.subr.mxu0 0.0
      %3621 = vmatpush1.msra.mxu0 0.0
      %3622 = vmatprep.subr.mxu0 0.0
      %3623 = vmatpush1.msra.mxu0 0.0
      %3624 = vmatprep.subr.mxu0 0.0
      %3625 = vmatpush1.msra.mxu0 0.0
      %3626 = vmatprep.subr.mxu0 0.0
      %3627 = vmatpush1.msra.mxu0 0.0
      %3628 = vmatprep.subr.mxu0 0.0
      %3629 = vmatpush1.msra.mxu0 0.0
      %3630 = vmatprep.subr.mxu0 0.0
      %3631 = vmatpush1.msra.mxu0 0.0
      %3632 = vmatprep.subr.mxu0 0.0
      %3633 = vmatpush1.msra.mxu0 0.0
      %3634 = vmatprep.subr.mxu0 0.0
      %3635 = vmatpush1.msra.mxu0 0.0
      %3636 = vmatprep.subr.mxu0 0.0
      %3637 = vmatpush1.msra.mxu0 0.0
      %3638 = vmatprep.subr.mxu0 0.0
      %3639 = vmatpush1.msra.mxu0 0.0
      %3640 = vmatprep.subr.mxu0 0.0
      %3641 = vmatpush1.msra.mxu0 0.0
      %3642 = vmatprep.subr.mxu0 0.0
      %3643 = vmatpush1.msra.mxu0 0.0
      %3644 = vmatprep.subr.mxu0 0.0
      %3645 = vmatpush1.msra.mxu0 0.0
      %3646 = vmatprep.subr.mxu0 0.0
      %3647 = vmatpush1.msra.mxu0 0.0
      %3648 = vmatprep.subr.mxu0 0.0
      %3649 = vmatpush1.msra.mxu0 0.0
      %3650 = vmatprep.subr.mxu0 0.0
      %3651 = vmatpush1.msra.mxu0 0.0
      %3652 = vmatprep.subr.mxu0 0.0
      %3653 = vmatpush1.msra.mxu0 0.0
      %3654 = vmatprep.subr.mxu0 0.0
      %3655 = vmatpush1.msra.mxu0 0.0
      %3656 = vmatprep.subr.mxu0 0.0
      %3657 = vmatpush1.msra.mxu0 0.0
      %3658 = vmatprep.subr.mxu0 0.0
      %3659 = vmatpush1.msra.mxu0 0.0
      %3660 = vmatprep.subr.mxu0 0.0
      %3661 = vmatpush1.msra.mxu0 0.0
      %3662 = vmatprep.subr.mxu0 0.0
      %3663 = vmatpush1.msra.mxu0 0.0
      %3664 = vmatprep.subr.mxu0 0.0
      %3665 = vmatpush1.msra.mxu0 0.0
      %3666 = vmatprep.subr.mxu0 0.0
      %3667 = vmatpush1.msra.mxu0 0.0
      %3668 = vmatprep.subr.mxu0 0.0
      %3669 = vmatpush1.msra.mxu0 0.0
      %3670 = vmatprep.subr.mxu0 0.0
      %3671 = vmatpush1.msra.mxu0 0.0
      %3672 = vmatprep.subr.mxu0 0.0
      %3673 = vmatpush1.msra.mxu0 0.0
      %3674 = vmatprep.subr.mxu0 0.0
      %3675 = vmatpush1.msra.mxu0 0.0
      %3676 = vmatprep.subr.mxu0 0.0
      %3677 = vmatpush1.msra.mxu0 0.0
      %3678 = vmatprep.mubr.f32.mxu0 0.0
      %3679 = vmatmul.mubr.f32.gmra.mrb[0].mxu0 %v3516
      %v3680 = vpop.f32.mrb[0].mxu0
      %v3681 = vadd.f32 0.0, %v3680
      %v3682 = vpop.f32.mrb[0].mxu0
      %3683 = vmatprep.mubr.f32.mxu0 0.0
      %3684 = vmatmul.mubr.f32.gmra.mrb[0].mxu0 %v3519
      %v3685 = vpop.f32.mrb[0].mxu0
      %v3686 = vadd.f32 0.0, %v3685
      %v3687 = vpop.f32.mrb[0].mxu0
      %3688 = vmatprep.mubr.f32.mxu0 0.0
      %3689 = vmatmul.mubr.f32.gmra.mrb[0].mxu0 %v3522
      %v3690 = vpop.f32.mrb[0].mxu0
      %v3691 = vadd.f32 0.0, %v3690
      %v3692 = vpop.f32.mrb[0].mxu0
      %3693 = vmatprep.mubr.f32.mxu0 0.0
      %3694 = vmatmul.mubr.f32.gmra.mrb[0].mxu0 %v3525
      %v3695 = vpop.f32.mrb[0].mxu0
      %v3696 = vadd.f32 0.0, %v3695
      %v3697 = vpop.f32.mrb[0].mxu0
      %3698 = vmatprep.mubr.f32.mxu0 0.0
      %3699 = vmatmul.mubr.f32.gmra.mrb[0].mxu0 %v3528
      %v3700 = vpop.f32.mrb[0].mxu0
      %v3701 = vadd.f32 0.0, %v3700
      %v3702 = vpop.f32.mrb[0].mxu0
      %3703 = vmatprep.mubr.f32.mxu0 0.0
      %3704 = vmatmul.mubr.f32.gmra.mrb[0].mxu0 %v3531
      %v3705 = vpop.f32.mrb[0].mxu0
      %v3706 = vadd.f32 0.0, %v3705
      %v3707 = vpop.f32.mrb[0].mxu0
      %3708 = vmatprep.mubr.f32.mxu0 0.0
      %3709 = vmatmul.mubr.f32.gmra.mrb[0].mxu0 %v3534
      %v3710 = vpop.f32.mrb[0].mxu0
      %v3711 = vadd.f32 0.0, %v3710
      %v3712 = vpop.f32.mrb[0].mxu0
      %3713 = vmatprep.mubr.f32.mxu0 0.0
      %3714 = vmatmul.mubr.f32.gmra.mrb[0].mxu0 %v3537
      %v3715 = vpop.f32.mrb[0].mxu0
      %v3716 = vadd.f32 0.0, %v3715
      %v3717 = vpop.f32.mrb[0].mxu0
      %3718 = vmatprep.mubr.f32.mxu0 0.0
      %3719 = vmatmul.mubr.f32.gmra.mrb[0].mxu0 %v3540
      %v3720 = vpop.f32.mrb[0].mxu0
      %v3721 = vadd.f32 0.0, %v3720
      %v3722 = vpop.f32.mrb[0].mxu0
      %3723 = vmatprep.mubr.f32.mxu0 0.0
      %3724 = vmatmul.mubr.f32.gmra.mrb[0].mxu0 %v3543
      %v3725 = vpop.f32.mrb[0].mxu0
      %v3726 = vadd.f32 0.0, %v3725
      %v3727 = vpop.f32.mrb[0].mxu0
      %3728 = vmatprep.mubr.f32.mxu0 0.0
      %3729 = vmatmul.mubr.f32.gmra.mrb[0].mxu0 %v3546
      %v3730 = vpop.f32.mrb[0].mxu0
      %v3731 = vadd.f32 0.0, %v3730
      %v3732 = vpop.f32.mrb[0].mxu0
      %3733 = vmatprep.mubr.f32.mxu0 0.0
      %3734 = vmatmul.mubr.f32.gmra.mrb[0].mxu0 %v3549
      %v3735 = vpop.f32.mrb[0].mxu0
      %v3736 = vadd.f32 0.0, %v3735
      %v3737 = vpop.f32.mrb[0].mxu0
      %3738 = vmatprep.mubr.f32.mxu0 0.0
      %3739 = vmatmul.mubr.f32.gmra.mrb[0].mxu0 %v3552
      %v3740 = vpop.f32.mrb[0].mxu0
      %v3741 = vadd.f32 0.0, %v3740
      %v3742 = vpop.f32.mrb[0].mxu0
      %3743 = vmatprep.mubr.f32.mxu0 0.0
      %3744 = vmatmul.mubr.f32.gmra.mrb[0].mxu0 %v3555
      %v3745 = vpop.f32.mrb[0].mxu0
      %v3746 = vadd.f32 0.0, %v3745
      %v3747 = vpop.f32.mrb[0].mxu0
      %3748 = vmatprep.mubr.f32.mxu0 0.0
      %3749 = vmatmul.mubr.f32.gmra.mrb[0].mxu0 %v3558
      %v3750 = vpop.f32.mrb[0].mxu0
      %v3751 = vadd.f32 0.0, %v3750
      %v3752 = vpop.f32.mrb[0].mxu0
      %3753 = vmatprep.mubr.f32.mxu0 0.0
      %3754 = vmatmul.mubr.f32.gmra.mrb[0].mxu0 %v3561
      %v3755 = vpop.f32.mrb[0].mxu0
      %v3756 = vadd.f32 0.0, %v3755
      %v3757 = vpop.f32.mrb[0].mxu0
      %3758 = vmatprep.mubr.f32.mxu0 0.0
      %3759 = vmatmul.mubr.f32.gmra.mrb[0].mxu0 %v3564
      %v3760 = vpop.f32.mrb[0].mxu0
      %v3761 = vadd.f32 0.0, %v3760
      %v3762 = vpop.f32.mrb[0].mxu0
      %3763 = vmatprep.mubr.f32.mxu0 0.0
      %3764 = vmatmul.mubr.f32.gmra.mrb[0].mxu0 %v3567
      %v3765 = vpop.f32.mrb[0].mxu0
      %v3766 = vadd.f32 0.0, %v3765
      %v3767 = vpop.f32.mrb[0].mxu0
      %3768 = vmatprep.mubr.f32.mxu0 0.0
      %3769 = vmatmul.mubr.f32.gmra.mrb[0].mxu0 %v3570
      %v3770 = vpop.f32.mrb[0].mxu0
      %v3771 = vadd.f32 0.0, %v3770
      %v3772 = vpop.f32.mrb[0].mxu0
      %3773 = vmatprep.mubr.f32.mxu0 0.0
      %3774 = vmatmul.mubr.f32.gmra.mrb[0].mxu0 %v3573
      %v3775 = vpop.f32.mrb[0].mxu0
      %v3776 = vadd.f32 0.0, %v3775
      %v3777 = vpop.f32.mrb[0].mxu0
      %3778 = vmatprep.mubr.f32.mxu0 0.0
      %3779 = vmatmul.mubr.f32.gmra.mrb[0].mxu0 %v3576
      %v3780 = vpop.f32.mrb[0].mxu0
      %v3781 = vadd.f32 0.0, %v3780
      %v3782 = vpop.f32.mrb[0].mxu0
      %3783 = vmatprep.mubr.f32.mxu0 0.0
      %3784 = vmatmul.mubr.f32.gmra.mrb[0].mxu0 %v3579
      %v3785 = vpop.f32.mrb[0].mxu0
      %v3786 = vadd.f32 0.0, %v3785
      %v3787 = vpop.f32.mrb[0].mxu0
      %3788 = vmatprep.mubr.f32.mxu0 0.0
      %3789 = vmatmul.mubr.f32.gmra.mrb[0].mxu0 %v3582
      %v3790 = vpop.f32.mrb[0].mxu0
      %v3791 = vadd.f32 0.0, %v3790
      %v3792 = vpop.f32.mrb[0].mxu0
      %3793 = vmatprep.mubr.f32.mxu0 0.0
      %3794 = vmatmul.mubr.f32.gmra.mrb[0].mxu0 %v3585
      %v3795 = vpop.f32.mrb[0].mxu0
      %v3796 = vadd.f32 0.0, %v3795
      %v3797 = vpop.f32.mrb[0].mxu0
      %3798 = vmatprep.mubr.f32.mxu0 0.0
      %3799 = vmatmul.mubr.f32.gmra.mrb[0].mxu0 %v3588
      %v3800 = vpop.f32.mrb[0].mxu0
      %v3801 = vadd.f32 0.0, %v3800
      %v3802 = vpop.f32.mrb[0].mxu0
      %3803 = vmatprep.mubr.f32.mxu0 0.0
      %3804 = vmatmul.mubr.f32.gmra.mrb[0].mxu0 %v3591
      %v3805 = vpop.f32.mrb[0].mxu0
      %v3806 = vadd.f32 0.0, %v3805
      %v3807 = vpop.f32.mrb[0].mxu0
      %3808 = vmatprep.mubr.f32.mxu0 0.0
      %3809 = vmatmul.mubr.f32.gmra.mrb[0].mxu0 %v3594
      %v3810 = vpop.f32.mrb[0].mxu0
      %v3811 = vadd.f32 0.0, %v3810
      %v3812 = vpop.f32.mrb[0].mxu0
      %3813 = vmatprep.mubr.f32.mxu0 0.0
      %3814 = vmatmul.mubr.f32.gmra.mrb[0].mxu0 %v3597
      %v3815 = vpop.f32.mrb[0].mxu0
      %v3816 = vadd.f32 0.0, %v3815
      %v3817 = vpop.f32.mrb[0].mxu0
      %3818 = vmatprep.mubr.f32.mxu0 0.0
      %3819 = vmatmul.mubr.f32.gmra.mrb[0].mxu0 %v3600
      %v3820 = vpop.f32.mrb[0].mxu0
      %v3821 = vadd.f32 0.0, %v3820
      %v3822 = vpop.f32.mrb[0].mxu0
      %3823 = vmatprep.mubr.f32.mxu0 0.0
      %3824 = vmatmul.mubr.f32.gmra.mrb[0].mxu0 %v3603
      %v3825 = vpop.f32.mrb[0].mxu0
      %v3826 = vadd.f32 0.0, %v3825
      %v3827 = vpop.f32.mrb[0].mxu0
      %3828 = vmatprep.mubr.f32.mxu0 0.0
      %3829 = vmatmul.mubr.f32.gmra.mrb[0].mxu0 %v3606
      %v3830 = vpop.f32.mrb[0].mxu0
      %v3831 = vadd.f32 0.0, %v3830
      %v3832 = vpop.f32.mrb[0].mxu0
      %3833 = vmatprep.mubr.f32.mxu0 0.0
      %3834 = vmatmul.mubr.f32.gmra.mrb[0].mxu0 %v3609
      %v3835 = vpop.f32.mrb[0].mxu0
      %v3836 = vadd.f32 0.0, %v3835
      %v3837 = vpop.f32.mrb[0].mxu0
      %3838 = vdwg.mxu0
      %v3839 = vadd.f32 %v3448, %v3681
      %v3840 = vadd.f32 %v3449, %v3686
      %v3841 = vadd.f32 %v3450, %v3691
      %v3842 = vadd.f32 %v3451, %v3696
      %v3843 = vadd.f32 %v3452, %v3701
      %v3844 = vadd.f32 %v3453, %v3706
      %v3845 = vadd.f32 %v3454, %v3711
      %v3846 = vadd.f32 %v3455, %v3716
      %v3847 = vadd.f32 %v3456, %v3721
      %v3848 = vadd.f32 %v3457, %v3726
      %v3849 = vadd.f32 %v3458, %v3731
      %v3850 = vadd.f32 %v3459, %v3736
      %v3851 = vadd.f32 %v3460, %v3741
      %v3852 = vadd.f32 %v3461, %v3746
      %v3853 = vadd.f32 %v3462, %v3751
      %v3854 = vadd.f32 %v3463, %v3756
      %v3855 = vadd.f32 %v3464, %v3761
      %v3856 = vadd.f32 %v3465, %v3766
      %v3857 = vadd.f32 %v3466, %v3771
      %v3858 = vadd.f32 %v3467, %v3776
      %v3859 = vadd.f32 %v3468, %v3781
      %v3860 = vadd.f32 %v3469, %v3786
      %v3861 = vadd.f32 %v3470, %v3791
      %v3862 = vadd.f32 %v3471, %v3796
      %v3863 = vadd.f32 %v3472, %v3801
      %v3864 = vadd.f32 %v3473, %v3806
      %v3865 = vadd.f32 %v3474, %v3811
      %v3866 = vadd.f32 %v3475, %v3816
      %v3867 = vadd.f32 %v3476, %v3821
      %v3868 = vadd.f32 %v3477, %v3826
      %v3869 = vadd.f32 %v3478, %v3831
      %v3870 = vadd.f32 %v3479, %v3836
      %v3872 = vlaneseq
      %v3873 = vshrl.u32 %v3872, 7
      %v3874 = vsub.s32 0, %v3873
      %v3875 = vrot.slane %v420, %v3874
      %v3877 = vadd.f32 %v3839, %v3875
      %v3878 = vadd.f32 %v3840, %v3875
      %v3879 = vadd.f32 %v3841, %v3875
      %v3880 = vadd.f32 %v3842, %v3875
      %v3881 = vadd.f32 %v3843, %v3875
      %v3882 = vadd.f32 %v3844, %v3875
      %v3883 = vadd.f32 %v3845, %v3875
      %v3884 = vadd.f32 %v3846, %v3875
      %v3885 = vadd.f32 %v3847, %v3875
      %v3886 = vadd.f32 %v3848, %v3875
      %v3887 = vadd.f32 %v3849, %v3875
      %v3888 = vadd.f32 %v3850, %v3875
      %v3889 = vadd.f32 %v3851, %v3875
      %v3890 = vadd.f32 %v3852, %v3875
      %v3891 = vadd.f32 %v3853, %v3875
      %v3892 = vadd.f32 %v3854, %v3875
      %v3893 = vadd.f32 %v3855, %v3875
      %v3894 = vadd.f32 %v3856, %v3875
      %v3895 = vadd.f32 %v3857, %v3875
      %v3896 = vadd.f32 %v3858, %v3875
      %v3897 = vadd.f32 %v3859, %v3875
      %v3898 = vadd.f32 %v3860, %v3875
      %v3899 = vadd.f32 %v3861, %v3875
      %v3900 = vadd.f32 %v3862, %v3875
      %v3901 = vadd.f32 %v3863, %v3875
      %v3902 = vadd.f32 %v3864, %v3875
      %v3903 = vadd.f32 %v3865, %v3875
      %v3904 = vadd.f32 %v3866, %v3875
      %v3905 = vadd.f32 %v3867, %v3875
      %v3906 = vadd.f32 %v3868, %v3875
      %v3907 = vadd.f32 %v3869, %v3875
      %v3908 = vadd.f32 %v3870, %v3875
      %v3909 = vsel %vm258, %v3877, 0.0
      %v3910 = vsel %vm258, %v3878, 0.0
      %v3911 = vadd.f32 %v3909, %v3910
      %v3912 = vsel %vm258, %v3879, 0.0
      %v3913 = vadd.f32 %v3911, %v3912
      %v3914 = vsel %vm258, %v3880, 0.0
      %v3915 = vadd.f32 %v3913, %v3914
      %v3916 = vsel %vm258, %v3881, 0.0
      %v3917 = vadd.f32 %v3915, %v3916
      %v3918 = vsel %vm258, %v3882, 0.0
      %v3919 = vadd.f32 %v3917, %v3918
      %v3920 = vsel %vm258, %v3883, 0.0
      %v3921 = vadd.f32 %v3919, %v3920
      %v3922 = vsel %vm258, %v3884, 0.0
      %v3923 = vadd.f32 %v3921, %v3922
      %v3924 = vsel %vm258, %v3885, 0.0
      %v3925 = vadd.f32 %v3923, %v3924
      %v3926 = vsel %vm258, %v3886, 0.0
      %v3927 = vadd.f32 %v3925, %v3926
      %v3928 = vsel %vm258, %v3887, 0.0
      %v3929 = vadd.f32 %v3927, %v3928
      %v3930 = vsel %vm258, %v3888, 0.0
      %v3931 = vadd.f32 %v3929, %v3930
      %v3932 = vsel %vm258, %v3889, 0.0
      %v3933 = vadd.f32 %v3931, %v3932
      %v3934 = vsel %vm258, %v3890, 0.0
      %v3935 = vadd.f32 %v3933, %v3934
      %v3936 = vsel %vm258, %v3891, 0.0
      %v3937 = vadd.f32 %v3935, %v3936
      %v3938 = vsel %vm258, %v3892, 0.0
      %v3939 = vadd.f32 %v3937, %v3938
      %v3940 = vsel %vm258, %v3893, 0.0
      %v3941 = vadd.f32 %v3939, %v3940
      %v3942 = vsel %vm258, %v3894, 0.0
      %v3943 = vadd.f32 %v3941, %v3942
      %v3944 = vsel %vm258, %v3895, 0.0
      %v3945 = vadd.f32 %v3943, %v3944
      %v3946 = vsel %vm258, %v3896, 0.0
      %v3947 = vadd.f32 %v3945, %v3946
      %v3948 = vsel %vm258, %v3897, 0.0
      %v3949 = vadd.f32 %v3947, %v3948
      %v3950 = vsel %vm258, %v3898, 0.0
      %v3951 = vadd.f32 %v3949, %v3950
      %v3952 = vsel %vm258, %v3899, 0.0
      %v3953 = vadd.f32 %v3951, %v3952
      %v3954 = vsel %vm258, %v3900, 0.0
      %v3955 = vadd.f32 %v3953, %v3954
      %v3956 = vsel %vm258, %v3901, 0.0
      %v3957 = vadd.f32 %v3955, %v3956
      %v3958 = vsel %vm258, %v3902, 0.0
      %v3959 = vadd.f32 %v3957, %v3958
      %v3960 = vsel %vm258, %v3903, 0.0
      %v3961 = vadd.f32 %v3959, %v3960
      %v3962 = vsel %vm258, %v3904, 0.0
      %v3963 = vadd.f32 %v3961, %v3962
      %v3964 = vsel %vm258, %v3905, 0.0
      %v3965 = vadd.f32 %v3963, %v3964
      %v3966 = vsel %vm258, %v3906, 0.0
      %v3967 = vadd.f32 %v3965, %v3966
      %v3968 = vsel %vm258, %v3907, 0.0
      %v3969 = vadd.f32 %v3967, %v3968
      %v3970 = vsel %vm258, %v3908, 0.0
      %v3971 = vadd.f32 %v3969, %v3970
      %v3972 = vrot.slane %v3971, 4
      %v3973 = vadd.f32 %v3971, %v3972
      %v3974 = vrot.slane %v3973, 2
      %v3975 = vadd.f32 %v3973, %v3974
      %v3976 = vrot.slane %v3975, 1
      %v3977 = vadd.f32 %v3975, %v3976
      %v3978 = vmul.f32 %v3877, %v3877
      %v3979 = vmul.f32 %v3878, %v3878
      %v3980 = vmul.f32 %v3879, %v3879
      %v3981 = vmul.f32 %v3880, %v3880
      %v3982 = vmul.f32 %v3881, %v3881
      %v3983 = vmul.f32 %v3882, %v3882
      %v3984 = vmul.f32 %v3883, %v3883
      %v3985 = vmul.f32 %v3884, %v3884
      %v3986 = vmul.f32 %v3885, %v3885
      %v3987 = vmul.f32 %v3886, %v3886
      %v3988 = vmul.f32 %v3887, %v3887
      %v3989 = vmul.f32 %v3888, %v3888
      %v3990 = vmul.f32 %v3889, %v3889
      %v3991 = vmul.f32 %v3890, %v3890
      %v3992 = vmul.f32 %v3891, %v3891
      %v3993 = vmul.f32 %v3892, %v3892
      %v3994 = vmul.f32 %v3893, %v3893
      %v3995 = vmul.f32 %v3894, %v3894
      %v3996 = vmul.f32 %v3895, %v3895
      %v3997 = vmul.f32 %v3896, %v3896
      %v3998 = vmul.f32 %v3897, %v3897
      %v3999 = vmul.f32 %v3898, %v3898
      %v4000 = vmul.f32 %v3899, %v3899
      %v4001 = vmul.f32 %v3900, %v3900
      %v4002 = vmul.f32 %v3901, %v3901
      %v4003 = vmul.f32 %v3902, %v3902
      %v4004 = vmul.f32 %v3903, %v3903
      %v4005 = vmul.f32 %v3904, %v3904
      %v4006 = vmul.f32 %v3905, %v3905
      %v4007 = vmul.f32 %v3906, %v3906
      %v4008 = vmul.f32 %v3907, %v3907
      %v4009 = vmul.f32 %v3908, %v3908
      %v4010 = vsel %vm258, %v3978, 0.0
      %v4011 = vsel %vm258, %v3979, 0.0
      %v4012 = vadd.f32 %v4010, %v4011
      %v4013 = vsel %vm258, %v3980, 0.0
      %v4014 = vadd.f32 %v4012, %v4013
      %v4015 = vsel %vm258, %v3981, 0.0
      %v4016 = vadd.f32 %v4014, %v4015
      %v4017 = vsel %vm258, %v3982, 0.0
      %v4018 = vadd.f32 %v4016, %v4017
      %v4019 = vsel %vm258, %v3983, 0.0
      %v4020 = vadd.f32 %v4018, %v4019
      %v4021 = vsel %vm258, %v3984, 0.0
      %v4022 = vadd.f32 %v4020, %v4021
      %v4023 = vsel %vm258, %v3985, 0.0
      %v4024 = vadd.f32 %v4022, %v4023
      %v4025 = vsel %vm258, %v3986, 0.0
      %v4026 = vadd.f32 %v4024, %v4025
      %v4027 = vsel %vm258, %v3987, 0.0
      %v4028 = vadd.f32 %v4026, %v4027
      %v4029 = vsel %vm258, %v3988, 0.0
      %v4030 = vadd.f32 %v4028, %v4029
      %v4031 = vsel %vm258, %v3989, 0.0
      %v4032 = vadd.f32 %v4030, %v4031
      %v4033 = vsel %vm258, %v3990, 0.0
      %v4034 = vadd.f32 %v4032, %v4033
      %v4035 = vsel %vm258, %v3991, 0.0
      %v4036 = vadd.f32 %v4034, %v4035
      %v4037 = vsel %vm258, %v3992, 0.0
      %v4038 = vadd.f32 %v4036, %v4037
      %v4039 = vsel %vm258, %v3993, 0.0
      %v4040 = vadd.f32 %v4038, %v4039
      %v4041 = vsel %vm258, %v3994, 0.0
      %v4042 = vadd.f32 %v4040, %v4041
      %v4043 = vsel %vm258, %v3995, 0.0
      %v4044 = vadd.f32 %v4042, %v4043
      %v4045 = vsel %vm258, %v3996, 0.0
      %v4046 = vadd.f32 %v4044, %v4045
      %v4047 = vsel %vm258, %v3997, 0.0
      %v4048 = vadd.f32 %v4046, %v4047
      %v4049 = vsel %vm258, %v3998, 0.0
      %v4050 = vadd.f32 %v4048, %v4049
      %v4051 = vsel %vm258, %v3999, 0.0
      %v4052 = vadd.f32 %v4050, %v4051
      %v4053 = vsel %vm258, %v4000, 0.0
      %v4054 = vadd.f32 %v4052, %v4053
      %v4055 = vsel %vm258, %v4001, 0.0
      %v4056 = vadd.f32 %v4054, %v4055
      %v4057 = vsel %vm258, %v4002, 0.0
      %v4058 = vadd.f32 %v4056, %v4057
      %v4059 = vsel %vm258, %v4003, 0.0
      %v4060 = vadd.f32 %v4058, %v4059
      %v4061 = vsel %vm258, %v4004, 0.0
      %v4062 = vadd.f32 %v4060, %v4061
      %v4063 = vsel %vm258, %v4005, 0.0
      %v4064 = vadd.f32 %v4062, %v4063
      %v4065 = vsel %vm258, %v4006, 0.0
      %v4066 = vadd.f32 %v4064, %v4065
      %v4067 = vsel %vm258, %v4007, 0.0
      %v4068 = vadd.f32 %v4066, %v4067
      %v4069 = vsel %vm258, %v4008, 0.0
      %v4070 = vadd.f32 %v4068, %v4069
      %v4071 = vsel %vm258, %v4009, 0.0
      %v4072 = vadd.f32 %v4070, %v4071
      %v4073 = vrot.slane %v4072, 4
      %v4074 = vadd.f32 %v4072, %v4073
      %v4075 = vrot.slane %v4074, 2
      %v4076 = vadd.f32 %v4074, %v4075
      %v4077 = vrot.slane %v4076, 1
      %v4078 = vadd.f32 %v4076, %v4077
      %v4079 = vmul.f32 %v3977, 0.00390625
      %v4080 = vmul.f32 %v4078, 0.00390625
      %v4081 = vmul.f32 %v4079, %v4079
      %v4082 = vsub.f32 %v4080, %v4081
      %v4083 = vmax.f32 %v4082, 0.0
      %v4084 = vsub.f32 %v3877, %v4079
      %v4085 = vsub.f32 %v3878, %v4079
      %v4086 = vsub.f32 %v3879, %v4079
      %v4087 = vsub.f32 %v3880, %v4079
      %v4088 = vsub.f32 %v3881, %v4079
      %v4089 = vsub.f32 %v3882, %v4079
      %v4090 = vsub.f32 %v3883, %v4079
      %v4091 = vsub.f32 %v3884, %v4079
      %v4092 = vsub.f32 %v3885, %v4079
      %v4093 = vsub.f32 %v3886, %v4079
      %v4094 = vsub.f32 %v3887, %v4079
      %v4095 = vsub.f32 %v3888, %v4079
      %v4096 = vsub.f32 %v3889, %v4079
      %v4097 = vsub.f32 %v3890, %v4079
      %v4098 = vsub.f32 %v3891, %v4079
      %v4099 = vsub.f32 %v3892, %v4079
      %v4100 = vsub.f32 %v3893, %v4079
      %v4101 = vsub.f32 %v3894, %v4079
      %v4102 = vsub.f32 %v3895, %v4079
      %v4103 = vsub.f32 %v3896, %v4079
      %v4104 = vsub.f32 %v3897, %v4079
      %v4105 = vsub.f32 %v3898, %v4079
      %v4106 = vsub.f32 %v3899, %v4079
      %v4107 = vsub.f32 %v3900, %v4079
      %v4108 = vsub.f32 %v3901, %v4079
      %v4109 = vsub.f32 %v3902, %v4079
      %v4110 = vsub.f32 %v3903, %v4079
      %v4111 = vsub.f32 %v3904, %v4079
      %v4112 = vsub.f32 %v3905, %v4079
      %v4113 = vsub.f32 %v3906, %v4079
      %v4114 = vsub.f32 %v3907, %v4079
      %v4115 = vsub.f32 %v3908, %v4079
      %v4116 = vadd.f32 %v4083, 1e-05
      %v4117 = vrsqrt.pop %v4116
      %v4118 = vmul.f32 %v4084, %v4117
      %v4119 = vmul.f32 %v4085, %v4117
      %v4120 = vmul.f32 %v4086, %v4117
      %v4121 = vmul.f32 %v4087, %v4117
      %v4122 = vmul.f32 %v4088, %v4117
      %v4123 = vmul.f32 %v4089, %v4117
      %v4124 = vmul.f32 %v4090, %v4117
      %v4125 = vmul.f32 %v4091, %v4117
      %v4126 = vmul.f32 %v4092, %v4117
      %v4127 = vmul.f32 %v4093, %v4117
      %v4128 = vmul.f32 %v4094, %v4117
      %v4129 = vmul.f32 %v4095, %v4117
      %v4130 = vmul.f32 %v4096, %v4117
      %v4131 = vmul.f32 %v4097, %v4117
      %v4132 = vmul.f32 %v4098, %v4117
      %v4133 = vmul.f32 %v4099, %v4117
      %v4134 = vmul.f32 %v4100, %v4117
      %v4135 = vmul.f32 %v4101, %v4117
      %v4136 = vmul.f32 %v4102, %v4117
      %v4137 = vmul.f32 %v4103, %v4117
      %v4138 = vmul.f32 %v4104, %v4117
      %v4139 = vmul.f32 %v4105, %v4117
      %v4140 = vmul.f32 %v4106, %v4117
      %v4141 = vmul.f32 %v4107, %v4117
      %v4142 = vmul.f32 %v4108, %v4117
      %v4143 = vmul.f32 %v4109, %v4117
      %v4144 = vmul.f32 %v4110, %v4117
      %v4145 = vmul.f32 %v4111, %v4117
      %v4146 = vmul.f32 %v4112, %v4117
      %v4147 = vmul.f32 %v4113, %v4117
      %v4148 = vmul.f32 %v4114, %v4117
      %v4149 = vmul.f32 %v4115, %v4117
      %v4150 = vmax.f32 %v4118, 0.0
      %v4151 = vmax.f32 %v4119, 0.0
      %v4152 = vmax.f32 %v4120, 0.0
      %v4153 = vmax.f32 %v4121, 0.0
      %v4154 = vmax.f32 %v4122, 0.0
      %v4155 = vmax.f32 %v4123, 0.0
      %v4156 = vmax.f32 %v4124, 0.0
      %v4157 = vmax.f32 %v4125, 0.0
      %v4158 = vmax.f32 %v4126, 0.0
      %v4159 = vmax.f32 %v4127, 0.0
      %v4160 = vmax.f32 %v4128, 0.0
      %v4161 = vmax.f32 %v4129, 0.0
      %v4162 = vmax.f32 %v4130, 0.0
      %v4163 = vmax.f32 %v4131, 0.0
      %v4164 = vmax.f32 %v4132, 0.0
      %v4165 = vmax.f32 %v4133, 0.0
      %v4166 = vmax.f32 %v4134, 0.0
      %v4167 = vmax.f32 %v4135, 0.0
      %v4168 = vmax.f32 %v4136, 0.0
      %v4169 = vmax.f32 %v4137, 0.0
      %v4170 = vmax.f32 %v4138, 0.0
      %v4171 = vmax.f32 %v4139, 0.0
      %v4172 = vmax.f32 %v4140, 0.0
      %v4173 = vmax.f32 %v4141, 0.0
      %v4174 = vmax.f32 %v4142, 0.0
      %v4175 = vmax.f32 %v4143, 0.0
      %v4176 = vmax.f32 %v4144, 0.0
      %v4177 = vmax.f32 %v4145, 0.0
      %v4178 = vmax.f32 %v4146, 0.0
      %v4179 = vmax.f32 %v4147, 0.0
      %v4180 = vmax.f32 %v4148, 0.0
      %v4181 = vmax.f32 %v4149, 0.0
      %4182 = vst.msk [vmem:[%s257] sm:$0xff] %vm258, %v4150
      %4183 = vst.msk [vmem:[%s257 + $0x8] sm:$0xff] %vm258, %v4151
      %4184 = vst.msk [vmem:[%s257 + $0x10] sm:$0xff] %vm258, %v4152
      %4185 = vst.msk [vmem:[%s257 + $0x18] sm:$0xff] %vm258, %v4153
      %4186 = vst.msk [vmem:[%s257 + $0x20] sm:$0xff] %vm258, %v4154
      %4187 = vst.msk [vmem:[%s257 + $0x28] sm:$0xff] %vm258, %v4155
      %4188 = vst.msk [vmem:[%s257 + $0x30] sm:$0xff] %vm258, %v4156
      %4189 = vst.msk [vmem:[%s257 + $0x38] sm:$0xff] %vm258, %v4157
      %4190 = vst.msk [vmem:[%s257 + $0x40] sm:$0xff] %vm258, %v4158
      %4191 = vst.msk [vmem:[%s257 + $0x48] sm:$0xff] %vm258, %v4159
      %4192 = vst.msk [vmem:[%s257 + $0x50] sm:$0xff] %vm258, %v4160
      %4193 = vst.msk [vmem:[%s257 + $0x58] sm:$0xff] %vm258, %v4161
      %4194 = vst.msk [vmem:[%s257 + $0x60] sm:$0xff] %vm258, %v4162
      %4195 = vst.msk [vmem:[%s257 + $0x68] sm:$0xff] %vm258, %v4163
      %4196 = vst.msk [vmem:[%s257 + $0x70] sm:$0xff] %vm258, %v4164
      %4197 = vst.msk [vmem:[%s257 + $0x78] sm:$0xff] %vm258, %v4165
      %4198 = vst.msk [vmem:[%s257 + $0x80] sm:$0xff] %vm258, %v4166
      %4199 = vst.msk [vmem:[%s257 + $0x88] sm:$0xff] %vm258, %v4167
      %4200 = vst.msk [vmem:[%s257 + $0x90] sm:$0xff] %vm258, %v4168
      %4201 = vst.msk [vmem:[%s257 + $0x98] sm:$0xff] %vm258, %v4169
      %4202 = vst.msk [vmem:[%s257 + $0xa0] sm:$0xff] %vm258, %v4170
      %4203 = vst.msk [vmem:[%s257 + $0xa8] sm:$0xff] %vm258, %v4171
      %4204 = vst.msk [vmem:[%s257 + $0xb0] sm:$0xff] %vm258, %v4172
      %4205 = vst.msk [vmem:[%s257 + $0xb8] sm:$0xff] %vm258, %v4173
      %4206 = vst.msk [vmem:[%s257 + $0xc0] sm:$0xff] %vm258, %v4174
      %4207 = vst.msk [vmem:[%s257 + $0xc8] sm:$0xff] %vm258, %v4175
      %4208 = vst.msk [vmem:[%s257 + $0xd0] sm:$0xff] %vm258, %v4176
      %4209 = vst.msk [vmem:[%s257 + $0xd8] sm:$0xff] %vm258, %v4177
      %4210 = vst.msk [vmem:[%s257 + $0xe0] sm:$0xff] %vm258, %v4178
      %4211 = vst.msk [vmem:[%s257 + $0xe8] sm:$0xff] %vm258, %v4179
      %4212 = vst.msk [vmem:[%s257 + $0xf0] sm:$0xff] %vm258, %v4180
      %4213 = vst.msk [vmem:[%s257 + $0xf8] sm:$0xff] %vm258, %v4181
      %4214 = vst.msk [vmem:[%s291 + $0x1] sm:$0xff] %vm258, %v4150
      %4215 = vst.msk [vmem:[%s291 + $0x9] sm:$0x7f] %vm293, %v4151
      %4216 = vst.msk [vmem:[%s291 + $0x11] sm:$0xff] %vm258, %v4152
      %4217 = vst.msk [vmem:[%s291 + $0x19] sm:$0x7f] %vm293, %v4153
      %4218 = vst.msk [vmem:[%s291 + $0x21] sm:$0xff] %vm258, %v4154
      %4219 = vst.msk [vmem:[%s291 + $0x29] sm:$0x7f] %vm293, %v4155
      %4220 = vst.msk [vmem:[%s291 + $0x31] sm:$0xff] %vm258, %v4156
      %4221 = vst.msk [vmem:[%s291 + $0x39] sm:$0x7f] %vm293, %v4157
      %4222 = vst.msk [vmem:[%s291 + $0x41] sm:$0xff] %vm258, %v4158
      %4223 = vst.msk [vmem:[%s291 + $0x49] sm:$0x7f] %vm293, %v4159
      %4224 = vst.msk [vmem:[%s291 + $0x51] sm:$0xff] %vm258, %v4160
      %4225 = vst.msk [vmem:[%s291 + $0x59] sm:$0x7f] %vm293, %v4161
      %4226 = vst.msk [vmem:[%s291 + $0x61] sm:$0xff] %vm258, %v4162
      %4227 = vst.msk [vmem:[%s291 + $0x69] sm:$0x7f] %vm293, %v4163
      %4228 = vst.msk [vmem:[%s291 + $0x71] sm:$0xff] %vm258, %v4164
      %4229 = vst.msk [vmem:[%s291 + $0x79] sm:$0x7f] %vm293, %v4165
      %4230 = vst.msk [vmem:[%s291 + $0x81] sm:$0xff] %vm258, %v4166
      %4231 = vst.msk [vmem:[%s291 + $0x89] sm:$0x7f] %vm293, %v4167
      %4232 = vst.msk [vmem:[%s291 + $0x91] sm:$0xff] %vm258, %v4168
      %4233 = vst.msk [vmem:[%s291 + $0x99] sm:$0x7f] %vm293, %v4169
      %4234 = vst.msk [vmem:[%s291 + $0xa1] sm:$0xff] %vm258, %v4170
      %4235 = vst.msk [vmem:[%s291 + $0xa9] sm:$0x7f] %vm293, %v4171
      %4236 = vst.msk [vmem:[%s291 + $0xb1] sm:$0xff] %vm258, %v4172
      %4237 = vst.msk [vmem:[%s291 + $0xb9] sm:$0x7f] %vm293, %v4173
      %4238 = vst.msk [vmem:[%s291 + $0xc1] sm:$0xff] %vm258, %v4174
      %4239 = vst.msk [vmem:[%s291 + $0xc9] sm:$0x7f] %vm293, %v4175
      %4240 = vst.msk [vmem:[%s291 + $0xd1] sm:$0xff] %vm258, %v4176
      %4241 = vst.msk [vmem:[%s291 + $0xd9] sm:$0x7f] %vm293, %v4177
      %4242 = vst.msk [vmem:[%s291 + $0xe1] sm:$0xff] %vm258, %v4178
      %4243 = vst.msk [vmem:[%s291 + $0xe9] sm:$0x7f] %vm293, %v4179
      %4244 = vst.msk [vmem:[%s291 + $0xf1] sm:$0xff] %vm258, %v4180
      %4245 = vst.msk [vmem:[%s291 + $0xf9] sm:$0x7f] %vm293, %v4181
      %4246 = vst.msk [vmem:[%s291 - $0x1] sm:$0x2] %vm325, %v4150
      %4247 = vst.msk [vmem:[%s291 + $0xf] sm:$0x2] %vm325, %v4152
      %4248 = vst.msk [vmem:[%s291 + $0x1f] sm:$0x2] %vm325, %v4154
      %4249 = vst.msk [vmem:[%s291 + $0x2f] sm:$0x2] %vm325, %v4156
      %4250 = vst.msk [vmem:[%s291 + $0x3f] sm:$0x2] %vm325, %v4158
      %4251 = vst.msk [vmem:[%s291 + $0x4f] sm:$0x2] %vm325, %v4160
      %4252 = vst.msk [vmem:[%s291 + $0x5f] sm:$0x2] %vm325, %v4162
      %4253 = vst.msk [vmem:[%s291 + $0x6f] sm:$0x2] %vm325, %v4164
      %4254 = vst.msk [vmem:[%s291 + $0x7f] sm:$0x2] %vm325, %v4166
      %4255 = vst.msk [vmem:[%s291 + $0x8f] sm:$0x2] %vm325, %v4168
      %4256 = vst.msk [vmem:[%s291 + $0x9f] sm:$0x2] %vm325, %v4170
      %4257 = vst.msk [vmem:[%s291 + $0xaf] sm:$0x2] %vm325, %v4172
      %4258 = vst.msk [vmem:[%s291 + $0xbf] sm:$0x2] %vm325, %v4174
      %4259 = vst.msk [vmem:[%s291 + $0xcf] sm:$0x2] %vm325, %v4176
      %4260 = vst.msk [vmem:[%s291 + $0xdf] sm:$0x2] %vm325, %v4178
      %4261 = vst.msk [vmem:[%s291 + $0xef] sm:$0x2] %vm325, %v4180
      %4262 = vst.msk [vmem:[%s342 - $0x1] sm:$0xfe] %vm343, %v4150
      %4263 = vst.msk [vmem:[%s342 + $0x7] sm:$0xff] %vm258, %v4151
      %4264 = vst.msk [vmem:[%s342 + $0xf] sm:$0xfe] %vm343, %v4152
      %4265 = vst.msk [vmem:[%s342 + $0x17] sm:$0xff] %vm258, %v4153
      %4266 = vst.msk [vmem:[%s342 + $0x1f] sm:$0xfe] %vm343, %v4154
      %4267 = vst.msk [vmem:[%s342 + $0x27] sm:$0xff] %vm258, %v4155
      %4268 = vst.msk [vmem:[%s342 + $0x2f] sm:$0xfe] %vm343, %v4156
      %4269 = vst.msk [vmem:[%s342 + $0x37] sm:$0xff] %vm258, %v4157
      %4270 = vst.msk [vmem:[%s342 + $0x3f] sm:$0xfe] %vm343, %v4158
      %4271 = vst.msk [vmem:[%s342 + $0x47] sm:$0xff] %vm258, %v4159
      %4272 = vst.msk [vmem:[%s342 + $0x4f] sm:$0xfe] %vm343, %v4160
      %4273 = vst.msk [vmem:[%s342 + $0x57] sm:$0xff] %vm258, %v4161
      %4274 = vst.msk [vmem:[%s342 + $0x5f] sm:$0xfe] %vm343, %v4162
      %4275 = vst.msk [vmem:[%s342 + $0x67] sm:$0xff] %vm258, %v4163
      %4276 = vst.msk [vmem:[%s342 + $0x6f] sm:$0xfe] %vm343, %v4164
      %4277 = vst.msk [vmem:[%s342 + $0x77] sm:$0xff] %vm258, %v4165
      %4278 = vst.msk [vmem:[%s342 + $0x7f] sm:$0xfe] %vm343, %v4166
      %4279 = vst.msk [vmem:[%s342 + $0x87] sm:$0xff] %vm258, %v4167
      %4280 = vst.msk [vmem:[%s342 + $0x8f] sm:$0xfe] %vm343, %v4168
      %4281 = vst.msk [vmem:[%s342 + $0x97] sm:$0xff] %vm258, %v4169
      %4282 = vst.msk [vmem:[%s342 + $0x9f] sm:$0xfe] %vm343, %v4170
      %4283 = vst.msk [vmem:[%s342 + $0xa7] sm:$0xff] %vm258, %v4171
      %4284 = vst.msk [vmem:[%s342 + $0xaf] sm:$0xfe] %vm343, %v4172
      %4285 = vst.msk [vmem:[%s342 + $0xb7] sm:$0xff] %vm258, %v4173
      %4286 = vst.msk [vmem:[%s342 + $0xbf] sm:$0xfe] %vm343, %v4174
      %4287 = vst.msk [vmem:[%s342 + $0xc7] sm:$0xff] %vm258, %v4175
      %4288 = vst.msk [vmem:[%s342 + $0xcf] sm:$0xfe] %vm343, %v4176
      %4289 = vst.msk [vmem:[%s342 + $0xd7] sm:$0xff] %vm258, %v4177
      %4290 = vst.msk [vmem:[%s342 + $0xdf] sm:$0xfe] %vm343, %v4178
      %4291 = vst.msk [vmem:[%s342 + $0xe7] sm:$0xff] %vm258, %v4179
      %4292 = vst.msk [vmem:[%s342 + $0xef] sm:$0xfe] %vm343, %v4180
      %4293 = vst.msk [vmem:[%s342 + $0xf7] sm:$0xff] %vm258, %v4181
      %4294 = vst.msk [vmem:[%s342 + $0x9] sm:$0x40] %vm376, %v4151
      %4295 = vst.msk [vmem:[%s342 + $0x19] sm:$0x40] %vm376, %v4153
      %4296 = vst.msk [vmem:[%s342 + $0x29] sm:$0x40] %vm376, %v4155
      %4297 = vst.msk [vmem:[%s342 + $0x39] sm:$0x40] %vm376, %v4157
      %4298 = vst.msk [vmem:[%s342 + $0x49] sm:$0x40] %vm376, %v4159
      %4299 = vst.msk [vmem:[%s342 + $0x59] sm:$0x40] %vm376, %v4161
      %4300 = vst.msk [vmem:[%s342 + $0x69] sm:$0x40] %vm376, %v4163
      %4301 = vst.msk [vmem:[%s342 + $0x79] sm:$0x40] %vm376, %v4165
      %4302 = vst.msk [vmem:[%s342 + $0x89] sm:$0x40] %vm376, %v4167
      %4303 = vst.msk [vmem:[%s342 + $0x99] sm:$0x40] %vm376, %v4169
      %4304 = vst.msk [vmem:[%s342 + $0xa9] sm:$0x40] %vm376, %v4171
      %4305 = vst.msk [vmem:[%s342 + $0xb9] sm:$0x40] %vm376, %v4173
      %4306 = vst.msk [vmem:[%s342 + $0xc9] sm:$0x40] %vm376, %v4175
      %4307 = vst.msk [vmem:[%s342 + $0xd9] sm:$0x40] %vm376, %v4177
      %4308 = vst.msk [vmem:[%s342 + $0xe9] sm:$0x40] %vm376, %v4179
      %4309 = vst.msk [vmem:[%s342 + $0xf9] sm:$0x40] %vm376, %v4181
      %v4310 = vld [vmem:[%s393] sm:$0xff]
      %v4311 = vld [vmem:[%s393 + $0x8] sm:$0xff]
      %v4312 = vld [vmem:[%s393 + $0x120] sm:$0xff]
      %v4313 = vld [vmem:[%s393 + $0x128] sm:$0xff]
      %v4314 = vld [vmem:[%s393 + $0x240] sm:$0xff]
      %v4315 = vld [vmem:[%s393 + $0x248] sm:$0xff]
      %4316 = vst.msk [vmem:[#allocation2] sm:$0xff] %vm258, %v4310
      %4317 = vst.msk [vmem:[#allocation2 + $0x8] sm:$0xff] %vm258, %v4311
      %4318 = vst.msk [vmem:[#allocation2 + $0x120] sm:$0xff] %vm258, %v4312
      %4319 = vst.msk [vmem:[#allocation2 + $0x128] sm:$0xff] %vm258, %v4313
      %4320 = vst.msk [vmem:[#allocation2 + $0x240] sm:$0xff] %vm258, %v4314
      %4321 = vst.msk [vmem:[#allocation2 + $0x248] sm:$0xff] %vm258, %v4315
      %v4322 = vld [vmem:[%s406] sm:$0xff]
      %v4323 = vld [vmem:[%s406 + $0x8] sm:$0xff]
      %v4324 = vld [vmem:[%s406 + $0x120] sm:$0xff]
      %v4325 = vld [vmem:[%s406 + $0x128] sm:$0xff]
      %v4326 = vld [vmem:[%s406 + $0x240] sm:$0xff]
      %v4327 = vld [vmem:[%s406 + $0x248] sm:$0xff]
      %4328 = vst.msk [vmem:[%s413] sm:$0xff] %vm258, %v4322
      %4329 = vst.msk [vmem:[%s413 + $0x8] sm:$0xff] %vm258, %v4323
      %4330 = vst.msk [vmem:[%s413 + $0x120] sm:$0xff] %vm258, %v4324
      %4331 = vst.msk [vmem:[%s413 + $0x128] sm:$0xff] %vm258, %v4325
      %4332 = vst.msk [vmem:[%s413 + $0x240] sm:$0xff] %vm258, %v4326
      %4333 = vst.msk [vmem:[%s413 + $0x248] sm:$0xff] %vm258, %v4327
      %v4334 = vld [vmem:[%s4] sm:$0x1]
      %v4335 = vld [vmem:[#allocation2] sm:$0xff]
      %v4336 = vld [vmem:[#allocation2 + $0x8] sm:$0xff]
      %v4337 = vld [vmem:[#allocation2 + $0x10] sm:$0xff]
      %v4338 = vld [vmem:[#allocation2 + $0x18] sm:$0xff]
      %v4339 = vld [vmem:[#allocation2 + $0x20] sm:$0xff]
      %v4340 = vld [vmem:[#allocation2 + $0x28] sm:$0xff]
      %v4341 = vld [vmem:[#allocation2 + $0x30] sm:$0xff]
      %v4342 = vld [vmem:[#allocation2 + $0x38] sm:$0xff]
      %v4343 = vld [vmem:[#allocation2 + $0x40] sm:$0xff]
      %v4344 = vld [vmem:[#allocation2 + $0x48] sm:$0xff]
      %v4345 = vld [vmem:[#allocation2 + $0x50] sm:$0xff]
      %v4346 = vld [vmem:[#allocation2 + $0x58] sm:$0xff]
      %v4347 = vld [vmem:[#allocation2 + $0x60] sm:$0xff]
      %v4348 = vld [vmem:[#allocation2 + $0x68] sm:$0xff]
      %v4349 = vld [vmem:[#allocation2 + $0x70] sm:$0xff]
      %v4350 = vld [vmem:[#allocation2 + $0x78] sm:$0xff]
      %v4351 = vld [vmem:[#allocation2 + $0x80] sm:$0xff]
      %v4352 = vld [vmem:[#allocation2 + $0x88] sm:$0xff]
      %v4353 = vld [vmem:[#allocation2 + $0x90] sm:$0xff]
      %v4354 = vld [vmem:[#allocation2 + $0x98] sm:$0xff]
      %v4355 = vld [vmem:[#allocation2 + $0xa0] sm:$0xff]
      %v4356 = vld [vmem:[#allocation2 + $0xa8] sm:$0xff]
      %v4357 = vld [vmem:[#allocation2 + $0xb0] sm:$0xff]
      %v4358 = vld [vmem:[#allocation2 + $0xb8] sm:$0xff]
      %v4359 = vld [vmem:[#allocation2 + $0xc0] sm:$0xff]
      %v4360 = vld [vmem:[#allocation2 + $0xc8] sm:$0xff]
      %v4361 = vld [vmem:[#allocation2 + $0xd0] sm:$0xff]
      %v4362 = vld [vmem:[#allocation2 + $0xd8] sm:$0xff]
      %v4363 = vld [vmem:[#allocation2 + $0xe0] sm:$0xff]
      %v4364 = vld [vmem:[#allocation2 + $0xe8] sm:$0xff]
      %v4365 = vld [vmem:[#allocation2 + $0xf0] sm:$0xff]
      %v4366 = vld [vmem:[#allocation2 + $0xf8] sm:$0xff]
      %v4367 = vld [vmem:[%s3] sm:$0xf]
      %v4368 = vld [vmem:[%s454] sm:$0xff]
      %v4369 = vld [vmem:[%s454 + $0x8] sm:$0xff]
      %v4370 = vld [vmem:[%s454 + $0x10] sm:$0xff]
      %v4371 = vld [vmem:[%s454 + $0x18] sm:$0xff]
      %v4372 = vld [vmem:[%s454 + $0x20] sm:$0xff]
      %v4373 = vld [vmem:[%s454 + $0x28] sm:$0xff]
      %v4374 = vld [vmem:[%s454 + $0x30] sm:$0xff]
      %v4375 = vld [vmem:[%s454 + $0x38] sm:$0xff]
      %v4376 = vld [vmem:[%s454 + $0x40] sm:$0xff]
      %v4377 = vld [vmem:[%s454 + $0x48] sm:$0xff]
      %v4378 = vld [vmem:[%s454 + $0x50] sm:$0xff]
      %v4379 = vld [vmem:[%s454 + $0x58] sm:$0xff]
      %v4380 = vld [vmem:[%s454 + $0x60] sm:$0xff]
      %v4381 = vld [vmem:[%s454 + $0x68] sm:$0xff]
      %v4382 = vld [vmem:[%s454 + $0x70] sm:$0xff]
      %v4383 = vld [vmem:[%s454 + $0x78] sm:$0xff]
      %v4384 = vld [vmem:[%s454 + $0x80] sm:$0xff]
      %v4385 = vld [vmem:[%s454 + $0x88] sm:$0xff]
      %v4386 = vld [vmem:[%s454 + $0x90] sm:$0xff]
      %v4387 = vld [vmem:[%s454 + $0x98] sm:$0xff]
      %v4388 = vld [vmem:[%s454 + $0xa0] sm:$0xff]
      %v4389 = vld [vmem:[%s454 + $0xa8] sm:$0xff]
      %v4390 = vld [vmem:[%s454 + $0xb0] sm:$0xff]
      %v4391 = vld [vmem:[%s454 + $0xb8] sm:$0xff]
      %v4392 = vld [vmem:[%s454 + $0xc0] sm:$0xff]
      %v4393 = vld [vmem:[%s454 + $0xc8] sm:$0xff]
      %v4394 = vld [vmem:[%s454 + $0xd0] sm:$0xff]
      %v4395 = vld [vmem:[%s454 + $0xd8] sm:$0xff]
      %v4396 = vld [vmem:[%s454 + $0xe0] sm:$0xff]
      %v4397 = vld [vmem:[%s454 + $0xe8] sm:$0xff]
      %v4398 = vld [vmem:[%s454 + $0xf0] sm:$0xff]
      %v4399 = vld [vmem:[%s454 + $0xf8] sm:$0xff]
      %s4400 = scalar_lea.vmem %s3, 4
      %v4401 = vld [vmem:[%s4400] sm:$0xf]
      %v4403 = vsel %vm258, %v4368, 0
      %v4406 = vsel %vm258, %v4369, 0
      %v4409 = vsel %vm258, %v4370, 0
      %v4412 = vsel %vm258, %v4371, 0
      %v4415 = vsel %vm258, %v4372, 0
      %v4418 = vsel %vm258, %v4373, 0
      %v4421 = vsel %vm258, %v4374, 0
      %v4424 = vsel %vm258, %v4375, 0
      %v4427 = vsel %vm258, %v4376, 0
      %v4430 = vsel %vm258, %v4377, 0
      %v4433 = vsel %vm258, %v4378, 0
      %v4436 = vsel %vm258, %v4379, 0
      %v4439 = vsel %vm258, %v4380, 0
      %v4442 = vsel %vm258, %v4381, 0
      %v4445 = vsel %vm258, %v4382, 0
      %v4448 = vsel %vm258, %v4383, 0
      %v4451 = vsel %vm258, %v4384, 0
      %v4454 = vsel %vm258, %v4385, 0
      %v4457 = vsel %vm258, %v4386, 0
      %v4460 = vsel %vm258, %v4387, 0
      %v4463 = vsel %vm258, %v4388, 0
      %v4466 = vsel %vm258, %v4389, 0
      %v4469 = vsel %vm258, %v4390, 0
      %v4472 = vsel %vm258, %v4391, 0
      %v4475 = vsel %vm258, %v4392, 0
      %v4478 = vsel %vm258, %v4393, 0
      %v4481 = vsel %vm258, %v4394, 0
      %v4484 = vsel %vm258, %v4395, 0
      %v4487 = vsel %vm258, %v4396, 0
      %v4490 = vsel %vm258, %v4397, 0
      %v4493 = vsel %vm258, %v4398, 0
      %v4496 = vsel %vm258, %v4399, 0
      %v4499 = vsel %vm585, %v4401, 0
      %4501 = vmatprep.subr.mxu0 0.0
      %4502 = vmatpush1.msra.mxu0 %v4499
      %4503 = vmatprep.subr.mxu0 0.0
      %4504 = vmatpush1.msra.mxu0 0.0
      %4505 = vmatprep.subr.mxu0 0.0
      %4506 = vmatpush1.msra.mxu0 0.0
      %4507 = vmatprep.subr.mxu0 0.0
      %4508 = vmatpush1.msra.mxu0 0.0
      %4509 = vmatprep.subr.mxu0 0.0
      %4510 = vmatpush1.msra.mxu0 0.0
      %4511 = vmatprep.subr.mxu0 0.0
      %4512 = vmatpush1.msra.mxu0 0.0
      %4513 = vmatprep.subr.mxu0 0.0
      %4514 = vmatpush1.msra.mxu0 0.0
      %4515 = vmatprep.subr.mxu0 0.0
      %4516 = vmatpush1.msra.mxu0 0.0
      %4517 = vmatprep.subr.mxu0 0.0
      %4518 = vmatpush1.msra.mxu0 0.0
      %4519 = vmatprep.subr.mxu0 0.0
      %4520 = vmatpush1.msra.mxu0 0.0
      %4521 = vmatprep.subr.mxu0 0.0
      %4522 = vmatpush1.msra.mxu0 0.0
      %4523 = vmatprep.subr.mxu0 0.0
      %4524 = vmatpush1.msra.mxu0 0.0
      %4525 = vmatprep.subr.mxu0 0.0
      %4526 = vmatpush1.msra.mxu0 0.0
      %4527 = vmatprep.subr.mxu0 0.0
      %4528 = vmatpush1.msra.mxu0 0.0
      %4529 = vmatprep.subr.mxu0 0.0
      %4530 = vmatpush1.msra.mxu0 0.0
      %4531 = vmatprep.subr.mxu0 0.0
      %4532 = vmatpush1.msra.mxu0 0.0
      %4533 = vmatprep.subr.mxu0 0.0
      %4534 = vmatpush1.msra.mxu0 0.0
      %4535 = vmatprep.subr.mxu0 0.0
      %4536 = vmatpush1.msra.mxu0 0.0
      %4537 = vmatprep.subr.mxu0 0.0
      %4538 = vmatpush1.msra.mxu0 0.0
      %4539 = vmatprep.subr.mxu0 0.0
      %4540 = vmatpush1.msra.mxu0 0.0
      %4541 = vmatprep.subr.mxu0 0.0
      %4542 = vmatpush1.msra.mxu0 0.0
      %4543 = vmatprep.subr.mxu0 0.0
      %4544 = vmatpush1.msra.mxu0 0.0
      %4545 = vmatprep.subr.mxu0 0.0
      %4546 = vmatpush1.msra.mxu0 0.0
      %4547 = vmatprep.subr.mxu0 0.0
      %4548 = vmatpush1.msra.mxu0 0.0
      %4549 = vmatprep.subr.mxu0 0.0
      %4550 = vmatpush1.msra.mxu0 0.0
      %4551 = vmatprep.subr.mxu0 0.0
      %4552 = vmatpush1.msra.mxu0 0.0
      %4553 = vmatprep.subr.mxu0 0.0
      %4554 = vmatpush1.msra.mxu0 0.0
      %4555 = vmatprep.subr.mxu0 0.0
      %4556 = vmatpush1.msra.mxu0 0.0
      %4557 = vmatprep.subr.mxu0 0.0
      %4558 = vmatpush1.msra.mxu0 0.0
      %4559 = vmatprep.subr.mxu0 0.0
      %4560 = vmatpush1.msra.mxu0 0.0
      %4561 = vmatprep.subr.mxu0 0.0
      %4562 = vmatpush1.msra.mxu0 0.0
      %4563 = vmatprep.subr.mxu0 0.0
      %4564 = vmatpush1.msra.mxu0 0.0
      %4565 = vmatprep.mubr.f32.mxu0 0.0
      %4566 = vmatmul.mubr.f32.gmra.mrb[0].mxu0 %v4403
      %v4567 = vpop.f32.mrb[0].mxu0
      %v4568 = vadd.f32 0.0, %v4567
      %v4569 = vpop.f32.mrb[0].mxu0
      %4570 = vmatprep.mubr.f32.mxu0 0.0
      %4571 = vmatmul.mubr.f32.gmra.mrb[0].mxu0 %v4406
      %v4572 = vpop.f32.mrb[0].mxu0
      %v4573 = vadd.f32 0.0, %v4572
      %v4574 = vpop.f32.mrb[0].mxu0
      %4575 = vmatprep.mubr.f32.mxu0 0.0
      %4576 = vmatmul.mubr.f32.gmra.mrb[0].mxu0 %v4409
      %v4577 = vpop.f32.mrb[0].mxu0
      %v4578 = vadd.f32 0.0, %v4577
      %v4579 = vpop.f32.mrb[0].mxu0
      %4580 = vmatprep.mubr.f32.mxu0 0.0
      %4581 = vmatmul.mubr.f32.gmra.mrb[0].mxu0 %v4412
      %v4582 = vpop.f32.mrb[0].mxu0
      %v4583 = vadd.f32 0.0, %v4582
      %v4584 = vpop.f32.mrb[0].mxu0
      %4585 = vmatprep.mubr.f32.mxu0 0.0
      %4586 = vmatmul.mubr.f32.gmra.mrb[0].mxu0 %v4415
      %v4587 = vpop.f32.mrb[0].mxu0
      %v4588 = vadd.f32 0.0, %v4587
      %v4589 = vpop.f32.mrb[0].mxu0
      %4590 = vmatprep.mubr.f32.mxu0 0.0
      %4591 = vmatmul.mubr.f32.gmra.mrb[0].mxu0 %v4418
      %v4592 = vpop.f32.mrb[0].mxu0
      %v4593 = vadd.f32 0.0, %v4592
      %v4594 = vpop.f32.mrb[0].mxu0
      %4595 = vmatprep.mubr.f32.mxu0 0.0
      %4596 = vmatmul.mubr.f32.gmra.mrb[0].mxu0 %v4421
      %v4597 = vpop.f32.mrb[0].mxu0
      %v4598 = vadd.f32 0.0, %v4597
      %v4599 = vpop.f32.mrb[0].mxu0
      %4600 = vmatprep.mubr.f32.mxu0 0.0
      %4601 = vmatmul.mubr.f32.gmra.mrb[0].mxu0 %v4424
      %v4602 = vpop.f32.mrb[0].mxu0
      %v4603 = vadd.f32 0.0, %v4602
      %v4604 = vpop.f32.mrb[0].mxu0
      %4605 = vmatprep.mubr.f32.mxu0 0.0
      %4606 = vmatmul.mubr.f32.gmra.mrb[0].mxu0 %v4427
      %v4607 = vpop.f32.mrb[0].mxu0
      %v4608 = vadd.f32 0.0, %v4607
      %v4609 = vpop.f32.mrb[0].mxu0
      %4610 = vmatprep.mubr.f32.mxu0 0.0
      %4611 = vmatmul.mubr.f32.gmra.mrb[0].mxu0 %v4430
      %v4612 = vpop.f32.mrb[0].mxu0
      %v4613 = vadd.f32 0.0, %v4612
      %v4614 = vpop.f32.mrb[0].mxu0
      %4615 = vmatprep.mubr.f32.mxu0 0.0
      %4616 = vmatmul.mubr.f32.gmra.mrb[0].mxu0 %v4433
      %v4617 = vpop.f32.mrb[0].mxu0
      %v4618 = vadd.f32 0.0, %v4617
      %v4619 = vpop.f32.mrb[0].mxu0
      %4620 = vmatprep.mubr.f32.mxu0 0.0
      %4621 = vmatmul.mubr.f32.gmra.mrb[0].mxu0 %v4436
      %v4622 = vpop.f32.mrb[0].mxu0
      %v4623 = vadd.f32 0.0, %v4622
      %v4624 = vpop.f32.mrb[0].mxu0
      %4625 = vmatprep.mubr.f32.mxu0 0.0
      %4626 = vmatmul.mubr.f32.gmra.mrb[0].mxu0 %v4439
      %v4627 = vpop.f32.mrb[0].mxu0
      %v4628 = vadd.f32 0.0, %v4627
      %v4629 = vpop.f32.mrb[0].mxu0
      %4630 = vmatprep.mubr.f32.mxu0 0.0
      %4631 = vmatmul.mubr.f32.gmra.mrb[0].mxu0 %v4442
      %v4632 = vpop.f32.mrb[0].mxu0
      %v4633 = vadd.f32 0.0, %v4632
      %v4634 = vpop.f32.mrb[0].mxu0
      %4635 = vmatprep.mubr.f32.mxu0 0.0
      %4636 = vmatmul.mubr.f32.gmra.mrb[0].mxu0 %v4445
      %v4637 = vpop.f32.mrb[0].mxu0
      %v4638 = vadd.f32 0.0, %v4637
      %v4639 = vpop.f32.mrb[0].mxu0
      %4640 = vmatprep.mubr.f32.mxu0 0.0
      %4641 = vmatmul.mubr.f32.gmra.mrb[0].mxu0 %v4448
      %v4642 = vpop.f32.mrb[0].mxu0
      %v4643 = vadd.f32 0.0, %v4642
      %v4644 = vpop.f32.mrb[0].mxu0
      %4645 = vmatprep.mubr.f32.mxu0 0.0
      %4646 = vmatmul.mubr.f32.gmra.mrb[0].mxu0 %v4451
      %v4647 = vpop.f32.mrb[0].mxu0
      %v4648 = vadd.f32 0.0, %v4647
      %v4649 = vpop.f32.mrb[0].mxu0
      %4650 = vmatprep.mubr.f32.mxu0 0.0
      %4651 = vmatmul.mubr.f32.gmra.mrb[0].mxu0 %v4454
      %v4652 = vpop.f32.mrb[0].mxu0
      %v4653 = vadd.f32 0.0, %v4652
      %v4654 = vpop.f32.mrb[0].mxu0
      %4655 = vmatprep.mubr.f32.mxu0 0.0
      %4656 = vmatmul.mubr.f32.gmra.mrb[0].mxu0 %v4457
      %v4657 = vpop.f32.mrb[0].mxu0
      %v4658 = vadd.f32 0.0, %v4657
      %v4659 = vpop.f32.mrb[0].mxu0
      %4660 = vmatprep.mubr.f32.mxu0 0.0
      %4661 = vmatmul.mubr.f32.gmra.mrb[0].mxu0 %v4460
      %v4662 = vpop.f32.mrb[0].mxu0
      %v4663 = vadd.f32 0.0, %v4662
      %v4664 = vpop.f32.mrb[0].mxu0
      %4665 = vmatprep.mubr.f32.mxu0 0.0
      %4666 = vmatmul.mubr.f32.gmra.mrb[0].mxu0 %v4463
      %v4667 = vpop.f32.mrb[0].mxu0
      %v4668 = vadd.f32 0.0, %v4667
      %v4669 = vpop.f32.mrb[0].mxu0
      %4670 = vmatprep.mubr.f32.mxu0 0.0
      %4671 = vmatmul.mubr.f32.gmra.mrb[0].mxu0 %v4466
      %v4672 = vpop.f32.mrb[0].mxu0
      %v4673 = vadd.f32 0.0, %v4672
      %v4674 = vpop.f32.mrb[0].mxu0
      %4675 = vmatprep.mubr.f32.mxu0 0.0
      %4676 = vmatmul.mubr.f32.gmra.mrb[0].mxu0 %v4469
      %v4677 = vpop.f32.mrb[0].mxu0
      %v4678 = vadd.f32 0.0, %v4677
      %v4679 = vpop.f32.mrb[0].mxu0
      %4680 = vmatprep.mubr.f32.mxu0 0.0
      %4681 = vmatmul.mubr.f32.gmra.mrb[0].mxu0 %v4472
      %v4682 = vpop.f32.mrb[0].mxu0
      %v4683 = vadd.f32 0.0, %v4682
      %v4684 = vpop.f32.mrb[0].mxu0
      %4685 = vmatprep.mubr.f32.mxu0 0.0
      %4686 = vmatmul.mubr.f32.gmra.mrb[0].mxu0 %v4475
      %v4687 = vpop.f32.mrb[0].mxu0
      %v4688 = vadd.f32 0.0, %v4687
      %v4689 = vpop.f32.mrb[0].mxu0
      %4690 = vmatprep.mubr.f32.mxu0 0.0
      %4691 = vmatmul.mubr.f32.gmra.mrb[0].mxu0 %v4478
      %v4692 = vpop.f32.mrb[0].mxu0
      %v4693 = vadd.f32 0.0, %v4692
      %v4694 = vpop.f32.mrb[0].mxu0
      %4695 = vmatprep.mubr.f32.mxu0 0.0
      %4696 = vmatmul.mubr.f32.gmra.mrb[0].mxu0 %v4481
      %v4697 = vpop.f32.mrb[0].mxu0
      %v4698 = vadd.f32 0.0, %v4697
      %v4699 = vpop.f32.mrb[0].mxu0
      %4700 = vmatprep.mubr.f32.mxu0 0.0
      %4701 = vmatmul.mubr.f32.gmra.mrb[0].mxu0 %v4484
      %v4702 = vpop.f32.mrb[0].mxu0
      %v4703 = vadd.f32 0.0, %v4702
      %v4704 = vpop.f32.mrb[0].mxu0
      %4705 = vmatprep.mubr.f32.mxu0 0.0
      %4706 = vmatmul.mubr.f32.gmra.mrb[0].mxu0 %v4487
      %v4707 = vpop.f32.mrb[0].mxu0
      %v4708 = vadd.f32 0.0, %v4707
      %v4709 = vpop.f32.mrb[0].mxu0
      %4710 = vmatprep.mubr.f32.mxu0 0.0
      %4711 = vmatmul.mubr.f32.gmra.mrb[0].mxu0 %v4490
      %v4712 = vpop.f32.mrb[0].mxu0
      %v4713 = vadd.f32 0.0, %v4712
      %v4714 = vpop.f32.mrb[0].mxu0
      %4715 = vmatprep.mubr.f32.mxu0 0.0
      %4716 = vmatmul.mubr.f32.gmra.mrb[0].mxu0 %v4493
      %v4717 = vpop.f32.mrb[0].mxu0
      %v4718 = vadd.f32 0.0, %v4717
      %v4719 = vpop.f32.mrb[0].mxu0
      %4720 = vmatprep.mubr.f32.mxu0 0.0
      %4721 = vmatmul.mubr.f32.gmra.mrb[0].mxu0 %v4496
      %v4722 = vpop.f32.mrb[0].mxu0
      %v4723 = vadd.f32 0.0, %v4722
      %v4724 = vpop.f32.mrb[0].mxu0
      %4725 = vdwg.mxu0
      %v4727 = vsel %vm258, %v4335, 0
      %v4730 = vsel %vm258, %v4336, 0
      %v4733 = vsel %vm258, %v4337, 0
      %v4736 = vsel %vm258, %v4338, 0
      %v4739 = vsel %vm258, %v4339, 0
      %v4742 = vsel %vm258, %v4340, 0
      %v4745 = vsel %vm258, %v4341, 0
      %v4748 = vsel %vm258, %v4342, 0
      %v4751 = vsel %vm258, %v4343, 0
      %v4754 = vsel %vm258, %v4344, 0
      %v4757 = vsel %vm258, %v4345, 0
      %v4760 = vsel %vm258, %v4346, 0
      %v4763 = vsel %vm258, %v4347, 0
      %v4766 = vsel %vm258, %v4348, 0
      %v4769 = vsel %vm258, %v4349, 0
      %v4772 = vsel %vm258, %v4350, 0
      %v4775 = vsel %vm258, %v4351, 0
      %v4778 = vsel %vm258, %v4352, 0
      %v4781 = vsel %vm258, %v4353, 0
      %v4784 = vsel %vm258, %v4354, 0
      %v4787 = vsel %vm258, %v4355, 0
      %v4790 = vsel %vm258, %v4356, 0
      %v4793 = vsel %vm258, %v4357, 0
      %v4796 = vsel %vm258, %v4358, 0
      %v4799 = vsel %vm258, %v4359, 0
      %v4802 = vsel %vm258, %v4360, 0
      %v4805 = vsel %vm258, %v4361, 0
      %v4808 = vsel %vm258, %v4362, 0
      %v4811 = vsel %vm258, %v4363, 0
      %v4814 = vsel %vm258, %v4364, 0
      %v4817 = vsel %vm258, %v4365, 0
      %v4820 = vsel %vm258, %v4366, 0
      %v4823 = vsel %vm585, %v4367, 0
      %4825 = vmatprep.subr.mxu0 0.0
      %4826 = vmatpush1.msra.mxu0 %v4823
      %4827 = vmatprep.subr.mxu0 0.0
      %4828 = vmatpush1.msra.mxu0 0.0
      %4829 = vmatprep.subr.mxu0 0.0
      %4830 = vmatpush1.msra.mxu0 0.0
      %4831 = vmatprep.subr.mxu0 0.0
      %4832 = vmatpush1.msra.mxu0 0.0
      %4833 = vmatprep.subr.mxu0 0.0
      %4834 = vmatpush1.msra.mxu0 0.0
      %4835 = vmatprep.subr.mxu0 0.0
      %4836 = vmatpush1.msra.mxu0 0.0
      %4837 = vmatprep.subr.mxu0 0.0
      %4838 = vmatpush1.msra.mxu0 0.0
      %4839 = vmatprep.subr.mxu0 0.0
      %4840 = vmatpush1.msra.mxu0 0.0
      %4841 = vmatprep.subr.mxu0 0.0
      %4842 = vmatpush1.msra.mxu0 0.0
      %4843 = vmatprep.subr.mxu0 0.0
      %4844 = vmatpush1.msra.mxu0 0.0
      %4845 = vmatprep.subr.mxu0 0.0
      %4846 = vmatpush1.msra.mxu0 0.0
      %4847 = vmatprep.subr.mxu0 0.0
      %4848 = vmatpush1.msra.mxu0 0.0
      %4849 = vmatprep.subr.mxu0 0.0
      %4850 = vmatpush1.msra.mxu0 0.0
      %4851 = vmatprep.subr.mxu0 0.0
      %4852 = vmatpush1.msra.mxu0 0.0
      %4853 = vmatprep.subr.mxu0 0.0
      %4854 = vmatpush1.msra.mxu0 0.0
      %4855 = vmatprep.subr.mxu0 0.0
      %4856 = vmatpush1.msra.mxu0 0.0
      %4857 = vmatprep.subr.mxu0 0.0
      %4858 = vmatpush1.msra.mxu0 0.0
      %4859 = vmatprep.subr.mxu0 0.0
      %4860 = vmatpush1.msra.mxu0 0.0
      %4861 = vmatprep.subr.mxu0 0.0
      %4862 = vmatpush1.msra.mxu0 0.0
      %4863 = vmatprep.subr.mxu0 0.0
      %4864 = vmatpush1.msra.mxu0 0.0
      %4865 = vmatprep.subr.mxu0 0.0
      %4866 = vmatpush1.msra.mxu0 0.0
      %4867 = vmatprep.subr.mxu0 0.0
      %4868 = vmatpush1.msra.mxu0 0.0
      %4869 = vmatprep.subr.mxu0 0.0
      %4870 = vmatpush1.msra.mxu0 0.0
      %4871 = vmatprep.subr.mxu0 0.0
      %4872 = vmatpush1.msra.mxu0 0.0
      %4873 = vmatprep.subr.mxu0 0.0
      %4874 = vmatpush1.msra.mxu0 0.0
      %4875 = vmatprep.subr.mxu0 0.0
      %4876 = vmatpush1.msra.mxu0 0.0
      %4877 = vmatprep.subr.mxu0 0.0
      %4878 = vmatpush1.msra.mxu0 0.0
      %4879 = vmatprep.subr.mxu0 0.0
      %4880 = vmatpush1.msra.mxu0 0.0
      %4881 = vmatprep.subr.mxu0 0.0
      %4882 = vmatpush1.msra.mxu0 0.0
      %4883 = vmatprep.subr.mxu0 0.0
      %4884 = vmatpush1.msra.mxu0 0.0
      %4885 = vmatprep.subr.mxu0 0.0
      %4886 = vmatpush1.msra.mxu0 0.0
      %4887 = vmatprep.subr.mxu0 0.0
      %4888 = vmatpush1.msra.mxu0 0.0
      %4889 = vmatprep.mubr.f32.mxu0 0.0
      %4890 = vmatmul.mubr.f32.gmra.mrb[0].mxu0 %v4727
      %v4891 = vpop.f32.mrb[0].mxu0
      %v4892 = vadd.f32 %v4568, %v4891
      %v4893 = vpop.f32.mrb[0].mxu0
      %4894 = vmatprep.mubr.f32.mxu0 0.0
      %4895 = vmatmul.mubr.f32.gmra.mrb[0].mxu0 %v4730
      %v4896 = vpop.f32.mrb[0].mxu0
      %v4897 = vadd.f32 %v4573, %v4896
      %v4898 = vpop.f32.mrb[0].mxu0
      %4899 = vmatprep.mubr.f32.mxu0 0.0
      %4900 = vmatmul.mubr.f32.gmra.mrb[0].mxu0 %v4733
      %v4901 = vpop.f32.mrb[0].mxu0
      %v4902 = vadd.f32 %v4578, %v4901
      %v4903 = vpop.f32.mrb[0].mxu0
      %4904 = vmatprep.mubr.f32.mxu0 0.0
      %4905 = vmatmul.mubr.f32.gmra.mrb[0].mxu0 %v4736
      %v4906 = vpop.f32.mrb[0].mxu0
      %v4907 = vadd.f32 %v4583, %v4906
      %v4908 = vpop.f32.mrb[0].mxu0
      %4909 = vmatprep.mubr.f32.mxu0 0.0
      %4910 = vmatmul.mubr.f32.gmra.mrb[0].mxu0 %v4739
      %v4911 = vpop.f32.mrb[0].mxu0
      %v4912 = vadd.f32 %v4588, %v4911
      %v4913 = vpop.f32.mrb[0].mxu0
      %4914 = vmatprep.mubr.f32.mxu0 0.0
      %4915 = vmatmul.mubr.f32.gmra.mrb[0].mxu0 %v4742
      %v4916 = vpop.f32.mrb[0].mxu0
      %v4917 = vadd.f32 %v4593, %v4916
      %v4918 = vpop.f32.mrb[0].mxu0
      %4919 = vmatprep.mubr.f32.mxu0 0.0
      %4920 = vmatmul.mubr.f32.gmra.mrb[0].mxu0 %v4745
      %v4921 = vpop.f32.mrb[0].mxu0
      %v4922 = vadd.f32 %v4598, %v4921
      %v4923 = vpop.f32.mrb[0].mxu0
      %4924 = vmatprep.mubr.f32.mxu0 0.0
      %4925 = vmatmul.mubr.f32.gmra.mrb[0].mxu0 %v4748
      %v4926 = vpop.f32.mrb[0].mxu0
      %v4927 = vadd.f32 %v4603, %v4926
      %v4928 = vpop.f32.mrb[0].mxu0
      %4929 = vmatprep.mubr.f32.mxu0 0.0
      %4930 = vmatmul.mubr.f32.gmra.mrb[0].mxu0 %v4751
      %v4931 = vpop.f32.mrb[0].mxu0
      %v4932 = vadd.f32 %v4608, %v4931
      %v4933 = vpop.f32.mrb[0].mxu0
      %4934 = vmatprep.mubr.f32.mxu0 0.0
      %4935 = vmatmul.mubr.f32.gmra.mrb[0].mxu0 %v4754
      %v4936 = vpop.f32.mrb[0].mxu0
      %v4937 = vadd.f32 %v4613, %v4936
      %v4938 = vpop.f32.mrb[0].mxu0
      %4939 = vmatprep.mubr.f32.mxu0 0.0
      %4940 = vmatmul.mubr.f32.gmra.mrb[0].mxu0 %v4757
      %v4941 = vpop.f32.mrb[0].mxu0
      %v4942 = vadd.f32 %v4618, %v4941
      %v4943 = vpop.f32.mrb[0].mxu0
      %4944 = vmatprep.mubr.f32.mxu0 0.0
      %4945 = vmatmul.mubr.f32.gmra.mrb[0].mxu0 %v4760
      %v4946 = vpop.f32.mrb[0].mxu0
      %v4947 = vadd.f32 %v4623, %v4946
      %v4948 = vpop.f32.mrb[0].mxu0
      %4949 = vmatprep.mubr.f32.mxu0 0.0
      %4950 = vmatmul.mubr.f32.gmra.mrb[0].mxu0 %v4763
      %v4951 = vpop.f32.mrb[0].mxu0
      %v4952 = vadd.f32 %v4628, %v4951
      %v4953 = vpop.f32.mrb[0].mxu0
      %4954 = vmatprep.mubr.f32.mxu0 0.0
      %4955 = vmatmul.mubr.f32.gmra.mrb[0].mxu0 %v4766
      %v4956 = vpop.f32.mrb[0].mxu0
      %v4957 = vadd.f32 %v4633, %v4956
      %v4958 = vpop.f32.mrb[0].mxu0
      %4959 = vmatprep.mubr.f32.mxu0 0.0
      %4960 = vmatmul.mubr.f32.gmra.mrb[0].mxu0 %v4769
      %v4961 = vpop.f32.mrb[0].mxu0
      %v4962 = vadd.f32 %v4638, %v4961
      %v4963 = vpop.f32.mrb[0].mxu0
      %4964 = vmatprep.mubr.f32.mxu0 0.0
      %4965 = vmatmul.mubr.f32.gmra.mrb[0].mxu0 %v4772
      %v4966 = vpop.f32.mrb[0].mxu0
      %v4967 = vadd.f32 %v4643, %v4966
      %v4968 = vpop.f32.mrb[0].mxu0
      %4969 = vmatprep.mubr.f32.mxu0 0.0
      %4970 = vmatmul.mubr.f32.gmra.mrb[0].mxu0 %v4775
      %v4971 = vpop.f32.mrb[0].mxu0
      %v4972 = vadd.f32 %v4648, %v4971
      %v4973 = vpop.f32.mrb[0].mxu0
      %4974 = vmatprep.mubr.f32.mxu0 0.0
      %4975 = vmatmul.mubr.f32.gmra.mrb[0].mxu0 %v4778
      %v4976 = vpop.f32.mrb[0].mxu0
      %v4977 = vadd.f32 %v4653, %v4976
      %v4978 = vpop.f32.mrb[0].mxu0
      %4979 = vmatprep.mubr.f32.mxu0 0.0
      %4980 = vmatmul.mubr.f32.gmra.mrb[0].mxu0 %v4781
      %v4981 = vpop.f32.mrb[0].mxu0
      %v4982 = vadd.f32 %v4658, %v4981
      %v4983 = vpop.f32.mrb[0].mxu0
      %4984 = vmatprep.mubr.f32.mxu0 0.0
      %4985 = vmatmul.mubr.f32.gmra.mrb[0].mxu0 %v4784
      %v4986 = vpop.f32.mrb[0].mxu0
      %v4987 = vadd.f32 %v4663, %v4986
      %v4988 = vpop.f32.mrb[0].mxu0
      %4989 = vmatprep.mubr.f32.mxu0 0.0
      %4990 = vmatmul.mubr.f32.gmra.mrb[0].mxu0 %v4787
      %v4991 = vpop.f32.mrb[0].mxu0
      %v4992 = vadd.f32 %v4668, %v4991
      %v4993 = vpop.f32.mrb[0].mxu0
      %4994 = vmatprep.mubr.f32.mxu0 0.0
      %4995 = vmatmul.mubr.f32.gmra.mrb[0].mxu0 %v4790
      %v4996 = vpop.f32.mrb[0].mxu0
      %v4997 = vadd.f32 %v4673, %v4996
      %v4998 = vpop.f32.mrb[0].mxu0
      %4999 = vmatprep.mubr.f32.mxu0 0.0
      %5000 = vmatmul.mubr.f32.gmra.mrb[0].mxu0 %v4793
      %v5001 = vpop.f32.mrb[0].mxu0
      %v5002 = vadd.f32 %v4678, %v5001
      %v5003 = vpop.f32.mrb[0].mxu0
      %5004 = vmatprep.mubr.f32.mxu0 0.0
      %5005 = vmatmul.mubr.f32.gmra.mrb[0].mxu0 %v4796
      %v5006 = vpop.f32.mrb[0].mxu0
      %v5007 = vadd.f32 %v4683, %v5006
      %v5008 = vpop.f32.mrb[0].mxu0
      %5009 = vmatprep.mubr.f32.mxu0 0.0
      %5010 = vmatmul.mubr.f32.gmra.mrb[0].mxu0 %v4799
      %v5011 = vpop.f32.mrb[0].mxu0
      %v5012 = vadd.f32 %v4688, %v5011
      %v5013 = vpop.f32.mrb[0].mxu0
      %5014 = vmatprep.mubr.f32.mxu0 0.0
      %5015 = vmatmul.mubr.f32.gmra.mrb[0].mxu0 %v4802
      %v5016 = vpop.f32.mrb[0].mxu0
      %v5017 = vadd.f32 %v4693, %v5016
      %v5018 = vpop.f32.mrb[0].mxu0
      %5019 = vmatprep.mubr.f32.mxu0 0.0
      %5020 = vmatmul.mubr.f32.gmra.mrb[0].mxu0 %v4805
      %v5021 = vpop.f32.mrb[0].mxu0
      %v5022 = vadd.f32 %v4698, %v5021
      %v5023 = vpop.f32.mrb[0].mxu0
      %5024 = vmatprep.mubr.f32.mxu0 0.0
      %5025 = vmatmul.mubr.f32.gmra.mrb[0].mxu0 %v4808
      %v5026 = vpop.f32.mrb[0].mxu0
      %v5027 = vadd.f32 %v4703, %v5026
      %v5028 = vpop.f32.mrb[0].mxu0
      %5029 = vmatprep.mubr.f32.mxu0 0.0
      %5030 = vmatmul.mubr.f32.gmra.mrb[0].mxu0 %v4811
      %v5031 = vpop.f32.mrb[0].mxu0
      %v5032 = vadd.f32 %v4708, %v5031
      %v5033 = vpop.f32.mrb[0].mxu0
      %5034 = vmatprep.mubr.f32.mxu0 0.0
      %5035 = vmatmul.mubr.f32.gmra.mrb[0].mxu0 %v4814
      %v5036 = vpop.f32.mrb[0].mxu0
      %v5037 = vadd.f32 %v4713, %v5036
      %v5038 = vpop.f32.mrb[0].mxu0
      %5039 = vmatprep.mubr.f32.mxu0 0.0
      %5040 = vmatmul.mubr.f32.gmra.mrb[0].mxu0 %v4817
      %v5041 = vpop.f32.mrb[0].mxu0
      %v5042 = vadd.f32 %v4718, %v5041
      %v5043 = vpop.f32.mrb[0].mxu0
      %5044 = vmatprep.mubr.f32.mxu0 0.0
      %5045 = vmatmul.mubr.f32.gmra.mrb[0].mxu0 %v4820
      %v5046 = vpop.f32.mrb[0].mxu0
      %v5047 = vadd.f32 %v4723, %v5046
      %v5048 = vpop.f32.mrb[0].mxu0
      %5049 = vdwg.mxu0
      %v5050 = vld [vmem:[%s1138] sm:$0xff]
      %v5051 = vld [vmem:[%s1138 + $0x8] sm:$0xff]
      %v5052 = vld [vmem:[%s1138 + $0x10] sm:$0xff]
      %v5053 = vld [vmem:[%s1138 + $0x18] sm:$0xff]
      %v5054 = vld [vmem:[%s1138 + $0x20] sm:$0xff]
      %v5055 = vld [vmem:[%s1138 + $0x28] sm:$0xff]
      %v5056 = vld [vmem:[%s1138 + $0x30] sm:$0xff]
      %v5057 = vld [vmem:[%s1138 + $0x38] sm:$0xff]
      %v5058 = vld [vmem:[%s1138 + $0x40] sm:$0xff]
      %v5059 = vld [vmem:[%s1138 + $0x48] sm:$0xff]
      %v5060 = vld [vmem:[%s1138 + $0x50] sm:$0xff]
      %v5061 = vld [vmem:[%s1138 + $0x58] sm:$0xff]
      %v5062 = vld [vmem:[%s1138 + $0x60] sm:$0xff]
      %v5063 = vld [vmem:[%s1138 + $0x68] sm:$0xff]
      %v5064 = vld [vmem:[%s1138 + $0x70] sm:$0xff]
      %v5065 = vld [vmem:[%s1138 + $0x78] sm:$0xff]
      %v5066 = vld [vmem:[%s1138 + $0x80] sm:$0xff]
      %v5067 = vld [vmem:[%s1138 + $0x88] sm:$0xff]
      %v5068 = vld [vmem:[%s1138 + $0x90] sm:$0xff]
      %v5069 = vld [vmem:[%s1138 + $0x98] sm:$0xff]
      %v5070 = vld [vmem:[%s1138 + $0xa0] sm:$0xff]
      %v5071 = vld [vmem:[%s1138 + $0xa8] sm:$0xff]
      %v5072 = vld [vmem:[%s1138 + $0xb0] sm:$0xff]
      %v5073 = vld [vmem:[%s1138 + $0xb8] sm:$0xff]
      %v5074 = vld [vmem:[%s1138 + $0xc0] sm:$0xff]
      %v5075 = vld [vmem:[%s1138 + $0xc8] sm:$0xff]
      %v5076 = vld [vmem:[%s1138 + $0xd0] sm:$0xff]
      %v5077 = vld [vmem:[%s1138 + $0xd8] sm:$0xff]
      %v5078 = vld [vmem:[%s1138 + $0xe0] sm:$0xff]
      %v5079 = vld [vmem:[%s1138 + $0xe8] sm:$0xff]
      %v5080 = vld [vmem:[%s1138 + $0xf0] sm:$0xff]
      %v5081 = vld [vmem:[%s1138 + $0xf8] sm:$0xff]
      %s5082 = scalar_lea.vmem %s3, 8
      %v5083 = vld [vmem:[%s5082] sm:$0xf]
      %v5085 = vsel %vm258, %v5050, 0
      %v5088 = vsel %vm258, %v5051, 0
      %v5091 = vsel %vm258, %v5052, 0
      %v5094 = vsel %vm258, %v5053, 0
      %v5097 = vsel %vm258, %v5054, 0
      %v5100 = vsel %vm258, %v5055, 0
      %v5103 = vsel %vm258, %v5056, 0
      %v5106 = vsel %vm258, %v5057, 0
      %v5109 = vsel %vm258, %v5058, 0
      %v5112 = vsel %vm258, %v5059, 0
      %v5115 = vsel %vm258, %v5060, 0
      %v5118 = vsel %vm258, %v5061, 0
      %v5121 = vsel %vm258, %v5062, 0
      %v5124 = vsel %vm258, %v5063, 0
      %v5127 = vsel %vm258, %v5064, 0
      %v5130 = vsel %vm258, %v5065, 0
      %v5133 = vsel %vm258, %v5066, 0
      %v5136 = vsel %vm258, %v5067, 0
      %v5139 = vsel %vm258, %v5068, 0
      %v5142 = vsel %vm258, %v5069, 0
      %v5145 = vsel %vm258, %v5070, 0
      %v5148 = vsel %vm258, %v5071, 0
      %v5151 = vsel %vm258, %v5072, 0
      %v5154 = vsel %vm258, %v5073, 0
      %v5157 = vsel %vm258, %v5074, 0
      %v5160 = vsel %vm258, %v5075, 0
      %v5163 = vsel %vm258, %v5076, 0
      %v5166 = vsel %vm258, %v5077, 0
      %v5169 = vsel %vm258, %v5078, 0
      %v5172 = vsel %vm258, %v5079, 0
      %v5175 = vsel %vm258, %v5080, 0
      %v5178 = vsel %vm258, %v5081, 0
      %v5181 = vsel %vm585, %v5083, 0
      %5183 = vmatprep.subr.mxu0 0.0
      %5184 = vmatpush1.msra.mxu0 %v5181
      %5185 = vmatprep.subr.mxu0 0.0
      %5186 = vmatpush1.msra.mxu0 0.0
      %5187 = vmatprep.subr.mxu0 0.0
      %5188 = vmatpush1.msra.mxu0 0.0
      %5189 = vmatprep.subr.mxu0 0.0
      %5190 = vmatpush1.msra.mxu0 0.0
      %5191 = vmatprep.subr.mxu0 0.0
      %5192 = vmatpush1.msra.mxu0 0.0
      %5193 = vmatprep.subr.mxu0 0.0
      %5194 = vmatpush1.msra.mxu0 0.0
      %5195 = vmatprep.subr.mxu0 0.0
      %5196 = vmatpush1.msra.mxu0 0.0
      %5197 = vmatprep.subr.mxu0 0.0
      %5198 = vmatpush1.msra.mxu0 0.0
      %5199 = vmatprep.subr.mxu0 0.0
      %5200 = vmatpush1.msra.mxu0 0.0
      %5201 = vmatprep.subr.mxu0 0.0
      %5202 = vmatpush1.msra.mxu0 0.0
      %5203 = vmatprep.subr.mxu0 0.0
      %5204 = vmatpush1.msra.mxu0 0.0
      %5205 = vmatprep.subr.mxu0 0.0
      %5206 = vmatpush1.msra.mxu0 0.0
      %5207 = vmatprep.subr.mxu0 0.0
      %5208 = vmatpush1.msra.mxu0 0.0
      %5209 = vmatprep.subr.mxu0 0.0
      %5210 = vmatpush1.msra.mxu0 0.0
      %5211 = vmatprep.subr.mxu0 0.0
      %5212 = vmatpush1.msra.mxu0 0.0
      %5213 = vmatprep.subr.mxu0 0.0
      %5214 = vmatpush1.msra.mxu0 0.0
      %5215 = vmatprep.subr.mxu0 0.0
      %5216 = vmatpush1.msra.mxu0 0.0
      %5217 = vmatprep.subr.mxu0 0.0
      %5218 = vmatpush1.msra.mxu0 0.0
      %5219 = vmatprep.subr.mxu0 0.0
      %5220 = vmatpush1.msra.mxu0 0.0
      %5221 = vmatprep.subr.mxu0 0.0
      %5222 = vmatpush1.msra.mxu0 0.0
      %5223 = vmatprep.subr.mxu0 0.0
      %5224 = vmatpush1.msra.mxu0 0.0
      %5225 = vmatprep.subr.mxu0 0.0
      %5226 = vmatpush1.msra.mxu0 0.0
      %5227 = vmatprep.subr.mxu0 0.0
      %5228 = vmatpush1.msra.mxu0 0.0
      %5229 = vmatprep.subr.mxu0 0.0
      %5230 = vmatpush1.msra.mxu0 0.0
      %5231 = vmatprep.subr.mxu0 0.0
      %5232 = vmatpush1.msra.mxu0 0.0
      %5233 = vmatprep.subr.mxu0 0.0
      %5234 = vmatpush1.msra.mxu0 0.0
      %5235 = vmatprep.subr.mxu0 0.0
      %5236 = vmatpush1.msra.mxu0 0.0
      %5237 = vmatprep.subr.mxu0 0.0
      %5238 = vmatpush1.msra.mxu0 0.0
      %5239 = vmatprep.subr.mxu0 0.0
      %5240 = vmatpush1.msra.mxu0 0.0
      %5241 = vmatprep.subr.mxu0 0.0
      %5242 = vmatpush1.msra.mxu0 0.0
      %5243 = vmatprep.subr.mxu0 0.0
      %5244 = vmatpush1.msra.mxu0 0.0
      %5245 = vmatprep.subr.mxu0 0.0
      %5246 = vmatpush1.msra.mxu0 0.0
      %5247 = vmatprep.mubr.f32.mxu0 0.0
      %5248 = vmatmul.mubr.f32.gmra.mrb[0].mxu0 %v5085
      %v5249 = vpop.f32.mrb[0].mxu0
      %v5250 = vadd.f32 0.0, %v5249
      %v5251 = vpop.f32.mrb[0].mxu0
      %5252 = vmatprep.mubr.f32.mxu0 0.0
      %5253 = vmatmul.mubr.f32.gmra.mrb[0].mxu0 %v5088
      %v5254 = vpop.f32.mrb[0].mxu0
      %v5255 = vadd.f32 0.0, %v5254
      %v5256 = vpop.f32.mrb[0].mxu0
      %5257 = vmatprep.mubr.f32.mxu0 0.0
      %5258 = vmatmul.mubr.f32.gmra.mrb[0].mxu0 %v5091
      %v5259 = vpop.f32.mrb[0].mxu0
      %v5260 = vadd.f32 0.0, %v5259
      %v5261 = vpop.f32.mrb[0].mxu0
      %5262 = vmatprep.mubr.f32.mxu0 0.0
      %5263 = vmatmul.mubr.f32.gmra.mrb[0].mxu0 %v5094
      %v5264 = vpop.f32.mrb[0].mxu0
      %v5265 = vadd.f32 0.0, %v5264
      %v5266 = vpop.f32.mrb[0].mxu0
      %5267 = vmatprep.mubr.f32.mxu0 0.0
      %5268 = vmatmul.mubr.f32.gmra.mrb[0].mxu0 %v5097
      %v5269 = vpop.f32.mrb[0].mxu0
      %v5270 = vadd.f32 0.0, %v5269
      %v5271 = vpop.f32.mrb[0].mxu0
      %5272 = vmatprep.mubr.f32.mxu0 0.0
      %5273 = vmatmul.mubr.f32.gmra.mrb[0].mxu0 %v5100
      %v5274 = vpop.f32.mrb[0].mxu0
      %v5275 = vadd.f32 0.0, %v5274
      %v5276 = vpop.f32.mrb[0].mxu0
      %5277 = vmatprep.mubr.f32.mxu0 0.0
      %5278 = vmatmul.mubr.f32.gmra.mrb[0].mxu0 %v5103
      %v5279 = vpop.f32.mrb[0].mxu0
      %v5280 = vadd.f32 0.0, %v5279
      %v5281 = vpop.f32.mrb[0].mxu0
      %5282 = vmatprep.mubr.f32.mxu0 0.0
      %5283 = vmatmul.mubr.f32.gmra.mrb[0].mxu0 %v5106
      %v5284 = vpop.f32.mrb[0].mxu0
      %v5285 = vadd.f32 0.0, %v5284
      %v5286 = vpop.f32.mrb[0].mxu0
      %5287 = vmatprep.mubr.f32.mxu0 0.0
      %5288 = vmatmul.mubr.f32.gmra.mrb[0].mxu0 %v5109
      %v5289 = vpop.f32.mrb[0].mxu0
      %v5290 = vadd.f32 0.0, %v5289
      %v5291 = vpop.f32.mrb[0].mxu0
      %5292 = vmatprep.mubr.f32.mxu0 0.0
      %5293 = vmatmul.mubr.f32.gmra.mrb[0].mxu0 %v5112
      %v5294 = vpop.f32.mrb[0].mxu0
      %v5295 = vadd.f32 0.0, %v5294
      %v5296 = vpop.f32.mrb[0].mxu0
      %5297 = vmatprep.mubr.f32.mxu0 0.0
      %5298 = vmatmul.mubr.f32.gmra.mrb[0].mxu0 %v5115
      %v5299 = vpop.f32.mrb[0].mxu0
      %v5300 = vadd.f32 0.0, %v5299
      %v5301 = vpop.f32.mrb[0].mxu0
      %5302 = vmatprep.mubr.f32.mxu0 0.0
      %5303 = vmatmul.mubr.f32.gmra.mrb[0].mxu0 %v5118
      %v5304 = vpop.f32.mrb[0].mxu0
      %v5305 = vadd.f32 0.0, %v5304
      %v5306 = vpop.f32.mrb[0].mxu0
      %5307 = vmatprep.mubr.f32.mxu0 0.0
      %5308 = vmatmul.mubr.f32.gmra.mrb[0].mxu0 %v5121
      %v5309 = vpop.f32.mrb[0].mxu0
      %v5310 = vadd.f32 0.0, %v5309
      %v5311 = vpop.f32.mrb[0].mxu0
      %5312 = vmatprep.mubr.f32.mxu0 0.0
      %5313 = vmatmul.mubr.f32.gmra.mrb[0].mxu0 %v5124
      %v5314 = vpop.f32.mrb[0].mxu0
      %v5315 = vadd.f32 0.0, %v5314
      %v5316 = vpop.f32.mrb[0].mxu0
      %5317 = vmatprep.mubr.f32.mxu0 0.0
      %5318 = vmatmul.mubr.f32.gmra.mrb[0].mxu0 %v5127
      %v5319 = vpop.f32.mrb[0].mxu0
      %v5320 = vadd.f32 0.0, %v5319
      %v5321 = vpop.f32.mrb[0].mxu0
      %5322 = vmatprep.mubr.f32.mxu0 0.0
      %5323 = vmatmul.mubr.f32.gmra.mrb[0].mxu0 %v5130
      %v5324 = vpop.f32.mrb[0].mxu0
      %v5325 = vadd.f32 0.0, %v5324
      %v5326 = vpop.f32.mrb[0].mxu0
      %5327 = vmatprep.mubr.f32.mxu0 0.0
      %5328 = vmatmul.mubr.f32.gmra.mrb[0].mxu0 %v5133
      %v5329 = vpop.f32.mrb[0].mxu0
      %v5330 = vadd.f32 0.0, %v5329
      %v5331 = vpop.f32.mrb[0].mxu0
      %5332 = vmatprep.mubr.f32.mxu0 0.0
      %5333 = vmatmul.mubr.f32.gmra.mrb[0].mxu0 %v5136
      %v5334 = vpop.f32.mrb[0].mxu0
      %v5335 = vadd.f32 0.0, %v5334
      %v5336 = vpop.f32.mrb[0].mxu0
      %5337 = vmatprep.mubr.f32.mxu0 0.0
      %5338 = vmatmul.mubr.f32.gmra.mrb[0].mxu0 %v5139
      %v5339 = vpop.f32.mrb[0].mxu0
      %v5340 = vadd.f32 0.0, %v5339
      %v5341 = vpop.f32.mrb[0].mxu0
      %5342 = vmatprep.mubr.f32.mxu0 0.0
      %5343 = vmatmul.mubr.f32.gmra.mrb[0].mxu0 %v5142
      %v5344 = vpop.f32.mrb[0].mxu0
      %v5345 = vadd.f32 0.0, %v5344
      %v5346 = vpop.f32.mrb[0].mxu0
      %5347 = vmatprep.mubr.f32.mxu0 0.0
      %5348 = vmatmul.mubr.f32.gmra.mrb[0].mxu0 %v5145
      %v5349 = vpop.f32.mrb[0].mxu0
      %v5350 = vadd.f32 0.0, %v5349
      %v5351 = vpop.f32.mrb[0].mxu0
      %5352 = vmatprep.mubr.f32.mxu0 0.0
      %5353 = vmatmul.mubr.f32.gmra.mrb[0].mxu0 %v5148
      %v5354 = vpop.f32.mrb[0].mxu0
      %v5355 = vadd.f32 0.0, %v5354
      %v5356 = vpop.f32.mrb[0].mxu0
      %5357 = vmatprep.mubr.f32.mxu0 0.0
      %5358 = vmatmul.mubr.f32.gmra.mrb[0].mxu0 %v5151
      %v5359 = vpop.f32.mrb[0].mxu0
      %v5360 = vadd.f32 0.0, %v5359
      %v5361 = vpop.f32.mrb[0].mxu0
      %5362 = vmatprep.mubr.f32.mxu0 0.0
      %5363 = vmatmul.mubr.f32.gmra.mrb[0].mxu0 %v5154
      %v5364 = vpop.f32.mrb[0].mxu0
      %v5365 = vadd.f32 0.0, %v5364
      %v5366 = vpop.f32.mrb[0].mxu0
      %5367 = vmatprep.mubr.f32.mxu0 0.0
      %5368 = vmatmul.mubr.f32.gmra.mrb[0].mxu0 %v5157
      %v5369 = vpop.f32.mrb[0].mxu0
      %v5370 = vadd.f32 0.0, %v5369
      %v5371 = vpop.f32.mrb[0].mxu0
      %5372 = vmatprep.mubr.f32.mxu0 0.0
      %5373 = vmatmul.mubr.f32.gmra.mrb[0].mxu0 %v5160
      %v5374 = vpop.f32.mrb[0].mxu0
      %v5375 = vadd.f32 0.0, %v5374
      %v5376 = vpop.f32.mrb[0].mxu0
      %5377 = vmatprep.mubr.f32.mxu0 0.0
      %5378 = vmatmul.mubr.f32.gmra.mrb[0].mxu0 %v5163
      %v5379 = vpop.f32.mrb[0].mxu0
      %v5380 = vadd.f32 0.0, %v5379
      %v5381 = vpop.f32.mrb[0].mxu0
      %5382 = vmatprep.mubr.f32.mxu0 0.0
      %5383 = vmatmul.mubr.f32.gmra.mrb[0].mxu0 %v5166
      %v5384 = vpop.f32.mrb[0].mxu0
      %v5385 = vadd.f32 0.0, %v5384
      %v5386 = vpop.f32.mrb[0].mxu0
      %5387 = vmatprep.mubr.f32.mxu0 0.0
      %5388 = vmatmul.mubr.f32.gmra.mrb[0].mxu0 %v5169
      %v5389 = vpop.f32.mrb[0].mxu0
      %v5390 = vadd.f32 0.0, %v5389
      %v5391 = vpop.f32.mrb[0].mxu0
      %5392 = vmatprep.mubr.f32.mxu0 0.0
      %5393 = vmatmul.mubr.f32.gmra.mrb[0].mxu0 %v5172
      %v5394 = vpop.f32.mrb[0].mxu0
      %v5395 = vadd.f32 0.0, %v5394
      %v5396 = vpop.f32.mrb[0].mxu0
      %5397 = vmatprep.mubr.f32.mxu0 0.0
      %5398 = vmatmul.mubr.f32.gmra.mrb[0].mxu0 %v5175
      %v5399 = vpop.f32.mrb[0].mxu0
      %v5400 = vadd.f32 0.0, %v5399
      %v5401 = vpop.f32.mrb[0].mxu0
      %5402 = vmatprep.mubr.f32.mxu0 0.0
      %5403 = vmatmul.mubr.f32.gmra.mrb[0].mxu0 %v5178
      %v5404 = vpop.f32.mrb[0].mxu0
      %v5405 = vadd.f32 0.0, %v5404
      %v5406 = vpop.f32.mrb[0].mxu0
      %5407 = vdwg.mxu0
      %v5408 = vadd.f32 %v4892, %v5250
      %v5409 = vadd.f32 %v4897, %v5255
      %v5410 = vadd.f32 %v4902, %v5260
      %v5411 = vadd.f32 %v4907, %v5265
      %v5412 = vadd.f32 %v4912, %v5270
      %v5413 = vadd.f32 %v4917, %v5275
      %v5414 = vadd.f32 %v4922, %v5280
      %v5415 = vadd.f32 %v4927, %v5285
      %v5416 = vadd.f32 %v4932, %v5290
      %v5417 = vadd.f32 %v4937, %v5295
      %v5418 = vadd.f32 %v4942, %v5300
      %v5419 = vadd.f32 %v4947, %v5305
      %v5420 = vadd.f32 %v4952, %v5310
      %v5421 = vadd.f32 %v4957, %v5315
      %v5422 = vadd.f32 %v4962, %v5320
      %v5423 = vadd.f32 %v4967, %v5325
      %v5424 = vadd.f32 %v4972, %v5330
      %v5425 = vadd.f32 %v4977, %v5335
      %v5426 = vadd.f32 %v4982, %v5340
      %v5427 = vadd.f32 %v4987, %v5345
      %v5428 = vadd.f32 %v4992, %v5350
      %v5429 = vadd.f32 %v4997, %v5355
      %v5430 = vadd.f32 %v5002, %v5360
      %v5431 = vadd.f32 %v5007, %v5365
      %v5432 = vadd.f32 %v5012, %v5370
      %v5433 = vadd.f32 %v5017, %v5375
      %v5434 = vadd.f32 %v5022, %v5380
      %v5435 = vadd.f32 %v5027, %v5385
      %v5436 = vadd.f32 %v5032, %v5390
      %v5437 = vadd.f32 %v5037, %v5395
      %v5438 = vadd.f32 %v5042, %v5400
      %v5439 = vadd.f32 %v5047, %v5405
      %v5440 = vld [vmem:[%s291] sm:$0xff]
      %v5441 = vld [vmem:[%s291 + $0x8] sm:$0xff]
      %v5442 = vld [vmem:[%s291 + $0x10] sm:$0xff]
      %v5443 = vld [vmem:[%s291 + $0x18] sm:$0xff]
      %v5444 = vld [vmem:[%s291 + $0x20] sm:$0xff]
      %v5445 = vld [vmem:[%s291 + $0x28] sm:$0xff]
      %v5446 = vld [vmem:[%s291 + $0x30] sm:$0xff]
      %v5447 = vld [vmem:[%s291 + $0x38] sm:$0xff]
      %v5448 = vld [vmem:[%s291 + $0x40] sm:$0xff]
      %v5449 = vld [vmem:[%s291 + $0x48] sm:$0xff]
      %v5450 = vld [vmem:[%s291 + $0x50] sm:$0xff]
      %v5451 = vld [vmem:[%s291 + $0x58] sm:$0xff]
      %v5452 = vld [vmem:[%s291 + $0x60] sm:$0xff]
      %v5453 = vld [vmem:[%s291 + $0x68] sm:$0xff]
      %v5454 = vld [vmem:[%s291 + $0x70] sm:$0xff]
      %v5455 = vld [vmem:[%s291 + $0x78] sm:$0xff]
      %v5456 = vld [vmem:[%s291 + $0x80] sm:$0xff]
      %v5457 = vld [vmem:[%s291 + $0x88] sm:$0xff]
      %v5458 = vld [vmem:[%s291 + $0x90] sm:$0xff]
      %v5459 = vld [vmem:[%s291 + $0x98] sm:$0xff]
      %v5460 = vld [vmem:[%s291 + $0xa0] sm:$0xff]
      %v5461 = vld [vmem:[%s291 + $0xa8] sm:$0xff]
      %v5462 = vld [vmem:[%s291 + $0xb0] sm:$0xff]
      %v5463 = vld [vmem:[%s291 + $0xb8] sm:$0xff]
      %v5464 = vld [vmem:[%s291 + $0xc0] sm:$0xff]
      %v5465 = vld [vmem:[%s291 + $0xc8] sm:$0xff]
      %v5466 = vld [vmem:[%s291 + $0xd0] sm:$0xff]
      %v5467 = vld [vmem:[%s291 + $0xd8] sm:$0xff]
      %v5468 = vld [vmem:[%s291 + $0xe0] sm:$0xff]
      %v5469 = vld [vmem:[%s291 + $0xe8] sm:$0xff]
      %v5470 = vld [vmem:[%s291 + $0xf0] sm:$0xff]
      %v5471 = vld [vmem:[%s291 + $0xf8] sm:$0xff]
      %s5472 = scalar_lea.vmem %s3, 12
      %v5473 = vld [vmem:[%s5472] sm:$0xf]
      %v5475 = vsel %vm258, %v5440, 0
      %v5478 = vsel %vm258, %v5441, 0
      %v5481 = vsel %vm258, %v5442, 0
      %v5484 = vsel %vm258, %v5443, 0
      %v5487 = vsel %vm258, %v5444, 0
      %v5490 = vsel %vm258, %v5445, 0
      %v5493 = vsel %vm258, %v5446, 0
      %v5496 = vsel %vm258, %v5447, 0
      %v5499 = vsel %vm258, %v5448, 0
      %v5502 = vsel %vm258, %v5449, 0
      %v5505 = vsel %vm258, %v5450, 0
      %v5508 = vsel %vm258, %v5451, 0
      %v5511 = vsel %vm258, %v5452, 0
      %v5514 = vsel %vm258, %v5453, 0
      %v5517 = vsel %vm258, %v5454, 0
      %v5520 = vsel %vm258, %v5455, 0
      %v5523 = vsel %vm258, %v5456, 0
      %v5526 = vsel %vm258, %v5457, 0
      %v5529 = vsel %vm258, %v5458, 0
      %v5532 = vsel %vm258, %v5459, 0
      %v5535 = vsel %vm258, %v5460, 0
      %v5538 = vsel %vm258, %v5461, 0
      %v5541 = vsel %vm258, %v5462, 0
      %v5544 = vsel %vm258, %v5463, 0
      %v5547 = vsel %vm258, %v5464, 0
      %v5550 = vsel %vm258, %v5465, 0
      %v5553 = vsel %vm258, %v5466, 0
      %v5556 = vsel %vm258, %v5467, 0
      %v5559 = vsel %vm258, %v5468, 0
      %v5562 = vsel %vm258, %v5469, 0
      %v5565 = vsel %vm258, %v5470, 0
      %v5568 = vsel %vm258, %v5471, 0
      %v5571 = vsel %vm585, %v5473, 0
      %5573 = vmatprep.subr.mxu0 0.0
      %5574 = vmatpush1.msra.mxu0 %v5571
      %5575 = vmatprep.subr.mxu0 0.0
      %5576 = vmatpush1.msra.mxu0 0.0
      %5577 = vmatprep.subr.mxu0 0.0
      %5578 = vmatpush1.msra.mxu0 0.0
      %5579 = vmatprep.subr.mxu0 0.0
      %5580 = vmatpush1.msra.mxu0 0.0
      %5581 = vmatprep.subr.mxu0 0.0
      %5582 = vmatpush1.msra.mxu0 0.0
      %5583 = vmatprep.subr.mxu0 0.0
      %5584 = vmatpush1.msra.mxu0 0.0
      %5585 = vmatprep.subr.mxu0 0.0
      %5586 = vmatpush1.msra.mxu0 0.0
      %5587 = vmatprep.subr.mxu0 0.0
      %5588 = vmatpush1.msra.mxu0 0.0
      %5589 = vmatprep.subr.mxu0 0.0
      %5590 = vmatpush1.msra.mxu0 0.0
      %5591 = vmatprep.subr.mxu0 0.0
      %5592 = vmatpush1.msra.mxu0 0.0
      %5593 = vmatprep.subr.mxu0 0.0
      %5594 = vmatpush1.msra.mxu0 0.0
      %5595 = vmatprep.subr.mxu0 0.0
      %5596 = vmatpush1.msra.mxu0 0.0
      %5597 = vmatprep.subr.mxu0 0.0
      %5598 = vmatpush1.msra.mxu0 0.0
      %5599 = vmatprep.subr.mxu0 0.0
      %5600 = vmatpush1.msra.mxu0 0.0
      %5601 = vmatprep.subr.mxu0 0.0
      %5602 = vmatpush1.msra.mxu0 0.0
      %5603 = vmatprep.subr.mxu0 0.0
      %5604 = vmatpush1.msra.mxu0 0.0
      %5605 = vmatprep.subr.mxu0 0.0
      %5606 = vmatpush1.msra.mxu0 0.0
      %5607 = vmatprep.subr.mxu0 0.0
      %5608 = vmatpush1.msra.mxu0 0.0
      %5609 = vmatprep.subr.mxu0 0.0
      %5610 = vmatpush1.msra.mxu0 0.0
      %5611 = vmatprep.subr.mxu0 0.0
      %5612 = vmatpush1.msra.mxu0 0.0
      %5613 = vmatprep.subr.mxu0 0.0
      %5614 = vmatpush1.msra.mxu0 0.0
      %5615 = vmatprep.subr.mxu0 0.0
      %5616 = vmatpush1.msra.mxu0 0.0
      %5617 = vmatprep.subr.mxu0 0.0
      %5618 = vmatpush1.msra.mxu0 0.0
      %5619 = vmatprep.subr.mxu0 0.0
      %5620 = vmatpush1.msra.mxu0 0.0
      %5621 = vmatprep.subr.mxu0 0.0
      %5622 = vmatpush1.msra.mxu0 0.0
      %5623 = vmatprep.subr.mxu0 0.0
      %5624 = vmatpush1.msra.mxu0 0.0
      %5625 = vmatprep.subr.mxu0 0.0
      %5626 = vmatpush1.msra.mxu0 0.0
      %5627 = vmatprep.subr.mxu0 0.0
      %5628 = vmatpush1.msra.mxu0 0.0
      %5629 = vmatprep.subr.mxu0 0.0
      %5630 = vmatpush1.msra.mxu0 0.0
      %5631 = vmatprep.subr.mxu0 0.0
      %5632 = vmatpush1.msra.mxu0 0.0
      %5633 = vmatprep.subr.mxu0 0.0
      %5634 = vmatpush1.msra.mxu0 0.0
      %5635 = vmatprep.subr.mxu0 0.0
      %5636 = vmatpush1.msra.mxu0 0.0
      %5637 = vmatprep.mubr.f32.mxu0 0.0
      %5638 = vmatmul.mubr.f32.gmra.mrb[0].mxu0 %v5475
      %v5639 = vpop.f32.mrb[0].mxu0
      %v5640 = vadd.f32 0.0, %v5639
      %v5641 = vpop.f32.mrb[0].mxu0
      %5642 = vmatprep.mubr.f32.mxu0 0.0
      %5643 = vmatmul.mubr.f32.gmra.mrb[0].mxu0 %v5478
      %v5644 = vpop.f32.mrb[0].mxu0
      %v5645 = vadd.f32 0.0, %v5644
      %v5646 = vpop.f32.mrb[0].mxu0
      %5647 = vmatprep.mubr.f32.mxu0 0.0
      %5648 = vmatmul.mubr.f32.gmra.mrb[0].mxu0 %v5481
      %v5649 = vpop.f32.mrb[0].mxu0
      %v5650 = vadd.f32 0.0, %v5649
      %v5651 = vpop.f32.mrb[0].mxu0
      %5652 = vmatprep.mubr.f32.mxu0 0.0
      %5653 = vmatmul.mubr.f32.gmra.mrb[0].mxu0 %v5484
      %v5654 = vpop.f32.mrb[0].mxu0
      %v5655 = vadd.f32 0.0, %v5654
      %v5656 = vpop.f32.mrb[0].mxu0
      %5657 = vmatprep.mubr.f32.mxu0 0.0
      %5658 = vmatmul.mubr.f32.gmra.mrb[0].mxu0 %v5487
      %v5659 = vpop.f32.mrb[0].mxu0
      %v5660 = vadd.f32 0.0, %v5659
      %v5661 = vpop.f32.mrb[0].mxu0
      %5662 = vmatprep.mubr.f32.mxu0 0.0
      %5663 = vmatmul.mubr.f32.gmra.mrb[0].mxu0 %v5490
      %v5664 = vpop.f32.mrb[0].mxu0
      %v5665 = vadd.f32 0.0, %v5664
      %v5666 = vpop.f32.mrb[0].mxu0
      %5667 = vmatprep.mubr.f32.mxu0 0.0
      %5668 = vmatmul.mubr.f32.gmra.mrb[0].mxu0 %v5493
      %v5669 = vpop.f32.mrb[0].mxu0
      %v5670 = vadd.f32 0.0, %v5669
      %v5671 = vpop.f32.mrb[0].mxu0
      %5672 = vmatprep.mubr.f32.mxu0 0.0
      %5673 = vmatmul.mubr.f32.gmra.mrb[0].mxu0 %v5496
      %v5674 = vpop.f32.mrb[0].mxu0
      %v5675 = vadd.f32 0.0, %v5674
      %v5676 = vpop.f32.mrb[0].mxu0
      %5677 = vmatprep.mubr.f32.mxu0 0.0
      %5678 = vmatmul.mubr.f32.gmra.mrb[0].mxu0 %v5499
      %v5679 = vpop.f32.mrb[0].mxu0
      %v5680 = vadd.f32 0.0, %v5679
      %v5681 = vpop.f32.mrb[0].mxu0
      %5682 = vmatprep.mubr.f32.mxu0 0.0
      %5683 = vmatmul.mubr.f32.gmra.mrb[0].mxu0 %v5502
      %v5684 = vpop.f32.mrb[0].mxu0
      %v5685 = vadd.f32 0.0, %v5684
      %v5686 = vpop.f32.mrb[0].mxu0
      %5687 = vmatprep.mubr.f32.mxu0 0.0
      %5688 = vmatmul.mubr.f32.gmra.mrb[0].mxu0 %v5505
      %v5689 = vpop.f32.mrb[0].mxu0
      %v5690 = vadd.f32 0.0, %v5689
      %v5691 = vpop.f32.mrb[0].mxu0
      %5692 = vmatprep.mubr.f32.mxu0 0.0
      %5693 = vmatmul.mubr.f32.gmra.mrb[0].mxu0 %v5508
      %v5694 = vpop.f32.mrb[0].mxu0
      %v5695 = vadd.f32 0.0, %v5694
      %v5696 = vpop.f32.mrb[0].mxu0
      %5697 = vmatprep.mubr.f32.mxu0 0.0
      %5698 = vmatmul.mubr.f32.gmra.mrb[0].mxu0 %v5511
      %v5699 = vpop.f32.mrb[0].mxu0
      %v5700 = vadd.f32 0.0, %v5699
      %v5701 = vpop.f32.mrb[0].mxu0
      %5702 = vmatprep.mubr.f32.mxu0 0.0
      %5703 = vmatmul.mubr.f32.gmra.mrb[0].mxu0 %v5514
      %v5704 = vpop.f32.mrb[0].mxu0
      %v5705 = vadd.f32 0.0, %v5704
      %v5706 = vpop.f32.mrb[0].mxu0
      %5707 = vmatprep.mubr.f32.mxu0 0.0
      %5708 = vmatmul.mubr.f32.gmra.mrb[0].mxu0 %v5517
      %v5709 = vpop.f32.mrb[0].mxu0
      %v5710 = vadd.f32 0.0, %v5709
      %v5711 = vpop.f32.mrb[0].mxu0
      %5712 = vmatprep.mubr.f32.mxu0 0.0
      %5713 = vmatmul.mubr.f32.gmra.mrb[0].mxu0 %v5520
      %v5714 = vpop.f32.mrb[0].mxu0
      %v5715 = vadd.f32 0.0, %v5714
      %v5716 = vpop.f32.mrb[0].mxu0
      %5717 = vmatprep.mubr.f32.mxu0 0.0
      %5718 = vmatmul.mubr.f32.gmra.mrb[0].mxu0 %v5523
      %v5719 = vpop.f32.mrb[0].mxu0
      %v5720 = vadd.f32 0.0, %v5719
      %v5721 = vpop.f32.mrb[0].mxu0
      %5722 = vmatprep.mubr.f32.mxu0 0.0
      %5723 = vmatmul.mubr.f32.gmra.mrb[0].mxu0 %v5526
      %v5724 = vpop.f32.mrb[0].mxu0
      %v5725 = vadd.f32 0.0, %v5724
      %v5726 = vpop.f32.mrb[0].mxu0
      %5727 = vmatprep.mubr.f32.mxu0 0.0
      %5728 = vmatmul.mubr.f32.gmra.mrb[0].mxu0 %v5529
      %v5729 = vpop.f32.mrb[0].mxu0
      %v5730 = vadd.f32 0.0, %v5729
      %v5731 = vpop.f32.mrb[0].mxu0
      %5732 = vmatprep.mubr.f32.mxu0 0.0
      %5733 = vmatmul.mubr.f32.gmra.mrb[0].mxu0 %v5532
      %v5734 = vpop.f32.mrb[0].mxu0
      %v5735 = vadd.f32 0.0, %v5734
      %v5736 = vpop.f32.mrb[0].mxu0
      %5737 = vmatprep.mubr.f32.mxu0 0.0
      %5738 = vmatmul.mubr.f32.gmra.mrb[0].mxu0 %v5535
      %v5739 = vpop.f32.mrb[0].mxu0
      %v5740 = vadd.f32 0.0, %v5739
      %v5741 = vpop.f32.mrb[0].mxu0
      %5742 = vmatprep.mubr.f32.mxu0 0.0
      %5743 = vmatmul.mubr.f32.gmra.mrb[0].mxu0 %v5538
      %v5744 = vpop.f32.mrb[0].mxu0
      %v5745 = vadd.f32 0.0, %v5744
      %v5746 = vpop.f32.mrb[0].mxu0
      %5747 = vmatprep.mubr.f32.mxu0 0.0
      %5748 = vmatmul.mubr.f32.gmra.mrb[0].mxu0 %v5541
      %v5749 = vpop.f32.mrb[0].mxu0
      %v5750 = vadd.f32 0.0, %v5749
      %v5751 = vpop.f32.mrb[0].mxu0
      %5752 = vmatprep.mubr.f32.mxu0 0.0
      %5753 = vmatmul.mubr.f32.gmra.mrb[0].mxu0 %v5544
      %v5754 = vpop.f32.mrb[0].mxu0
      %v5755 = vadd.f32 0.0, %v5754
      %v5756 = vpop.f32.mrb[0].mxu0
      %5757 = vmatprep.mubr.f32.mxu0 0.0
      %5758 = vmatmul.mubr.f32.gmra.mrb[0].mxu0 %v5547
      %v5759 = vpop.f32.mrb[0].mxu0
      %v5760 = vadd.f32 0.0, %v5759
      %v5761 = vpop.f32.mrb[0].mxu0
      %5762 = vmatprep.mubr.f32.mxu0 0.0
      %5763 = vmatmul.mubr.f32.gmra.mrb[0].mxu0 %v5550
      %v5764 = vpop.f32.mrb[0].mxu0
      %v5765 = vadd.f32 0.0, %v5764
      %v5766 = vpop.f32.mrb[0].mxu0
      %5767 = vmatprep.mubr.f32.mxu0 0.0
      %5768 = vmatmul.mubr.f32.gmra.mrb[0].mxu0 %v5553
      %v5769 = vpop.f32.mrb[0].mxu0
      %v5770 = vadd.f32 0.0, %v5769
      %v5771 = vpop.f32.mrb[0].mxu0
      %5772 = vmatprep.mubr.f32.mxu0 0.0
      %5773 = vmatmul.mubr.f32.gmra.mrb[0].mxu0 %v5556
      %v5774 = vpop.f32.mrb[0].mxu0
      %v5775 = vadd.f32 0.0, %v5774
      %v5776 = vpop.f32.mrb[0].mxu0
      %5777 = vmatprep.mubr.f32.mxu0 0.0
      %5778 = vmatmul.mubr.f32.gmra.mrb[0].mxu0 %v5559
      %v5779 = vpop.f32.mrb[0].mxu0
      %v5780 = vadd.f32 0.0, %v5779
      %v5781 = vpop.f32.mrb[0].mxu0
      %5782 = vmatprep.mubr.f32.mxu0 0.0
      %5783 = vmatmul.mubr.f32.gmra.mrb[0].mxu0 %v5562
      %v5784 = vpop.f32.mrb[0].mxu0
      %v5785 = vadd.f32 0.0, %v5784
      %v5786 = vpop.f32.mrb[0].mxu0
      %5787 = vmatprep.mubr.f32.mxu0 0.0
      %5788 = vmatmul.mubr.f32.gmra.mrb[0].mxu0 %v5565
      %v5789 = vpop.f32.mrb[0].mxu0
      %v5790 = vadd.f32 0.0, %v5789
      %v5791 = vpop.f32.mrb[0].mxu0
      %5792 = vmatprep.mubr.f32.mxu0 0.0
      %5793 = vmatmul.mubr.f32.gmra.mrb[0].mxu0 %v5568
      %v5794 = vpop.f32.mrb[0].mxu0
      %v5795 = vadd.f32 0.0, %v5794
      %v5796 = vpop.f32.mrb[0].mxu0
      %5797 = vdwg.mxu0
      %v5798 = vadd.f32 %v5408, %v5640
      %v5799 = vadd.f32 %v5409, %v5645
      %v5800 = vadd.f32 %v5410, %v5650
      %v5801 = vadd.f32 %v5411, %v5655
      %v5802 = vadd.f32 %v5412, %v5660
      %v5803 = vadd.f32 %v5413, %v5665
      %v5804 = vadd.f32 %v5414, %v5670
      %v5805 = vadd.f32 %v5415, %v5675
      %v5806 = vadd.f32 %v5416, %v5680
      %v5807 = vadd.f32 %v5417, %v5685
      %v5808 = vadd.f32 %v5418, %v5690
      %v5809 = vadd.f32 %v5419, %v5695
      %v5810 = vadd.f32 %v5420, %v5700
      %v5811 = vadd.f32 %v5421, %v5705
      %v5812 = vadd.f32 %v5422, %v5710
      %v5813 = vadd.f32 %v5423, %v5715
      %v5814 = vadd.f32 %v5424, %v5720
      %v5815 = vadd.f32 %v5425, %v5725
      %v5816 = vadd.f32 %v5426, %v5730
      %v5817 = vadd.f32 %v5427, %v5735
      %v5818 = vadd.f32 %v5428, %v5740
      %v5819 = vadd.f32 %v5429, %v5745
      %v5820 = vadd.f32 %v5430, %v5750
      %v5821 = vadd.f32 %v5431, %v5755
      %v5822 = vadd.f32 %v5432, %v5760
      %v5823 = vadd.f32 %v5433, %v5765
      %v5824 = vadd.f32 %v5434, %v5770
      %v5825 = vadd.f32 %v5435, %v5775
      %v5826 = vadd.f32 %v5436, %v5780
      %v5827 = vadd.f32 %v5437, %v5785
      %v5828 = vadd.f32 %v5438, %v5790
      %v5829 = vadd.f32 %v5439, %v5795
      %v5830 = vld [vmem:[%s257] sm:$0xff]
      %v5831 = vld [vmem:[%s257 + $0x8] sm:$0xff]
      %v5832 = vld [vmem:[%s257 + $0x10] sm:$0xff]
      %v5833 = vld [vmem:[%s257 + $0x18] sm:$0xff]
      %v5834 = vld [vmem:[%s257 + $0x20] sm:$0xff]
      %v5835 = vld [vmem:[%s257 + $0x28] sm:$0xff]
      %v5836 = vld [vmem:[%s257 + $0x30] sm:$0xff]
      %v5837 = vld [vmem:[%s257 + $0x38] sm:$0xff]
      %v5838 = vld [vmem:[%s257 + $0x40] sm:$0xff]
      %v5839 = vld [vmem:[%s257 + $0x48] sm:$0xff]
      %v5840 = vld [vmem:[%s257 + $0x50] sm:$0xff]
      %v5841 = vld [vmem:[%s257 + $0x58] sm:$0xff]
      %v5842 = vld [vmem:[%s257 + $0x60] sm:$0xff]
      %v5843 = vld [vmem:[%s257 + $0x68] sm:$0xff]
      %v5844 = vld [vmem:[%s257 + $0x70] sm:$0xff]
      %v5845 = vld [vmem:[%s257 + $0x78] sm:$0xff]
      %v5846 = vld [vmem:[%s257 + $0x80] sm:$0xff]
      %v5847 = vld [vmem:[%s257 + $0x88] sm:$0xff]
      %v5848 = vld [vmem:[%s257 + $0x90] sm:$0xff]
      %v5849 = vld [vmem:[%s257 + $0x98] sm:$0xff]
      %v5850 = vld [vmem:[%s257 + $0xa0] sm:$0xff]
      %v5851 = vld [vmem:[%s257 + $0xa8] sm:$0xff]
      %v5852 = vld [vmem:[%s257 + $0xb0] sm:$0xff]
      %v5853 = vld [vmem:[%s257 + $0xb8] sm:$0xff]
      %v5854 = vld [vmem:[%s257 + $0xc0] sm:$0xff]
      %v5855 = vld [vmem:[%s257 + $0xc8] sm:$0xff]
      %v5856 = vld [vmem:[%s257 + $0xd0] sm:$0xff]
      %v5857 = vld [vmem:[%s257 + $0xd8] sm:$0xff]
      %v5858 = vld [vmem:[%s257 + $0xe0] sm:$0xff]
      %v5859 = vld [vmem:[%s257 + $0xe8] sm:$0xff]
      %v5860 = vld [vmem:[%s257 + $0xf0] sm:$0xff]
      %v5861 = vld [vmem:[%s257 + $0xf8] sm:$0xff]
      %s5862 = scalar_lea.vmem %s3, 16
      %v5863 = vld [vmem:[%s5862] sm:$0xf]
      %v5865 = vsel %vm258, %v5830, 0
      %v5868 = vsel %vm258, %v5831, 0
      %v5871 = vsel %vm258, %v5832, 0
      %v5874 = vsel %vm258, %v5833, 0
      %v5877 = vsel %vm258, %v5834, 0
      %v5880 = vsel %vm258, %v5835, 0
      %v5883 = vsel %vm258, %v5836, 0
      %v5886 = vsel %vm258, %v5837, 0
      %v5889 = vsel %vm258, %v5838, 0
      %v5892 = vsel %vm258, %v5839, 0
      %v5895 = vsel %vm258, %v5840, 0
      %v5898 = vsel %vm258, %v5841, 0
      %v5901 = vsel %vm258, %v5842, 0
      %v5904 = vsel %vm258, %v5843, 0
      %v5907 = vsel %vm258, %v5844, 0
      %v5910 = vsel %vm258, %v5845, 0
      %v5913 = vsel %vm258, %v5846, 0
      %v5916 = vsel %vm258, %v5847, 0
      %v5919 = vsel %vm258, %v5848, 0
      %v5922 = vsel %vm258, %v5849, 0
      %v5925 = vsel %vm258, %v5850, 0
      %v5928 = vsel %vm258, %v5851, 0
      %v5931 = vsel %vm258, %v5852, 0
      %v5934 = vsel %vm258, %v5853, 0
      %v5937 = vsel %vm258, %v5854, 0
      %v5940 = vsel %vm258, %v5855, 0
      %v5943 = vsel %vm258, %v5856, 0
      %v5946 = vsel %vm258, %v5857, 0
      %v5949 = vsel %vm258, %v5858, 0
      %v5952 = vsel %vm258, %v5859, 0
      %v5955 = vsel %vm258, %v5860, 0
      %v5958 = vsel %vm258, %v5861, 0
      %v5961 = vsel %vm585, %v5863, 0
      %5963 = vmatprep.subr.mxu0 0.0
      %5964 = vmatpush1.msra.mxu0 %v5961
      %5965 = vmatprep.subr.mxu0 0.0
      %5966 = vmatpush1.msra.mxu0 0.0
      %5967 = vmatprep.subr.mxu0 0.0
      %5968 = vmatpush1.msra.mxu0 0.0
      %5969 = vmatprep.subr.mxu0 0.0
      %5970 = vmatpush1.msra.mxu0 0.0
      %5971 = vmatprep.subr.mxu0 0.0
      %5972 = vmatpush1.msra.mxu0 0.0
      %5973 = vmatprep.subr.mxu0 0.0
      %5974 = vmatpush1.msra.mxu0 0.0
      %5975 = vmatprep.subr.mxu0 0.0
      %5976 = vmatpush1.msra.mxu0 0.0
      %5977 = vmatprep.subr.mxu0 0.0
      %5978 = vmatpush1.msra.mxu0 0.0
      %5979 = vmatprep.subr.mxu0 0.0
      %5980 = vmatpush1.msra.mxu0 0.0
      %5981 = vmatprep.subr.mxu0 0.0
      %5982 = vmatpush1.msra.mxu0 0.0
      %5983 = vmatprep.subr.mxu0 0.0
      %5984 = vmatpush1.msra.mxu0 0.0
      %5985 = vmatprep.subr.mxu0 0.0
      %5986 = vmatpush1.msra.mxu0 0.0
      %5987 = vmatprep.subr.mxu0 0.0
      %5988 = vmatpush1.msra.mxu0 0.0
      %5989 = vmatprep.subr.mxu0 0.0
      %5990 = vmatpush1.msra.mxu0 0.0
      %5991 = vmatprep.subr.mxu0 0.0
      %5992 = vmatpush1.msra.mxu0 0.0
      %5993 = vmatprep.subr.mxu0 0.0
      %5994 = vmatpush1.msra.mxu0 0.0
      %5995 = vmatprep.subr.mxu0 0.0
      %5996 = vmatpush1.msra.mxu0 0.0
      %5997 = vmatprep.subr.mxu0 0.0
      %5998 = vmatpush1.msra.mxu0 0.0
      %5999 = vmatprep.subr.mxu0 0.0
      %6000 = vmatpush1.msra.mxu0 0.0
      %6001 = vmatprep.subr.mxu0 0.0
      %6002 = vmatpush1.msra.mxu0 0.0
      %6003 = vmatprep.subr.mxu0 0.0
      %6004 = vmatpush1.msra.mxu0 0.0
      %6005 = vmatprep.subr.mxu0 0.0
      %6006 = vmatpush1.msra.mxu0 0.0
      %6007 = vmatprep.subr.mxu0 0.0
      %6008 = vmatpush1.msra.mxu0 0.0
      %6009 = vmatprep.subr.mxu0 0.0
      %6010 = vmatpush1.msra.mxu0 0.0
      %6011 = vmatprep.subr.mxu0 0.0
      %6012 = vmatpush1.msra.mxu0 0.0
      %6013 = vmatprep.subr.mxu0 0.0
      %6014 = vmatpush1.msra.mxu0 0.0
      %6015 = vmatprep.subr.mxu0 0.0
      %6016 = vmatpush1.msra.mxu0 0.0
      %6017 = vmatprep.subr.mxu0 0.0
      %6018 = vmatpush1.msra.mxu0 0.0
      %6019 = vmatprep.subr.mxu0 0.0
      %6020 = vmatpush1.msra.mxu0 0.0
      %6021 = vmatprep.subr.mxu0 0.0
      %6022 = vmatpush1.msra.mxu0 0.0
      %6023 = vmatprep.subr.mxu0 0.0
      %6024 = vmatpush1.msra.mxu0 0.0
      %6025 = vmatprep.subr.mxu0 0.0
      %6026 = vmatpush1.msra.mxu0 0.0
      %6027 = vmatprep.mubr.f32.mxu0 0.0
      %6028 = vmatmul.mubr.f32.gmra.mrb[0].mxu0 %v5865
      %v6029 = vpop.f32.mrb[0].mxu0
      %v6030 = vadd.f32 0.0, %v6029
      %v6031 = vpop.f32.mrb[0].mxu0
      %6032 = vmatprep.mubr.f32.mxu0 0.0
      %6033 = vmatmul.mubr.f32.gmra.mrb[0].mxu0 %v5868
      %v6034 = vpop.f32.mrb[0].mxu0
      %v6035 = vadd.f32 0.0, %v6034
      %v6036 = vpop.f32.mrb[0].mxu0
      %6037 = vmatprep.mubr.f32.mxu0 0.0
      %6038 = vmatmul.mubr.f32.gmra.mrb[0].mxu0 %v5871
      %v6039 = vpop.f32.mrb[0].mxu0
      %v6040 = vadd.f32 0.0, %v6039
      %v6041 = vpop.f32.mrb[0].mxu0
      %6042 = vmatprep.mubr.f32.mxu0 0.0
      %6043 = vmatmul.mubr.f32.gmra.mrb[0].mxu0 %v5874
      %v6044 = vpop.f32.mrb[0].mxu0
      %v6045 = vadd.f32 0.0, %v6044
      %v6046 = vpop.f32.mrb[0].mxu0
      %6047 = vmatprep.mubr.f32.mxu0 0.0
      %6048 = vmatmul.mubr.f32.gmra.mrb[0].mxu0 %v5877
      %v6049 = vpop.f32.mrb[0].mxu0
      %v6050 = vadd.f32 0.0, %v6049
      %v6051 = vpop.f32.mrb[0].mxu0
      %6052 = vmatprep.mubr.f32.mxu0 0.0
      %6053 = vmatmul.mubr.f32.gmra.mrb[0].mxu0 %v5880
      %v6054 = vpop.f32.mrb[0].mxu0
      %v6055 = vadd.f32 0.0, %v6054
      %v6056 = vpop.f32.mrb[0].mxu0
      %6057 = vmatprep.mubr.f32.mxu0 0.0
      %6058 = vmatmul.mubr.f32.gmra.mrb[0].mxu0 %v5883
      %v6059 = vpop.f32.mrb[0].mxu0
      %v6060 = vadd.f32 0.0, %v6059
      %v6061 = vpop.f32.mrb[0].mxu0
      %6062 = vmatprep.mubr.f32.mxu0 0.0
      %6063 = vmatmul.mubr.f32.gmra.mrb[0].mxu0 %v5886
      %v6064 = vpop.f32.mrb[0].mxu0
      %v6065 = vadd.f32 0.0, %v6064
      %v6066 = vpop.f32.mrb[0].mxu0
      %6067 = vmatprep.mubr.f32.mxu0 0.0
      %6068 = vmatmul.mubr.f32.gmra.mrb[0].mxu0 %v5889
      %v6069 = vpop.f32.mrb[0].mxu0
      %v6070 = vadd.f32 0.0, %v6069
      %v6071 = vpop.f32.mrb[0].mxu0
      %6072 = vmatprep.mubr.f32.mxu0 0.0
      %6073 = vmatmul.mubr.f32.gmra.mrb[0].mxu0 %v5892
      %v6074 = vpop.f32.mrb[0].mxu0
      %v6075 = vadd.f32 0.0, %v6074
      %v6076 = vpop.f32.mrb[0].mxu0
      %6077 = vmatprep.mubr.f32.mxu0 0.0
      %6078 = vmatmul.mubr.f32.gmra.mrb[0].mxu0 %v5895
      %v6079 = vpop.f32.mrb[0].mxu0
      %v6080 = vadd.f32 0.0, %v6079
      %v6081 = vpop.f32.mrb[0].mxu0
      %6082 = vmatprep.mubr.f32.mxu0 0.0
      %6083 = vmatmul.mubr.f32.gmra.mrb[0].mxu0 %v5898
      %v6084 = vpop.f32.mrb[0].mxu0
      %v6085 = vadd.f32 0.0, %v6084
      %v6086 = vpop.f32.mrb[0].mxu0
      %6087 = vmatprep.mubr.f32.mxu0 0.0
      %6088 = vmatmul.mubr.f32.gmra.mrb[0].mxu0 %v5901
      %v6089 = vpop.f32.mrb[0].mxu0
      %v6090 = vadd.f32 0.0, %v6089
      %v6091 = vpop.f32.mrb[0].mxu0
      %6092 = vmatprep.mubr.f32.mxu0 0.0
      %6093 = vmatmul.mubr.f32.gmra.mrb[0].mxu0 %v5904
      %v6094 = vpop.f32.mrb[0].mxu0
      %v6095 = vadd.f32 0.0, %v6094
      %v6096 = vpop.f32.mrb[0].mxu0
      %6097 = vmatprep.mubr.f32.mxu0 0.0
      %6098 = vmatmul.mubr.f32.gmra.mrb[0].mxu0 %v5907
      %v6099 = vpop.f32.mrb[0].mxu0
      %v6100 = vadd.f32 0.0, %v6099
      %v6101 = vpop.f32.mrb[0].mxu0
      %6102 = vmatprep.mubr.f32.mxu0 0.0
      %6103 = vmatmul.mubr.f32.gmra.mrb[0].mxu0 %v5910
      %v6104 = vpop.f32.mrb[0].mxu0
      %v6105 = vadd.f32 0.0, %v6104
      %v6106 = vpop.f32.mrb[0].mxu0
      %6107 = vmatprep.mubr.f32.mxu0 0.0
      %6108 = vmatmul.mubr.f32.gmra.mrb[0].mxu0 %v5913
      %v6109 = vpop.f32.mrb[0].mxu0
      %v6110 = vadd.f32 0.0, %v6109
      %v6111 = vpop.f32.mrb[0].mxu0
      %6112 = vmatprep.mubr.f32.mxu0 0.0
      %6113 = vmatmul.mubr.f32.gmra.mrb[0].mxu0 %v5916
      %v6114 = vpop.f32.mrb[0].mxu0
      %v6115 = vadd.f32 0.0, %v6114
      %v6116 = vpop.f32.mrb[0].mxu0
      %6117 = vmatprep.mubr.f32.mxu0 0.0
      %6118 = vmatmul.mubr.f32.gmra.mrb[0].mxu0 %v5919
      %v6119 = vpop.f32.mrb[0].mxu0
      %v6120 = vadd.f32 0.0, %v6119
      %v6121 = vpop.f32.mrb[0].mxu0
      %6122 = vmatprep.mubr.f32.mxu0 0.0
      %6123 = vmatmul.mubr.f32.gmra.mrb[0].mxu0 %v5922
      %v6124 = vpop.f32.mrb[0].mxu0
      %v6125 = vadd.f32 0.0, %v6124
      %v6126 = vpop.f32.mrb[0].mxu0
      %6127 = vmatprep.mubr.f32.mxu0 0.0
      %6128 = vmatmul.mubr.f32.gmra.mrb[0].mxu0 %v5925
      %v6129 = vpop.f32.mrb[0].mxu0
      %v6130 = vadd.f32 0.0, %v6129
      %v6131 = vpop.f32.mrb[0].mxu0
      %6132 = vmatprep.mubr.f32.mxu0 0.0
      %6133 = vmatmul.mubr.f32.gmra.mrb[0].mxu0 %v5928
      %v6134 = vpop.f32.mrb[0].mxu0
      %v6135 = vadd.f32 0.0, %v6134
      %v6136 = vpop.f32.mrb[0].mxu0
      %6137 = vmatprep.mubr.f32.mxu0 0.0
      %6138 = vmatmul.mubr.f32.gmra.mrb[0].mxu0 %v5931
      %v6139 = vpop.f32.mrb[0].mxu0
      %v6140 = vadd.f32 0.0, %v6139
      %v6141 = vpop.f32.mrb[0].mxu0
      %6142 = vmatprep.mubr.f32.mxu0 0.0
      %6143 = vmatmul.mubr.f32.gmra.mrb[0].mxu0 %v5934
      %v6144 = vpop.f32.mrb[0].mxu0
      %v6145 = vadd.f32 0.0, %v6144
      %v6146 = vpop.f32.mrb[0].mxu0
      %6147 = vmatprep.mubr.f32.mxu0 0.0
      %6148 = vmatmul.mubr.f32.gmra.mrb[0].mxu0 %v5937
      %v6149 = vpop.f32.mrb[0].mxu0
      %v6150 = vadd.f32 0.0, %v6149
      %v6151 = vpop.f32.mrb[0].mxu0
      %6152 = vmatprep.mubr.f32.mxu0 0.0
      %6153 = vmatmul.mubr.f32.gmra.mrb[0].mxu0 %v5940
      %v6154 = vpop.f32.mrb[0].mxu0
      %v6155 = vadd.f32 0.0, %v6154
      %v6156 = vpop.f32.mrb[0].mxu0
      %6157 = vmatprep.mubr.f32.mxu0 0.0
      %6158 = vmatmul.mubr.f32.gmra.mrb[0].mxu0 %v5943
      %v6159 = vpop.f32.mrb[0].mxu0
      %v6160 = vadd.f32 0.0, %v6159
      %v6161 = vpop.f32.mrb[0].mxu0
      %6162 = vmatprep.mubr.f32.mxu0 0.0
      %6163 = vmatmul.mubr.f32.gmra.mrb[0].mxu0 %v5946
      %v6164 = vpop.f32.mrb[0].mxu0
      %v6165 = vadd.f32 0.0, %v6164
      %v6166 = vpop.f32.mrb[0].mxu0
      %6167 = vmatprep.mubr.f32.mxu0 0.0
      %6168 = vmatmul.mubr.f32.gmra.mrb[0].mxu0 %v5949
      %v6169 = vpop.f32.mrb[0].mxu0
      %v6170 = vadd.f32 0.0, %v6169
      %v6171 = vpop.f32.mrb[0].mxu0
      %6172 = vmatprep.mubr.f32.mxu0 0.0
      %6173 = vmatmul.mubr.f32.gmra.mrb[0].mxu0 %v5952
      %v6174 = vpop.f32.mrb[0].mxu0
      %v6175 = vadd.f32 0.0, %v6174
      %v6176 = vpop.f32.mrb[0].mxu0
      %6177 = vmatprep.mubr.f32.mxu0 0.0
      %6178 = vmatmul.mubr.f32.gmra.mrb[0].mxu0 %v5955
      %v6179 = vpop.f32.mrb[0].mxu0
      %v6180 = vadd.f32 0.0, %v6179
      %v6181 = vpop.f32.mrb[0].mxu0
      %6182 = vmatprep.mubr.f32.mxu0 0.0
      %6183 = vmatmul.mubr.f32.gmra.mrb[0].mxu0 %v5958
      %v6184 = vpop.f32.mrb[0].mxu0
      %v6185 = vadd.f32 0.0, %v6184
      %v6186 = vpop.f32.mrb[0].mxu0
      %6187 = vdwg.mxu0
      %v6188 = vadd.f32 %v5798, %v6030
      %v6189 = vadd.f32 %v5799, %v6035
      %v6190 = vadd.f32 %v5800, %v6040
      %v6191 = vadd.f32 %v5801, %v6045
      %v6192 = vadd.f32 %v5802, %v6050
      %v6193 = vadd.f32 %v5803, %v6055
      %v6194 = vadd.f32 %v5804, %v6060
      %v6195 = vadd.f32 %v5805, %v6065
      %v6196 = vadd.f32 %v5806, %v6070
      %v6197 = vadd.f32 %v5807, %v6075
      %v6198 = vadd.f32 %v5808, %v6080
      %v6199 = vadd.f32 %v5809, %v6085
      %v6200 = vadd.f32 %v5810, %v6090
      %v6201 = vadd.f32 %v5811, %v6095
      %v6202 = vadd.f32 %v5812, %v6100
      %v6203 = vadd.f32 %v5813, %v6105
      %v6204 = vadd.f32 %v5814, %v6110
      %v6205 = vadd.f32 %v5815, %v6115
      %v6206 = vadd.f32 %v5816, %v6120
      %v6207 = vadd.f32 %v5817, %v6125
      %v6208 = vadd.f32 %v5818, %v6130
      %v6209 = vadd.f32 %v5819, %v6135
      %v6210 = vadd.f32 %v5820, %v6140
      %v6211 = vadd.f32 %v5821, %v6145
      %v6212 = vadd.f32 %v5822, %v6150
      %v6213 = vadd.f32 %v5823, %v6155
      %v6214 = vadd.f32 %v5824, %v6160
      %v6215 = vadd.f32 %v5825, %v6165
      %v6216 = vadd.f32 %v5826, %v6170
      %v6217 = vadd.f32 %v5827, %v6175
      %v6218 = vadd.f32 %v5828, %v6180
      %v6219 = vadd.f32 %v5829, %v6185
      %v6220 = vld [vmem:[%s342] sm:$0xff]
      %v6221 = vld [vmem:[%s342 + $0x8] sm:$0xff]
      %v6222 = vld [vmem:[%s342 + $0x10] sm:$0xff]
      %v6223 = vld [vmem:[%s342 + $0x18] sm:$0xff]
      %v6224 = vld [vmem:[%s342 + $0x20] sm:$0xff]
      %v6225 = vld [vmem:[%s342 + $0x28] sm:$0xff]
      %v6226 = vld [vmem:[%s342 + $0x30] sm:$0xff]
      %v6227 = vld [vmem:[%s342 + $0x38] sm:$0xff]
      %v6228 = vld [vmem:[%s342 + $0x40] sm:$0xff]
      %v6229 = vld [vmem:[%s342 + $0x48] sm:$0xff]
      %v6230 = vld [vmem:[%s342 + $0x50] sm:$0xff]
      %v6231 = vld [vmem:[%s342 + $0x58] sm:$0xff]
      %v6232 = vld [vmem:[%s342 + $0x60] sm:$0xff]
      %v6233 = vld [vmem:[%s342 + $0x68] sm:$0xff]
      %v6234 = vld [vmem:[%s342 + $0x70] sm:$0xff]
      %v6235 = vld [vmem:[%s342 + $0x78] sm:$0xff]
      %v6236 = vld [vmem:[%s342 + $0x80] sm:$0xff]
      %v6237 = vld [vmem:[%s342 + $0x88] sm:$0xff]
      %v6238 = vld [vmem:[%s342 + $0x90] sm:$0xff]
      %v6239 = vld [vmem:[%s342 + $0x98] sm:$0xff]
      %v6240 = vld [vmem:[%s342 + $0xa0] sm:$0xff]
      %v6241 = vld [vmem:[%s342 + $0xa8] sm:$0xff]
      %v6242 = vld [vmem:[%s342 + $0xb0] sm:$0xff]
      %v6243 = vld [vmem:[%s342 + $0xb8] sm:$0xff]
      %v6244 = vld [vmem:[%s342 + $0xc0] sm:$0xff]
      %v6245 = vld [vmem:[%s342 + $0xc8] sm:$0xff]
      %v6246 = vld [vmem:[%s342 + $0xd0] sm:$0xff]
      %v6247 = vld [vmem:[%s342 + $0xd8] sm:$0xff]
      %v6248 = vld [vmem:[%s342 + $0xe0] sm:$0xff]
      %v6249 = vld [vmem:[%s342 + $0xe8] sm:$0xff]
      %v6250 = vld [vmem:[%s342 + $0xf0] sm:$0xff]
      %v6251 = vld [vmem:[%s342 + $0xf8] sm:$0xff]
      %s6252 = scalar_lea.vmem %s3, 20
      %v6253 = vld [vmem:[%s6252] sm:$0xf]
      %v6255 = vsel %vm258, %v6220, 0
      %v6258 = vsel %vm258, %v6221, 0
      %v6261 = vsel %vm258, %v6222, 0
      %v6264 = vsel %vm258, %v6223, 0
      %v6267 = vsel %vm258, %v6224, 0
      %v6270 = vsel %vm258, %v6225, 0
      %v6273 = vsel %vm258, %v6226, 0
      %v6276 = vsel %vm258, %v6227, 0
      %v6279 = vsel %vm258, %v6228, 0
      %v6282 = vsel %vm258, %v6229, 0
      %v6285 = vsel %vm258, %v6230, 0
      %v6288 = vsel %vm258, %v6231, 0
      %v6291 = vsel %vm258, %v6232, 0
      %v6294 = vsel %vm258, %v6233, 0
      %v6297 = vsel %vm258, %v6234, 0
      %v6300 = vsel %vm258, %v6235, 0
      %v6303 = vsel %vm258, %v6236, 0
      %v6306 = vsel %vm258, %v6237, 0
      %v6309 = vsel %vm258, %v6238, 0
      %v6312 = vsel %vm258, %v6239, 0
      %v6315 = vsel %vm258, %v6240, 0
      %v6318 = vsel %vm258, %v6241, 0
      %v6321 = vsel %vm258, %v6242, 0
      %v6324 = vsel %vm258, %v6243, 0
      %v6327 = vsel %vm258, %v6244, 0
      %v6330 = vsel %vm258, %v6245, 0
      %v6333 = vsel %vm258, %v6246, 0
      %v6336 = vsel %vm258, %v6247, 0
      %v6339 = vsel %vm258, %v6248, 0
      %v6342 = vsel %vm258, %v6249, 0
      %v6345 = vsel %vm258, %v6250, 0
      %v6348 = vsel %vm258, %v6251, 0
      %v6351 = vsel %vm585, %v6253, 0
      %6353 = vmatprep.subr.mxu0 0.0
      %6354 = vmatpush1.msra.mxu0 %v6351
      %6355 = vmatprep.subr.mxu0 0.0
      %6356 = vmatpush1.msra.mxu0 0.0
      %6357 = vmatprep.subr.mxu0 0.0
      %6358 = vmatpush1.msra.mxu0 0.0
      %6359 = vmatprep.subr.mxu0 0.0
      %6360 = vmatpush1.msra.mxu0 0.0
      %6361 = vmatprep.subr.mxu0 0.0
      %6362 = vmatpush1.msra.mxu0 0.0
      %6363 = vmatprep.subr.mxu0 0.0
      %6364 = vmatpush1.msra.mxu0 0.0
      %6365 = vmatprep.subr.mxu0 0.0
      %6366 = vmatpush1.msra.mxu0 0.0
      %6367 = vmatprep.subr.mxu0 0.0
      %6368 = vmatpush1.msra.mxu0 0.0
      %6369 = vmatprep.subr.mxu0 0.0
      %6370 = vmatpush1.msra.mxu0 0.0
      %6371 = vmatprep.subr.mxu0 0.0
      %6372 = vmatpush1.msra.mxu0 0.0
      %6373 = vmatprep.subr.mxu0 0.0
      %6374 = vmatpush1.msra.mxu0 0.0
      %6375 = vmatprep.subr.mxu0 0.0
      %6376 = vmatpush1.msra.mxu0 0.0
      %6377 = vmatprep.subr.mxu0 0.0
      %6378 = vmatpush1.msra.mxu0 0.0
      %6379 = vmatprep.subr.mxu0 0.0
      %6380 = vmatpush1.msra.mxu0 0.0
      %6381 = vmatprep.subr.mxu0 0.0
      %6382 = vmatpush1.msra.mxu0 0.0
      %6383 = vmatprep.subr.mxu0 0.0
      %6384 = vmatpush1.msra.mxu0 0.0
      %6385 = vmatprep.subr.mxu0 0.0
      %6386 = vmatpush1.msra.mxu0 0.0
      %6387 = vmatprep.subr.mxu0 0.0
      %6388 = vmatpush1.msra.mxu0 0.0
      %6389 = vmatprep.subr.mxu0 0.0
      %6390 = vmatpush1.msra.mxu0 0.0
      %6391 = vmatprep.subr.mxu0 0.0
      %6392 = vmatpush1.msra.mxu0 0.0
      %6393 = vmatprep.subr.mxu0 0.0
      %6394 = vmatpush1.msra.mxu0 0.0
      %6395 = vmatprep.subr.mxu0 0.0
      %6396 = vmatpush1.msra.mxu0 0.0
      %6397 = vmatprep.subr.mxu0 0.0
      %6398 = vmatpush1.msra.mxu0 0.0
      %6399 = vmatprep.subr.mxu0 0.0
      %6400 = vmatpush1.msra.mxu0 0.0
      %6401 = vmatprep.subr.mxu0 0.0
      %6402 = vmatpush1.msra.mxu0 0.0
      %6403 = vmatprep.subr.mxu0 0.0
      %6404 = vmatpush1.msra.mxu0 0.0
      %6405 = vmatprep.subr.mxu0 0.0
      %6406 = vmatpush1.msra.mxu0 0.0
      %6407 = vmatprep.subr.mxu0 0.0
      %6408 = vmatpush1.msra.mxu0 0.0
      %6409 = vmatprep.subr.mxu0 0.0
      %6410 = vmatpush1.msra.mxu0 0.0
      %6411 = vmatprep.subr.mxu0 0.0
      %6412 = vmatpush1.msra.mxu0 0.0
      %6413 = vmatprep.subr.mxu0 0.0
      %6414 = vmatpush1.msra.mxu0 0.0
      %6415 = vmatprep.subr.mxu0 0.0
      %6416 = vmatpush1.msra.mxu0 0.0
      %6417 = vmatprep.mubr.f32.mxu0 0.0
      %6418 = vmatmul.mubr.f32.gmra.mrb[0].mxu0 %v6255
      %v6419 = vpop.f32.mrb[0].mxu0
      %v6420 = vadd.f32 0.0, %v6419
      %v6421 = vpop.f32.mrb[0].mxu0
      %6422 = vmatprep.mubr.f32.mxu0 0.0
      %6423 = vmatmul.mubr.f32.gmra.mrb[0].mxu0 %v6258
      %v6424 = vpop.f32.mrb[0].mxu0
      %v6425 = vadd.f32 0.0, %v6424
      %v6426 = vpop.f32.mrb[0].mxu0
      %6427 = vmatprep.mubr.f32.mxu0 0.0
      %6428 = vmatmul.mubr.f32.gmra.mrb[0].mxu0 %v6261
      %v6429 = vpop.f32.mrb[0].mxu0
      %v6430 = vadd.f32 0.0, %v6429
      %v6431 = vpop.f32.mrb[0].mxu0
      %6432 = vmatprep.mubr.f32.mxu0 0.0
      %6433 = vmatmul.mubr.f32.gmra.mrb[0].mxu0 %v6264
      %v6434 = vpop.f32.mrb[0].mxu0
      %v6435 = vadd.f32 0.0, %v6434
      %v6436 = vpop.f32.mrb[0].mxu0
      %6437 = vmatprep.mubr.f32.mxu0 0.0
      %6438 = vmatmul.mubr.f32.gmra.mrb[0].mxu0 %v6267
      %v6439 = vpop.f32.mrb[0].mxu0
      %v6440 = vadd.f32 0.0, %v6439
      %v6441 = vpop.f32.mrb[0].mxu0
      %6442 = vmatprep.mubr.f32.mxu0 0.0
      %6443 = vmatmul.mubr.f32.gmra.mrb[0].mxu0 %v6270
      %v6444 = vpop.f32.mrb[0].mxu0
      %v6445 = vadd.f32 0.0, %v6444
      %v6446 = vpop.f32.mrb[0].mxu0
      %6447 = vmatprep.mubr.f32.mxu0 0.0
      %6448 = vmatmul.mubr.f32.gmra.mrb[0].mxu0 %v6273
      %v6449 = vpop.f32.mrb[0].mxu0
      %v6450 = vadd.f32 0.0, %v6449
      %v6451 = vpop.f32.mrb[0].mxu0
      %6452 = vmatprep.mubr.f32.mxu0 0.0
      %6453 = vmatmul.mubr.f32.gmra.mrb[0].mxu0 %v6276
      %v6454 = vpop.f32.mrb[0].mxu0
      %v6455 = vadd.f32 0.0, %v6454
      %v6456 = vpop.f32.mrb[0].mxu0
      %6457 = vmatprep.mubr.f32.mxu0 0.0
      %6458 = vmatmul.mubr.f32.gmra.mrb[0].mxu0 %v6279
      %v6459 = vpop.f32.mrb[0].mxu0
      %v6460 = vadd.f32 0.0, %v6459
      %v6461 = vpop.f32.mrb[0].mxu0
      %6462 = vmatprep.mubr.f32.mxu0 0.0
      %6463 = vmatmul.mubr.f32.gmra.mrb[0].mxu0 %v6282
      %v6464 = vpop.f32.mrb[0].mxu0
      %v6465 = vadd.f32 0.0, %v6464
      %v6466 = vpop.f32.mrb[0].mxu0
      %6467 = vmatprep.mubr.f32.mxu0 0.0
      %6468 = vmatmul.mubr.f32.gmra.mrb[0].mxu0 %v6285
      %v6469 = vpop.f32.mrb[0].mxu0
      %v6470 = vadd.f32 0.0, %v6469
      %v6471 = vpop.f32.mrb[0].mxu0
      %6472 = vmatprep.mubr.f32.mxu0 0.0
      %6473 = vmatmul.mubr.f32.gmra.mrb[0].mxu0 %v6288
      %v6474 = vpop.f32.mrb[0].mxu0
      %v6475 = vadd.f32 0.0, %v6474
      %v6476 = vpop.f32.mrb[0].mxu0
      %6477 = vmatprep.mubr.f32.mxu0 0.0
      %6478 = vmatmul.mubr.f32.gmra.mrb[0].mxu0 %v6291
      %v6479 = vpop.f32.mrb[0].mxu0
      %v6480 = vadd.f32 0.0, %v6479
      %v6481 = vpop.f32.mrb[0].mxu0
      %6482 = vmatprep.mubr.f32.mxu0 0.0
      %6483 = vmatmul.mubr.f32.gmra.mrb[0].mxu0 %v6294
      %v6484 = vpop.f32.mrb[0].mxu0
      %v6485 = vadd.f32 0.0, %v6484
      %v6486 = vpop.f32.mrb[0].mxu0
      %6487 = vmatprep.mubr.f32.mxu0 0.0
      %6488 = vmatmul.mubr.f32.gmra.mrb[0].mxu0 %v6297
      %v6489 = vpop.f32.mrb[0].mxu0
      %v6490 = vadd.f32 0.0, %v6489
      %v6491 = vpop.f32.mrb[0].mxu0
      %6492 = vmatprep.mubr.f32.mxu0 0.0
      %6493 = vmatmul.mubr.f32.gmra.mrb[0].mxu0 %v6300
      %v6494 = vpop.f32.mrb[0].mxu0
      %v6495 = vadd.f32 0.0, %v6494
      %v6496 = vpop.f32.mrb[0].mxu0
      %6497 = vmatprep.mubr.f32.mxu0 0.0
      %6498 = vmatmul.mubr.f32.gmra.mrb[0].mxu0 %v6303
      %v6499 = vpop.f32.mrb[0].mxu0
      %v6500 = vadd.f32 0.0, %v6499
      %v6501 = vpop.f32.mrb[0].mxu0
      %6502 = vmatprep.mubr.f32.mxu0 0.0
      %6503 = vmatmul.mubr.f32.gmra.mrb[0].mxu0 %v6306
      %v6504 = vpop.f32.mrb[0].mxu0
      %v6505 = vadd.f32 0.0, %v6504
      %v6506 = vpop.f32.mrb[0].mxu0
      %6507 = vmatprep.mubr.f32.mxu0 0.0
      %6508 = vmatmul.mubr.f32.gmra.mrb[0].mxu0 %v6309
      %v6509 = vpop.f32.mrb[0].mxu0
      %v6510 = vadd.f32 0.0, %v6509
      %v6511 = vpop.f32.mrb[0].mxu0
      %6512 = vmatprep.mubr.f32.mxu0 0.0
      %6513 = vmatmul.mubr.f32.gmra.mrb[0].mxu0 %v6312
      %v6514 = vpop.f32.mrb[0].mxu0
      %v6515 = vadd.f32 0.0, %v6514
      %v6516 = vpop.f32.mrb[0].mxu0
      %6517 = vmatprep.mubr.f32.mxu0 0.0
      %6518 = vmatmul.mubr.f32.gmra.mrb[0].mxu0 %v6315
      %v6519 = vpop.f32.mrb[0].mxu0
      %v6520 = vadd.f32 0.0, %v6519
      %v6521 = vpop.f32.mrb[0].mxu0
      %6522 = vmatprep.mubr.f32.mxu0 0.0
      %6523 = vmatmul.mubr.f32.gmra.mrb[0].mxu0 %v6318
      %v6524 = vpop.f32.mrb[0].mxu0
      %v6525 = vadd.f32 0.0, %v6524
      %v6526 = vpop.f32.mrb[0].mxu0
      %6527 = vmatprep.mubr.f32.mxu0 0.0
      %6528 = vmatmul.mubr.f32.gmra.mrb[0].mxu0 %v6321
      %v6529 = vpop.f32.mrb[0].mxu0
      %v6530 = vadd.f32 0.0, %v6529
      %v6531 = vpop.f32.mrb[0].mxu0
      %6532 = vmatprep.mubr.f32.mxu0 0.0
      %6533 = vmatmul.mubr.f32.gmra.mrb[0].mxu0 %v6324
      %v6534 = vpop.f32.mrb[0].mxu0
      %v6535 = vadd.f32 0.0, %v6534
      %v6536 = vpop.f32.mrb[0].mxu0
      %6537 = vmatprep.mubr.f32.mxu0 0.0
      %6538 = vmatmul.mubr.f32.gmra.mrb[0].mxu0 %v6327
      %v6539 = vpop.f32.mrb[0].mxu0
      %v6540 = vadd.f32 0.0, %v6539
      %v6541 = vpop.f32.mrb[0].mxu0
      %6542 = vmatprep.mubr.f32.mxu0 0.0
      %6543 = vmatmul.mubr.f32.gmra.mrb[0].mxu0 %v6330
      %v6544 = vpop.f32.mrb[0].mxu0
      %v6545 = vadd.f32 0.0, %v6544
      %v6546 = vpop.f32.mrb[0].mxu0
      %6547 = vmatprep.mubr.f32.mxu0 0.0
      %6548 = vmatmul.mubr.f32.gmra.mrb[0].mxu0 %v6333
      %v6549 = vpop.f32.mrb[0].mxu0
      %v6550 = vadd.f32 0.0, %v6549
      %v6551 = vpop.f32.mrb[0].mxu0
      %6552 = vmatprep.mubr.f32.mxu0 0.0
      %6553 = vmatmul.mubr.f32.gmra.mrb[0].mxu0 %v6336
      %v6554 = vpop.f32.mrb[0].mxu0
      %v6555 = vadd.f32 0.0, %v6554
      %v6556 = vpop.f32.mrb[0].mxu0
      %6557 = vmatprep.mubr.f32.mxu0 0.0
      %6558 = vmatmul.mubr.f32.gmra.mrb[0].mxu0 %v6339
      %v6559 = vpop.f32.mrb[0].mxu0
      %v6560 = vadd.f32 0.0, %v6559
      %v6561 = vpop.f32.mrb[0].mxu0
      %6562 = vmatprep.mubr.f32.mxu0 0.0
      %6563 = vmatmul.mubr.f32.gmra.mrb[0].mxu0 %v6342
      %v6564 = vpop.f32.mrb[0].mxu0
      %v6565 = vadd.f32 0.0, %v6564
      %v6566 = vpop.f32.mrb[0].mxu0
      %6567 = vmatprep.mubr.f32.mxu0 0.0
      %6568 = vmatmul.mubr.f32.gmra.mrb[0].mxu0 %v6345
      %v6569 = vpop.f32.mrb[0].mxu0
      %v6570 = vadd.f32 0.0, %v6569
      %v6571 = vpop.f32.mrb[0].mxu0
      %6572 = vmatprep.mubr.f32.mxu0 0.0
      %6573 = vmatmul.mubr.f32.gmra.mrb[0].mxu0 %v6348
      %v6574 = vpop.f32.mrb[0].mxu0
      %v6575 = vadd.f32 0.0, %v6574
      %v6576 = vpop.f32.mrb[0].mxu0
      %6577 = vdwg.mxu0
      %v6578 = vadd.f32 %v6188, %v6420
      %v6579 = vadd.f32 %v6189, %v6425
      %v6580 = vadd.f32 %v6190, %v6430
      %v6581 = vadd.f32 %v6191, %v6435
      %v6582 = vadd.f32 %v6192, %v6440
      %v6583 = vadd.f32 %v6193, %v6445
      %v6584 = vadd.f32 %v6194, %v6450
      %v6585 = vadd.f32 %v6195, %v6455
      %v6586 = vadd.f32 %v6196, %v6460
      %v6587 = vadd.f32 %v6197, %v6465
      %v6588 = vadd.f32 %v6198, %v6470
      %v6589 = vadd.f32 %v6199, %v6475
      %v6590 = vadd.f32 %v6200, %v6480
      %v6591 = vadd.f32 %v6201, %v6485
      %v6592 = vadd.f32 %v6202, %v6490
      %v6593 = vadd.f32 %v6203, %v6495
      %v6594 = vadd.f32 %v6204, %v6500
      %v6595 = vadd.f32 %v6205, %v6505
      %v6596 = vadd.f32 %v6206, %v6510
      %v6597 = vadd.f32 %v6207, %v6515
      %v6598 = vadd.f32 %v6208, %v6520
      %v6599 = vadd.f32 %v6209, %v6525
      %v6600 = vadd.f32 %v6210, %v6530
      %v6601 = vadd.f32 %v6211, %v6535
      %v6602 = vadd.f32 %v6212, %v6540
      %v6603 = vadd.f32 %v6213, %v6545
      %v6604 = vadd.f32 %v6214, %v6550
      %v6605 = vadd.f32 %v6215, %v6555
      %v6606 = vadd.f32 %v6216, %v6560
      %v6607 = vadd.f32 %v6217, %v6565
      %v6608 = vadd.f32 %v6218, %v6570
      %v6609 = vadd.f32 %v6219, %v6575
      %v6610 = vld [vmem:[%s393] sm:$0xff]
      %v6611 = vld [vmem:[%s393 + $0x8] sm:$0xff]
      %v6612 = vld [vmem:[%s393 + $0x10] sm:$0xff]
      %v6613 = vld [vmem:[%s393 + $0x18] sm:$0xff]
      %v6614 = vld [vmem:[%s393 + $0x20] sm:$0xff]
      %v6615 = vld [vmem:[%s393 + $0x28] sm:$0xff]
      %v6616 = vld [vmem:[%s393 + $0x30] sm:$0xff]
      %v6617 = vld [vmem:[%s393 + $0x38] sm:$0xff]
      %v6618 = vld [vmem:[%s393 + $0x40] sm:$0xff]
      %v6619 = vld [vmem:[%s393 + $0x48] sm:$0xff]
      %v6620 = vld [vmem:[%s393 + $0x50] sm:$0xff]
      %v6621 = vld [vmem:[%s393 + $0x58] sm:$0xff]
      %v6622 = vld [vmem:[%s393 + $0x60] sm:$0xff]
      %v6623 = vld [vmem:[%s393 + $0x68] sm:$0xff]
      %v6624 = vld [vmem:[%s393 + $0x70] sm:$0xff]
      %v6625 = vld [vmem:[%s393 + $0x78] sm:$0xff]
      %v6626 = vld [vmem:[%s393 + $0x80] sm:$0xff]
      %v6627 = vld [vmem:[%s393 + $0x88] sm:$0xff]
      %v6628 = vld [vmem:[%s393 + $0x90] sm:$0xff]
      %v6629 = vld [vmem:[%s393 + $0x98] sm:$0xff]
      %v6630 = vld [vmem:[%s393 + $0xa0] sm:$0xff]
      %v6631 = vld [vmem:[%s393 + $0xa8] sm:$0xff]
      %v6632 = vld [vmem:[%s393 + $0xb0] sm:$0xff]
      %v6633 = vld [vmem:[%s393 + $0xb8] sm:$0xff]
      %v6634 = vld [vmem:[%s393 + $0xc0] sm:$0xff]
      %v6635 = vld [vmem:[%s393 + $0xc8] sm:$0xff]
      %v6636 = vld [vmem:[%s393 + $0xd0] sm:$0xff]
      %v6637 = vld [vmem:[%s393 + $0xd8] sm:$0xff]
      %v6638 = vld [vmem:[%s393 + $0xe0] sm:$0xff]
      %v6639 = vld [vmem:[%s393 + $0xe8] sm:$0xff]
      %v6640 = vld [vmem:[%s393 + $0xf0] sm:$0xff]
      %v6641 = vld [vmem:[%s393 + $0xf8] sm:$0xff]
      %s6642 = scalar_lea.vmem %s3, 24
      %v6643 = vld [vmem:[%s6642] sm:$0xf]
      %v6645 = vsel %vm258, %v6610, 0
      %v6648 = vsel %vm258, %v6611, 0
      %v6651 = vsel %vm258, %v6612, 0
      %v6654 = vsel %vm258, %v6613, 0
      %v6657 = vsel %vm258, %v6614, 0
      %v6660 = vsel %vm258, %v6615, 0
      %v6663 = vsel %vm258, %v6616, 0
      %v6666 = vsel %vm258, %v6617, 0
      %v6669 = vsel %vm258, %v6618, 0
      %v6672 = vsel %vm258, %v6619, 0
      %v6675 = vsel %vm258, %v6620, 0
      %v6678 = vsel %vm258, %v6621, 0
      %v6681 = vsel %vm258, %v6622, 0
      %v6684 = vsel %vm258, %v6623, 0
      %v6687 = vsel %vm258, %v6624, 0
      %v6690 = vsel %vm258, %v6625, 0
      %v6693 = vsel %vm258, %v6626, 0
      %v6696 = vsel %vm258, %v6627, 0
      %v6699 = vsel %vm258, %v6628, 0
      %v6702 = vsel %vm258, %v6629, 0
      %v6705 = vsel %vm258, %v6630, 0
      %v6708 = vsel %vm258, %v6631, 0
      %v6711 = vsel %vm258, %v6632, 0
      %v6714 = vsel %vm258, %v6633, 0
      %v6717 = vsel %vm258, %v6634, 0
      %v6720 = vsel %vm258, %v6635, 0
      %v6723 = vsel %vm258, %v6636, 0
      %v6726 = vsel %vm258, %v6637, 0
      %v6729 = vsel %vm258, %v6638, 0
      %v6732 = vsel %vm258, %v6639, 0
      %v6735 = vsel %vm258, %v6640, 0
      %v6738 = vsel %vm258, %v6641, 0
      %v6741 = vsel %vm585, %v6643, 0
      %6743 = vmatprep.subr.mxu0 0.0
      %6744 = vmatpush1.msra.mxu0 %v6741
      %6745 = vmatprep.subr.mxu0 0.0
      %6746 = vmatpush1.msra.mxu0 0.0
      %6747 = vmatprep.subr.mxu0 0.0
      %6748 = vmatpush1.msra.mxu0 0.0
      %6749 = vmatprep.subr.mxu0 0.0
      %6750 = vmatpush1.msra.mxu0 0.0
      %6751 = vmatprep.subr.mxu0 0.0
      %6752 = vmatpush1.msra.mxu0 0.0
      %6753 = vmatprep.subr.mxu0 0.0
      %6754 = vmatpush1.msra.mxu0 0.0
      %6755 = vmatprep.subr.mxu0 0.0
      %6756 = vmatpush1.msra.mxu0 0.0
      %6757 = vmatprep.subr.mxu0 0.0
      %6758 = vmatpush1.msra.mxu0 0.0
      %6759 = vmatprep.subr.mxu0 0.0
      %6760 = vmatpush1.msra.mxu0 0.0
      %6761 = vmatprep.subr.mxu0 0.0
      %6762 = vmatpush1.msra.mxu0 0.0
      %6763 = vmatprep.subr.mxu0 0.0
      %6764 = vmatpush1.msra.mxu0 0.0
      %6765 = vmatprep.subr.mxu0 0.0
      %6766 = vmatpush1.msra.mxu0 0.0
      %6767 = vmatprep.subr.mxu0 0.0
      %6768 = vmatpush1.msra.mxu0 0.0
      %6769 = vmatprep.subr.mxu0 0.0
      %6770 = vmatpush1.msra.mxu0 0.0
      %6771 = vmatprep.subr.mxu0 0.0
      %6772 = vmatpush1.msra.mxu0 0.0
      %6773 = vmatprep.subr.mxu0 0.0
      %6774 = vmatpush1.msra.mxu0 0.0
      %6775 = vmatprep.subr.mxu0 0.0
      %6776 = vmatpush1.msra.mxu0 0.0
      %6777 = vmatprep.subr.mxu0 0.0
      %6778 = vmatpush1.msra.mxu0 0.0
      %6779 = vmatprep.subr.mxu0 0.0
      %6780 = vmatpush1.msra.mxu0 0.0
      %6781 = vmatprep.subr.mxu0 0.0
      %6782 = vmatpush1.msra.mxu0 0.0
      %6783 = vmatprep.subr.mxu0 0.0
      %6784 = vmatpush1.msra.mxu0 0.0
      %6785 = vmatprep.subr.mxu0 0.0
      %6786 = vmatpush1.msra.mxu0 0.0
      %6787 = vmatprep.subr.mxu0 0.0
      %6788 = vmatpush1.msra.mxu0 0.0
      %6789 = vmatprep.subr.mxu0 0.0
      %6790 = vmatpush1.msra.mxu0 0.0
      %6791 = vmatprep.subr.mxu0 0.0
      %6792 = vmatpush1.msra.mxu0 0.0
      %6793 = vmatprep.subr.mxu0 0.0
      %6794 = vmatpush1.msra.mxu0 0.0
      %6795 = vmatprep.subr.mxu0 0.0
      %6796 = vmatpush1.msra.mxu0 0.0
      %6797 = vmatprep.subr.mxu0 0.0
      %6798 = vmatpush1.msra.mxu0 0.0
      %6799 = vmatprep.subr.mxu0 0.0
      %6800 = vmatpush1.msra.mxu0 0.0
      %6801 = vmatprep.subr.mxu0 0.0
      %6802 = vmatpush1.msra.mxu0 0.0
      %6803 = vmatprep.subr.mxu0 0.0
      %6804 = vmatpush1.msra.mxu0 0.0
      %6805 = vmatprep.subr.mxu0 0.0
      %6806 = vmatpush1.msra.mxu0 0.0
      %6807 = vmatprep.mubr.f32.mxu0 0.0
      %6808 = vmatmul.mubr.f32.gmra.mrb[0].mxu0 %v6645
      %v6809 = vpop.f32.mrb[0].mxu0
      %v6810 = vadd.f32 0.0, %v6809
      %v6811 = vpop.f32.mrb[0].mxu0
      %6812 = vmatprep.mubr.f32.mxu0 0.0
      %6813 = vmatmul.mubr.f32.gmra.mrb[0].mxu0 %v6648
      %v6814 = vpop.f32.mrb[0].mxu0
      %v6815 = vadd.f32 0.0, %v6814
      %v6816 = vpop.f32.mrb[0].mxu0
      %6817 = vmatprep.mubr.f32.mxu0 0.0
      %6818 = vmatmul.mubr.f32.gmra.mrb[0].mxu0 %v6651
      %v6819 = vpop.f32.mrb[0].mxu0
      %v6820 = vadd.f32 0.0, %v6819
      %v6821 = vpop.f32.mrb[0].mxu0
      %6822 = vmatprep.mubr.f32.mxu0 0.0
      %6823 = vmatmul.mubr.f32.gmra.mrb[0].mxu0 %v6654
      %v6824 = vpop.f32.mrb[0].mxu0
      %v6825 = vadd.f32 0.0, %v6824
      %v6826 = vpop.f32.mrb[0].mxu0
      %6827 = vmatprep.mubr.f32.mxu0 0.0
      %6828 = vmatmul.mubr.f32.gmra.mrb[0].mxu0 %v6657
      %v6829 = vpop.f32.mrb[0].mxu0
      %v6830 = vadd.f32 0.0, %v6829
      %v6831 = vpop.f32.mrb[0].mxu0
      %6832 = vmatprep.mubr.f32.mxu0 0.0
      %6833 = vmatmul.mubr.f32.gmra.mrb[0].mxu0 %v6660
      %v6834 = vpop.f32.mrb[0].mxu0
      %v6835 = vadd.f32 0.0, %v6834
      %v6836 = vpop.f32.mrb[0].mxu0
      %6837 = vmatprep.mubr.f32.mxu0 0.0
      %6838 = vmatmul.mubr.f32.gmra.mrb[0].mxu0 %v6663
      %v6839 = vpop.f32.mrb[0].mxu0
      %v6840 = vadd.f32 0.0, %v6839
      %v6841 = vpop.f32.mrb[0].mxu0
      %6842 = vmatprep.mubr.f32.mxu0 0.0
      %6843 = vmatmul.mubr.f32.gmra.mrb[0].mxu0 %v6666
      %v6844 = vpop.f32.mrb[0].mxu0
      %v6845 = vadd.f32 0.0, %v6844
      %v6846 = vpop.f32.mrb[0].mxu0
      %6847 = vmatprep.mubr.f32.mxu0 0.0
      %6848 = vmatmul.mubr.f32.gmra.mrb[0].mxu0 %v6669
      %v6849 = vpop.f32.mrb[0].mxu0
      %v6850 = vadd.f32 0.0, %v6849
      %v6851 = vpop.f32.mrb[0].mxu0
      %6852 = vmatprep.mubr.f32.mxu0 0.0
      %6853 = vmatmul.mubr.f32.gmra.mrb[0].mxu0 %v6672
      %v6854 = vpop.f32.mrb[0].mxu0
      %v6855 = vadd.f32 0.0, %v6854
      %v6856 = vpop.f32.mrb[0].mxu0
      %6857 = vmatprep.mubr.f32.mxu0 0.0
      %6858 = vmatmul.mubr.f32.gmra.mrb[0].mxu0 %v6675
      %v6859 = vpop.f32.mrb[0].mxu0
      %v6860 = vadd.f32 0.0, %v6859
      %v6861 = vpop.f32.mrb[0].mxu0
      %6862 = vmatprep.mubr.f32.mxu0 0.0
      %6863 = vmatmul.mubr.f32.gmra.mrb[0].mxu0 %v6678
      %v6864 = vpop.f32.mrb[0].mxu0
      %v6865 = vadd.f32 0.0, %v6864
      %v6866 = vpop.f32.mrb[0].mxu0
      %6867 = vmatprep.mubr.f32.mxu0 0.0
      %6868 = vmatmul.mubr.f32.gmra.mrb[0].mxu0 %v6681
      %v6869 = vpop.f32.mrb[0].mxu0
      %v6870 = vadd.f32 0.0, %v6869
      %v6871 = vpop.f32.mrb[0].mxu0
      %6872 = vmatprep.mubr.f32.mxu0 0.0
      %6873 = vmatmul.mubr.f32.gmra.mrb[0].mxu0 %v6684
      %v6874 = vpop.f32.mrb[0].mxu0
      %v6875 = vadd.f32 0.0, %v6874
      %v6876 = vpop.f32.mrb[0].mxu0
      %6877 = vmatprep.mubr.f32.mxu0 0.0
      %6878 = vmatmul.mubr.f32.gmra.mrb[0].mxu0 %v6687
      %v6879 = vpop.f32.mrb[0].mxu0
      %v6880 = vadd.f32 0.0, %v6879
      %v6881 = vpop.f32.mrb[0].mxu0
      %6882 = vmatprep.mubr.f32.mxu0 0.0
      %6883 = vmatmul.mubr.f32.gmra.mrb[0].mxu0 %v6690
      %v6884 = vpop.f32.mrb[0].mxu0
      %v6885 = vadd.f32 0.0, %v6884
      %v6886 = vpop.f32.mrb[0].mxu0
      %6887 = vmatprep.mubr.f32.mxu0 0.0
      %6888 = vmatmul.mubr.f32.gmra.mrb[0].mxu0 %v6693
      %v6889 = vpop.f32.mrb[0].mxu0
      %v6890 = vadd.f32 0.0, %v6889
      %v6891 = vpop.f32.mrb[0].mxu0
      %6892 = vmatprep.mubr.f32.mxu0 0.0
      %6893 = vmatmul.mubr.f32.gmra.mrb[0].mxu0 %v6696
      %v6894 = vpop.f32.mrb[0].mxu0
      %v6895 = vadd.f32 0.0, %v6894
      %v6896 = vpop.f32.mrb[0].mxu0
      %6897 = vmatprep.mubr.f32.mxu0 0.0
      %6898 = vmatmul.mubr.f32.gmra.mrb[0].mxu0 %v6699
      %v6899 = vpop.f32.mrb[0].mxu0
      %v6900 = vadd.f32 0.0, %v6899
      %v6901 = vpop.f32.mrb[0].mxu0
      %6902 = vmatprep.mubr.f32.mxu0 0.0
      %6903 = vmatmul.mubr.f32.gmra.mrb[0].mxu0 %v6702
      %v6904 = vpop.f32.mrb[0].mxu0
      %v6905 = vadd.f32 0.0, %v6904
      %v6906 = vpop.f32.mrb[0].mxu0
      %6907 = vmatprep.mubr.f32.mxu0 0.0
      %6908 = vmatmul.mubr.f32.gmra.mrb[0].mxu0 %v6705
      %v6909 = vpop.f32.mrb[0].mxu0
      %v6910 = vadd.f32 0.0, %v6909
      %v6911 = vpop.f32.mrb[0].mxu0
      %6912 = vmatprep.mubr.f32.mxu0 0.0
      %6913 = vmatmul.mubr.f32.gmra.mrb[0].mxu0 %v6708
      %v6914 = vpop.f32.mrb[0].mxu0
      %v6915 = vadd.f32 0.0, %v6914
      %v6916 = vpop.f32.mrb[0].mxu0
      %6917 = vmatprep.mubr.f32.mxu0 0.0
      %6918 = vmatmul.mubr.f32.gmra.mrb[0].mxu0 %v6711
      %v6919 = vpop.f32.mrb[0].mxu0
      %v6920 = vadd.f32 0.0, %v6919
      %v6921 = vpop.f32.mrb[0].mxu0
      %6922 = vmatprep.mubr.f32.mxu0 0.0
      %6923 = vmatmul.mubr.f32.gmra.mrb[0].mxu0 %v6714
      %v6924 = vpop.f32.mrb[0].mxu0
      %v6925 = vadd.f32 0.0, %v6924
      %v6926 = vpop.f32.mrb[0].mxu0
      %6927 = vmatprep.mubr.f32.mxu0 0.0
      %6928 = vmatmul.mubr.f32.gmra.mrb[0].mxu0 %v6717
      %v6929 = vpop.f32.mrb[0].mxu0
      %v6930 = vadd.f32 0.0, %v6929
      %v6931 = vpop.f32.mrb[0].mxu0
      %6932 = vmatprep.mubr.f32.mxu0 0.0
      %6933 = vmatmul.mubr.f32.gmra.mrb[0].mxu0 %v6720
      %v6934 = vpop.f32.mrb[0].mxu0
      %v6935 = vadd.f32 0.0, %v6934
      %v6936 = vpop.f32.mrb[0].mxu0
      %6937 = vmatprep.mubr.f32.mxu0 0.0
      %6938 = vmatmul.mubr.f32.gmra.mrb[0].mxu0 %v6723
      %v6939 = vpop.f32.mrb[0].mxu0
      %v6940 = vadd.f32 0.0, %v6939
      %v6941 = vpop.f32.mrb[0].mxu0
      %6942 = vmatprep.mubr.f32.mxu0 0.0
      %6943 = vmatmul.mubr.f32.gmra.mrb[0].mxu0 %v6726
      %v6944 = vpop.f32.mrb[0].mxu0
      %v6945 = vadd.f32 0.0, %v6944
      %v6946 = vpop.f32.mrb[0].mxu0
      %6947 = vmatprep.mubr.f32.mxu0 0.0
      %6948 = vmatmul.mubr.f32.gmra.mrb[0].mxu0 %v6729
      %v6949 = vpop.f32.mrb[0].mxu0
      %v6950 = vadd.f32 0.0, %v6949
      %v6951 = vpop.f32.mrb[0].mxu0
      %6952 = vmatprep.mubr.f32.mxu0 0.0
      %6953 = vmatmul.mubr.f32.gmra.mrb[0].mxu0 %v6732
      %v6954 = vpop.f32.mrb[0].mxu0
      %v6955 = vadd.f32 0.0, %v6954
      %v6956 = vpop.f32.mrb[0].mxu0
      %6957 = vmatprep.mubr.f32.mxu0 0.0
      %6958 = vmatmul.mubr.f32.gmra.mrb[0].mxu0 %v6735
      %v6959 = vpop.f32.mrb[0].mxu0
      %v6960 = vadd.f32 0.0, %v6959
      %v6961 = vpop.f32.mrb[0].mxu0
      %6962 = vmatprep.mubr.f32.mxu0 0.0
      %6963 = vmatmul.mubr.f32.gmra.mrb[0].mxu0 %v6738
      %v6964 = vpop.f32.mrb[0].mxu0
      %v6965 = vadd.f32 0.0, %v6964
      %v6966 = vpop.f32.mrb[0].mxu0
      %6967 = vdwg.mxu0
      %v6968 = vadd.f32 %v6578, %v6810
      %v6969 = vadd.f32 %v6579, %v6815
      %v6970 = vadd.f32 %v6580, %v6820
      %v6971 = vadd.f32 %v6581, %v6825
      %v6972 = vadd.f32 %v6582, %v6830
      %v6973 = vadd.f32 %v6583, %v6835
      %v6974 = vadd.f32 %v6584, %v6840
      %v6975 = vadd.f32 %v6585, %v6845
      %v6976 = vadd.f32 %v6586, %v6850
      %v6977 = vadd.f32 %v6587, %v6855
      %v6978 = vadd.f32 %v6588, %v6860
      %v6979 = vadd.f32 %v6589, %v6865
      %v6980 = vadd.f32 %v6590, %v6870
      %v6981 = vadd.f32 %v6591, %v6875
      %v6982 = vadd.f32 %v6592, %v6880
      %v6983 = vadd.f32 %v6593, %v6885
      %v6984 = vadd.f32 %v6594, %v6890
      %v6985 = vadd.f32 %v6595, %v6895
      %v6986 = vadd.f32 %v6596, %v6900
      %v6987 = vadd.f32 %v6597, %v6905
      %v6988 = vadd.f32 %v6598, %v6910
      %v6989 = vadd.f32 %v6599, %v6915
      %v6990 = vadd.f32 %v6600, %v6920
      %v6991 = vadd.f32 %v6601, %v6925
      %v6992 = vadd.f32 %v6602, %v6930
      %v6993 = vadd.f32 %v6603, %v6935
      %v6994 = vadd.f32 %v6604, %v6940
      %v6995 = vadd.f32 %v6605, %v6945
      %v6996 = vadd.f32 %v6606, %v6950
      %v6997 = vadd.f32 %v6607, %v6955
      %v6998 = vadd.f32 %v6608, %v6960
      %v6999 = vadd.f32 %v6609, %v6965
      %v7000 = vld [vmem:[%s3089] sm:$0xff]
      %v7001 = vld [vmem:[%s3089 + $0x8] sm:$0xff]
      %v7002 = vld [vmem:[%s3089 + $0x10] sm:$0xff]
      %v7003 = vld [vmem:[%s3089 + $0x18] sm:$0xff]
      %v7004 = vld [vmem:[%s3089 + $0x20] sm:$0xff]
      %v7005 = vld [vmem:[%s3089 + $0x28] sm:$0xff]
      %v7006 = vld [vmem:[%s3089 + $0x30] sm:$0xff]
      %v7007 = vld [vmem:[%s3089 + $0x38] sm:$0xff]
      %v7008 = vld [vmem:[%s3089 + $0x40] sm:$0xff]
      %v7009 = vld [vmem:[%s3089 + $0x48] sm:$0xff]
      %v7010 = vld [vmem:[%s3089 + $0x50] sm:$0xff]
      %v7011 = vld [vmem:[%s3089 + $0x58] sm:$0xff]
      %v7012 = vld [vmem:[%s3089 + $0x60] sm:$0xff]
      %v7013 = vld [vmem:[%s3089 + $0x68] sm:$0xff]
      %v7014 = vld [vmem:[%s3089 + $0x70] sm:$0xff]
      %v7015 = vld [vmem:[%s3089 + $0x78] sm:$0xff]
      %v7016 = vld [vmem:[%s3089 + $0x80] sm:$0xff]
      %v7017 = vld [vmem:[%s3089 + $0x88] sm:$0xff]
      %v7018 = vld [vmem:[%s3089 + $0x90] sm:$0xff]
      %v7019 = vld [vmem:[%s3089 + $0x98] sm:$0xff]
      %v7020 = vld [vmem:[%s3089 + $0xa0] sm:$0xff]
      %v7021 = vld [vmem:[%s3089 + $0xa8] sm:$0xff]
      %v7022 = vld [vmem:[%s3089 + $0xb0] sm:$0xff]
      %v7023 = vld [vmem:[%s3089 + $0xb8] sm:$0xff]
      %v7024 = vld [vmem:[%s3089 + $0xc0] sm:$0xff]
      %v7025 = vld [vmem:[%s3089 + $0xc8] sm:$0xff]
      %v7026 = vld [vmem:[%s3089 + $0xd0] sm:$0xff]
      %v7027 = vld [vmem:[%s3089 + $0xd8] sm:$0xff]
      %v7028 = vld [vmem:[%s3089 + $0xe0] sm:$0xff]
      %v7029 = vld [vmem:[%s3089 + $0xe8] sm:$0xff]
      %v7030 = vld [vmem:[%s3089 + $0xf0] sm:$0xff]
      %v7031 = vld [vmem:[%s3089 + $0xf8] sm:$0xff]
      %s7032 = scalar_lea.vmem %s3, 28
      %v7033 = vld [vmem:[%s7032] sm:$0xf]
      %v7035 = vsel %vm258, %v7000, 0
      %v7038 = vsel %vm258, %v7001, 0
      %v7041 = vsel %vm258, %v7002, 0
      %v7044 = vsel %vm258, %v7003, 0
      %v7047 = vsel %vm258, %v7004, 0
      %v7050 = vsel %vm258, %v7005, 0
      %v7053 = vsel %vm258, %v7006, 0
      %v7056 = vsel %vm258, %v7007, 0
      %v7059 = vsel %vm258, %v7008, 0
      %v7062 = vsel %vm258, %v7009, 0
      %v7065 = vsel %vm258, %v7010, 0
      %v7068 = vsel %vm258, %v7011, 0
      %v7071 = vsel %vm258, %v7012, 0
      %v7074 = vsel %vm258, %v7013, 0
      %v7077 = vsel %vm258, %v7014, 0
      %v7080 = vsel %vm258, %v7015, 0
      %v7083 = vsel %vm258, %v7016, 0
      %v7086 = vsel %vm258, %v7017, 0
      %v7089 = vsel %vm258, %v7018, 0
      %v7092 = vsel %vm258, %v7019, 0
      %v7095 = vsel %vm258, %v7020, 0
      %v7098 = vsel %vm258, %v7021, 0
      %v7101 = vsel %vm258, %v7022, 0
      %v7104 = vsel %vm258, %v7023, 0
      %v7107 = vsel %vm258, %v7024, 0
      %v7110 = vsel %vm258, %v7025, 0
      %v7113 = vsel %vm258, %v7026, 0
      %v7116 = vsel %vm258, %v7027, 0
      %v7119 = vsel %vm258, %v7028, 0
      %v7122 = vsel %vm258, %v7029, 0
      %v7125 = vsel %vm258, %v7030, 0
      %v7128 = vsel %vm258, %v7031, 0
      %v7131 = vsel %vm585, %v7033, 0
      %7133 = vmatprep.subr.mxu0 0.0
      %7134 = vmatpush1.msra.mxu0 %v7131
      %7135 = vmatprep.subr.mxu0 0.0
      %7136 = vmatpush1.msra.mxu0 0.0
      %7137 = vmatprep.subr.mxu0 0.0
      %7138 = vmatpush1.msra.mxu0 0.0
      %7139 = vmatprep.subr.mxu0 0.0
      %7140 = vmatpush1.msra.mxu0 0.0
      %7141 = vmatprep.subr.mxu0 0.0
      %7142 = vmatpush1.msra.mxu0 0.0
      %7143 = vmatprep.subr.mxu0 0.0
      %7144 = vmatpush1.msra.mxu0 0.0
      %7145 = vmatprep.subr.mxu0 0.0
      %7146 = vmatpush1.msra.mxu0 0.0
      %7147 = vmatprep.subr.mxu0 0.0
      %7148 = vmatpush1.msra.mxu0 0.0
      %7149 = vmatprep.subr.mxu0 0.0
      %7150 = vmatpush1.msra.mxu0 0.0
      %7151 = vmatprep.subr.mxu0 0.0
      %7152 = vmatpush1.msra.mxu0 0.0
      %7153 = vmatprep.subr.mxu0 0.0
      %7154 = vmatpush1.msra.mxu0 0.0
      %7155 = vmatprep.subr.mxu0 0.0
      %7156 = vmatpush1.msra.mxu0 0.0
      %7157 = vmatprep.subr.mxu0 0.0
      %7158 = vmatpush1.msra.mxu0 0.0
      %7159 = vmatprep.subr.mxu0 0.0
      %7160 = vmatpush1.msra.mxu0 0.0
      %7161 = vmatprep.subr.mxu0 0.0
      %7162 = vmatpush1.msra.mxu0 0.0
      %7163 = vmatprep.subr.mxu0 0.0
      %7164 = vmatpush1.msra.mxu0 0.0
      %7165 = vmatprep.subr.mxu0 0.0
      %7166 = vmatpush1.msra.mxu0 0.0
      %7167 = vmatprep.subr.mxu0 0.0
      %7168 = vmatpush1.msra.mxu0 0.0
      %7169 = vmatprep.subr.mxu0 0.0
      %7170 = vmatpush1.msra.mxu0 0.0
      %7171 = vmatprep.subr.mxu0 0.0
      %7172 = vmatpush1.msra.mxu0 0.0
      %7173 = vmatprep.subr.mxu0 0.0
      %7174 = vmatpush1.msra.mxu0 0.0
      %7175 = vmatprep.subr.mxu0 0.0
      %7176 = vmatpush1.msra.mxu0 0.0
      %7177 = vmatprep.subr.mxu0 0.0
      %7178 = vmatpush1.msra.mxu0 0.0
      %7179 = vmatprep.subr.mxu0 0.0
      %7180 = vmatpush1.msra.mxu0 0.0
      %7181 = vmatprep.subr.mxu0 0.0
      %7182 = vmatpush1.msra.mxu0 0.0
      %7183 = vmatprep.subr.mxu0 0.0
      %7184 = vmatpush1.msra.mxu0 0.0
      %7185 = vmatprep.subr.mxu0 0.0
      %7186 = vmatpush1.msra.mxu0 0.0
      %7187 = vmatprep.subr.mxu0 0.0
      %7188 = vmatpush1.msra.mxu0 0.0
      %7189 = vmatprep.subr.mxu0 0.0
      %7190 = vmatpush1.msra.mxu0 0.0
      %7191 = vmatprep.subr.mxu0 0.0
      %7192 = vmatpush1.msra.mxu0 0.0
      %7193 = vmatprep.subr.mxu0 0.0
      %7194 = vmatpush1.msra.mxu0 0.0
      %7195 = vmatprep.subr.mxu0 0.0
      %7196 = vmatpush1.msra.mxu0 0.0
      %7197 = vmatprep.mubr.f32.mxu0 0.0
      %7198 = vmatmul.mubr.f32.gmra.mrb[0].mxu0 %v7035
      %v7199 = vpop.f32.mrb[0].mxu0
      %v7200 = vadd.f32 0.0, %v7199
      %v7201 = vpop.f32.mrb[0].mxu0
      %7202 = vmatprep.mubr.f32.mxu0 0.0
      %7203 = vmatmul.mubr.f32.gmra.mrb[0].mxu0 %v7038
      %v7204 = vpop.f32.mrb[0].mxu0
      %v7205 = vadd.f32 0.0, %v7204
      %v7206 = vpop.f32.mrb[0].mxu0
      %7207 = vmatprep.mubr.f32.mxu0 0.0
      %7208 = vmatmul.mubr.f32.gmra.mrb[0].mxu0 %v7041
      %v7209 = vpop.f32.mrb[0].mxu0
      %v7210 = vadd.f32 0.0, %v7209
      %v7211 = vpop.f32.mrb[0].mxu0
      %7212 = vmatprep.mubr.f32.mxu0 0.0
      %7213 = vmatmul.mubr.f32.gmra.mrb[0].mxu0 %v7044
      %v7214 = vpop.f32.mrb[0].mxu0
      %v7215 = vadd.f32 0.0, %v7214
      %v7216 = vpop.f32.mrb[0].mxu0
      %7217 = vmatprep.mubr.f32.mxu0 0.0
      %7218 = vmatmul.mubr.f32.gmra.mrb[0].mxu0 %v7047
      %v7219 = vpop.f32.mrb[0].mxu0
      %v7220 = vadd.f32 0.0, %v7219
      %v7221 = vpop.f32.mrb[0].mxu0
      %7222 = vmatprep.mubr.f32.mxu0 0.0
      %7223 = vmatmul.mubr.f32.gmra.mrb[0].mxu0 %v7050
      %v7224 = vpop.f32.mrb[0].mxu0
      %v7225 = vadd.f32 0.0, %v7224
      %v7226 = vpop.f32.mrb[0].mxu0
      %7227 = vmatprep.mubr.f32.mxu0 0.0
      %7228 = vmatmul.mubr.f32.gmra.mrb[0].mxu0 %v7053
      %v7229 = vpop.f32.mrb[0].mxu0
      %v7230 = vadd.f32 0.0, %v7229
      %v7231 = vpop.f32.mrb[0].mxu0
      %7232 = vmatprep.mubr.f32.mxu0 0.0
      %7233 = vmatmul.mubr.f32.gmra.mrb[0].mxu0 %v7056
      %v7234 = vpop.f32.mrb[0].mxu0
      %v7235 = vadd.f32 0.0, %v7234
      %v7236 = vpop.f32.mrb[0].mxu0
      %7237 = vmatprep.mubr.f32.mxu0 0.0
      %7238 = vmatmul.mubr.f32.gmra.mrb[0].mxu0 %v7059
      %v7239 = vpop.f32.mrb[0].mxu0
      %v7240 = vadd.f32 0.0, %v7239
      %v7241 = vpop.f32.mrb[0].mxu0
      %7242 = vmatprep.mubr.f32.mxu0 0.0
      %7243 = vmatmul.mubr.f32.gmra.mrb[0].mxu0 %v7062
      %v7244 = vpop.f32.mrb[0].mxu0
      %v7245 = vadd.f32 0.0, %v7244
      %v7246 = vpop.f32.mrb[0].mxu0
      %7247 = vmatprep.mubr.f32.mxu0 0.0
      %7248 = vmatmul.mubr.f32.gmra.mrb[0].mxu0 %v7065
      %v7249 = vpop.f32.mrb[0].mxu0
      %v7250 = vadd.f32 0.0, %v7249
      %v7251 = vpop.f32.mrb[0].mxu0
      %7252 = vmatprep.mubr.f32.mxu0 0.0
      %7253 = vmatmul.mubr.f32.gmra.mrb[0].mxu0 %v7068
      %v7254 = vpop.f32.mrb[0].mxu0
      %v7255 = vadd.f32 0.0, %v7254
      %v7256 = vpop.f32.mrb[0].mxu0
      %7257 = vmatprep.mubr.f32.mxu0 0.0
      %7258 = vmatmul.mubr.f32.gmra.mrb[0].mxu0 %v7071
      %v7259 = vpop.f32.mrb[0].mxu0
      %v7260 = vadd.f32 0.0, %v7259
      %v7261 = vpop.f32.mrb[0].mxu0
      %7262 = vmatprep.mubr.f32.mxu0 0.0
      %7263 = vmatmul.mubr.f32.gmra.mrb[0].mxu0 %v7074
      %v7264 = vpop.f32.mrb[0].mxu0
      %v7265 = vadd.f32 0.0, %v7264
      %v7266 = vpop.f32.mrb[0].mxu0
      %7267 = vmatprep.mubr.f32.mxu0 0.0
      %7268 = vmatmul.mubr.f32.gmra.mrb[0].mxu0 %v7077
      %v7269 = vpop.f32.mrb[0].mxu0
      %v7270 = vadd.f32 0.0, %v7269
      %v7271 = vpop.f32.mrb[0].mxu0
      %7272 = vmatprep.mubr.f32.mxu0 0.0
      %7273 = vmatmul.mubr.f32.gmra.mrb[0].mxu0 %v7080
      %v7274 = vpop.f32.mrb[0].mxu0
      %v7275 = vadd.f32 0.0, %v7274
      %v7276 = vpop.f32.mrb[0].mxu0
      %7277 = vmatprep.mubr.f32.mxu0 0.0
      %7278 = vmatmul.mubr.f32.gmra.mrb[0].mxu0 %v7083
      %v7279 = vpop.f32.mrb[0].mxu0
      %v7280 = vadd.f32 0.0, %v7279
      %v7281 = vpop.f32.mrb[0].mxu0
      %7282 = vmatprep.mubr.f32.mxu0 0.0
      %7283 = vmatmul.mubr.f32.gmra.mrb[0].mxu0 %v7086
      %v7284 = vpop.f32.mrb[0].mxu0
      %v7285 = vadd.f32 0.0, %v7284
      %v7286 = vpop.f32.mrb[0].mxu0
      %7287 = vmatprep.mubr.f32.mxu0 0.0
      %7288 = vmatmul.mubr.f32.gmra.mrb[0].mxu0 %v7089
      %v7289 = vpop.f32.mrb[0].mxu0
      %v7290 = vadd.f32 0.0, %v7289
      %v7291 = vpop.f32.mrb[0].mxu0
      %7292 = vmatprep.mubr.f32.mxu0 0.0
      %7293 = vmatmul.mubr.f32.gmra.mrb[0].mxu0 %v7092
      %v7294 = vpop.f32.mrb[0].mxu0
      %v7295 = vadd.f32 0.0, %v7294
      %v7296 = vpop.f32.mrb[0].mxu0
      %7297 = vmatprep.mubr.f32.mxu0 0.0
      %7298 = vmatmul.mubr.f32.gmra.mrb[0].mxu0 %v7095
      %v7299 = vpop.f32.mrb[0].mxu0
      %v7300 = vadd.f32 0.0, %v7299
      %v7301 = vpop.f32.mrb[0].mxu0
      %7302 = vmatprep.mubr.f32.mxu0 0.0
      %7303 = vmatmul.mubr.f32.gmra.mrb[0].mxu0 %v7098
      %v7304 = vpop.f32.mrb[0].mxu0
      %v7305 = vadd.f32 0.0, %v7304
      %v7306 = vpop.f32.mrb[0].mxu0
      %7307 = vmatprep.mubr.f32.mxu0 0.0
      %7308 = vmatmul.mubr.f32.gmra.mrb[0].mxu0 %v7101
      %v7309 = vpop.f32.mrb[0].mxu0
      %v7310 = vadd.f32 0.0, %v7309
      %v7311 = vpop.f32.mrb[0].mxu0
      %7312 = vmatprep.mubr.f32.mxu0 0.0
      %7313 = vmatmul.mubr.f32.gmra.mrb[0].mxu0 %v7104
      %v7314 = vpop.f32.mrb[0].mxu0
      %v7315 = vadd.f32 0.0, %v7314
      %v7316 = vpop.f32.mrb[0].mxu0
      %7317 = vmatprep.mubr.f32.mxu0 0.0
      %7318 = vmatmul.mubr.f32.gmra.mrb[0].mxu0 %v7107
      %v7319 = vpop.f32.mrb[0].mxu0
      %v7320 = vadd.f32 0.0, %v7319
      %v7321 = vpop.f32.mrb[0].mxu0
      %7322 = vmatprep.mubr.f32.mxu0 0.0
      %7323 = vmatmul.mubr.f32.gmra.mrb[0].mxu0 %v7110
      %v7324 = vpop.f32.mrb[0].mxu0
      %v7325 = vadd.f32 0.0, %v7324
      %v7326 = vpop.f32.mrb[0].mxu0
      %7327 = vmatprep.mubr.f32.mxu0 0.0
      %7328 = vmatmul.mubr.f32.gmra.mrb[0].mxu0 %v7113
      %v7329 = vpop.f32.mrb[0].mxu0
      %v7330 = vadd.f32 0.0, %v7329
      %v7331 = vpop.f32.mrb[0].mxu0
      %7332 = vmatprep.mubr.f32.mxu0 0.0
      %7333 = vmatmul.mubr.f32.gmra.mrb[0].mxu0 %v7116
      %v7334 = vpop.f32.mrb[0].mxu0
      %v7335 = vadd.f32 0.0, %v7334
      %v7336 = vpop.f32.mrb[0].mxu0
      %7337 = vmatprep.mubr.f32.mxu0 0.0
      %7338 = vmatmul.mubr.f32.gmra.mrb[0].mxu0 %v7119
      %v7339 = vpop.f32.mrb[0].mxu0
      %v7340 = vadd.f32 0.0, %v7339
      %v7341 = vpop.f32.mrb[0].mxu0
      %7342 = vmatprep.mubr.f32.mxu0 0.0
      %7343 = vmatmul.mubr.f32.gmra.mrb[0].mxu0 %v7122
      %v7344 = vpop.f32.mrb[0].mxu0
      %v7345 = vadd.f32 0.0, %v7344
      %v7346 = vpop.f32.mrb[0].mxu0
      %7347 = vmatprep.mubr.f32.mxu0 0.0
      %7348 = vmatmul.mubr.f32.gmra.mrb[0].mxu0 %v7125
      %v7349 = vpop.f32.mrb[0].mxu0
      %v7350 = vadd.f32 0.0, %v7349
      %v7351 = vpop.f32.mrb[0].mxu0
      %7352 = vmatprep.mubr.f32.mxu0 0.0
      %7353 = vmatmul.mubr.f32.gmra.mrb[0].mxu0 %v7128
      %v7354 = vpop.f32.mrb[0].mxu0
      %v7355 = vadd.f32 0.0, %v7354
      %v7356 = vpop.f32.mrb[0].mxu0
      %7357 = vdwg.mxu0
      %v7358 = vadd.f32 %v6968, %v7200
      %v7359 = vadd.f32 %v6969, %v7205
      %v7360 = vadd.f32 %v6970, %v7210
      %v7361 = vadd.f32 %v6971, %v7215
      %v7362 = vadd.f32 %v6972, %v7220
      %v7363 = vadd.f32 %v6973, %v7225
      %v7364 = vadd.f32 %v6974, %v7230
      %v7365 = vadd.f32 %v6975, %v7235
      %v7366 = vadd.f32 %v6976, %v7240
      %v7367 = vadd.f32 %v6977, %v7245
      %v7368 = vadd.f32 %v6978, %v7250
      %v7369 = vadd.f32 %v6979, %v7255
      %v7370 = vadd.f32 %v6980, %v7260
      %v7371 = vadd.f32 %v6981, %v7265
      %v7372 = vadd.f32 %v6982, %v7270
      %v7373 = vadd.f32 %v6983, %v7275
      %v7374 = vadd.f32 %v6984, %v7280
      %v7375 = vadd.f32 %v6985, %v7285
      %v7376 = vadd.f32 %v6986, %v7290
      %v7377 = vadd.f32 %v6987, %v7295
      %v7378 = vadd.f32 %v6988, %v7300
      %v7379 = vadd.f32 %v6989, %v7305
      %v7380 = vadd.f32 %v6990, %v7310
      %v7381 = vadd.f32 %v6991, %v7315
      %v7382 = vadd.f32 %v6992, %v7320
      %v7383 = vadd.f32 %v6993, %v7325
      %v7384 = vadd.f32 %v6994, %v7330
      %v7385 = vadd.f32 %v6995, %v7335
      %v7386 = vadd.f32 %v6996, %v7340
      %v7387 = vadd.f32 %v6997, %v7345
      %v7388 = vadd.f32 %v6998, %v7350
      %v7389 = vadd.f32 %v6999, %v7355
      %v7390 = vld [vmem:[%s3480] sm:$0xff]
      %v7391 = vld [vmem:[%s3480 + $0x8] sm:$0xff]
      %v7392 = vld [vmem:[%s3480 + $0x10] sm:$0xff]
      %v7393 = vld [vmem:[%s3480 + $0x18] sm:$0xff]
      %v7394 = vld [vmem:[%s3480 + $0x20] sm:$0xff]
      %v7395 = vld [vmem:[%s3480 + $0x28] sm:$0xff]
      %v7396 = vld [vmem:[%s3480 + $0x30] sm:$0xff]
      %v7397 = vld [vmem:[%s3480 + $0x38] sm:$0xff]
      %v7398 = vld [vmem:[%s3480 + $0x40] sm:$0xff]
      %v7399 = vld [vmem:[%s3480 + $0x48] sm:$0xff]
      %v7400 = vld [vmem:[%s3480 + $0x50] sm:$0xff]
      %v7401 = vld [vmem:[%s3480 + $0x58] sm:$0xff]
      %v7402 = vld [vmem:[%s3480 + $0x60] sm:$0xff]
      %v7403 = vld [vmem:[%s3480 + $0x68] sm:$0xff]
      %v7404 = vld [vmem:[%s3480 + $0x70] sm:$0xff]
      %v7405 = vld [vmem:[%s3480 + $0x78] sm:$0xff]
      %v7406 = vld [vmem:[%s3480 + $0x80] sm:$0xff]
      %v7407 = vld [vmem:[%s3480 + $0x88] sm:$0xff]
      %v7408 = vld [vmem:[%s3480 + $0x90] sm:$0xff]
      %v7409 = vld [vmem:[%s3480 + $0x98] sm:$0xff]
      %v7410 = vld [vmem:[%s3480 + $0xa0] sm:$0xff]
      %v7411 = vld [vmem:[%s3480 + $0xa8] sm:$0xff]
      %v7412 = vld [vmem:[%s3480 + $0xb0] sm:$0xff]
      %v7413 = vld [vmem:[%s3480 + $0xb8] sm:$0xff]
      %v7414 = vld [vmem:[%s3480 + $0xc0] sm:$0xff]
      %v7415 = vld [vmem:[%s3480 + $0xc8] sm:$0xff]
      %v7416 = vld [vmem:[%s3480 + $0xd0] sm:$0xff]
      %v7417 = vld [vmem:[%s3480 + $0xd8] sm:$0xff]
      %v7418 = vld [vmem:[%s3480 + $0xe0] sm:$0xff]
      %v7419 = vld [vmem:[%s3480 + $0xe8] sm:$0xff]
      %v7420 = vld [vmem:[%s3480 + $0xf0] sm:$0xff]
      %v7421 = vld [vmem:[%s3480 + $0xf8] sm:$0xff]
      %s7422 = scalar_lea.vmem %s3, 32
      %v7423 = vld [vmem:[%s7422] sm:$0xf]
      %v7425 = vsel %vm258, %v7390, 0
      %v7428 = vsel %vm258, %v7391, 0
      %v7431 = vsel %vm258, %v7392, 0
      %v7434 = vsel %vm258, %v7393, 0
      %v7437 = vsel %vm258, %v7394, 0
      %v7440 = vsel %vm258, %v7395, 0
      %v7443 = vsel %vm258, %v7396, 0
      %v7446 = vsel %vm258, %v7397, 0
      %v7449 = vsel %vm258, %v7398, 0
      %v7452 = vsel %vm258, %v7399, 0
      %v7455 = vsel %vm258, %v7400, 0
      %v7458 = vsel %vm258, %v7401, 0
      %v7461 = vsel %vm258, %v7402, 0
      %v7464 = vsel %vm258, %v7403, 0
      %v7467 = vsel %vm258, %v7404, 0
      %v7470 = vsel %vm258, %v7405, 0
      %v7473 = vsel %vm258, %v7406, 0
      %v7476 = vsel %vm258, %v7407, 0
      %v7479 = vsel %vm258, %v7408, 0
      %v7482 = vsel %vm258, %v7409, 0
      %v7485 = vsel %vm258, %v7410, 0
      %v7488 = vsel %vm258, %v7411, 0
      %v7491 = vsel %vm258, %v7412, 0
      %v7494 = vsel %vm258, %v7413, 0
      %v7497 = vsel %vm258, %v7414, 0
      %v7500 = vsel %vm258, %v7415, 0
      %v7503 = vsel %vm258, %v7416, 0
      %v7506 = vsel %vm258, %v7417, 0
      %v7509 = vsel %vm258, %v7418, 0
      %v7512 = vsel %vm258, %v7419, 0
      %v7515 = vsel %vm258, %v7420, 0
      %v7518 = vsel %vm258, %v7421, 0
      %v7521 = vsel %vm585, %v7423, 0
      %7523 = vmatprep.subr.mxu0 0.0
      %7524 = vmatpush1.msra.mxu0 %v7521
      %7525 = vmatprep.subr.mxu0 0.0
      %7526 = vmatpush1.msra.mxu0 0.0
      %7527 = vmatprep.subr.mxu0 0.0
      %7528 = vmatpush1.msra.mxu0 0.0
      %7529 = vmatprep.subr.mxu0 0.0
      %7530 = vmatpush1.msra.mxu0 0.0
      %7531 = vmatprep.subr.mxu0 0.0
      %7532 = vmatpush1.msra.mxu0 0.0
      %7533 = vmatprep.subr.mxu0 0.0
      %7534 = vmatpush1.msra.mxu0 0.0
      %7535 = vmatprep.subr.mxu0 0.0
      %7536 = vmatpush1.msra.mxu0 0.0
      %7537 = vmatprep.subr.mxu0 0.0
      %7538 = vmatpush1.msra.mxu0 0.0
      %7539 = vmatprep.subr.mxu0 0.0
      %7540 = vmatpush1.msra.mxu0 0.0
      %7541 = vmatprep.subr.mxu0 0.0
      %7542 = vmatpush1.msra.mxu0 0.0
      %7543 = vmatprep.subr.mxu0 0.0
      %7544 = vmatpush1.msra.mxu0 0.0
      %7545 = vmatprep.subr.mxu0 0.0
      %7546 = vmatpush1.msra.mxu0 0.0
      %7547 = vmatprep.subr.mxu0 0.0
      %7548 = vmatpush1.msra.mxu0 0.0
      %7549 = vmatprep.subr.mxu0 0.0
      %7550 = vmatpush1.msra.mxu0 0.0
      %7551 = vmatprep.subr.mxu0 0.0
      %7552 = vmatpush1.msra.mxu0 0.0
      %7553 = vmatprep.subr.mxu0 0.0
      %7554 = vmatpush1.msra.mxu0 0.0
      %7555 = vmatprep.subr.mxu0 0.0
      %7556 = vmatpush1.msra.mxu0 0.0
      %7557 = vmatprep.subr.mxu0 0.0
      %7558 = vmatpush1.msra.mxu0 0.0
      %7559 = vmatprep.subr.mxu0 0.0
      %7560 = vmatpush1.msra.mxu0 0.0
      %7561 = vmatprep.subr.mxu0 0.0
      %7562 = vmatpush1.msra.mxu0 0.0
      %7563 = vmatprep.subr.mxu0 0.0
      %7564 = vmatpush1.msra.mxu0 0.0
      %7565 = vmatprep.subr.mxu0 0.0
      %7566 = vmatpush1.msra.mxu0 0.0
      %7567 = vmatprep.subr.mxu0 0.0
      %7568 = vmatpush1.msra.mxu0 0.0
      %7569 = vmatprep.subr.mxu0 0.0
      %7570 = vmatpush1.msra.mxu0 0.0
      %7571 = vmatprep.subr.mxu0 0.0
      %7572 = vmatpush1.msra.mxu0 0.0
      %7573 = vmatprep.subr.mxu0 0.0
      %7574 = vmatpush1.msra.mxu0 0.0
      %7575 = vmatprep.subr.mxu0 0.0
      %7576 = vmatpush1.msra.mxu0 0.0
      %7577 = vmatprep.subr.mxu0 0.0
      %7578 = vmatpush1.msra.mxu0 0.0
      %7579 = vmatprep.subr.mxu0 0.0
      %7580 = vmatpush1.msra.mxu0 0.0
      %7581 = vmatprep.subr.mxu0 0.0
      %7582 = vmatpush1.msra.mxu0 0.0
      %7583 = vmatprep.subr.mxu0 0.0
      %7584 = vmatpush1.msra.mxu0 0.0
      %7585 = vmatprep.subr.mxu0 0.0
      %7586 = vmatpush1.msra.mxu0 0.0
      %7587 = vmatprep.mubr.f32.mxu0 0.0
      %7588 = vmatmul.mubr.f32.gmra.mrb[0].mxu0 %v7425
      %v7589 = vpop.f32.mrb[0].mxu0
      %v7590 = vadd.f32 0.0, %v7589
      %v7591 = vpop.f32.mrb[0].mxu0
      %7592 = vmatprep.mubr.f32.mxu0 0.0
      %7593 = vmatmul.mubr.f32.gmra.mrb[0].mxu0 %v7428
      %v7594 = vpop.f32.mrb[0].mxu0
      %v7595 = vadd.f32 0.0, %v7594
      %v7596 = vpop.f32.mrb[0].mxu0
      %7597 = vmatprep.mubr.f32.mxu0 0.0
      %7598 = vmatmul.mubr.f32.gmra.mrb[0].mxu0 %v7431
      %v7599 = vpop.f32.mrb[0].mxu0
      %v7600 = vadd.f32 0.0, %v7599
      %v7601 = vpop.f32.mrb[0].mxu0
      %7602 = vmatprep.mubr.f32.mxu0 0.0
      %7603 = vmatmul.mubr.f32.gmra.mrb[0].mxu0 %v7434
      %v7604 = vpop.f32.mrb[0].mxu0
      %v7605 = vadd.f32 0.0, %v7604
      %v7606 = vpop.f32.mrb[0].mxu0
      %7607 = vmatprep.mubr.f32.mxu0 0.0
      %7608 = vmatmul.mubr.f32.gmra.mrb[0].mxu0 %v7437
      %v7609 = vpop.f32.mrb[0].mxu0
      %v7610 = vadd.f32 0.0, %v7609
      %v7611 = vpop.f32.mrb[0].mxu0
      %7612 = vmatprep.mubr.f32.mxu0 0.0
      %7613 = vmatmul.mubr.f32.gmra.mrb[0].mxu0 %v7440
      %v7614 = vpop.f32.mrb[0].mxu0
      %v7615 = vadd.f32 0.0, %v7614
      %v7616 = vpop.f32.mrb[0].mxu0
      %7617 = vmatprep.mubr.f32.mxu0 0.0
      %7618 = vmatmul.mubr.f32.gmra.mrb[0].mxu0 %v7443
      %v7619 = vpop.f32.mrb[0].mxu0
      %v7620 = vadd.f32 0.0, %v7619
      %v7621 = vpop.f32.mrb[0].mxu0
      %7622 = vmatprep.mubr.f32.mxu0 0.0
      %7623 = vmatmul.mubr.f32.gmra.mrb[0].mxu0 %v7446
      %v7624 = vpop.f32.mrb[0].mxu0
      %v7625 = vadd.f32 0.0, %v7624
      %v7626 = vpop.f32.mrb[0].mxu0
      %7627 = vmatprep.mubr.f32.mxu0 0.0
      %7628 = vmatmul.mubr.f32.gmra.mrb[0].mxu0 %v7449
      %v7629 = vpop.f32.mrb[0].mxu0
      %v7630 = vadd.f32 0.0, %v7629
      %v7631 = vpop.f32.mrb[0].mxu0
      %7632 = vmatprep.mubr.f32.mxu0 0.0
      %7633 = vmatmul.mubr.f32.gmra.mrb[0].mxu0 %v7452
      %v7634 = vpop.f32.mrb[0].mxu0
      %v7635 = vadd.f32 0.0, %v7634
      %v7636 = vpop.f32.mrb[0].mxu0
      %7637 = vmatprep.mubr.f32.mxu0 0.0
      %7638 = vmatmul.mubr.f32.gmra.mrb[0].mxu0 %v7455
      %v7639 = vpop.f32.mrb[0].mxu0
      %v7640 = vadd.f32 0.0, %v7639
      %v7641 = vpop.f32.mrb[0].mxu0
      %7642 = vmatprep.mubr.f32.mxu0 0.0
      %7643 = vmatmul.mubr.f32.gmra.mrb[0].mxu0 %v7458
      %v7644 = vpop.f32.mrb[0].mxu0
      %v7645 = vadd.f32 0.0, %v7644
      %v7646 = vpop.f32.mrb[0].mxu0
      %7647 = vmatprep.mubr.f32.mxu0 0.0
      %7648 = vmatmul.mubr.f32.gmra.mrb[0].mxu0 %v7461
      %v7649 = vpop.f32.mrb[0].mxu0
      %v7650 = vadd.f32 0.0, %v7649
      %v7651 = vpop.f32.mrb[0].mxu0
      %7652 = vmatprep.mubr.f32.mxu0 0.0
      %7653 = vmatmul.mubr.f32.gmra.mrb[0].mxu0 %v7464
      %v7654 = vpop.f32.mrb[0].mxu0
      %v7655 = vadd.f32 0.0, %v7654
      %v7656 = vpop.f32.mrb[0].mxu0
      %7657 = vmatprep.mubr.f32.mxu0 0.0
      %7658 = vmatmul.mubr.f32.gmra.mrb[0].mxu0 %v7467
      %v7659 = vpop.f32.mrb[0].mxu0
      %v7660 = vadd.f32 0.0, %v7659
      %v7661 = vpop.f32.mrb[0].mxu0
      %7662 = vmatprep.mubr.f32.mxu0 0.0
      %7663 = vmatmul.mubr.f32.gmra.mrb[0].mxu0 %v7470
      %v7664 = vpop.f32.mrb[0].mxu0
      %v7665 = vadd.f32 0.0, %v7664
      %v7666 = vpop.f32.mrb[0].mxu0
      %7667 = vmatprep.mubr.f32.mxu0 0.0
      %7668 = vmatmul.mubr.f32.gmra.mrb[0].mxu0 %v7473
      %v7669 = vpop.f32.mrb[0].mxu0
      %v7670 = vadd.f32 0.0, %v7669
      %v7671 = vpop.f32.mrb[0].mxu0
      %7672 = vmatprep.mubr.f32.mxu0 0.0
      %7673 = vmatmul.mubr.f32.gmra.mrb[0].mxu0 %v7476
      %v7674 = vpop.f32.mrb[0].mxu0
      %v7675 = vadd.f32 0.0, %v7674
      %v7676 = vpop.f32.mrb[0].mxu0
      %7677 = vmatprep.mubr.f32.mxu0 0.0
      %7678 = vmatmul.mubr.f32.gmra.mrb[0].mxu0 %v7479
      %v7679 = vpop.f32.mrb[0].mxu0
      %v7680 = vadd.f32 0.0, %v7679
      %v7681 = vpop.f32.mrb[0].mxu0
      %7682 = vmatprep.mubr.f32.mxu0 0.0
      %7683 = vmatmul.mubr.f32.gmra.mrb[0].mxu0 %v7482
      %v7684 = vpop.f32.mrb[0].mxu0
      %v7685 = vadd.f32 0.0, %v7684
      %v7686 = vpop.f32.mrb[0].mxu0
      %7687 = vmatprep.mubr.f32.mxu0 0.0
      %7688 = vmatmul.mubr.f32.gmra.mrb[0].mxu0 %v7485
      %v7689 = vpop.f32.mrb[0].mxu0
      %v7690 = vadd.f32 0.0, %v7689
      %v7691 = vpop.f32.mrb[0].mxu0
      %7692 = vmatprep.mubr.f32.mxu0 0.0
      %7693 = vmatmul.mubr.f32.gmra.mrb[0].mxu0 %v7488
      %v7694 = vpop.f32.mrb[0].mxu0
      %v7695 = vadd.f32 0.0, %v7694
      %v7696 = vpop.f32.mrb[0].mxu0
      %7697 = vmatprep.mubr.f32.mxu0 0.0
      %7698 = vmatmul.mubr.f32.gmra.mrb[0].mxu0 %v7491
      %v7699 = vpop.f32.mrb[0].mxu0
      %v7700 = vadd.f32 0.0, %v7699
      %v7701 = vpop.f32.mrb[0].mxu0
      %7702 = vmatprep.mubr.f32.mxu0 0.0
      %7703 = vmatmul.mubr.f32.gmra.mrb[0].mxu0 %v7494
      %v7704 = vpop.f32.mrb[0].mxu0
      %v7705 = vadd.f32 0.0, %v7704
      %v7706 = vpop.f32.mrb[0].mxu0
      %7707 = vmatprep.mubr.f32.mxu0 0.0
      %7708 = vmatmul.mubr.f32.gmra.mrb[0].mxu0 %v7497
      %v7709 = vpop.f32.mrb[0].mxu0
      %v7710 = vadd.f32 0.0, %v7709
      %v7711 = vpop.f32.mrb[0].mxu0
      %7712 = vmatprep.mubr.f32.mxu0 0.0
      %7713 = vmatmul.mubr.f32.gmra.mrb[0].mxu0 %v7500
      %v7714 = vpop.f32.mrb[0].mxu0
      %v7715 = vadd.f32 0.0, %v7714
      %v7716 = vpop.f32.mrb[0].mxu0
      %7717 = vmatprep.mubr.f32.mxu0 0.0
      %7718 = vmatmul.mubr.f32.gmra.mrb[0].mxu0 %v7503
      %v7719 = vpop.f32.mrb[0].mxu0
      %v7720 = vadd.f32 0.0, %v7719
      %v7721 = vpop.f32.mrb[0].mxu0
      %7722 = vmatprep.mubr.f32.mxu0 0.0
      %7723 = vmatmul.mubr.f32.gmra.mrb[0].mxu0 %v7506
      %v7724 = vpop.f32.mrb[0].mxu0
      %v7725 = vadd.f32 0.0, %v7724
      %v7726 = vpop.f32.mrb[0].mxu0
      %7727 = vmatprep.mubr.f32.mxu0 0.0
      %7728 = vmatmul.mubr.f32.gmra.mrb[0].mxu0 %v7509
      %v7729 = vpop.f32.mrb[0].mxu0
      %v7730 = vadd.f32 0.0, %v7729
      %v7731 = vpop.f32.mrb[0].mxu0
      %7732 = vmatprep.mubr.f32.mxu0 0.0
      %7733 = vmatmul.mubr.f32.gmra.mrb[0].mxu0 %v7512
      %v7734 = vpop.f32.mrb[0].mxu0
      %v7735 = vadd.f32 0.0, %v7734
      %v7736 = vpop.f32.mrb[0].mxu0
      %7737 = vmatprep.mubr.f32.mxu0 0.0
      %7738 = vmatmul.mubr.f32.gmra.mrb[0].mxu0 %v7515
      %v7739 = vpop.f32.mrb[0].mxu0
      %v7740 = vadd.f32 0.0, %v7739
      %v7741 = vpop.f32.mrb[0].mxu0
      %7742 = vmatprep.mubr.f32.mxu0 0.0
      %7743 = vmatmul.mubr.f32.gmra.mrb[0].mxu0 %v7518
      %v7744 = vpop.f32.mrb[0].mxu0
      %v7745 = vadd.f32 0.0, %v7744
      %v7746 = vpop.f32.mrb[0].mxu0
      %7747 = vdwg.mxu0
      %v7748 = vadd.f32 %v7358, %v7590
      %v7749 = vadd.f32 %v7359, %v7595
      %v7750 = vadd.f32 %v7360, %v7600
      %v7751 = vadd.f32 %v7361, %v7605
      %v7752 = vadd.f32 %v7362, %v7610
      %v7753 = vadd.f32 %v7363, %v7615
      %v7754 = vadd.f32 %v7364, %v7620
      %v7755 = vadd.f32 %v7365, %v7625
      %v7756 = vadd.f32 %v7366, %v7630
      %v7757 = vadd.f32 %v7367, %v7635
      %v7758 = vadd.f32 %v7368, %v7640
      %v7759 = vadd.f32 %v7369, %v7645
      %v7760 = vadd.f32 %v7370, %v7650
      %v7761 = vadd.f32 %v7371, %v7655
      %v7762 = vadd.f32 %v7372, %v7660
      %v7763 = vadd.f32 %v7373, %v7665
      %v7764 = vadd.f32 %v7374, %v7670
      %v7765 = vadd.f32 %v7375, %v7675
      %v7766 = vadd.f32 %v7376, %v7680
      %v7767 = vadd.f32 %v7377, %v7685
      %v7768 = vadd.f32 %v7378, %v7690
      %v7769 = vadd.f32 %v7379, %v7695
      %v7770 = vadd.f32 %v7380, %v7700
      %v7771 = vadd.f32 %v7381, %v7705
      %v7772 = vadd.f32 %v7382, %v7710
      %v7773 = vadd.f32 %v7383, %v7715
      %v7774 = vadd.f32 %v7384, %v7720
      %v7775 = vadd.f32 %v7385, %v7725
      %v7776 = vadd.f32 %v7386, %v7730
      %v7777 = vadd.f32 %v7387, %v7735
      %v7778 = vadd.f32 %v7388, %v7740
      %v7779 = vadd.f32 %v7389, %v7745
      %v7781 = vlaneseq
      %v7782 = vshrl.u32 %v7781, 7
      %v7783 = vsub.s32 0, %v7782
      %v7784 = vrot.slane %v4334, %v7783
      %v7786 = vadd.f32 %v7748, %v7784
      %v7787 = vadd.f32 %v7749, %v7784
      %v7788 = vadd.f32 %v7750, %v7784
      %v7789 = vadd.f32 %v7751, %v7784
      %v7790 = vadd.f32 %v7752, %v7784
      %v7791 = vadd.f32 %v7753, %v7784
      %v7792 = vadd.f32 %v7754, %v7784
      %v7793 = vadd.f32 %v7755, %v7784
      %v7794 = vadd.f32 %v7756, %v7784
      %v7795 = vadd.f32 %v7757, %v7784
      %v7796 = vadd.f32 %v7758, %v7784
      %v7797 = vadd.f32 %v7759, %v7784
      %v7798 = vadd.f32 %v7760, %v7784
      %v7799 = vadd.f32 %v7761, %v7784
      %v7800 = vadd.f32 %v7762, %v7784
      %v7801 = vadd.f32 %v7763, %v7784
      %v7802 = vadd.f32 %v7764, %v7784
      %v7803 = vadd.f32 %v7765, %v7784
      %v7804 = vadd.f32 %v7766, %v7784
      %v7805 = vadd.f32 %v7767, %v7784
      %v7806 = vadd.f32 %v7768, %v7784
      %v7807 = vadd.f32 %v7769, %v7784
      %v7808 = vadd.f32 %v7770, %v7784
      %v7809 = vadd.f32 %v7771, %v7784
      %v7810 = vadd.f32 %v7772, %v7784
      %v7811 = vadd.f32 %v7773, %v7784
      %v7812 = vadd.f32 %v7774, %v7784
      %v7813 = vadd.f32 %v7775, %v7784
      %v7814 = vadd.f32 %v7776, %v7784
      %v7815 = vadd.f32 %v7777, %v7784
      %v7816 = vadd.f32 %v7778, %v7784
      %v7817 = vadd.f32 %v7779, %v7784
      %v7818 = vsel %vm258, %v7786, 0.0
      %v7819 = vsel %vm258, %v7787, 0.0
      %v7820 = vadd.f32 %v7818, %v7819
      %v7821 = vsel %vm258, %v7788, 0.0
      %v7822 = vadd.f32 %v7820, %v7821
      %v7823 = vsel %vm258, %v7789, 0.0
      %v7824 = vadd.f32 %v7822, %v7823
      %v7825 = vsel %vm258, %v7790, 0.0
      %v7826 = vadd.f32 %v7824, %v7825
      %v7827 = vsel %vm258, %v7791, 0.0
      %v7828 = vadd.f32 %v7826, %v7827
      %v7829 = vsel %vm258, %v7792, 0.0
      %v7830 = vadd.f32 %v7828, %v7829
      %v7831 = vsel %vm258, %v7793, 0.0
      %v7832 = vadd.f32 %v7830, %v7831
      %v7833 = vsel %vm258, %v7794, 0.0
      %v7834 = vadd.f32 %v7832, %v7833
      %v7835 = vsel %vm258, %v7795, 0.0
      %v7836 = vadd.f32 %v7834, %v7835
      %v7837 = vsel %vm258, %v7796, 0.0
      %v7838 = vadd.f32 %v7836, %v7837
      %v7839 = vsel %vm258, %v7797, 0.0
      %v7840 = vadd.f32 %v7838, %v7839
      %v7841 = vsel %vm258, %v7798, 0.0
      %v7842 = vadd.f32 %v7840, %v7841
      %v7843 = vsel %vm258, %v7799, 0.0
      %v7844 = vadd.f32 %v7842, %v7843
      %v7845 = vsel %vm258, %v7800, 0.0
      %v7846 = vadd.f32 %v7844, %v7845
      %v7847 = vsel %vm258, %v7801, 0.0
      %v7848 = vadd.f32 %v7846, %v7847
      %v7849 = vsel %vm258, %v7802, 0.0
      %v7850 = vadd.f32 %v7848, %v7849
      %v7851 = vsel %vm258, %v7803, 0.0
      %v7852 = vadd.f32 %v7850, %v7851
      %v7853 = vsel %vm258, %v7804, 0.0
      %v7854 = vadd.f32 %v7852, %v7853
      %v7855 = vsel %vm258, %v7805, 0.0
      %v7856 = vadd.f32 %v7854, %v7855
      %v7857 = vsel %vm258, %v7806, 0.0
      %v7858 = vadd.f32 %v7856, %v7857
      %v7859 = vsel %vm258, %v7807, 0.0
      %v7860 = vadd.f32 %v7858, %v7859
      %v7861 = vsel %vm258, %v7808, 0.0
      %v7862 = vadd.f32 %v7860, %v7861
      %v7863 = vsel %vm258, %v7809, 0.0
      %v7864 = vadd.f32 %v7862, %v7863
      %v7865 = vsel %vm258, %v7810, 0.0
      %v7866 = vadd.f32 %v7864, %v7865
      %v7867 = vsel %vm258, %v7811, 0.0
      %v7868 = vadd.f32 %v7866, %v7867
      %v7869 = vsel %vm258, %v7812, 0.0
      %v7870 = vadd.f32 %v7868, %v7869
      %v7871 = vsel %vm258, %v7813, 0.0
      %v7872 = vadd.f32 %v7870, %v7871
      %v7873 = vsel %vm258, %v7814, 0.0
      %v7874 = vadd.f32 %v7872, %v7873
      %v7875 = vsel %vm258, %v7815, 0.0
      %v7876 = vadd.f32 %v7874, %v7875
      %v7877 = vsel %vm258, %v7816, 0.0
      %v7878 = vadd.f32 %v7876, %v7877
      %v7879 = vsel %vm258, %v7817, 0.0
      %v7880 = vadd.f32 %v7878, %v7879
      %v7881 = vrot.slane %v7880, 4
      %v7882 = vadd.f32 %v7880, %v7881
      %v7883 = vrot.slane %v7882, 2
      %v7884 = vadd.f32 %v7882, %v7883
      %v7885 = vrot.slane %v7884, 1
      %v7886 = vadd.f32 %v7884, %v7885
      %v7887 = vmul.f32 %v7786, %v7786
      %v7888 = vmul.f32 %v7787, %v7787
      %v7889 = vmul.f32 %v7788, %v7788
      %v7890 = vmul.f32 %v7789, %v7789
      %v7891 = vmul.f32 %v7790, %v7790
      %v7892 = vmul.f32 %v7791, %v7791
      %v7893 = vmul.f32 %v7792, %v7792
      %v7894 = vmul.f32 %v7793, %v7793
      %v7895 = vmul.f32 %v7794, %v7794
      %v7896 = vmul.f32 %v7795, %v7795
      %v7897 = vmul.f32 %v7796, %v7796
      %v7898 = vmul.f32 %v7797, %v7797
      %v7899 = vmul.f32 %v7798, %v7798
      %v7900 = vmul.f32 %v7799, %v7799
      %v7901 = vmul.f32 %v7800, %v7800
      %v7902 = vmul.f32 %v7801, %v7801
      %v7903 = vmul.f32 %v7802, %v7802
      %v7904 = vmul.f32 %v7803, %v7803
      %v7905 = vmul.f32 %v7804, %v7804
      %v7906 = vmul.f32 %v7805, %v7805
      %v7907 = vmul.f32 %v7806, %v7806
      %v7908 = vmul.f32 %v7807, %v7807
      %v7909 = vmul.f32 %v7808, %v7808
      %v7910 = vmul.f32 %v7809, %v7809
      %v7911 = vmul.f32 %v7810, %v7810
      %v7912 = vmul.f32 %v7811, %v7811
      %v7913 = vmul.f32 %v7812, %v7812
      %v7914 = vmul.f32 %v7813, %v7813
      %v7915 = vmul.f32 %v7814, %v7814
      %v7916 = vmul.f32 %v7815, %v7815
      %v7917 = vmul.f32 %v7816, %v7816
      %v7918 = vmul.f32 %v7817, %v7817
      %v7919 = vsel %vm258, %v7887, 0.0
      %v7920 = vsel %vm258, %v7888, 0.0
      %v7921 = vadd.f32 %v7919, %v7920
      %v7922 = vsel %vm258, %v7889, 0.0
      %v7923 = vadd.f32 %v7921, %v7922
      %v7924 = vsel %vm258, %v7890, 0.0
      %v7925 = vadd.f32 %v7923, %v7924
      %v7926 = vsel %vm258, %v7891, 0.0
      %v7927 = vadd.f32 %v7925, %v7926
      %v7928 = vsel %vm258, %v7892, 0.0
      %v7929 = vadd.f32 %v7927, %v7928
      %v7930 = vsel %vm258, %v7893, 0.0
      %v7931 = vadd.f32 %v7929, %v7930
      %v7932 = vsel %vm258, %v7894, 0.0
      %v7933 = vadd.f32 %v7931, %v7932
      %v7934 = vsel %vm258, %v7895, 0.0
      %v7935 = vadd.f32 %v7933, %v7934
      %v7936 = vsel %vm258, %v7896, 0.0
      %v7937 = vadd.f32 %v7935, %v7936
      %v7938 = vsel %vm258, %v7897, 0.0
      %v7939 = vadd.f32 %v7937, %v7938
      %v7940 = vsel %vm258, %v7898, 0.0
      %v7941 = vadd.f32 %v7939, %v7940
      %v7942 = vsel %vm258, %v7899, 0.0
      %v7943 = vadd.f32 %v7941, %v7942
      %v7944 = vsel %vm258, %v7900, 0.0
      %v7945 = vadd.f32 %v7943, %v7944
      %v7946 = vsel %vm258, %v7901, 0.0
      %v7947 = vadd.f32 %v7945, %v7946
      %v7948 = vsel %vm258, %v7902, 0.0
      %v7949 = vadd.f32 %v7947, %v7948
      %v7950 = vsel %vm258, %v7903, 0.0
      %v7951 = vadd.f32 %v7949, %v7950
      %v7952 = vsel %vm258, %v7904, 0.0
      %v7953 = vadd.f32 %v7951, %v7952
      %v7954 = vsel %vm258, %v7905, 0.0
      %v7955 = vadd.f32 %v7953, %v7954
      %v7956 = vsel %vm258, %v7906, 0.0
      %v7957 = vadd.f32 %v7955, %v7956
      %v7958 = vsel %vm258, %v7907, 0.0
      %v7959 = vadd.f32 %v7957, %v7958
      %v7960 = vsel %vm258, %v7908, 0.0
      %v7961 = vadd.f32 %v7959, %v7960
      %v7962 = vsel %vm258, %v7909, 0.0
      %v7963 = vadd.f32 %v7961, %v7962
      %v7964 = vsel %vm258, %v7910, 0.0
      %v7965 = vadd.f32 %v7963, %v7964
      %v7966 = vsel %vm258, %v7911, 0.0
      %v7967 = vadd.f32 %v7965, %v7966
      %v7968 = vsel %vm258, %v7912, 0.0
      %v7969 = vadd.f32 %v7967, %v7968
      %v7970 = vsel %vm258, %v7913, 0.0
      %v7971 = vadd.f32 %v7969, %v7970
      %v7972 = vsel %vm258, %v7914, 0.0
      %v7973 = vadd.f32 %v7971, %v7972
      %v7974 = vsel %vm258, %v7915, 0.0
      %v7975 = vadd.f32 %v7973, %v7974
      %v7976 = vsel %vm258, %v7916, 0.0
      %v7977 = vadd.f32 %v7975, %v7976
      %v7978 = vsel %vm258, %v7917, 0.0
      %v7979 = vadd.f32 %v7977, %v7978
      %v7980 = vsel %vm258, %v7918, 0.0
      %v7981 = vadd.f32 %v7979, %v7980
      %v7982 = vrot.slane %v7981, 4
      %v7983 = vadd.f32 %v7981, %v7982
      %v7984 = vrot.slane %v7983, 2
      %v7985 = vadd.f32 %v7983, %v7984
      %v7986 = vrot.slane %v7985, 1
      %v7987 = vadd.f32 %v7985, %v7986
      %v7988 = vmul.f32 %v7886, 0.00390625
      %v7989 = vmul.f32 %v7987, 0.00390625
      %v7990 = vmul.f32 %v7988, %v7988
      %v7991 = vsub.f32 %v7989, %v7990
      %v7992 = vmax.f32 %v7991, 0.0
      %v7993 = vsub.f32 %v7786, %v7988
      %v7994 = vsub.f32 %v7787, %v7988
      %v7995 = vsub.f32 %v7788, %v7988
      %v7996 = vsub.f32 %v7789, %v7988
      %v7997 = vsub.f32 %v7790, %v7988
      %v7998 = vsub.f32 %v7791, %v7988
      %v7999 = vsub.f32 %v7792, %v7988
      %v8000 = vsub.f32 %v7793, %v7988
      %v8001 = vsub.f32 %v7794, %v7988
      %v8002 = vsub.f32 %v7795, %v7988
      %v8003 = vsub.f32 %v7796, %v7988
      %v8004 = vsub.f32 %v7797, %v7988
      %v8005 = vsub.f32 %v7798, %v7988
      %v8006 = vsub.f32 %v7799, %v7988
      %v8007 = vsub.f32 %v7800, %v7988
      %v8008 = vsub.f32 %v7801, %v7988
      %v8009 = vsub.f32 %v7802, %v7988
      %v8010 = vsub.f32 %v7803, %v7988
      %v8011 = vsub.f32 %v7804, %v7988
      %v8012 = vsub.f32 %v7805, %v7988
      %v8013 = vsub.f32 %v7806, %v7988
      %v8014 = vsub.f32 %v7807, %v7988
      %v8015 = vsub.f32 %v7808, %v7988
      %v8016 = vsub.f32 %v7809, %v7988
      %v8017 = vsub.f32 %v7810, %v7988
      %v8018 = vsub.f32 %v7811, %v7988
      %v8019 = vsub.f32 %v7812, %v7988
      %v8020 = vsub.f32 %v7813, %v7988
      %v8021 = vsub.f32 %v7814, %v7988
      %v8022 = vsub.f32 %v7815, %v7988
      %v8023 = vsub.f32 %v7816, %v7988
      %v8024 = vsub.f32 %v7817, %v7988
      %v8025 = vadd.f32 %v7992, 1e-05
      %v8026 = vrsqrt.pop %v8025
      %v8027 = vmul.f32 %v7993, %v8026
      %v8028 = vmul.f32 %v7994, %v8026
      %v8029 = vmul.f32 %v7995, %v8026
      %v8030 = vmul.f32 %v7996, %v8026
      %v8031 = vmul.f32 %v7997, %v8026
      %v8032 = vmul.f32 %v7998, %v8026
      %v8033 = vmul.f32 %v7999, %v8026
      %v8034 = vmul.f32 %v8000, %v8026
      %v8035 = vmul.f32 %v8001, %v8026
      %v8036 = vmul.f32 %v8002, %v8026
      %v8037 = vmul.f32 %v8003, %v8026
      %v8038 = vmul.f32 %v8004, %v8026
      %v8039 = vmul.f32 %v8005, %v8026
      %v8040 = vmul.f32 %v8006, %v8026
      %v8041 = vmul.f32 %v8007, %v8026
      %v8042 = vmul.f32 %v8008, %v8026
      %v8043 = vmul.f32 %v8009, %v8026
      %v8044 = vmul.f32 %v8010, %v8026
      %v8045 = vmul.f32 %v8011, %v8026
      %v8046 = vmul.f32 %v8012, %v8026
      %v8047 = vmul.f32 %v8013, %v8026
      %v8048 = vmul.f32 %v8014, %v8026
      %v8049 = vmul.f32 %v8015, %v8026
      %v8050 = vmul.f32 %v8016, %v8026
      %v8051 = vmul.f32 %v8017, %v8026
      %v8052 = vmul.f32 %v8018, %v8026
      %v8053 = vmul.f32 %v8019, %v8026
      %v8054 = vmul.f32 %v8020, %v8026
      %v8055 = vmul.f32 %v8021, %v8026
      %v8056 = vmul.f32 %v8022, %v8026
      %v8057 = vmul.f32 %v8023, %v8026
      %v8058 = vmul.f32 %v8024, %v8026
      %v8059 = vadd.f32 %v225, %v8027
      %v8060 = vadd.f32 %v226, %v8028
      %v8061 = vadd.f32 %v227, %v8029
      %v8062 = vadd.f32 %v228, %v8030
      %v8063 = vadd.f32 %v229, %v8031
      %v8064 = vadd.f32 %v230, %v8032
      %v8065 = vadd.f32 %v231, %v8033
      %v8066 = vadd.f32 %v232, %v8034
      %v8067 = vadd.f32 %v233, %v8035
      %v8068 = vadd.f32 %v234, %v8036
      %v8069 = vadd.f32 %v235, %v8037
      %v8070 = vadd.f32 %v236, %v8038
      %v8071 = vadd.f32 %v237, %v8039
      %v8072 = vadd.f32 %v238, %v8040
      %v8073 = vadd.f32 %v239, %v8041
      %v8074 = vadd.f32 %v240, %v8042
      %v8075 = vadd.f32 %v241, %v8043
      %v8076 = vadd.f32 %v242, %v8044
      %v8077 = vadd.f32 %v243, %v8045
      %v8078 = vadd.f32 %v244, %v8046
      %v8079 = vadd.f32 %v245, %v8047
      %v8080 = vadd.f32 %v246, %v8048
      %v8081 = vadd.f32 %v247, %v8049
      %v8082 = vadd.f32 %v248, %v8050
      %v8083 = vadd.f32 %v249, %v8051
      %v8084 = vadd.f32 %v250, %v8052
      %v8085 = vadd.f32 %v251, %v8053
      %v8086 = vadd.f32 %v252, %v8054
      %v8087 = vadd.f32 %v253, %v8055
      %v8088 = vadd.f32 %v254, %v8056
      %v8089 = vadd.f32 %v255, %v8057
      %v8090 = vadd.f32 %v256, %v8058
      %8091 = vst.msk [vmem:[%s224] sm:$0xff] %vm258, %v8059
      %8092 = vst.msk [vmem:[%s224 + $0x8] sm:$0xff] %vm258, %v8060
      %8093 = vst.msk [vmem:[%s224 + $0x10] sm:$0xff] %vm258, %v8061
      %8094 = vst.msk [vmem:[%s224 + $0x18] sm:$0xff] %vm258, %v8062
      %8095 = vst.msk [vmem:[%s224 + $0x20] sm:$0xff] %vm258, %v8063
      %8096 = vst.msk [vmem:[%s224 + $0x28] sm:$0xff] %vm258, %v8064
      %8097 = vst.msk [vmem:[%s224 + $0x30] sm:$0xff] %vm258, %v8065
      %8098 = vst.msk [vmem:[%s224 + $0x38] sm:$0xff] %vm258, %v8066
      %8099 = vst.msk [vmem:[%s224 + $0x40] sm:$0xff] %vm258, %v8067
      %8100 = vst.msk [vmem:[%s224 + $0x48] sm:$0xff] %vm258, %v8068
      %8101 = vst.msk [vmem:[%s224 + $0x50] sm:$0xff] %vm258, %v8069
      %8102 = vst.msk [vmem:[%s224 + $0x58] sm:$0xff] %vm258, %v8070
      %8103 = vst.msk [vmem:[%s224 + $0x60] sm:$0xff] %vm258, %v8071
      %8104 = vst.msk [vmem:[%s224 + $0x68] sm:$0xff] %vm258, %v8072
      %8105 = vst.msk [vmem:[%s224 + $0x70] sm:$0xff] %vm258, %v8073
      %8106 = vst.msk [vmem:[%s224 + $0x78] sm:$0xff] %vm258, %v8074
      %8107 = vst.msk [vmem:[%s224 + $0x80] sm:$0xff] %vm258, %v8075
      %8108 = vst.msk [vmem:[%s224 + $0x88] sm:$0xff] %vm258, %v8076
      %8109 = vst.msk [vmem:[%s224 + $0x90] sm:$0xff] %vm258, %v8077
      %8110 = vst.msk [vmem:[%s224 + $0x98] sm:$0xff] %vm258, %v8078
      %8111 = vst.msk [vmem:[%s224 + $0xa0] sm:$0xff] %vm258, %v8079
      %8112 = vst.msk [vmem:[%s224 + $0xa8] sm:$0xff] %vm258, %v8080
      %8113 = vst.msk [vmem:[%s224 + $0xb0] sm:$0xff] %vm258, %v8081
      %8114 = vst.msk [vmem:[%s224 + $0xb8] sm:$0xff] %vm258, %v8082
      %8115 = vst.msk [vmem:[%s224 + $0xc0] sm:$0xff] %vm258, %v8083
      %8116 = vst.msk [vmem:[%s224 + $0xc8] sm:$0xff] %vm258, %v8084
      %8117 = vst.msk [vmem:[%s224 + $0xd0] sm:$0xff] %vm258, %v8085
      %8118 = vst.msk [vmem:[%s224 + $0xd8] sm:$0xff] %vm258, %v8086
      %8119 = vst.msk [vmem:[%s224 + $0xe0] sm:$0xff] %vm258, %v8087
      %8120 = vst.msk [vmem:[%s224 + $0xe8] sm:$0xff] %vm258, %v8088
      %8121 = vst.msk [vmem:[%s224 + $0xf0] sm:$0xff] %vm258, %v8089
      %8122 = vst.msk [vmem:[%s224 + $0xf8] sm:$0xff] %vm258, %v8090
      %p8123 = scmp.lt.s32.totalorder %s16, 1
      %s8124 = scalar_select %p8123, %s16, 1
      %s8125 = smul.addr %s8124, 32
      %s8126 = smul.addr %s8125, 8
      %s8127 = scalar_lea.vmem %s5, %s8126
      // Predicated region
      $region41: #{residual_block_nchw.1} parent=39 // pred_check
        %p8128 = pneg %p144
      $region42: #{residual_block_nchw.1} parent=39 // pred_check_branch
        %8130 = sbr.rel (%p8128) target = $region44
      $region43: #{residual_block_nchw.1} parent=39 // pred_region
        _
      $region44: #{residual_block_nchw.1} parent=39 // pred_fallthru
        _
    $region40: #{residual_block_nchw.1} parent=5 // pred_fallthru
      _
    %p8131 = scmp.le.s32.totalorder 2, %s11
    // Predicated region
    $region45: #{residual_block_nchw.1} parent=5 // pred_check
      %p8132 = pneg %p8131
    $region46: #{residual_block_nchw.1} parent=5 // pred_check_branch
      %8134 = sbr.rel (%p8132) target = $region48
    $region47: #{residual_block_nchw.1} parent=5 // pred_region
      %s8135 = ssub.s32 %s11, 2
      // Predicated region
      $region49: #{residual_block_nchw.1} parent=47 // pred_check
        %p8136 = pneg %p150
      $region50: #{residual_block_nchw.1} parent=47 // pred_check_branch
        %8138 = sbr.rel (%p8136) target = $region52
      $region51: #{residual_block_nchw.1} parent=47 // pred_region
        %p8139 = scmp.lt.s32.totalorder %s17, 1
        %s8140 = scalar_select %p8139, %s17, 1
        %s8141 = smul.addr %s8140, 32
        %s8142 = smul.addr %s8141, 8
        %s8143 = scalar_lea.vmem %s5, %s8142
      $region52: #{residual_block_nchw.1} parent=47 // pred_fallthru
        _
    $region48: #{residual_block_nchw.1} parent=5 // pred_fallthru
      _
  $region6: #{residual_block_nchw.1} parent=0 // loop_footer
    %s15 = sadd.s32 1, %s11
  $region7: #{residual_block_nchw.1} parent=0 // loop_footer_branch
    %10 = sbr.rel target = $region3
  $region8: #{residual_block_nchw.1} parent=0 // loop_exit
    _

</llo_original>
